<compile_context>
chip_gen: v5e
topology: v5e:2x2
jax: 0.10.0
libtpu: 0.0.40
codegen_flags: <defaults>
</compile_context>

<pallas_src>
import functools

import jax
import jax.numpy as jnp
from jax import lax
from jax.experimental import pallas as pl
from jax.experimental.pallas import tpu as pltpu


# ----------------------------------------------------------------------------
# In-kernel helpers (operate on VMEM refs / values only)
# ----------------------------------------------------------------------------
def _lrelu(x):
    return jnp.where(x >= 0.0, x, 0.2 * x)


def _conv3x3_flat(pad_scr, w_ref, b_ref, H, W):
    """3x3 / stride-1 / pad-1 conv from a flattened zero-padded VMEM scratch.

    pad_scr : Ref[( (H+2)*(W+2), Cin )]  f32, zero border, interior written.
    w_ref   : Ref[(9, Cin, Cout)]        bf16 (tap index = di*3 + dj).
    b_ref   : Ref[(1, Cout)]             f32.
    Returns (L, Cout) f32 value, L = (H-1)*(W+2) + W; valid output row (oh, ow)
    lives at flat row  oh*(W+2) + ow.
    """
    Wp = W + 2
    L = (H - 1) * Wp + W
    cout = w_ref.shape[-1]
    acc = jnp.zeros((L, cout), jnp.float32)
    for di in range(3):
        for dj in range(3):
            base = di * Wp + dj
            acc = acc + jnp.dot(
                pad_scr[base:base + L, :].astype(jnp.bfloat16),
                w_ref[di * 3 + dj],
                preferred_element_type=jnp.float32)
    return acc + b_ref[...]


# ----------------------------------------------------------------------------
# Down block kernel: Conv2d(4,4,s=2,p=1) + LeakyReLU + ResidualBlock
# (one batch element per grid step; everything stays in VMEM / vregs)
# ----------------------------------------------------------------------------
def _down_block_kernel(xpar_ref, wd_ref, bd_ref, w1_ref, b1_ref, w2_ref, b2_ref,
                       o_ref, pad_scr, *, Ho, Wo):
    C = wd_ref.shape[-1]
    Wp2 = Wo + 1                       # row stride of a parity plane
    L2 = (Ho - 1) * Wp2 + Wo
    Wp = Wo + 2                        # row stride of the 3x3 padded scratch

    # ---- Conv2d(k=4, s=2, p=1): 16 taps over 4 parity planes, + bias + LeakyReLU
    acc = jnp.zeros((L2, C), jnp.float32)
    for g in range(4):                 # g = 2*ri + rj  (parity of the tap)
        for pi in range(2):
            for pj in range(2):
                base = pi * Wp2 + pj
                acc = acc + jnp.dot(
                    xpar_ref[g, base:base + L2, :],           # bf16 slab
                    wd_ref[g * 4 + pi * 2 + pj],              # bf16 (Cin, C)
                    preferred_element_type=jnp.float32)
    h = _lrelu(acc + bd_ref[...])      # (L2, C) f32 — ResidualBlock input & skip

    # ---- ResidualBlock: conv3x3 -> LeakyReLU -> conv3x3, + identity skip
    pad_scr[...] = jnp.zeros(pad_scr.shape, pad_scr.dtype)    # zero border
    for oh in range(Ho):               # scatter valid rows into the padded tile
        pad_scr[(oh + 1) * Wp + 1:(oh + 1) * Wp + 1 + Wo, :] = \
            h[oh * Wp2:oh * Wp2 + Wo, :]
    a1 = _lrelu(_conv3x3_flat(pad_scr, w1_ref, b1_ref, Ho, Wo))
    for oh in range(Ho):
        pad_scr[(oh + 1) * Wp + 1:(oh + 1) * Wp + 1 + Wo, :] = \
            a1[oh * Wp:oh * Wp + Wo, :]
    a2 = _conv3x3_flat(pad_scr, w2_ref, b2_ref, Ho, Wo)
    for oh in range(Ho):               # conv2 + bias + skip, write output rows
        o_ref[0, oh] = (a2[oh * Wp:oh * Wp + Wo, :]
                        + h[oh * Wp2:oh * Wp2 + Wo, :]).astype(o_ref.dtype)


# ----------------------------------------------------------------------------
# Mid kernel: multi-head Attention + ResidualBlock + out Conv2d(3x3, p=1)
# (one batch element per grid step)
# ----------------------------------------------------------------------------
def _mid_kernel(x_ref, wq_ref, bq_ref, wk_ref, bk_ref, wv_ref, bv_ref,
                wo_ref, bo_ref, w1_ref, b1_ref, w2_ref, b2_ref,
                wout_ref, bout_ref, o_ref, pad_scr, *, H, W, C, Dh, nH):
    Wp = W + 2
    scale = float(Dh) ** -0.5

    x = x_ref[0]                                      # (S, C) f32
    x_b = x.astype(jnp.bfloat16)

    # ---- multi-head attention (all heads inside this single grid step)
    yacc = jnp.zeros(x.shape, jnp.float32)
    for hd in range(nH):
        q = jnp.dot(x_b, wq_ref[hd], preferred_element_type=jnp.float32) + bq_ref[hd]
        k = jnp.dot(x_b, wk_ref[hd], preferred_element_type=jnp.float32) + bk_ref[hd]
        v = jnp.dot(x_b, wv_ref[hd], preferred_element_type=jnp.float32) + bv_ref[hd]
        s = lax.dot_general(                          # q @ k^T without transpose
            q.astype(jnp.bfloat16), k.astype(jnp.bfloat16),
            (((1,), (1,)), ((), ())),
            preferred_element_type=jnp.float32) * scale
        m = jnp.max(s, axis=-1, keepdims=True)
        e = jnp.exp(s - m)
        p = e * pl.reciprocal(jnp.sum(e, axis=-1, keepdims=True), approx=True)
        ov = jnp.dot(p.astype(jnp.bfloat16), v.astype(jnp.bfloat16),
                     preferred_element_type=jnp.float32)       # (S, Dh)
        yacc = yacc + jnp.dot(ov.astype(jnp.bfloat16), wo_ref[hd],
                              preferred_element_type=jnp.float32)
    y = yacc + bo_ref[...] + x                        # out-proj bias + residual

    # ---- mid ResidualBlock
    pad_scr[...] = jnp.zeros(pad_scr.shape, pad_scr.dtype)    # zero border
    for oh in range(H):
        pad_scr[(oh + 1) * Wp + 1:(oh + 1) * Wp + 1 + W, :] = \
            y[oh * W:oh * W + W, :]
    a1 = _lrelu(_conv3x3_flat(pad_scr, w1_ref, b1_ref, H, W))
    for oh in range(H):
        pad_scr[(oh + 1) * Wp + 1:(oh + 1) * Wp + 1 + W, :] = \
            a1[oh * Wp:oh * Wp + W, :]
    a2 = _conv3x3_flat(pad_scr, w2_ref, b2_ref, H, W)
    for oh in range(H):                               # skip add, feed out-conv
        pad_scr[(oh + 1) * Wp + 1:(oh + 1) * Wp + 1 + W, :] = \
            a2[oh * Wp:oh * Wp + W, :] + y[oh * W:oh * W + W, :]

    # ---- out Conv2d(3x3, pad=1)
    a3 = _conv3x3_flat(pad_scr, wout_ref, bout_ref, H, W)
    for oh in range(H):
        o_ref[0, oh] = a3[oh * Wp:oh * Wp + W, :].astype(o_ref.dtype)


# ----------------------------------------------------------------------------
# Wrappers (wrapper-side ops are pure layout glue: pad / reshape / transpose)
# ----------------------------------------------------------------------------
def _full_spec(shape):
    nd = len(shape)
    return pl.BlockSpec(shape, lambda *_: (0,) * nd)


def down_block(x, p):
    """x: (N, H, W, Cin) f32 -> (N, H/2, W/2, C) f32."""
    N, H, W, Cin = x.shape
    C = p["wd"].shape[-1]
    Ho, Wo = H // 2, W // 2
    Hp2, Wp2 = Ho + 1, Wo + 1
    Wp = Wo + 2

    # zero-pad + parity (space-to-depth) split; same total bytes as the input.
    xp = jnp.pad(x, ((0, 0), (1, 1), (1, 1), (0, 0)))
    xpar = (xp.reshape(N, Hp2, 2, Wp2, 2, Cin)
              .transpose(0, 2, 4, 1, 3, 5)
              .reshape(N * 4, Hp2 * Wp2, Cin)
              .astype(jnp.bfloat16))

    # weight reorg: wd[2*pi+ri, 2*pj+rj] -> wd_r[(2*ri+rj)*4 + pi*2 + pj]
    wd_r = (p["wd"].reshape(2, 2, 2, 2, Cin, C)
                   .transpose(1, 3, 0, 2, 4, 5)
                   .reshape(16, Cin, C).astype(jnp.bfloat16))
    w1_r = p["res"]["w1"].reshape(9, C, C).astype(jnp.bfloat16)
    w2_r = p["res"]["w2"].reshape(9, C, C).astype(jnp.bfloat16)
    bd = p["bd"].reshape(1, C).astype(jnp.float32)
    b1 = p["res"]["b1"].reshape(1, C).astype(jnp.float32)
    b2 = p["res"]["b2"].reshape(1, C).astype(jnp.float32)

    kernel = functools.partial(_down_block_kernel, Ho=Ho, Wo=Wo)
    return pl.pallas_call(
        kernel,
        out_shape=jax.ShapeDtypeStruct((N, Ho, Wo, C), jnp.float32),
        grid=(N,),
        in_specs=[
            pl.BlockSpec((4, Hp2 * Wp2, Cin), lambda n: (n, 0, 0)),
            _full_spec((16, Cin, C)), _full_spec((1, C)),
            _full_spec((9, C, C)), _full_spec((1, C)),
            _full_spec((9, C, C)), _full_spec((1, C)),
        ],
        out_specs=pl.BlockSpec((1, Ho, Wo, C), lambda n: (n, 0, 0, 0)),
        scratch_shapes=[
            pltpu.VMEM(((Ho + 2) * Wp, C), jnp.float32),   # padded conv input
        ],
        compiler_params=pltpu.CompilerParams(
            dimension_semantics=("parallel",)),
    )(xpar, wd_r, bd, w1_r, b1, w2_r, b2)


def mid_block(x, params, H, W, dim_keys, n_heads, latent_dim):
    """x: (N, H*W, C) f32 -> (N, H, W, latent_dim) f32."""
    N, S, C = x.shape
    nH, Dh = n_heads, dim_keys
    Wp = W + 2

    ap = params["attn"]

    def heads_in(w):                   # (C, nH*Dh) -> (nH, C, Dh), bf16
        return w.reshape(C, nH, Dh).transpose(1, 0, 2).astype(jnp.bfloat16)

    wq_r, wk_r, wv_r = heads_in(ap["wq"]), heads_in(ap["wk"]), heads_in(ap["wv"])
    bq_r = ap["bq"].reshape(nH, 1, Dh).astype(jnp.float32)
    bk_r = ap["bk"].reshape(nH, 1, Dh).astype(jnp.float32)
    bv_r = ap["bv"].reshape(nH, 1, Dh).astype(jnp.float32)
    wo_r = ap["wo"].reshape(nH, Dh, C).astype(jnp.bfloat16)
    bo = ap["bo"].reshape(1, C).astype(jnp.float32)

    mp = params["mid"]
    w1 = mp["w1"].reshape(9, C, C).astype(jnp.bfloat16)
    w2 = mp["w2"].reshape(9, C, C).astype(jnp.bfloat16)
    b1 = mp["b1"].reshape(1, C).astype(jnp.float32)
    b2 = mp["b2"].reshape(1, C).astype(jnp.float32)
    wout = params["wout"].reshape(9, C, latent_dim).astype(jnp.bfloat16)
    bout = params["bout"].reshape(1, latent_dim).astype(jnp.float32)

    kernel = functools.partial(_mid_kernel, H=H, W=W, C=C, Dh=Dh, nH=nH)
    return pl.pallas_call(
        kernel,
        out_shape=jax.ShapeDtypeStruct((N, H, W, latent_dim), jnp.float32),
        grid=(N,),
        in_specs=[
            pl.BlockSpec((1, S, C), lambda n: (n, 0, 0)),
            _full_spec((nH, C, Dh)), _full_spec((nH, 1, Dh)),
            _full_spec((nH, C, Dh)), _full_spec((nH, 1, Dh)),
            _full_spec((nH, C, Dh)), _full_spec((nH, 1, Dh)),
            _full_spec((nH, Dh, C)), _full_spec((1, C)),
            _full_spec((9, C, C)), _full_spec((1, C)),
            _full_spec((9, C, C)), _full_spec((1, C)),
            _full_spec((9, C, latent_dim)), _full_spec((1, latent_dim)),
        ],
        out_specs=pl.BlockSpec((1, H, W, latent_dim), lambda n: (n, 0, 0, 0)),
        scratch_shapes=[
            pltpu.VMEM(((H + 2) * Wp, C), jnp.float32),    # padded conv input
        ],
        compiler_params=pltpu.CompilerParams(
            dimension_semantics=("parallel",)),
    )(x, wq_r, bq_r, wk_r, bk_r, wv_r, bv_r, wo_r, bo,
      w1, b1, w2, b2, wout, bout)


def encoder_light_forward(x_nchw, params, dim_keys, n_heads, latent_dim):
    x = jnp.transpose(x_nchw, (0, 2, 3, 1)).astype(jnp.float32)   # NCHW -> NHWC
    for p in params["down"]:
        x = down_block(x, p)
    N, H, W, C = x.shape
    y = mid_block(x.reshape(N, H * W, C), params, H, W,
                  dim_keys, n_heads, latent_dim)
    return jnp.transpose(y, (0, 3, 1, 2))                          # NHWC -> NCHW


# ----------------------------------------------------------------------------
# Pure-JAX reference (same assumed module structure) for a correctness check
# ----------------------------------------------------------------------------
def _ref_conv(x, w, b, stride, pad):
    y = lax.conv_general_dilated(
        x, w, window_strides=(stride, stride),
        padding=((pad, pad), (pad, pad)),
        dimension_numbers=("NHWC", "HWIO", "NHWC"))
    return y + b.reshape(1, 1, 1, -1)


def _ref_resblock(x, p):
    h = _lrelu(_ref_conv(x, p["w1"], p["b1"], 1, 1))
    return _ref_conv(h, p["w2"], p["b2"], 1, 1) + x


def _ref_attention(x, ap, Dh, nH):
    N, H, W, C = x.shape
    S = H * W
    inner = Dh * nH
    xf = x.reshape(N, S, C)
    q = xf @ ap["wq"] + ap["bq"]
    k = xf @ ap["wk"] + ap["bk"]
    v = xf @ ap["wv"] + ap["bv"]

    def split(t):
        return t.reshape(N, S, nH, Dh).transpose(0, 2, 1, 3)

    q, k, v = split(q), split(k), split(v)
    s = jnp.einsum("nhqd,nhkd->nhqk", q, k) * (float(Dh) ** -0.5)
    p = jax.nn.softmax(s, axis=-1)
    o = jnp.einsum("nhqk,nhkd->nhqd", p, v).transpose(0, 2, 1, 3).reshape(N, S, inner)
    y = o @ ap["wo"] + ap["bo"] + xf
    return y.reshape(N, H, W, C)


def encoder_light_reference(x_nchw, params, dim_keys, n_heads):
    x = jnp.transpose(x_nchw, (0, 2, 3, 1)).astype(jnp.float32)
    for p in params["down"]:
        x = _lrelu(_ref_conv(x, p["wd"], p["bd"], 2, 1))
        x = _ref_resblock(x, p["res"])
    x = _ref_attention(x, params["attn"], dim_keys, n_heads)
    x = _ref_resblock(x, params["mid"])
    x = _ref_conv(x, params["wout"], params["bout"], 1, 1)
    return jnp.transpose(x, (0, 3, 1, 2))


# ----------------------------------------------------------------------------
# Deterministic parameter init (synthetic weights, matching module shapes)
# ----------------------------------------------------------------------------
def init_encoder_params(key, in_channels, latent_dim, channels, dim_keys, n_heads):
    keys = iter(jax.random.split(key, 64))

    def conv_p(cin, cout, k):
        w = jax.random.normal(next(keys), (k, k, cin, cout), jnp.float32) * 0.05
        b = jax.random.normal(next(keys), (cout,), jnp.float32) * 0.01
        return w, b

    def lin_p(cin, cout):
        w = jax.random.normal(next(keys), (cin, cout), jnp.float32) * 0.05
        b = jax.random.normal(next(keys), (cout,), jnp.float32) * 0.01
        return w, b

    params = {"down": []}
    prev = in_channels
    for c in channels:
        wd, bd = conv_p(prev, c, 4)
        w1, b1 = conv_p(c, c, 3)
        w2, b2 = conv_p(c, c, 3)
        params["down"].append(
            {"wd": wd, "bd": bd,
             "res": {"w1": w1, "b1": b1, "w2": w2, "b2": b2}})
        prev = c

    inner = dim_keys * n_heads
    wq, bq = lin_p(prev, inner)
    wk, bk = lin_p(prev, inner)
    wv, bv = lin_p(prev, inner)
    wo, bo = lin_p(inner, prev)
    params["attn"] = dict(wq=wq, bq=bq, wk=wk, bk=bk, wv=wv, bv=bv, wo=wo, bo=bo)

    w1, b1 = conv_p(prev, prev, 3)
    w2, b2 = conv_p(prev, prev, 3)
    params["mid"] = {"w1": w1, "b1": b1, "w2": w2, "b2": b2}

    wout, bout = conv_p(prev, latent_dim, 3)
    params["wout"], params["bout"] = wout, bout
    return params


# ----------------------------------------------------------------------------
if __name__ == "__main__":
    in_channels = 3
    latent_dim = 8
    channels = [8, 16]        # two down blocks: 16x16 image -> 4x4 latent
    dim_keys = 16
    n_heads = 2

    key = jax.random.PRNGKey(0)
    k_param, k_x = jax.random.split(key)
    params = init_encoder_params(k_param, in_channels, latent_dim,
                                 channels, dim_keys, n_heads)
    x = jax.random.normal(k_x, (2, in_channels, 16, 16), jnp.float32)   # NCHW

    fwd = jax.jit(lambda xx, pp: encoder_light_forward(
        xx, pp, dim_keys, n_heads, latent_dim))
    out = jax.block_until_ready(fwd(x, params))

    expected = (2, latent_dim, 16 // 2 ** len(channels), 16 // 2 ** len(channels))
    assert out.shape == expected, (out.shape, expected)
    assert bool(jnp.all(jnp.isfinite(out)))

    ref = jax.jit(lambda xx, pp: encoder_light_reference(
        xx, pp, dim_keys, n_heads))(x, params)
    max_err = float(jnp.max(jnp.abs(out - ref)))
    assert bool(jnp.allclose(out, ref, rtol=3e-2, atol=3e-2)), max_err

    print("KERNEL_OK")
</pallas_src>

<mosaic_0001>
module attributes {stable_mosaic.version = 11 : i64} {
  func.func @_down_block_kernel(%arg0: i32, %arg1: memref<4x81x3xbf16, #tpu.memory_space<vmem>>, %arg2: memref<16x3x8xbf16, #tpu.memory_space<vmem>>, %arg3: memref<1x8xf32, #tpu.memory_space<vmem>>, %arg4: memref<9x8x8xbf16, #tpu.memory_space<vmem>>, %arg5: memref<1x8xf32, #tpu.memory_space<vmem>>, %arg6: memref<9x8x8xbf16, #tpu.memory_space<vmem>>, %arg7: memref<1x8xf32, #tpu.memory_space<vmem>>, %arg8: memref<1x8x8x8xf32, #tpu.memory_space<vmem>>, %arg9: memref<100x8xf32, #tpu.memory_space<vmem>>) attributes {dimension_semantics = [#tpu.dimension_semantics<parallel>], iteration_bounds = array<i64: 2>, scalar_prefetch = 0 : i64, scratch_operands = 1 : i64, tpu.core_type = #tpu.core_type<tc>, window_params = [{transform_indices = @transform_0, window_bounds = array<i64: 4, 81, 3>}, {pipeline_mode = #tpu.pipeline_mode<synchronous>, transform_indices = @transform_1, window_bounds = array<i64: 16, 3, 8>}, {pipeline_mode = #tpu.pipeline_mode<synchronous>, transform_indices = @transform_2, window_bounds = array<i64: 1, 8>}, {pipeline_mode = #tpu.pipeline_mode<synchronous>, transform_indices = @transform_3, window_bounds = array<i64: 9, 8, 8>}, {pipeline_mode = #tpu.pipeline_mode<synchronous>, transform_indices = @transform_4, window_bounds = array<i64: 1, 8>}, {pipeline_mode = #tpu.pipeline_mode<synchronous>, transform_indices = @transform_5, window_bounds = array<i64: 9, 8, 8>}, {pipeline_mode = #tpu.pipeline_mode<synchronous>, transform_indices = @transform_6, window_bounds = array<i64: 1, 8>}, {transform_indices = @transform_7, window_bounds = array<i64: 1, 8, 8, 8>}]} {
    %cst = arith.constant 0.000000e+00 : f32
    %0 = vector.broadcast %cst : f32 to vector<71x8xf32>
    %c0 = arith.constant 0 : index
    %c0_0 = arith.constant 0 : index
    %c0_1 = arith.constant 0 : index
    %1 = vector.load %arg1[%c0, %c0_0, %c0_1] : memref<4x81x3xbf16, #tpu.memory_space<vmem>>, vector<1x71x3xbf16>
    %2 = vector.shape_cast %1 : vector<1x71x3xbf16> to vector<71x3xbf16>
    %c0_2 = arith.constant 0 : index
    %c0_3 = arith.constant 0 : index
    %c0_4 = arith.constant 0 : index
    %3 = vector.load %arg2[%c0_2, %c0_3, %c0_4] : memref<16x3x8xbf16, #tpu.memory_space<vmem>>, vector<1x3x8xbf16>
    %4 = vector.shape_cast %3 : vector<1x3x8xbf16> to vector<3x8xbf16>
    %cst_5 = arith.constant dense<0.000000e+00> : vector<71x8xf32>
    %5 = tpu.matmul %2, %4, %cst_5 {dimension_numbers = #tpu.dot_dimension_numbers<[1], [0], [0], [1], [0, 0, 1, 1], [], []>} : vector<71x3xbf16>, vector<3x8xbf16>, vector<71x8xf32> -> vector<71x8xf32>
    %6 = arith.addf %0, %5 : vector<71x8xf32>
    %c0_6 = arith.constant 0 : index
    %c1 = arith.constant 1 : index
    %c0_7 = arith.constant 0 : index
    %7 = vector.load %arg1[%c0_6, %c1, %c0_7] : memref<4x81x3xbf16, #tpu.memory_space<vmem>>, vector<1x71x3xbf16>
    %8 = vector.shape_cast %7 : vector<1x71x3xbf16> to vector<71x3xbf16>
    %c1_8 = arith.constant 1 : index
    %c0_9 = arith.constant 0 : index
    %c0_10 = arith.constant 0 : index
    %9 = vector.load %arg2[%c1_8, %c0_9, %c0_10] : memref<16x3x8xbf16, #tpu.memory_space<vmem>>, vector<1x3x8xbf16>
    %10 = vector.shape_cast %9 : vector<1x3x8xbf16> to vector<3x8xbf16>
    %cst_11 = arith.constant dense<0.000000e+00> : vector<71x8xf32>
    %11 = tpu.matmul %8, %10, %cst_11 {dimension_numbers = #tpu.dot_dimension_numbers<[1], [0], [0], [1], [0, 0, 1, 1], [], []>} : vector<71x3xbf16>, vector<3x8xbf16>, vector<71x8xf32> -> vector<71x8xf32>
    %12 = arith.addf %6, %11 : vector<71x8xf32>
    %c0_12 = arith.constant 0 : index
    %c9 = arith.constant 9 : index
    %c0_13 = arith.constant 0 : index
    %13 = vector.load %arg1[%c0_12, %c9, %c0_13] : memref<4x81x3xbf16, #tpu.memory_space<vmem>>, vector<1x71x3xbf16>
    %14 = vector.shape_cast %13 : vector<1x71x3xbf16> to vector<71x3xbf16>
    %c2 = arith.constant 2 : index
    %c0_14 = arith.constant 0 : index
    %c0_15 = arith.constant 0 : index
    %15 = vector.load %arg2[%c2, %c0_14, %c0_15] : memref<16x3x8xbf16, #tpu.memory_space<vmem>>, vector<1x3x8xbf16>
    %16 = vector.shape_cast %15 : vector<1x3x8xbf16> to vector<3x8xbf16>
    %cst_16 = arith.constant dense<0.000000e+00> : vector<71x8xf32>
    %17 = tpu.matmul %14, %16, %cst_16 {dimension_numbers = #tpu.dot_dimension_numbers<[1], [0], [0], [1], [0, 0, 1, 1], [], []>} : vector<71x3xbf16>, vector<3x8xbf16>, vector<71x8xf32> -> vector<71x8xf32>
    %18 = arith.addf %12, %17 : vector<71x8xf32>
    %c0_17 = arith.constant 0 : index
    %c10 = arith.constant 10 : index
    %c0_18 = arith.constant 0 : index
    %19 = vector.load %arg1[%c0_17, %c10, %c0_18] : memref<4x81x3xbf16, #tpu.memory_space<vmem>>, vector<1x71x3xbf16>
    %20 = vector.shape_cast %19 : vector<1x71x3xbf16> to vector<71x3xbf16>
    %c3 = arith.constant 3 : index
    %c0_19 = arith.constant 0 : index
    %c0_20 = arith.constant 0 : index
    %21 = vector.load %arg2[%c3, %c0_19, %c0_20] : memref<16x3x8xbf16, #tpu.memory_space<vmem>>, vector<1x3x8xbf16>
    %22 = vector.shape_cast %21 : vector<1x3x8xbf16> to vector<3x8xbf16>
    %cst_21 = arith.constant dense<0.000000e+00> : vector<71x8xf32>
    %23 = tpu.matmul %20, %22, %cst_21 {dimension_numbers = #tpu.dot_dimension_numbers<[1], [0], [0], [1], [0, 0, 1, 1], [], []>} : vector<71x3xbf16>, vector<3x8xbf16>, vector<71x8xf32> -> vector<71x8xf32>
    %24 = arith.addf %18, %23 : vector<71x8xf32>
    %c1_22 = arith.constant 1 : index
    %c0_23 = arith.constant 0 : index
    %c0_24 = arith.constant 0 : index
    %25 = vector.load %arg1[%c1_22, %c0_23, %c0_24] : memref<4x81x3xbf16, #tpu.memory_space<vmem>>, vector<1x71x3xbf16>
    %26 = vector.shape_cast %25 : vector<1x71x3xbf16> to vector<71x3xbf16>
    %c4 = arith.constant 4 : index
    %c0_25 = arith.constant 0 : index
    %c0_26 = arith.constant 0 : index
    %27 = vector.load %arg2[%c4, %c0_25, %c0_26] : memref<16x3x8xbf16, #tpu.memory_space<vmem>>, vector<1x3x8xbf16>
    %28 = vector.shape_cast %27 : vector<1x3x8xbf16> to vector<3x8xbf16>
    %cst_27 = arith.constant dense<0.000000e+00> : vector<71x8xf32>
    %29 = tpu.matmul %26, %28, %cst_27 {dimension_numbers = #tpu.dot_dimension_numbers<[1], [0], [0], [1], [0, 0, 1, 1], [], []>} : vector<71x3xbf16>, vector<3x8xbf16>, vector<71x8xf32> -> vector<71x8xf32>
    %30 = arith.addf %24, %29 : vector<71x8xf32>
    %c1_28 = arith.constant 1 : index
    %c1_29 = arith.constant 1 : index
    %c0_30 = arith.constant 0 : index
    %31 = vector.load %arg1[%c1_28, %c1_29, %c0_30] : memref<4x81x3xbf16, #tpu.memory_space<vmem>>, vector<1x71x3xbf16>
    %32 = vector.shape_cast %31 : vector<1x71x3xbf16> to vector<71x3xbf16>
    %c5 = arith.constant 5 : index
    %c0_31 = arith.constant 0 : index
    %c0_32 = arith.constant 0 : index
    %33 = vector.load %arg2[%c5, %c0_31, %c0_32] : memref<16x3x8xbf16, #tpu.memory_space<vmem>>, vector<1x3x8xbf16>
    %34 = vector.shape_cast %33 : vector<1x3x8xbf16> to vector<3x8xbf16>
    %cst_33 = arith.constant dense<0.000000e+00> : vector<71x8xf32>
    %35 = tpu.matmul %32, %34, %cst_33 {dimension_numbers = #tpu.dot_dimension_numbers<[1], [0], [0], [1], [0, 0, 1, 1], [], []>} : vector<71x3xbf16>, vector<3x8xbf16>, vector<71x8xf32> -> vector<71x8xf32>
    %36 = arith.addf %30, %35 : vector<71x8xf32>
    %c1_34 = arith.constant 1 : index
    %c9_35 = arith.constant 9 : index
    %c0_36 = arith.constant 0 : index
    %37 = vector.load %arg1[%c1_34, %c9_35, %c0_36] : memref<4x81x3xbf16, #tpu.memory_space<vmem>>, vector<1x71x3xbf16>
    %38 = vector.shape_cast %37 : vector<1x71x3xbf16> to vector<71x3xbf16>
    %c6 = arith.constant 6 : index
    %c0_37 = arith.constant 0 : index
    %c0_38 = arith.constant 0 : index
    %39 = vector.load %arg2[%c6, %c0_37, %c0_38] : memref<16x3x8xbf16, #tpu.memory_space<vmem>>, vector<1x3x8xbf16>
    %40 = vector.shape_cast %39 : vector<1x3x8xbf16> to vector<3x8xbf16>
    %cst_39 = arith.constant dense<0.000000e+00> : vector<71x8xf32>
    %41 = tpu.matmul %38, %40, %cst_39 {dimension_numbers = #tpu.dot_dimension_numbers<[1], [0], [0], [1], [0, 0, 1, 1], [], []>} : vector<71x3xbf16>, vector<3x8xbf16>, vector<71x8xf32> -> vector<71x8xf32>
    %42 = arith.addf %36, %41 : vector<71x8xf32>
    %c1_40 = arith.constant 1 : index
    %c10_41 = arith.constant 10 : index
    %c0_42 = arith.constant 0 : index
    %43 = vector.load %arg1[%c1_40, %c10_41, %c0_42] : memref<4x81x3xbf16, #tpu.memory_space<vmem>>, vector<1x71x3xbf16>
    %44 = vector.shape_cast %43 : vector<1x71x3xbf16> to vector<71x3xbf16>
    %c7 = arith.constant 7 : index
    %c0_43 = arith.constant 0 : index
    %c0_44 = arith.constant 0 : index
    %45 = vector.load %arg2[%c7, %c0_43, %c0_44] : memref<16x3x8xbf16, #tpu.memory_space<vmem>>, vector<1x3x8xbf16>
    %46 = vector.shape_cast %45 : vector<1x3x8xbf16> to vector<3x8xbf16>
    %cst_45 = arith.constant dense<0.000000e+00> : vector<71x8xf32>
    %47 = tpu.matmul %44, %46, %cst_45 {dimension_numbers = #tpu.dot_dimension_numbers<[1], [0], [0], [1], [0, 0, 1, 1], [], []>} : vector<71x3xbf16>, vector<3x8xbf16>, vector<71x8xf32> -> vector<71x8xf32>
    %48 = arith.addf %42, %47 : vector<71x8xf32>
    %c2_46 = arith.constant 2 : index
    %c0_47 = arith.constant 0 : index
    %c0_48 = arith.constant 0 : index
    %49 = vector.load %arg1[%c2_46, %c0_47, %c0_48] : memref<4x81x3xbf16, #tpu.memory_space<vmem>>, vector<1x71x3xbf16>
    %50 = vector.shape_cast %49 : vector<1x71x3xbf16> to vector<71x3xbf16>
    %c8 = arith.constant 8 : index
    %c0_49 = arith.constant 0 : index
    %c0_50 = arith.constant 0 : index
    %51 = vector.load %arg2[%c8, %c0_49, %c0_50] : memref<16x3x8xbf16, #tpu.memory_space<vmem>>, vector<1x3x8xbf16>
    %52 = vector.shape_cast %51 : vector<1x3x8xbf16> to vector<3x8xbf16>
    %cst_51 = arith.constant dense<0.000000e+00> : vector<71x8xf32>
    %53 = tpu.matmul %50, %52, %cst_51 {dimension_numbers = #tpu.dot_dimension_numbers<[1], [0], [0], [1], [0, 0, 1, 1], [], []>} : vector<71x3xbf16>, vector<3x8xbf16>, vector<71x8xf32> -> vector<71x8xf32>
    %54 = arith.addf %48, %53 : vector<71x8xf32>
    %c2_52 = arith.constant 2 : index
    %c1_53 = arith.constant 1 : index
    %c0_54 = arith.constant 0 : index
    %55 = vector.load %arg1[%c2_52, %c1_53, %c0_54] : memref<4x81x3xbf16, #tpu.memory_space<vmem>>, vector<1x71x3xbf16>
    %56 = vector.shape_cast %55 : vector<1x71x3xbf16> to vector<71x3xbf16>
    %c9_55 = arith.constant 9 : index
    %c0_56 = arith.constant 0 : index
    %c0_57 = arith.constant 0 : index
    %57 = vector.load %arg2[%c9_55, %c0_56, %c0_57] : memref<16x3x8xbf16, #tpu.memory_space<vmem>>, vector<1x3x8xbf16>
    %58 = vector.shape_cast %57 : vector<1x3x8xbf16> to vector<3x8xbf16>
    %cst_58 = arith.constant dense<0.000000e+00> : vector<71x8xf32>
    %59 = tpu.matmul %56, %58, %cst_58 {dimension_numbers = #tpu.dot_dimension_numbers<[1], [0], [0], [1], [0, 0, 1, 1], [], []>} : vector<71x3xbf16>, vector<3x8xbf16>, vector<71x8xf32> -> vector<71x8xf32>
    %60 = arith.addf %54, %59 : vector<71x8xf32>
    %c2_59 = arith.constant 2 : index
    %c9_60 = arith.constant 9 : index
    %c0_61 = arith.constant 0 : index
    %61 = vector.load %arg1[%c2_59, %c9_60, %c0_61] : memref<4x81x3xbf16, #tpu.memory_space<vmem>>, vector<1x71x3xbf16>
    %62 = vector.shape_cast %61 : vector<1x71x3xbf16> to vector<71x3xbf16>
    %c10_62 = arith.constant 10 : index
    %c0_63 = arith.constant 0 : index
    %c0_64 = arith.constant 0 : index
    %63 = vector.load %arg2[%c10_62, %c0_63, %c0_64] : memref<16x3x8xbf16, #tpu.memory_space<vmem>>, vector<1x3x8xbf16>
    %64 = vector.shape_cast %63 : vector<1x3x8xbf16> to vector<3x8xbf16>
    %cst_65 = arith.constant dense<0.000000e+00> : vector<71x8xf32>
    %65 = tpu.matmul %62, %64, %cst_65 {dimension_numbers = #tpu.dot_dimension_numbers<[1], [0], [0], [1], [0, 0, 1, 1], [], []>} : vector<71x3xbf16>, vector<3x8xbf16>, vector<71x8xf32> -> vector<71x8xf32>
    %66 = arith.addf %60, %65 : vector<71x8xf32>
    %c2_66 = arith.constant 2 : index
    %c10_67 = arith.constant 10 : index
    %c0_68 = arith.constant 0 : index
    %67 = vector.load %arg1[%c2_66, %c10_67, %c0_68] : memref<4x81x3xbf16, #tpu.memory_space<vmem>>, vector<1x71x3xbf16>
    %68 = vector.shape_cast %67 : vector<1x71x3xbf16> to vector<71x3xbf16>
    %c11 = arith.constant 11 : index
    %c0_69 = arith.constant 0 : index
    %c0_70 = arith.constant 0 : index
    %69 = vector.load %arg2[%c11, %c0_69, %c0_70] : memref<16x3x8xbf16, #tpu.memory_space<vmem>>, vector<1x3x8xbf16>
    %70 = vector.shape_cast %69 : vector<1x3x8xbf16> to vector<3x8xbf16>
    %cst_71 = arith.constant dense<0.000000e+00> : vector<71x8xf32>
    %71 = tpu.matmul %68, %70, %cst_71 {dimension_numbers = #tpu.dot_dimension_numbers<[1], [0], [0], [1], [0, 0, 1, 1], [], []>} : vector<71x3xbf16>, vector<3x8xbf16>, vector<71x8xf32> -> vector<71x8xf32>
    %72 = arith.addf %66, %71 : vector<71x8xf32>
    %c3_72 = arith.constant 3 : index
    %c0_73 = arith.constant 0 : index
    %c0_74 = arith.constant 0 : index
    %73 = vector.load %arg1[%c3_72, %c0_73, %c0_74] : memref<4x81x3xbf16, #tpu.memory_space<vmem>>, vector<1x71x3xbf16>
    %74 = vector.shape_cast %73 : vector<1x71x3xbf16> to vector<71x3xbf16>
    %c12 = arith.constant 12 : index
    %c0_75 = arith.constant 0 : index
    %c0_76 = arith.constant 0 : index
    %75 = vector.load %arg2[%c12, %c0_75, %c0_76] : memref<16x3x8xbf16, #tpu.memory_space<vmem>>, vector<1x3x8xbf16>
    %76 = vector.shape_cast %75 : vector<1x3x8xbf16> to vector<3x8xbf16>
    %cst_77 = arith.constant dense<0.000000e+00> : vector<71x8xf32>
    %77 = tpu.matmul %74, %76, %cst_77 {dimension_numbers = #tpu.dot_dimension_numbers<[1], [0], [0], [1], [0, 0, 1, 1], [], []>} : vector<71x3xbf16>, vector<3x8xbf16>, vector<71x8xf32> -> vector<71x8xf32>
    %78 = arith.addf %72, %77 : vector<71x8xf32>
    %c3_78 = arith.constant 3 : index
    %c1_79 = arith.constant 1 : index
    %c0_80 = arith.constant 0 : index
    %79 = vector.load %arg1[%c3_78, %c1_79, %c0_80] : memref<4x81x3xbf16, #tpu.memory_space<vmem>>, vector<1x71x3xbf16>
    %80 = vector.shape_cast %79 : vector<1x71x3xbf16> to vector<71x3xbf16>
    %c13 = arith.constant 13 : index
    %c0_81 = arith.constant 0 : index
    %c0_82 = arith.constant 0 : index
    %81 = vector.load %arg2[%c13, %c0_81, %c0_82] : memref<16x3x8xbf16, #tpu.memory_space<vmem>>, vector<1x3x8xbf16>
    %82 = vector.shape_cast %81 : vector<1x3x8xbf16> to vector<3x8xbf16>
    %cst_83 = arith.constant dense<0.000000e+00> : vector<71x8xf32>
    %83 = tpu.matmul %80, %82, %cst_83 {dimension_numbers = #tpu.dot_dimension_numbers<[1], [0], [0], [1], [0, 0, 1, 1], [], []>} : vector<71x3xbf16>, vector<3x8xbf16>, vector<71x8xf32> -> vector<71x8xf32>
    %84 = arith.addf %78, %83 : vector<71x8xf32>
    %c3_84 = arith.constant 3 : index
    %c9_85 = arith.constant 9 : index
    %c0_86 = arith.constant 0 : index
    %85 = vector.load %arg1[%c3_84, %c9_85, %c0_86] : memref<4x81x3xbf16, #tpu.memory_space<vmem>>, vector<1x71x3xbf16>
    %86 = vector.shape_cast %85 : vector<1x71x3xbf16> to vector<71x3xbf16>
    %c14 = arith.constant 14 : index
    %c0_87 = arith.constant 0 : index
    %c0_88 = arith.constant 0 : index
    %87 = vector.load %arg2[%c14, %c0_87, %c0_88] : memref<16x3x8xbf16, #tpu.memory_space<vmem>>, vector<1x3x8xbf16>
    %88 = vector.shape_cast %87 : vector<1x3x8xbf16> to vector<3x8xbf16>
    %cst_89 = arith.constant dense<0.000000e+00> : vector<71x8xf32>
    %89 = tpu.matmul %86, %88, %cst_89 {dimension_numbers = #tpu.dot_dimension_numbers<[1], [0], [0], [1], [0, 0, 1, 1], [], []>} : vector<71x3xbf16>, vector<3x8xbf16>, vector<71x8xf32> -> vector<71x8xf32>
    %90 = arith.addf %84, %89 : vector<71x8xf32>
    %c3_90 = arith.constant 3 : index
    %c10_91 = arith.constant 10 : index
    %c0_92 = arith.constant 0 : index
    %91 = vector.load %arg1[%c3_90, %c10_91, %c0_92] : memref<4x81x3xbf16, #tpu.memory_space<vmem>>, vector<1x71x3xbf16>
    %92 = vector.shape_cast %91 : vector<1x71x3xbf16> to vector<71x3xbf16>
    %c15 = arith.constant 15 : index
    %c0_93 = arith.constant 0 : index
    %c0_94 = arith.constant 0 : index
    %93 = vector.load %arg2[%c15, %c0_93, %c0_94] : memref<16x3x8xbf16, #tpu.memory_space<vmem>>, vector<1x3x8xbf16>
    %94 = vector.shape_cast %93 : vector<1x3x8xbf16> to vector<3x8xbf16>
    %cst_95 = arith.constant dense<0.000000e+00> : vector<71x8xf32>
    %95 = tpu.matmul %92, %94, %cst_95 {dimension_numbers = #tpu.dot_dimension_numbers<[1], [0], [0], [1], [0, 0, 1, 1], [], []>} : vector<71x3xbf16>, vector<3x8xbf16>, vector<71x8xf32> -> vector<71x8xf32>
    %96 = arith.addf %90, %95 : vector<71x8xf32>
    %c0_96 = arith.constant 0 : index
    %c0_97 = arith.constant 0 : index
    %97 = vector.load %arg3[%c0_96, %c0_97] : memref<1x8xf32, #tpu.memory_space<vmem>>, vector<1x8xf32>
    %98 = vector.broadcast %97 : vector<1x8xf32> to vector<71x8xf32>
    %99 = arith.addf %96, %98 : vector<71x8xf32>
    %cst_98 = arith.constant 0.000000e+00 : f32
    %100 = vector.broadcast %cst_98 : f32 to vector<71x8xf32>
    %101 = arith.cmpf oge, %99, %100 : vector<71x8xf32>
    %cst_99 = arith.constant 2.000000e-01 : f32
    %102 = vector.broadcast %cst_99 : f32 to vector<71x8xf32>
    %103 = arith.mulf %102, %99 : vector<71x8xf32>
    %104 = arith.select %101, %99, %103 : vector<71x8xi1>, vector<71x8xf32>
    %cst_100 = arith.constant 0.000000e+00 : f32
    %105 = vector.broadcast %cst_100 : f32 to vector<100x8xf32>
    %c0_101 = arith.constant 0 : index
    %c0_102 = arith.constant 0 : index
    %106 = vector.load %arg9[%c0_101, %c0_102] : memref<100x8xf32, #tpu.memory_space<vmem>>, vector<100x8xf32>
    tpu.vector_store %arg9[%c0_101, %c0_102], %105 {strides = array<i32>} : memref<100x8xf32, #tpu.memory_space<vmem>>, vector<100x8xf32>,
    %107 = vector.extract_strided_slice %104 {offsets = [0, 0], sizes = [8, 8], strides = [1, 1]} : vector<71x8xf32> to vector<8x8xf32>
    %c11_103 = arith.constant 11 : index
    %c0_104 = arith.constant 0 : index
    %108 = vector.load %arg9[%c11_103, %c0_104] : memref<100x8xf32, #tpu.memory_space<vmem>>, vector<8x8xf32>
    tpu.vector_store %arg9[%c11_103, %c0_104], %107 {strides = array<i32>} : memref<100x8xf32, #tpu.memory_space<vmem>>, vector<8x8xf32>,
    %109 = vector.extract_strided_slice %104 {offsets = [9, 0], sizes = [8, 8], strides = [1, 1]} : vector<71x8xf32> to vector<8x8xf32>
    %c21 = arith.constant 21 : index
    %c0_105 = arith.constant 0 : index
    %110 = vector.load %arg9[%c21, %c0_105] : memref<100x8xf32, #tpu.memory_space<vmem>>, vector<8x8xf32>
    tpu.vector_store %arg9[%c21, %c0_105], %109 {strides = array<i32>} : memref<100x8xf32, #tpu.memory_space<vmem>>, vector<8x8xf32>,
    %111 = vector.extract_strided_slice %104 {offsets = [18, 0], sizes = [8, 8], strides = [1, 1]} : vector<71x8xf32> to vector<8x8xf32>
    %c31 = arith.constant 31 : index
    %c0_106 = arith.constant 0 : index
    %112 = vector.load %arg9[%c31, %c0_106] : memref<100x8xf32, #tpu.memory_space<vmem>>, vector<8x8xf32>
    tpu.vector_store %arg9[%c31, %c0_106], %111 {strides = array<i32>} : memref<100x8xf32, #tpu.memory_space<vmem>>, vector<8x8xf32>,
    %113 = vector.extract_strided_slice %104 {offsets = [27, 0], sizes = [8, 8], strides = [1, 1]} : vector<71x8xf32> to vector<8x8xf32>
    %c41 = arith.constant 41 : index
    %c0_107 = arith.constant 0 : index
    %114 = vector.load %arg9[%c41, %c0_107] : memref<100x8xf32, #tpu.memory_space<vmem>>, vector<8x8xf32>
    tpu.vector_store %arg9[%c41, %c0_107], %113 {strides = array<i32>} : memref<100x8xf32, #tpu.memory_space<vmem>>, vector<8x8xf32>,
    %115 = vector.extract_strided_slice %104 {offsets = [36, 0], sizes = [8, 8], strides = [1, 1]} : vector<71x8xf32> to vector<8x8xf32>
    %c51 = arith.constant 51 : index
    %c0_108 = arith.constant 0 : index
    %116 = vector.load %arg9[%c51, %c0_108] : memref<100x8xf32, #tpu.memory_space<vmem>>, vector<8x8xf32>
    tpu.vector_store %arg9[%c51, %c0_108], %115 {strides = array<i32>} : memref<100x8xf32, #tpu.memory_space<vmem>>, vector<8x8xf32>,
    %117 = vector.extract_strided_slice %104 {offsets = [45, 0], sizes = [8, 8], strides = [1, 1]} : vector<71x8xf32> to vector<8x8xf32>
    %c61 = arith.constant 61 : index
    %c0_109 = arith.constant 0 : index
    %118 = vector.load %arg9[%c61, %c0_109] : memref<100x8xf32, #tpu.memory_space<vmem>>, vector<8x8xf32>
    tpu.vector_store %arg9[%c61, %c0_109], %117 {strides = array<i32>} : memref<100x8xf32, #tpu.memory_space<vmem>>, vector<8x8xf32>,
    %119 = vector.extract_strided_slice %104 {offsets = [54, 0], sizes = [8, 8], strides = [1, 1]} : vector<71x8xf32> to vector<8x8xf32>
    %c71 = arith.constant 71 : index
    %c0_110 = arith.constant 0 : index
    %120 = vector.load %arg9[%c71, %c0_110] : memref<100x8xf32, #tpu.memory_space<vmem>>, vector<8x8xf32>
    tpu.vector_store %arg9[%c71, %c0_110], %119 {strides = array<i32>} : memref<100x8xf32, #tpu.memory_space<vmem>>, vector<8x8xf32>,
    %121 = vector.extract_strided_slice %104 {offsets = [63, 0], sizes = [8, 8], strides = [1, 1]} : vector<71x8xf32> to vector<8x8xf32>
    %c81 = arith.constant 81 : index
    %c0_111 = arith.constant 0 : index
    %122 = vector.load %arg9[%c81, %c0_111] : memref<100x8xf32, #tpu.memory_space<vmem>>, vector<8x8xf32>
    tpu.vector_store %arg9[%c81, %c0_111], %121 {strides = array<i32>} : memref<100x8xf32, #tpu.memory_space<vmem>>, vector<8x8xf32>,
    %cst_112 = arith.constant 0.000000e+00 : f32
    %123 = vector.broadcast %cst_112 : f32 to vector<78x8xf32>
    %c0_113 = arith.constant 0 : index
    %c0_114 = arith.constant 0 : index
    %124 = vector.load %arg9[%c0_113, %c0_114] : memref<100x8xf32, #tpu.memory_space<vmem>>, vector<78x8xf32>
    %125 = arith.truncf %124 : vector<78x8xf32> to vector<78x8xbf16>
    %c0_115 = arith.constant 0 : index
    %c0_116 = arith.constant 0 : index
    %c0_117 = arith.constant 0 : index
    %126 = vector.load %arg4[%c0_115, %c0_116, %c0_117] : memref<9x8x8xbf16, #tpu.memory_space<vmem>>, vector<1x8x8xbf16>
    %127 = vector.shape_cast %126 : vector<1x8x8xbf16> to vector<8x8xbf16>
    %cst_118 = arith.constant dense<0.000000e+00> : vector<78x8xf32>
    %128 = tpu.matmul %125, %127, %cst_118 {dimension_numbers = #tpu.dot_dimension_numbers<[1], [0], [0], [1], [0, 0, 1, 1], [], []>} : vector<78x8xbf16>, vector<8x8xbf16>, vector<78x8xf32> -> vector<78x8xf32>
    %129 = arith.addf %123, %128 : vector<78x8xf32>
    %c1_119 = arith.constant 1 : index
    %c0_120 = arith.constant 0 : index
    %130 = vector.load %arg9[%c1_119, %c0_120] : memref<100x8xf32, #tpu.memory_space<vmem>>, vector<78x8xf32>
    %131 = arith.truncf %130 : vector<78x8xf32> to vector<78x8xbf16>
    %c1_121 = arith.constant 1 : index
    %c0_122 = arith.constant 0 : index
    %c0_123 = arith.constant 0 : index
    %132 = vector.load %arg4[%c1_121, %c0_122, %c0_123] : memref<9x8x8xbf16, #tpu.memory_space<vmem>>, vector<1x8x8xbf16>
    %133 = vector.shape_cast %132 : vector<1x8x8xbf16> to vector<8x8xbf16>
    %cst_124 = arith.constant dense<0.000000e+00> : vector<78x8xf32>
    %134 = tpu.matmul %131, %133, %cst_124 {dimension_numbers = #tpu.dot_dimension_numbers<[1], [0], [0], [1], [0, 0, 1, 1], [], []>} : vector<78x8xbf16>, vector<8x8xbf16>, vector<78x8xf32> -> vector<78x8xf32>
    %135 = arith.addf %129, %134 : vector<78x8xf32>
    %c2_125 = arith.constant 2 : index
    %c0_126 = arith.constant 0 : index
    %136 = vector.load %arg9[%c2_125, %c0_126] : memref<100x8xf32, #tpu.memory_space<vmem>>, vector<78x8xf32>
    %137 = arith.truncf %136 : vector<78x8xf32> to vector<78x8xbf16>
    %c2_127 = arith.constant 2 : index
    %c0_128 = arith.constant 0 : index
    %c0_129 = arith.constant 0 : index
    %138 = vector.load %arg4[%c2_127, %c0_128, %c0_129] : memref<9x8x8xbf16, #tpu.memory_space<vmem>>, vector<1x8x8xbf16>
    %139 = vector.shape_cast %138 : vector<1x8x8xbf16> to vector<8x8xbf16>
    %cst_130 = arith.constant dense<0.000000e+00> : vector<78x8xf32>
    %140 = tpu.matmul %137, %139, %cst_130 {dimension_numbers = #tpu.dot_dimension_numbers<[1], [0], [0], [1], [0, 0, 1, 1], [], []>} : vector<78x8xbf16>, vector<8x8xbf16>, vector<78x8xf32> -> vector<78x8xf32>
    %141 = arith.addf %135, %140 : vector<78x8xf32>
    %c10_131 = arith.constant 10 : index
    %c0_132 = arith.constant 0 : index
    %142 = vector.load %arg9[%c10_131, %c0_132] : memref<100x8xf32, #tpu.memory_space<vmem>>, vector<78x8xf32>
    %143 = arith.truncf %142 : vector<78x8xf32> to vector<78x8xbf16>
    %c3_133 = arith.constant 3 : index
    %c0_134 = arith.constant 0 : index
    %c0_135 = arith.constant 0 : index
    %144 = vector.load %arg4[%c3_133, %c0_134, %c0_135] : memref<9x8x8xbf16, #tpu.memory_space<vmem>>, vector<1x8x8xbf16>
    %145 = vector.shape_cast %144 : vector<1x8x8xbf16> to vector<8x8xbf16>
    %cst_136 = arith.constant dense<0.000000e+00> : vector<78x8xf32>
    %146 = tpu.matmul %143, %145, %cst_136 {dimension_numbers = #tpu.dot_dimension_numbers<[1], [0], [0], [1], [0, 0, 1, 1], [], []>} : vector<78x8xbf16>, vector<8x8xbf16>, vector<78x8xf32> -> vector<78x8xf32>
    %147 = arith.addf %141, %146 : vector<78x8xf32>
    %c11_137 = arith.constant 11 : index
    %c0_138 = arith.constant 0 : index
    %148 = vector.load %arg9[%c11_137, %c0_138] : memref<100x8xf32, #tpu.memory_space<vmem>>, vector<78x8xf32>
    %149 = arith.truncf %148 : vector<78x8xf32> to vector<78x8xbf16>
    %c4_139 = arith.constant 4 : index
    %c0_140 = arith.constant 0 : index
    %c0_141 = arith.constant 0 : index
    %150 = vector.load %arg4[%c4_139, %c0_140, %c0_141] : memref<9x8x8xbf16, #tpu.memory_space<vmem>>, vector<1x8x8xbf16>
    %151 = vector.shape_cast %150 : vector<1x8x8xbf16> to vector<8x8xbf16>
    %cst_142 = arith.constant dense<0.000000e+00> : vector<78x8xf32>
    %152 = tpu.matmul %149, %151, %cst_142 {dimension_numbers = #tpu.dot_dimension_numbers<[1], [0], [0], [1], [0, 0, 1, 1], [], []>} : vector<78x8xbf16>, vector<8x8xbf16>, vector<78x8xf32> -> vector<78x8xf32>
    %153 = arith.addf %147, %152 : vector<78x8xf32>
    %c12_143 = arith.constant 12 : index
    %c0_144 = arith.constant 0 : index
    %154 = vector.load %arg9[%c12_143, %c0_144] : memref<100x8xf32, #tpu.memory_space<vmem>>, vector<78x8xf32>
    %155 = arith.truncf %154 : vector<78x8xf32> to vector<78x8xbf16>
    %c5_145 = arith.constant 5 : index
    %c0_146 = arith.constant 0 : index
    %c0_147 = arith.constant 0 : index
    %156 = vector.load %arg4[%c5_145, %c0_146, %c0_147] : memref<9x8x8xbf16, #tpu.memory_space<vmem>>, vector<1x8x8xbf16>
    %157 = vector.shape_cast %156 : vector<1x8x8xbf16> to vector<8x8xbf16>
    %cst_148 = arith.constant dense<0.000000e+00> : vector<78x8xf32>
    %158 = tpu.matmul %155, %157, %cst_148 {dimension_numbers = #tpu.dot_dimension_numbers<[1], [0], [0], [1], [0, 0, 1, 1], [], []>} : vector<78x8xbf16>, vector<8x8xbf16>, vector<78x8xf32> -> vector<78x8xf32>
    %159 = arith.addf %153, %158 : vector<78x8xf32>
    %c20 = arith.constant 20 : index
    %c0_149 = arith.constant 0 : index
    %160 = vector.load %arg9[%c20, %c0_149] : memref<100x8xf32, #tpu.memory_space<vmem>>, vector<78x8xf32>
    %161 = arith.truncf %160 : vector<78x8xf32> to vector<78x8xbf16>
    %c6_150 = arith.constant 6 : index
    %c0_151 = arith.constant 0 : index
    %c0_152 = arith.constant 0 : index
    %162 = vector.load %arg4[%c6_150, %c0_151, %c0_152] : memref<9x8x8xbf16, #tpu.memory_space<vmem>>, vector<1x8x8xbf16>
    %163 = vector.shape_cast %162 : vector<1x8x8xbf16> to vector<8x8xbf16>
    %cst_153 = arith.constant dense<0.000000e+00> : vector<78x8xf32>
    %164 = tpu.matmul %161, %163, %cst_153 {dimension_numbers = #tpu.dot_dimension_numbers<[1], [0], [0], [1], [0, 0, 1, 1], [], []>} : vector<78x8xbf16>, vector<8x8xbf16>, vector<78x8xf32> -> vector<78x8xf32>
    %165 = arith.addf %159, %164 : vector<78x8xf32>
    %c21_154 = arith.constant 21 : index
    %c0_155 = arith.constant 0 : index
    %166 = vector.load %arg9[%c21_154, %c0_155] : memref<100x8xf32, #tpu.memory_space<vmem>>, vector<78x8xf32>
    %167 = arith.truncf %166 : vector<78x8xf32> to vector<78x8xbf16>
    %c7_156 = arith.constant 7 : index
    %c0_157 = arith.constant 0 : index
    %c0_158 = arith.constant 0 : index
    %168 = vector.load %arg4[%c7_156, %c0_157, %c0_158] : memref<9x8x8xbf16, #tpu.memory_space<vmem>>, vector<1x8x8xbf16>
    %169 = vector.shape_cast %168 : vector<1x8x8xbf16> to vector<8x8xbf16>
    %cst_159 = arith.constant dense<0.000000e+00> : vector<78x8xf32>
    %170 = tpu.matmul %167, %169, %cst_159 {dimension_numbers = #tpu.dot_dimension_numbers<[1], [0], [0], [1], [0, 0, 1, 1], [], []>} : vector<78x8xbf16>, vector<8x8xbf16>, vector<78x8xf32> -> vector<78x8xf32>
    %171 = arith.addf %165, %170 : vector<78x8xf32>
    %c22 = arith.constant 22 : index
    %c0_160 = arith.constant 0 : index
    %172 = vector.load %arg9[%c22, %c0_160] : memref<100x8xf32, #tpu.memory_space<vmem>>, vector<78x8xf32>
    %173 = arith.truncf %172 : vector<78x8xf32> to vector<78x8xbf16>
    %c8_161 = arith.constant 8 : index
    %c0_162 = arith.constant 0 : index
    %c0_163 = arith.constant 0 : index
    %174 = vector.load %arg4[%c8_161, %c0_162, %c0_163] : memref<9x8x8xbf16, #tpu.memory_space<vmem>>, vector<1x8x8xbf16>
    %175 = vector.shape_cast %174 : vector<1x8x8xbf16> to vector<8x8xbf16>
    %cst_164 = arith.constant dense<0.000000e+00> : vector<78x8xf32>
    %176 = tpu.matmul %173, %175, %cst_164 {dimension_numbers = #tpu.dot_dimension_numbers<[1], [0], [0], [1], [0, 0, 1, 1], [], []>} : vector<78x8xbf16>, vector<8x8xbf16>, vector<78x8xf32> -> vector<78x8xf32>
    %177 = arith.addf %171, %176 : vector<78x8xf32>
    %c0_165 = arith.constant 0 : index
    %c0_166 = arith.constant 0 : index
    %178 = vector.load %arg5[%c0_165, %c0_166] : memref<1x8xf32, #tpu.memory_space<vmem>>, vector<1x8xf32>
    %179 = vector.broadcast %178 : vector<1x8xf32> to vector<78x8xf32>
    %180 = arith.addf %177, %179 : vector<78x8xf32>
    %cst_167 = arith.constant 0.000000e+00 : f32
    %181 = vector.broadcast %cst_167 : f32 to vector<78x8xf32>
    %182 = arith.cmpf oge, %180, %181 : vector<78x8xf32>
    %cst_168 = arith.constant 2.000000e-01 : f32
    %183 = vector.broadcast %cst_168 : f32 to vector<78x8xf32>
    %184 = arith.mulf %183, %180 : vector<78x8xf32>
    %185 = arith.select %182, %180, %184 : vector<78x8xi1>, vector<78x8xf32>
    %186 = vector.extract_strided_slice %185 {offsets = [0, 0], sizes = [8, 8], strides = [1, 1]} : vector<78x8xf32> to vector<8x8xf32>
    %c11_169 = arith.constant 11 : index
    %c0_170 = arith.constant 0 : index
    %187 = vector.load %arg9[%c11_169, %c0_170] : memref<100x8xf32, #tpu.memory_space<vmem>>, vector<8x8xf32>
    tpu.vector_store %arg9[%c11_169, %c0_170], %186 {strides = array<i32>} : memref<100x8xf32, #tpu.memory_space<vmem>>, vector<8x8xf32>,
    %188 = vector.extract_strided_slice %185 {offsets = [10, 0], sizes = [8, 8], strides = [1, 1]} : vector<78x8xf32> to vector<8x8xf32>
    %c21_171 = arith.constant 21 : index
    %c0_172 = arith.constant 0 : index
    %189 = vector.load %arg9[%c21_171, %c0_172] : memref<100x8xf32, #tpu.memory_space<vmem>>, vector<8x8xf32>
    tpu.vector_store %arg9[%c21_171, %c0_172], %188 {strides = array<i32>} : memref<100x8xf32, #tpu.memory_space<vmem>>, vector<8x8xf32>,
    %190 = vector.extract_strided_slice %185 {offsets = [20, 0], sizes = [8, 8], strides = [1, 1]} : vector<78x8xf32> to vector<8x8xf32>
    %c31_173 = arith.constant 31 : index
    %c0_174 = arith.constant 0 : index
    %191 = vector.load %arg9[%c31_173, %c0_174] : memref<100x8xf32, #tpu.memory_space<vmem>>, vector<8x8xf32>
    tpu.vector_store %arg9[%c31_173, %c0_174], %190 {strides = array<i32>} : memref<100x8xf32, #tpu.memory_space<vmem>>, vector<8x8xf32>,
    %192 = vector.extract_strided_slice %185 {offsets = [30, 0], sizes = [8, 8], strides = [1, 1]} : vector<78x8xf32> to vector<8x8xf32>
    %c41_175 = arith.constant 41 : index
    %c0_176 = arith.constant 0 : index
    %193 = vector.load %arg9[%c41_175, %c0_176] : memref<100x8xf32, #tpu.memory_space<vmem>>, vector<8x8xf32>
    tpu.vector_store %arg9[%c41_175, %c0_176], %192 {strides = array<i32>} : memref<100x8xf32, #tpu.memory_space<vmem>>, vector<8x8xf32>,
    %194 = vector.extract_strided_slice %185 {offsets = [40, 0], sizes = [8, 8], strides = [1, 1]} : vector<78x8xf32> to vector<8x8xf32>
    %c51_177 = arith.constant 51 : index
    %c0_178 = arith.constant 0 : index
    %195 = vector.load %arg9[%c51_177, %c0_178] : memref<100x8xf32, #tpu.memory_space<vmem>>, vector<8x8xf32>
    tpu.vector_store %arg9[%c51_177, %c0_178], %194 {strides = array<i32>} : memref<100x8xf32, #tpu.memory_space<vmem>>, vector<8x8xf32>,
    %196 = vector.extract_strided_slice %185 {offsets = [50, 0], sizes = [8, 8], strides = [1, 1]} : vector<78x8xf32> to vector<8x8xf32>
    %c61_179 = arith.constant 61 : index
    %c0_180 = arith.constant 0 : index
    %197 = vector.load %arg9[%c61_179, %c0_180] : memref<100x8xf32, #tpu.memory_space<vmem>>, vector<8x8xf32>
    tpu.vector_store %arg9[%c61_179, %c0_180], %196 {strides = array<i32>} : memref<100x8xf32, #tpu.memory_space<vmem>>, vector<8x8xf32>,
    %198 = vector.extract_strided_slice %185 {offsets = [60, 0], sizes = [8, 8], strides = [1, 1]} : vector<78x8xf32> to vector<8x8xf32>
    %c71_181 = arith.constant 71 : index
    %c0_182 = arith.constant 0 : index
    %199 = vector.load %arg9[%c71_181, %c0_182] : memref<100x8xf32, #tpu.memory_space<vmem>>, vector<8x8xf32>
    tpu.vector_store %arg9[%c71_181, %c0_182], %198 {strides = array<i32>} : memref<100x8xf32, #tpu.memory_space<vmem>>, vector<8x8xf32>,
    %200 = vector.extract_strided_slice %185 {offsets = [70, 0], sizes = [8, 8], strides = [1, 1]} : vector<78x8xf32> to vector<8x8xf32>
    %c81_183 = arith.constant 81 : index
    %c0_184 = arith.constant 0 : index
    %201 = vector.load %arg9[%c81_183, %c0_184] : memref<100x8xf32, #tpu.memory_space<vmem>>, vector<8x8xf32>
    tpu.vector_store %arg9[%c81_183, %c0_184], %200 {strides = array<i32>} : memref<100x8xf32, #tpu.memory_space<vmem>>, vector<8x8xf32>,
    %cst_185 = arith.constant 0.000000e+00 : f32
    %202 = vector.broadcast %cst_185 : f32 to vector<78x8xf32>
    %c0_186 = arith.constant 0 : index
    %c0_187 = arith.constant 0 : index
    %203 = vector.load %arg9[%c0_186, %c0_187] : memref<100x8xf32, #tpu.memory_space<vmem>>, vector<78x8xf32>
    %204 = arith.truncf %203 : vector<78x8xf32> to vector<78x8xbf16>
    %c0_188 = arith.constant 0 : index
    %c0_189 = arith.constant 0 : index
    %c0_190 = arith.constant 0 : index
    %205 = vector.load %arg6[%c0_188, %c0_189, %c0_190] : memref<9x8x8xbf16, #tpu.memory_space<vmem>>, vector<1x8x8xbf16>
    %206 = vector.shape_cast %205 : vector<1x8x8xbf16> to vector<8x8xbf16>
    %cst_191 = arith.constant dense<0.000000e+00> : vector<78x8xf32>
    %207 = tpu.matmul %204, %206, %cst_191 {dimension_numbers = #tpu.dot_dimension_numbers<[1], [0], [0], [1], [0, 0, 1, 1], [], []>} : vector<78x8xbf16>, vector<8x8xbf16>, vector<78x8xf32> -> vector<78x8xf32>
    %208 = arith.addf %202, %207 : vector<78x8xf32>
    %c1_192 = arith.constant 1 : index
    %c0_193 = arith.constant 0 : index
    %209 = vector.load %arg9[%c1_192, %c0_193] : memref<100x8xf32, #tpu.memory_space<vmem>>, vector<78x8xf32>
    %210 = arith.truncf %209 : vector<78x8xf32> to vector<78x8xbf16>
    %c1_194 = arith.constant 1 : index
    %c0_195 = arith.constant 0 : index
    %c0_196 = arith.constant 0 : index
    %211 = vector.load %arg6[%c1_194, %c0_195, %c0_196] : memref<9x8x8xbf16, #tpu.memory_space<vmem>>, vector<1x8x8xbf16>
    %212 = vector.shape_cast %211 : vector<1x8x8xbf16> to vector<8x8xbf16>
    %cst_197 = arith.constant dense<0.000000e+00> : vector<78x8xf32>
    %213 = tpu.matmul %210, %212, %cst_197 {dimension_numbers = #tpu.dot_dimension_numbers<[1], [0], [0], [1], [0, 0, 1, 1], [], []>} : vector<78x8xbf16>, vector<8x8xbf16>, vector<78x8xf32> -> vector<78x8xf32>
    %214 = arith.addf %208, %213 : vector<78x8xf32>
    %c2_198 = arith.constant 2 : index
    %c0_199 = arith.constant 0 : index
    %215 = vector.load %arg9[%c2_198, %c0_199] : memref<100x8xf32, #tpu.memory_space<vmem>>, vector<78x8xf32>
    %216 = arith.truncf %215 : vector<78x8xf32> to vector<78x8xbf16>
    %c2_200 = arith.constant 2 : index
    %c0_201 = arith.constant 0 : index
    %c0_202 = arith.constant 0 : index
    %217 = vector.load %arg6[%c2_200, %c0_201, %c0_202] : memref<9x8x8xbf16, #tpu.memory_space<vmem>>, vector<1x8x8xbf16>
    %218 = vector.shape_cast %217 : vector<1x8x8xbf16> to vector<8x8xbf16>
    %cst_203 = arith.constant dense<0.000000e+00> : vector<78x8xf32>
    %219 = tpu.matmul %216, %218, %cst_203 {dimension_numbers = #tpu.dot_dimension_numbers<[1], [0], [0], [1], [0, 0, 1, 1], [], []>} : vector<78x8xbf16>, vector<8x8xbf16>, vector<78x8xf32> -> vector<78x8xf32>
    %220 = arith.addf %214, %219 : vector<78x8xf32>
    %c10_204 = arith.constant 10 : index
    %c0_205 = arith.constant 0 : index
    %221 = vector.load %arg9[%c10_204, %c0_205] : memref<100x8xf32, #tpu.memory_space<vmem>>, vector<78x8xf32>
    %222 = arith.truncf %221 : vector<78x8xf32> to vector<78x8xbf16>
    %c3_206 = arith.constant 3 : index
    %c0_207 = arith.constant 0 : index
    %c0_208 = arith.constant 0 : index
    %223 = vector.load %arg6[%c3_206, %c0_207, %c0_208] : memref<9x8x8xbf16, #tpu.memory_space<vmem>>, vector<1x8x8xbf16>
    %224 = vector.shape_cast %223 : vector<1x8x8xbf16> to vector<8x8xbf16>
    %cst_209 = arith.constant dense<0.000000e+00> : vector<78x8xf32>
    %225 = tpu.matmul %222, %224, %cst_209 {dimension_numbers = #tpu.dot_dimension_numbers<[1], [0], [0], [1], [0, 0, 1, 1], [], []>} : vector<78x8xbf16>, vector<8x8xbf16>, vector<78x8xf32> -> vector<78x8xf32>
    %226 = arith.addf %220, %225 : vector<78x8xf32>
    %c11_210 = arith.constant 11 : index
    %c0_211 = arith.constant 0 : index
    %227 = vector.load %arg9[%c11_210, %c0_211] : memref<100x8xf32, #tpu.memory_space<vmem>>, vector<78x8xf32>
    %228 = arith.truncf %227 : vector<78x8xf32> to vector<78x8xbf16>
    %c4_212 = arith.constant 4 : index
    %c0_213 = arith.constant 0 : index
    %c0_214 = arith.constant 0 : index
    %229 = vector.load %arg6[%c4_212, %c0_213, %c0_214] : memref<9x8x8xbf16, #tpu.memory_space<vmem>>, vector<1x8x8xbf16>
    %230 = vector.shape_cast %229 : vector<1x8x8xbf16> to vector<8x8xbf16>
    %cst_215 = arith.constant dense<0.000000e+00> : vector<78x8xf32>
    %231 = tpu.matmul %228, %230, %cst_215 {dimension_numbers = #tpu.dot_dimension_numbers<[1], [0], [0], [1], [0, 0, 1, 1], [], []>} : vector<78x8xbf16>, vector<8x8xbf16>, vector<78x8xf32> -> vector<78x8xf32>
    %232 = arith.addf %226, %231 : vector<78x8xf32>
    %c12_216 = arith.constant 12 : index
    %c0_217 = arith.constant 0 : index
    %233 = vector.load %arg9[%c12_216, %c0_217] : memref<100x8xf32, #tpu.memory_space<vmem>>, vector<78x8xf32>
    %234 = arith.truncf %233 : vector<78x8xf32> to vector<78x8xbf16>
    %c5_218 = arith.constant 5 : index
    %c0_219 = arith.constant 0 : index
    %c0_220 = arith.constant 0 : index
    %235 = vector.load %arg6[%c5_218, %c0_219, %c0_220] : memref<9x8x8xbf16, #tpu.memory_space<vmem>>, vector<1x8x8xbf16>
    %236 = vector.shape_cast %235 : vector<1x8x8xbf16> to vector<8x8xbf16>
    %cst_221 = arith.constant dense<0.000000e+00> : vector<78x8xf32>
    %237 = tpu.matmul %234, %236, %cst_221 {dimension_numbers = #tpu.dot_dimension_numbers<[1], [0], [0], [1], [0, 0, 1, 1], [], []>} : vector<78x8xbf16>, vector<8x8xbf16>, vector<78x8xf32> -> vector<78x8xf32>
    %238 = arith.addf %232, %237 : vector<78x8xf32>
    %c20_222 = arith.constant 20 : index
    %c0_223 = arith.constant 0 : index
    %239 = vector.load %arg9[%c20_222, %c0_223] : memref<100x8xf32, #tpu.memory_space<vmem>>, vector<78x8xf32>
    %240 = arith.truncf %239 : vector<78x8xf32> to vector<78x8xbf16>
    %c6_224 = arith.constant 6 : index
    %c0_225 = arith.constant 0 : index
    %c0_226 = arith.constant 0 : index
    %241 = vector.load %arg6[%c6_224, %c0_225, %c0_226] : memref<9x8x8xbf16, #tpu.memory_space<vmem>>, vector<1x8x8xbf16>
    %242 = vector.shape_cast %241 : vector<1x8x8xbf16> to vector<8x8xbf16>
    %cst_227 = arith.constant dense<0.000000e+00> : vector<78x8xf32>
    %243 = tpu.matmul %240, %242, %cst_227 {dimension_numbers = #tpu.dot_dimension_numbers<[1], [0], [0], [1], [0, 0, 1, 1], [], []>} : vector<78x8xbf16>, vector<8x8xbf16>, vector<78x8xf32> -> vector<78x8xf32>
    %244 = arith.addf %238, %243 : vector<78x8xf32>
    %c21_228 = arith.constant 21 : index
    %c0_229 = arith.constant 0 : index
    %245 = vector.load %arg9[%c21_228, %c0_229] : memref<100x8xf32, #tpu.memory_space<vmem>>, vector<78x8xf32>
    %246 = arith.truncf %245 : vector<78x8xf32> to vector<78x8xbf16>
    %c7_230 = arith.constant 7 : index
    %c0_231 = arith.constant 0 : index
    %c0_232 = arith.constant 0 : index
    %247 = vector.load %arg6[%c7_230, %c0_231, %c0_232] : memref<9x8x8xbf16, #tpu.memory_space<vmem>>, vector<1x8x8xbf16>
    %248 = vector.shape_cast %247 : vector<1x8x8xbf16> to vector<8x8xbf16>
    %cst_233 = arith.constant dense<0.000000e+00> : vector<78x8xf32>
    %249 = tpu.matmul %246, %248, %cst_233 {dimension_numbers = #tpu.dot_dimension_numbers<[1], [0], [0], [1], [0, 0, 1, 1], [], []>} : vector<78x8xbf16>, vector<8x8xbf16>, vector<78x8xf32> -> vector<78x8xf32>
    %250 = arith.addf %244, %249 : vector<78x8xf32>
    %c22_234 = arith.constant 22 : index
    %c0_235 = arith.constant 0 : index
    %251 = vector.load %arg9[%c22_234, %c0_235] : memref<100x8xf32, #tpu.memory_space<vmem>>, vector<78x8xf32>
    %252 = arith.truncf %251 : vector<78x8xf32> to vector<78x8xbf16>
    %c8_236 = arith.constant 8 : index
    %c0_237 = arith.constant 0 : index
    %c0_238 = arith.constant 0 : index
    %253 = vector.load %arg6[%c8_236, %c0_237, %c0_238] : memref<9x8x8xbf16, #tpu.memory_space<vmem>>, vector<1x8x8xbf16>
    %254 = vector.shape_cast %253 : vector<1x8x8xbf16> to vector<8x8xbf16>
    %cst_239 = arith.constant dense<0.000000e+00> : vector<78x8xf32>
    %255 = tpu.matmul %252, %254, %cst_239 {dimension_numbers = #tpu.dot_dimension_numbers<[1], [0], [0], [1], [0, 0, 1, 1], [], []>} : vector<78x8xbf16>, vector<8x8xbf16>, vector<78x8xf32> -> vector<78x8xf32>
    %256 = arith.addf %250, %255 : vector<78x8xf32>
    %c0_240 = arith.constant 0 : index
    %c0_241 = arith.constant 0 : index
    %257 = vector.load %arg7[%c0_240, %c0_241] : memref<1x8xf32, #tpu.memory_space<vmem>>, vector<1x8xf32>
    %258 = vector.broadcast %257 : vector<1x8xf32> to vector<78x8xf32>
    %259 = arith.addf %256, %258 : vector<78x8xf32>
    %260 = vector.extract_strided_slice %259 {offsets = [0, 0], sizes = [8, 8], strides = [1, 1]} : vector<78x8xf32> to vector<8x8xf32>
    %261 = vector.extract_strided_slice %104 {offsets = [0, 0], sizes = [8, 8], strides = [1, 1]} : vector<71x8xf32> to vector<8x8xf32>
    %262 = arith.addf %260, %261 : vector<8x8xf32>
    %c0_242 = arith.constant 0 : index
    %c0_243 = arith.constant 0 : index
    %c0_244 = arith.constant 0 : index
    %c0_245 = arith.constant 0 : index
    %263 = vector.load %arg8[%c0_242, %c0_243, %c0_244, %c0_245] : memref<1x8x8x8xf32, #tpu.memory_space<vmem>>, vector<1x1x8x8xf32>
    %264 = vector.shape_cast %263 : vector<1x1x8x8xf32> to vector<8x8xf32>
    %265 = vector.shape_cast %262 : vector<8x8xf32> to vector<1x1x8x8xf32>
    tpu.vector_store %arg8[%c0_242, %c0_243, %c0_244, %c0_245], %265 {strides = array<i32>} : memref<1x8x8x8xf32, #tpu.memory_space<vmem>>, vector<1x1x8x8xf32>,
    %266 = vector.extract_strided_slice %259 {offsets = [10, 0], sizes = [8, 8], strides = [1, 1]} : vector<78x8xf32> to vector<8x8xf32>
    %267 = vector.extract_strided_slice %104 {offsets = [9, 0], sizes = [8, 8], strides = [1, 1]} : vector<71x8xf32> to vector<8x8xf32>
    %268 = arith.addf %266, %267 : vector<8x8xf32>
    %c0_246 = arith.constant 0 : index
    %c1_247 = arith.constant 1 : index
    %c0_248 = arith.constant 0 : index
    %c0_249 = arith.constant 0 : index
    %269 = vector.load %arg8[%c0_246, %c1_247, %c0_248, %c0_249] : memref<1x8x8x8xf32, #tpu.memory_space<vmem>>, vector<1x1x8x8xf32>
    %270 = vector.shape_cast %269 : vector<1x1x8x8xf32> to vector<8x8xf32>
    %271 = vector.shape_cast %268 : vector<8x8xf32> to vector<1x1x8x8xf32>
    tpu.vector_store %arg8[%c0_246, %c1_247, %c0_248, %c0_249], %271 {strides = array<i32>} : memref<1x8x8x8xf32, #tpu.memory_space<vmem>>, vector<1x1x8x8xf32>,
    %272 = vector.extract_strided_slice %259 {offsets = [20, 0], sizes = [8, 8], strides = [1, 1]} : vector<78x8xf32> to vector<8x8xf32>
    %273 = vector.extract_strided_slice %104 {offsets = [18, 0], sizes = [8, 8], strides = [1, 1]} : vector<71x8xf32> to vector<8x8xf32>
    %274 = arith.addf %272, %273 : vector<8x8xf32>
    %c0_250 = arith.constant 0 : index
    %c2_251 = arith.constant 2 : index
    %c0_252 = arith.constant 0 : index
    %c0_253 = arith.constant 0 : index
    %275 = vector.load %arg8[%c0_250, %c2_251, %c0_252, %c0_253] : memref<1x8x8x8xf32, #tpu.memory_space<vmem>>, vector<1x1x8x8xf32>
    %276 = vector.shape_cast %275 : vector<1x1x8x8xf32> to vector<8x8xf32>
    %277 = vector.shape_cast %274 : vector<8x8xf32> to vector<1x1x8x8xf32>
    tpu.vector_store %arg8[%c0_250, %c2_251, %c0_252, %c0_253], %277 {strides = array<i32>} : memref<1x8x8x8xf32, #tpu.memory_space<vmem>>, vector<1x1x8x8xf32>,
    %278 = vector.extract_strided_slice %259 {offsets = [30, 0], sizes = [8, 8], strides = [1, 1]} : vector<78x8xf32> to vector<8x8xf32>
    %279 = vector.extract_strided_slice %104 {offsets = [27, 0], sizes = [8, 8], strides = [1, 1]} : vector<71x8xf32> to vector<8x8xf32>
    %280 = arith.addf %278, %279 : vector<8x8xf32>
    %c0_254 = arith.constant 0 : index
    %c3_255 = arith.constant 3 : index
    %c0_256 = arith.constant 0 : index
    %c0_257 = arith.constant 0 : index
    %281 = vector.load %arg8[%c0_254, %c3_255, %c0_256, %c0_257] : memref<1x8x8x8xf32, #tpu.memory_space<vmem>>, vector<1x1x8x8xf32>
    %282 = vector.shape_cast %281 : vector<1x1x8x8xf32> to vector<8x8xf32>
    %283 = vector.shape_cast %280 : vector<8x8xf32> to vector<1x1x8x8xf32>
    tpu.vector_store %arg8[%c0_254, %c3_255, %c0_256, %c0_257], %283 {strides = array<i32>} : memref<1x8x8x8xf32, #tpu.memory_space<vmem>>, vector<1x1x8x8xf32>,
    %284 = vector.extract_strided_slice %259 {offsets = [40, 0], sizes = [8, 8], strides = [1, 1]} : vector<78x8xf32> to vector<8x8xf32>
    %285 = vector.extract_strided_slice %104 {offsets = [36, 0], sizes = [8, 8], strides = [1, 1]} : vector<71x8xf32> to vector<8x8xf32>
    %286 = arith.addf %284, %285 : vector<8x8xf32>
    %c0_258 = arith.constant 0 : index
    %c4_259 = arith.constant 4 : index
    %c0_260 = arith.constant 0 : index
    %c0_261 = arith.constant 0 : index
    %287 = vector.load %arg8[%c0_258, %c4_259, %c0_260, %c0_261] : memref<1x8x8x8xf32, #tpu.memory_space<vmem>>, vector<1x1x8x8xf32>
    %288 = vector.shape_cast %287 : vector<1x1x8x8xf32> to vector<8x8xf32>
    %289 = vector.shape_cast %286 : vector<8x8xf32> to vector<1x1x8x8xf32>
    tpu.vector_store %arg8[%c0_258, %c4_259, %c0_260, %c0_261], %289 {strides = array<i32>} : memref<1x8x8x8xf32, #tpu.memory_space<vmem>>, vector<1x1x8x8xf32>,
    %290 = vector.extract_strided_slice %259 {offsets = [50, 0], sizes = [8, 8], strides = [1, 1]} : vector<78x8xf32> to vector<8x8xf32>
    %291 = vector.extract_strided_slice %104 {offsets = [45, 0], sizes = [8, 8], strides = [1, 1]} : vector<71x8xf32> to vector<8x8xf32>
    %292 = arith.addf %290, %291 : vector<8x8xf32>
    %c0_262 = arith.constant 0 : index
    %c5_263 = arith.constant 5 : index
    %c0_264 = arith.constant 0 : index
    %c0_265 = arith.constant 0 : index
    %293 = vector.load %arg8[%c0_262, %c5_263, %c0_264, %c0_265] : memref<1x8x8x8xf32, #tpu.memory_space<vmem>>, vector<1x1x8x8xf32>
    %294 = vector.shape_cast %293 : vector<1x1x8x8xf32> to vector<8x8xf32>
    %295 = vector.shape_cast %292 : vector<8x8xf32> to vector<1x1x8x8xf32>
    tpu.vector_store %arg8[%c0_262, %c5_263, %c0_264, %c0_265], %295 {strides = array<i32>} : memref<1x8x8x8xf32, #tpu.memory_space<vmem>>, vector<1x1x8x8xf32>,
    %296 = vector.extract_strided_slice %259 {offsets = [60, 0], sizes = [8, 8], strides = [1, 1]} : vector<78x8xf32> to vector<8x8xf32>
    %297 = vector.extract_strided_slice %104 {offsets = [54, 0], sizes = [8, 8], strides = [1, 1]} : vector<71x8xf32> to vector<8x8xf32>
    %298 = arith.addf %296, %297 : vector<8x8xf32>
    %c0_266 = arith.constant 0 : index
    %c6_267 = arith.constant 6 : index
    %c0_268 = arith.constant 0 : index
    %c0_269 = arith.constant 0 : index
    %299 = vector.load %arg8[%c0_266, %c6_267, %c0_268, %c0_269] : memref<1x8x8x8xf32, #tpu.memory_space<vmem>>, vector<1x1x8x8xf32>
    %300 = vector.shape_cast %299 : vector<1x1x8x8xf32> to vector<8x8xf32>
    %301 = vector.shape_cast %298 : vector<8x8xf32> to vector<1x1x8x8xf32>
    tpu.vector_store %arg8[%c0_266, %c6_267, %c0_268, %c0_269], %301 {strides = array<i32>} : memref<1x8x8x8xf32, #tpu.memory_space<vmem>>, vector<1x1x8x8xf32>,
    %302 = vector.extract_strided_slice %259 {offsets = [70, 0], sizes = [8, 8], strides = [1, 1]} : vector<78x8xf32> to vector<8x8xf32>
    %303 = vector.extract_strided_slice %104 {offsets = [63, 0], sizes = [8, 8], strides = [1, 1]} : vector<71x8xf32> to vector<8x8xf32>
    %304 = arith.addf %302, %303 : vector<8x8xf32>
    %c0_270 = arith.constant 0 : index
    %c7_271 = arith.constant 7 : index
    %c0_272 = arith.constant 0 : index
    %c0_273 = arith.constant 0 : index
    %305 = vector.load %arg8[%c0_270, %c7_271, %c0_272, %c0_273] : memref<1x8x8x8xf32, #tpu.memory_space<vmem>>, vector<1x1x8x8xf32>
    %306 = vector.shape_cast %305 : vector<1x1x8x8xf32> to vector<8x8xf32>
    %307 = vector.shape_cast %304 : vector<8x8xf32> to vector<1x1x8x8xf32>
    tpu.vector_store %arg8[%c0_270, %c7_271, %c0_272, %c0_273], %307 {strides = array<i32>} : memref<1x8x8x8xf32, #tpu.memory_space<vmem>>, vector<1x1x8x8xf32>,
    return
  }
  func.func @transform_0(%arg0: i32) -> (i32, i32, i32) {
    %c0_i32 = arith.constant 0 : i32
    %c0_i32_0 = arith.constant 0 : i32
    %c0_i32_1 = arith.constant 0 : i32
    return %arg0, %c0_i32, %c0_i32_0 : i32, i32, i32
  }
  func.func @transform_1(%arg0: i32) -> (i32, i32, i32) {
    %c0_i32 = arith.constant 0 : i32
    %c0_i32_0 = arith.constant 0 : i32
    %c0_i32_1 = arith.constant 0 : i32
    %c0_i32_2 = arith.constant 0 : i32
    return %c0_i32, %c0_i32_0, %c0_i32_1 : i32, i32, i32
  }
  func.func @transform_2(%arg0: i32) -> (i32, i32) {
    %c0_i32 = arith.constant 0 : i32
    %c0_i32_0 = arith.constant 0 : i32
    %c0_i32_1 = arith.constant 0 : i32
    return %c0_i32, %c0_i32_0 : i32, i32
  }
  func.func @transform_3(%arg0: i32) -> (i32, i32, i32) {
    %c0_i32 = arith.constant 0 : i32
    %c0_i32_0 = arith.constant 0 : i32
    %c0_i32_1 = arith.constant 0 : i32
    %c0_i32_2 = arith.constant 0 : i32
    return %c0_i32, %c0_i32_0, %c0_i32_1 : i32, i32, i32
  }
  func.func @transform_4(%arg0: i32) -> (i32, i32) {
    %c0_i32 = arith.constant 0 : i32
    %c0_i32_0 = arith.constant 0 : i32
    %c0_i32_1 = arith.constant 0 : i32
    return %c0_i32, %c0_i32_0 : i32, i32
  }
  func.func @transform_5(%arg0: i32) -> (i32, i32, i32) {
    %c0_i32 = arith.constant 0 : i32
    %c0_i32_0 = arith.constant 0 : i32
    %c0_i32_1 = arith.constant 0 : i32
    %c0_i32_2 = arith.constant 0 : i32
    return %c0_i32, %c0_i32_0, %c0_i32_1 : i32, i32, i32
  }
  func.func @transform_6(%arg0: i32) -> (i32, i32) {
    %c0_i32 = arith.constant 0 : i32
    %c0_i32_0 = arith.constant 0 : i32
    %c0_i32_1 = arith.constant 0 : i32
    return %c0_i32, %c0_i32_0 : i32, i32
  }
  func.func @transform_7(%arg0: i32) -> (i32, i32, i32, i32) {
    %c0_i32 = arith.constant 0 : i32
    %c0_i32_0 = arith.constant 0 : i32
    %c0_i32_1 = arith.constant 0 : i32
    %c0_i32_2 = arith.constant 0 : i32
    return %arg0, %c0_i32, %c0_i32_0, %c0_i32_1 : i32, i32, i32, i32
  }
}

module attributes {stable_mosaic.version = 11 : i64} {
  func.func @_down_block_kernel(%arg0: i32, %arg1: memref<4x25x8xbf16, #tpu.memory_space<vmem>>, %arg2: memref<16x8x16xbf16, #tpu.memory_space<vmem>>, %arg3: memref<1x16xf32, #tpu.memory_space<vmem>>, %arg4: memref<9x16x16xbf16, #tpu.memory_space<vmem>>, %arg5: memref<1x16xf32, #tpu.memory_space<vmem>>, %arg6: memref<9x16x16xbf16, #tpu.memory_space<vmem>>, %arg7: memref<1x16xf32, #tpu.memory_space<vmem>>, %arg8: memref<1x4x4x16xf32, #tpu.memory_space<vmem>>, %arg9: memref<36x16xf32, #tpu.memory_space<vmem>>) attributes {dimension_semantics = [#tpu.dimension_semantics<parallel>], iteration_bounds = array<i64: 2>, scalar_prefetch = 0 : i64, scratch_operands = 1 : i64, tpu.core_type = #tpu.core_type<tc>, window_params = [{transform_indices = @transform_0, window_bounds = array<i64: 4, 25, 8>}, {pipeline_mode = #tpu.pipeline_mode<synchronous>, transform_indices = @transform_1, window_bounds = array<i64: 16, 8, 16>}, {pipeline_mode = #tpu.pipeline_mode<synchronous>, transform_indices = @transform_2, window_bounds = array<i64: 1, 16>}, {pipeline_mode = #tpu.pipeline_mode<synchronous>, transform_indices = @transform_3, window_bounds = array<i64: 9, 16, 16>}, {pipeline_mode = #tpu.pipeline_mode<synchronous>, transform_indices = @transform_4, window_bounds = array<i64: 1, 16>}, {pipeline_mode = #tpu.pipeline_mode<synchronous>, transform_indices = @transform_5, window_bounds = array<i64: 9, 16, 16>}, {pipeline_mode = #tpu.pipeline_mode<synchronous>, transform_indices = @transform_6, window_bounds = array<i64: 1, 16>}, {transform_indices = @transform_7, window_bounds = array<i64: 1, 4, 4, 16>}]} {
    %cst = arith.constant 0.000000e+00 : f32
    %0 = vector.broadcast %cst : f32 to vector<19x16xf32>
    %c0 = arith.constant 0 : index
    %c0_0 = arith.constant 0 : index
    %c0_1 = arith.constant 0 : index
    %1 = vector.load %arg1[%c0, %c0_0, %c0_1] : memref<4x25x8xbf16, #tpu.memory_space<vmem>>, vector<1x19x8xbf16>
    %2 = vector.shape_cast %1 : vector<1x19x8xbf16> to vector<19x8xbf16>
    %c0_2 = arith.constant 0 : index
    %c0_3 = arith.constant 0 : index
    %c0_4 = arith.constant 0 : index
    %3 = vector.load %arg2[%c0_2, %c0_3, %c0_4] : memref<16x8x16xbf16, #tpu.memory_space<vmem>>, vector<1x8x16xbf16>
    %4 = vector.shape_cast %3 : vector<1x8x16xbf16> to vector<8x16xbf16>
    %cst_5 = arith.constant dense<0.000000e+00> : vector<19x16xf32>
    %5 = tpu.matmul %2, %4, %cst_5 {dimension_numbers = #tpu.dot_dimension_numbers<[1], [0], [0], [1], [0, 0, 1, 1], [], []>} : vector<19x8xbf16>, vector<8x16xbf16>, vector<19x16xf32> -> vector<19x16xf32>
    %6 = arith.addf %0, %5 : vector<19x16xf32>
    %c0_6 = arith.constant 0 : index
    %c1 = arith.constant 1 : index
    %c0_7 = arith.constant 0 : index
    %7 = vector.load %arg1[%c0_6, %c1, %c0_7] : memref<4x25x8xbf16, #tpu.memory_space<vmem>>, vector<1x19x8xbf16>
    %8 = vector.shape_cast %7 : vector<1x19x8xbf16> to vector<19x8xbf16>
    %c1_8 = arith.constant 1 : index
    %c0_9 = arith.constant 0 : index
    %c0_10 = arith.constant 0 : index
    %9 = vector.load %arg2[%c1_8, %c0_9, %c0_10] : memref<16x8x16xbf16, #tpu.memory_space<vmem>>, vector<1x8x16xbf16>
    %10 = vector.shape_cast %9 : vector<1x8x16xbf16> to vector<8x16xbf16>
    %cst_11 = arith.constant dense<0.000000e+00> : vector<19x16xf32>
    %11 = tpu.matmul %8, %10, %cst_11 {dimension_numbers = #tpu.dot_dimension_numbers<[1], [0], [0], [1], [0, 0, 1, 1], [], []>} : vector<19x8xbf16>, vector<8x16xbf16>, vector<19x16xf32> -> vector<19x16xf32>
    %12 = arith.addf %6, %11 : vector<19x16xf32>
    %c0_12 = arith.constant 0 : index
    %c5 = arith.constant 5 : index
    %c0_13 = arith.constant 0 : index
    %13 = vector.load %arg1[%c0_12, %c5, %c0_13] : memref<4x25x8xbf16, #tpu.memory_space<vmem>>, vector<1x19x8xbf16>
    %14 = vector.shape_cast %13 : vector<1x19x8xbf16> to vector<19x8xbf16>
    %c2 = arith.constant 2 : index
    %c0_14 = arith.constant 0 : index
    %c0_15 = arith.constant 0 : index
    %15 = vector.load %arg2[%c2, %c0_14, %c0_15] : memref<16x8x16xbf16, #tpu.memory_space<vmem>>, vector<1x8x16xbf16>
    %16 = vector.shape_cast %15 : vector<1x8x16xbf16> to vector<8x16xbf16>
    %cst_16 = arith.constant dense<0.000000e+00> : vector<19x16xf32>
    %17 = tpu.matmul %14, %16, %cst_16 {dimension_numbers = #tpu.dot_dimension_numbers<[1], [0], [0], [1], [0, 0, 1, 1], [], []>} : vector<19x8xbf16>, vector<8x16xbf16>, vector<19x16xf32> -> vector<19x16xf32>
    %18 = arith.addf %12, %17 : vector<19x16xf32>
    %c0_17 = arith.constant 0 : index
    %c6 = arith.constant 6 : index
    %c0_18 = arith.constant 0 : index
    %19 = vector.load %arg1[%c0_17, %c6, %c0_18] : memref<4x25x8xbf16, #tpu.memory_space<vmem>>, vector<1x19x8xbf16>
    %20 = vector.shape_cast %19 : vector<1x19x8xbf16> to vector<19x8xbf16>
    %c3 = arith.constant 3 : index
    %c0_19 = arith.constant 0 : index
    %c0_20 = arith.constant 0 : index
    %21 = vector.load %arg2[%c3, %c0_19, %c0_20] : memref<16x8x16xbf16, #tpu.memory_space<vmem>>, vector<1x8x16xbf16>
    %22 = vector.shape_cast %21 : vector<1x8x16xbf16> to vector<8x16xbf16>
    %cst_21 = arith.constant dense<0.000000e+00> : vector<19x16xf32>
    %23 = tpu.matmul %20, %22, %cst_21 {dimension_numbers = #tpu.dot_dimension_numbers<[1], [0], [0], [1], [0, 0, 1, 1], [], []>} : vector<19x8xbf16>, vector<8x16xbf16>, vector<19x16xf32> -> vector<19x16xf32>
    %24 = arith.addf %18, %23 : vector<19x16xf32>
    %c1_22 = arith.constant 1 : index
    %c0_23 = arith.constant 0 : index
    %c0_24 = arith.constant 0 : index
    %25 = vector.load %arg1[%c1_22, %c0_23, %c0_24] : memref<4x25x8xbf16, #tpu.memory_space<vmem>>, vector<1x19x8xbf16>
    %26 = vector.shape_cast %25 : vector<1x19x8xbf16> to vector<19x8xbf16>
    %c4 = arith.constant 4 : index
    %c0_25 = arith.constant 0 : index
    %c0_26 = arith.constant 0 : index
    %27 = vector.load %arg2[%c4, %c0_25, %c0_26] : memref<16x8x16xbf16, #tpu.memory_space<vmem>>, vector<1x8x16xbf16>
    %28 = vector.shape_cast %27 : vector<1x8x16xbf16> to vector<8x16xbf16>
    %cst_27 = arith.constant dense<0.000000e+00> : vector<19x16xf32>
    %29 = tpu.matmul %26, %28, %cst_27 {dimension_numbers = #tpu.dot_dimension_numbers<[1], [0], [0], [1], [0, 0, 1, 1], [], []>} : vector<19x8xbf16>, vector<8x16xbf16>, vector<19x16xf32> -> vector<19x16xf32>
    %30 = arith.addf %24, %29 : vector<19x16xf32>
    %c1_28 = arith.constant 1 : index
    %c1_29 = arith.constant 1 : index
    %c0_30 = arith.constant 0 : index
    %31 = vector.load %arg1[%c1_28, %c1_29, %c0_30] : memref<4x25x8xbf16, #tpu.memory_space<vmem>>, vector<1x19x8xbf16>
    %32 = vector.shape_cast %31 : vector<1x19x8xbf16> to vector<19x8xbf16>
    %c5_31 = arith.constant 5 : index
    %c0_32 = arith.constant 0 : index
    %c0_33 = arith.constant 0 : index
    %33 = vector.load %arg2[%c5_31, %c0_32, %c0_33] : memref<16x8x16xbf16, #tpu.memory_space<vmem>>, vector<1x8x16xbf16>
    %34 = vector.shape_cast %33 : vector<1x8x16xbf16> to vector<8x16xbf16>
    %cst_34 = arith.constant dense<0.000000e+00> : vector<19x16xf32>
    %35 = tpu.matmul %32, %34, %cst_34 {dimension_numbers = #tpu.dot_dimension_numbers<[1], [0], [0], [1], [0, 0, 1, 1], [], []>} : vector<19x8xbf16>, vector<8x16xbf16>, vector<19x16xf32> -> vector<19x16xf32>
    %36 = arith.addf %30, %35 : vector<19x16xf32>
    %c1_35 = arith.constant 1 : index
    %c5_36 = arith.constant 5 : index
    %c0_37 = arith.constant 0 : index
    %37 = vector.load %arg1[%c1_35, %c5_36, %c0_37] : memref<4x25x8xbf16, #tpu.memory_space<vmem>>, vector<1x19x8xbf16>
    %38 = vector.shape_cast %37 : vector<1x19x8xbf16> to vector<19x8xbf16>
    %c6_38 = arith.constant 6 : index
    %c0_39 = arith.constant 0 : index
    %c0_40 = arith.constant 0 : index
    %39 = vector.load %arg2[%c6_38, %c0_39, %c0_40] : memref<16x8x16xbf16, #tpu.memory_space<vmem>>, vector<1x8x16xbf16>
    %40 = vector.shape_cast %39 : vector<1x8x16xbf16> to vector<8x16xbf16>
    %cst_41 = arith.constant dense<0.000000e+00> : vector<19x16xf32>
    %41 = tpu.matmul %38, %40, %cst_41 {dimension_numbers = #tpu.dot_dimension_numbers<[1], [0], [0], [1], [0, 0, 1, 1], [], []>} : vector<19x8xbf16>, vector<8x16xbf16>, vector<19x16xf32> -> vector<19x16xf32>
    %42 = arith.addf %36, %41 : vector<19x16xf32>
    %c1_42 = arith.constant 1 : index
    %c6_43 = arith.constant 6 : index
    %c0_44 = arith.constant 0 : index
    %43 = vector.load %arg1[%c1_42, %c6_43, %c0_44] : memref<4x25x8xbf16, #tpu.memory_space<vmem>>, vector<1x19x8xbf16>
    %44 = vector.shape_cast %43 : vector<1x19x8xbf16> to vector<19x8xbf16>
    %c7 = arith.constant 7 : index
    %c0_45 = arith.constant 0 : index
    %c0_46 = arith.constant 0 : index
    %45 = vector.load %arg2[%c7, %c0_45, %c0_46] : memref<16x8x16xbf16, #tpu.memory_space<vmem>>, vector<1x8x16xbf16>
    %46 = vector.shape_cast %45 : vector<1x8x16xbf16> to vector<8x16xbf16>
    %cst_47 = arith.constant dense<0.000000e+00> : vector<19x16xf32>
    %47 = tpu.matmul %44, %46, %cst_47 {dimension_numbers = #tpu.dot_dimension_numbers<[1], [0], [0], [1], [0, 0, 1, 1], [], []>} : vector<19x8xbf16>, vector<8x16xbf16>, vector<19x16xf32> -> vector<19x16xf32>
    %48 = arith.addf %42, %47 : vector<19x16xf32>
    %c2_48 = arith.constant 2 : index
    %c0_49 = arith.constant 0 : index
    %c0_50 = arith.constant 0 : index
    %49 = vector.load %arg1[%c2_48, %c0_49, %c0_50] : memref<4x25x8xbf16, #tpu.memory_space<vmem>>, vector<1x19x8xbf16>
    %50 = vector.shape_cast %49 : vector<1x19x8xbf16> to vector<19x8xbf16>
    %c8 = arith.constant 8 : index
    %c0_51 = arith.constant 0 : index
    %c0_52 = arith.constant 0 : index
    %51 = vector.load %arg2[%c8, %c0_51, %c0_52] : memref<16x8x16xbf16, #tpu.memory_space<vmem>>, vector<1x8x16xbf16>
    %52 = vector.shape_cast %51 : vector<1x8x16xbf16> to vector<8x16xbf16>
    %cst_53 = arith.constant dense<0.000000e+00> : vector<19x16xf32>
    %53 = tpu.matmul %50, %52, %cst_53 {dimension_numbers = #tpu.dot_dimension_numbers<[1], [0], [0], [1], [0, 0, 1, 1], [], []>} : vector<19x8xbf16>, vector<8x16xbf16>, vector<19x16xf32> -> vector<19x16xf32>
    %54 = arith.addf %48, %53 : vector<19x16xf32>
    %c2_54 = arith.constant 2 : index
    %c1_55 = arith.constant 1 : index
    %c0_56 = arith.constant 0 : index
    %55 = vector.load %arg1[%c2_54, %c1_55, %c0_56] : memref<4x25x8xbf16, #tpu.memory_space<vmem>>, vector<1x19x8xbf16>
    %56 = vector.shape_cast %55 : vector<1x19x8xbf16> to vector<19x8xbf16>
    %c9 = arith.constant 9 : index
    %c0_57 = arith.constant 0 : index
    %c0_58 = arith.constant 0 : index
    %57 = vector.load %arg2[%c9, %c0_57, %c0_58] : memref<16x8x16xbf16, #tpu.memory_space<vmem>>, vector<1x8x16xbf16>
    %58 = vector.shape_cast %57 : vector<1x8x16xbf16> to vector<8x16xbf16>
    %cst_59 = arith.constant dense<0.000000e+00> : vector<19x16xf32>
    %59 = tpu.matmul %56, %58, %cst_59 {dimension_numbers = #tpu.dot_dimension_numbers<[1], [0], [0], [1], [0, 0, 1, 1], [], []>} : vector<19x8xbf16>, vector<8x16xbf16>, vector<19x16xf32> -> vector<19x16xf32>
    %60 = arith.addf %54, %59 : vector<19x16xf32>
    %c2_60 = arith.constant 2 : index
    %c5_61 = arith.constant 5 : index
    %c0_62 = arith.constant 0 : index
    %61 = vector.load %arg1[%c2_60, %c5_61, %c0_62] : memref<4x25x8xbf16, #tpu.memory_space<vmem>>, vector<1x19x8xbf16>
    %62 = vector.shape_cast %61 : vector<1x19x8xbf16> to vector<19x8xbf16>
    %c10 = arith.constant 10 : index
    %c0_63 = arith.constant 0 : index
    %c0_64 = arith.constant 0 : index
    %63 = vector.load %arg2[%c10, %c0_63, %c0_64] : memref<16x8x16xbf16, #tpu.memory_space<vmem>>, vector<1x8x16xbf16>
    %64 = vector.shape_cast %63 : vector<1x8x16xbf16> to vector<8x16xbf16>
    %cst_65 = arith.constant dense<0.000000e+00> : vector<19x16xf32>
    %65 = tpu.matmul %62, %64, %cst_65 {dimension_numbers = #tpu.dot_dimension_numbers<[1], [0], [0], [1], [0, 0, 1, 1], [], []>} : vector<19x8xbf16>, vector<8x16xbf16>, vector<19x16xf32> -> vector<19x16xf32>
    %66 = arith.addf %60, %65 : vector<19x16xf32>
    %c2_66 = arith.constant 2 : index
    %c6_67 = arith.constant 6 : index
    %c0_68 = arith.constant 0 : index
    %67 = vector.load %arg1[%c2_66, %c6_67, %c0_68] : memref<4x25x8xbf16, #tpu.memory_space<vmem>>, vector<1x19x8xbf16>
    %68 = vector.shape_cast %67 : vector<1x19x8xbf16> to vector<19x8xbf16>
    %c11 = arith.constant 11 : index
    %c0_69 = arith.constant 0 : index
    %c0_70 = arith.constant 0 : index
    %69 = vector.load %arg2[%c11, %c0_69, %c0_70] : memref<16x8x16xbf16, #tpu.memory_space<vmem>>, vector<1x8x16xbf16>
    %70 = vector.shape_cast %69 : vector<1x8x16xbf16> to vector<8x16xbf16>
    %cst_71 = arith.constant dense<0.000000e+00> : vector<19x16xf32>
    %71 = tpu.matmul %68, %70, %cst_71 {dimension_numbers = #tpu.dot_dimension_numbers<[1], [0], [0], [1], [0, 0, 1, 1], [], []>} : vector<19x8xbf16>, vector<8x16xbf16>, vector<19x16xf32> -> vector<19x16xf32>
    %72 = arith.addf %66, %71 : vector<19x16xf32>
    %c3_72 = arith.constant 3 : index
    %c0_73 = arith.constant 0 : index
    %c0_74 = arith.constant 0 : index
    %73 = vector.load %arg1[%c3_72, %c0_73, %c0_74] : memref<4x25x8xbf16, #tpu.memory_space<vmem>>, vector<1x19x8xbf16>
    %74 = vector.shape_cast %73 : vector<1x19x8xbf16> to vector<19x8xbf16>
    %c12 = arith.constant 12 : index
    %c0_75 = arith.constant 0 : index
    %c0_76 = arith.constant 0 : index
    %75 = vector.load %arg2[%c12, %c0_75, %c0_76] : memref<16x8x16xbf16, #tpu.memory_space<vmem>>, vector<1x8x16xbf16>
    %76 = vector.shape_cast %75 : vector<1x8x16xbf16> to vector<8x16xbf16>
    %cst_77 = arith.constant dense<0.000000e+00> : vector<19x16xf32>
    %77 = tpu.matmul %74, %76, %cst_77 {dimension_numbers = #tpu.dot_dimension_numbers<[1], [0], [0], [1], [0, 0, 1, 1], [], []>} : vector<19x8xbf16>, vector<8x16xbf16>, vector<19x16xf32> -> vector<19x16xf32>
    %78 = arith.addf %72, %77 : vector<19x16xf32>
    %c3_78 = arith.constant 3 : index
    %c1_79 = arith.constant 1 : index
    %c0_80 = arith.constant 0 : index
    %79 = vector.load %arg1[%c3_78, %c1_79, %c0_80] : memref<4x25x8xbf16, #tpu.memory_space<vmem>>, vector<1x19x8xbf16>
    %80 = vector.shape_cast %79 : vector<1x19x8xbf16> to vector<19x8xbf16>
    %c13 = arith.constant 13 : index
    %c0_81 = arith.constant 0 : index
    %c0_82 = arith.constant 0 : index
    %81 = vector.load %arg2[%c13, %c0_81, %c0_82] : memref<16x8x16xbf16, #tpu.memory_space<vmem>>, vector<1x8x16xbf16>
    %82 = vector.shape_cast %81 : vector<1x8x16xbf16> to vector<8x16xbf16>
    %cst_83 = arith.constant dense<0.000000e+00> : vector<19x16xf32>
    %83 = tpu.matmul %80, %82, %cst_83 {dimension_numbers = #tpu.dot_dimension_numbers<[1], [0], [0], [1], [0, 0, 1, 1], [], []>} : vector<19x8xbf16>, vector<8x16xbf16>, vector<19x16xf32> -> vector<19x16xf32>
    %84 = arith.addf %78, %83 : vector<19x16xf32>
    %c3_84 = arith.constant 3 : index
    %c5_85 = arith.constant 5 : index
    %c0_86 = arith.constant 0 : index
    %85 = vector.load %arg1[%c3_84, %c5_85, %c0_86] : memref<4x25x8xbf16, #tpu.memory_space<vmem>>, vector<1x19x8xbf16>
    %86 = vector.shape_cast %85 : vector<1x19x8xbf16> to vector<19x8xbf16>
    %c14 = arith.constant 14 : index
    %c0_87 = arith.constant 0 : index
    %c0_88 = arith.constant 0 : index
    %87 = vector.load %arg2[%c14, %c0_87, %c0_88] : memref<16x8x16xbf16, #tpu.memory_space<vmem>>, vector<1x8x16xbf16>
    %88 = vector.shape_cast %87 : vector<1x8x16xbf16> to vector<8x16xbf16>
    %cst_89 = arith.constant dense<0.000000e+00> : vector<19x16xf32>
    %89 = tpu.matmul %86, %88, %cst_89 {dimension_numbers = #tpu.dot_dimension_numbers<[1], [0], [0], [1], [0, 0, 1, 1], [], []>} : vector<19x8xbf16>, vector<8x16xbf16>, vector<19x16xf32> -> vector<19x16xf32>
    %90 = arith.addf %84, %89 : vector<19x16xf32>
    %c3_90 = arith.constant 3 : index
    %c6_91 = arith.constant 6 : index
    %c0_92 = arith.constant 0 : index
    %91 = vector.load %arg1[%c3_90, %c6_91, %c0_92] : memref<4x25x8xbf16, #tpu.memory_space<vmem>>, vector<1x19x8xbf16>
    %92 = vector.shape_cast %91 : vector<1x19x8xbf16> to vector<19x8xbf16>
    %c15 = arith.constant 15 : index
    %c0_93 = arith.constant 0 : index
    %c0_94 = arith.constant 0 : index
    %93 = vector.load %arg2[%c15, %c0_93, %c0_94] : memref<16x8x16xbf16, #tpu.memory_space<vmem>>, vector<1x8x16xbf16>
    %94 = vector.shape_cast %93 : vector<1x8x16xbf16> to vector<8x16xbf16>
    %cst_95 = arith.constant dense<0.000000e+00> : vector<19x16xf32>
    %95 = tpu.matmul %92, %94, %cst_95 {dimension_numbers = #tpu.dot_dimension_numbers<[1], [0], [0], [1], [0, 0, 1, 1], [], []>} : vector<19x8xbf16>, vector<8x16xbf16>, vector<19x16xf32> -> vector<19x16xf32>
    %96 = arith.addf %90, %95 : vector<19x16xf32>
    %c0_96 = arith.constant 0 : index
    %c0_97 = arith.constant 0 : index
    %97 = vector.load %arg3[%c0_96, %c0_97] : memref<1x16xf32, #tpu.memory_space<vmem>>, vector<1x16xf32>
    %98 = vector.broadcast %97 : vector<1x16xf32> to vector<19x16xf32>
    %99 = arith.addf %96, %98 : vector<19x16xf32>
    %cst_98 = arith.constant 0.000000e+00 : f32
    %100 = vector.broadcast %cst_98 : f32 to vector<19x16xf32>
    %101 = arith.cmpf oge, %99, %100 : vector<19x16xf32>
    %cst_99 = arith.constant 2.000000e-01 : f32
    %102 = vector.broadcast %cst_99 : f32 to vector<19x16xf32>
    %103 = arith.mulf %102, %99 : vector<19x16xf32>
    %104 = arith.select %101, %99, %103 : vector<19x16xi1>, vector<19x16xf32>
    %cst_100 = arith.constant 0.000000e+00 : f32
    %105 = vector.broadcast %cst_100 : f32 to vector<36x16xf32>
    %c0_101 = arith.constant 0 : index
    %c0_102 = arith.constant 0 : index
    %106 = vector.load %arg9[%c0_101, %c0_102] : memref<36x16xf32, #tpu.memory_space<vmem>>, vector<36x16xf32>
    tpu.vector_store %arg9[%c0_101, %c0_102], %105 {strides = array<i32>} : memref<36x16xf32, #tpu.memory_space<vmem>>, vector<36x16xf32>,
    %107 = vector.extract_strided_slice %104 {offsets = [0, 0], sizes = [4, 16], strides = [1, 1]} : vector<19x16xf32> to vector<4x16xf32>
    %c7_103 = arith.constant 7 : index
    %c0_104 = arith.constant 0 : index
    %108 = vector.load %arg9[%c7_103, %c0_104] : memref<36x16xf32, #tpu.memory_space<vmem>>, vector<4x16xf32>
    tpu.vector_store %arg9[%c7_103, %c0_104], %107 {strides = array<i32>} : memref<36x16xf32, #tpu.memory_space<vmem>>, vector<4x16xf32>,
    %109 = vector.extract_strided_slice %104 {offsets = [5, 0], sizes = [4, 16], strides = [1, 1]} : vector<19x16xf32> to vector<4x16xf32>
    %c13_105 = arith.constant 13 : index
    %c0_106 = arith.constant 0 : index
    %110 = vector.load %arg9[%c13_105, %c0_106] : memref<36x16xf32, #tpu.memory_space<vmem>>, vector<4x16xf32>
    tpu.vector_store %arg9[%c13_105, %c0_106], %109 {strides = array<i32>} : memref<36x16xf32, #tpu.memory_space<vmem>>, vector<4x16xf32>,
    %111 = vector.extract_strided_slice %104 {offsets = [10, 0], sizes = [4, 16], strides = [1, 1]} : vector<19x16xf32> to vector<4x16xf32>
    %c19 = arith.constant 19 : index
    %c0_107 = arith.constant 0 : index
    %112 = vector.load %arg9[%c19, %c0_107] : memref<36x16xf32, #tpu.memory_space<vmem>>, vector<4x16xf32>
    tpu.vector_store %arg9[%c19, %c0_107], %111 {strides = array<i32>} : memref<36x16xf32, #tpu.memory_space<vmem>>, vector<4x16xf32>,
    %113 = vector.extract_strided_slice %104 {offsets = [15, 0], sizes = [4, 16], strides = [1, 1]} : vector<19x16xf32> to vector<4x16xf32>
    %c25 = arith.constant 25 : index
    %c0_108 = arith.constant 0 : index
    %114 = vector.load %arg9[%c25, %c0_108] : memref<36x16xf32, #tpu.memory_space<vmem>>, vector<4x16xf32>
    tpu.vector_store %arg9[%c25, %c0_108], %113 {strides = array<i32>} : memref<36x16xf32, #tpu.memory_space<vmem>>, vector<4x16xf32>,
    %cst_109 = arith.constant 0.000000e+00 : f32
    %115 = vector.broadcast %cst_109 : f32 to vector<22x16xf32>
    %c0_110 = arith.constant 0 : index
    %c0_111 = arith.constant 0 : index
    %116 = vector.load %arg9[%c0_110, %c0_111] : memref<36x16xf32, #tpu.memory_space<vmem>>, vector<22x16xf32>
    %117 = arith.truncf %116 : vector<22x16xf32> to vector<22x16xbf16>
    %c0_112 = arith.constant 0 : index
    %c0_113 = arith.constant 0 : index
    %c0_114 = arith.constant 0 : index
    %118 = vector.load %arg4[%c0_112, %c0_113, %c0_114] : memref<9x16x16xbf16, #tpu.memory_space<vmem>>, vector<1x16x16xbf16>
    %119 = vector.shape_cast %118 : vector<1x16x16xbf16> to vector<16x16xbf16>
    %cst_115 = arith.constant dense<0.000000e+00> : vector<22x16xf32>
    %120 = tpu.matmul %117, %119, %cst_115 {dimension_numbers = #tpu.dot_dimension_numbers<[1], [0], [0], [1], [0, 0, 1, 1], [], []>} : vector<22x16xbf16>, vector<16x16xbf16>, vector<22x16xf32> -> vector<22x16xf32>
    %121 = arith.addf %115, %120 : vector<22x16xf32>
    %c1_116 = arith.constant 1 : index
    %c0_117 = arith.constant 0 : index
    %122 = vector.load %arg9[%c1_116, %c0_117] : memref<36x16xf32, #tpu.memory_space<vmem>>, vector<22x16xf32>
    %123 = arith.truncf %122 : vector<22x16xf32> to vector<22x16xbf16>
    %c1_118 = arith.constant 1 : index
    %c0_119 = arith.constant 0 : index
    %c0_120 = arith.constant 0 : index
    %124 = vector.load %arg4[%c1_118, %c0_119, %c0_120] : memref<9x16x16xbf16, #tpu.memory_space<vmem>>, vector<1x16x16xbf16>
    %125 = vector.shape_cast %124 : vector<1x16x16xbf16> to vector<16x16xbf16>
    %cst_121 = arith.constant dense<0.000000e+00> : vector<22x16xf32>
    %126 = tpu.matmul %123, %125, %cst_121 {dimension_numbers = #tpu.dot_dimension_numbers<[1], [0], [0], [1], [0, 0, 1, 1], [], []>} : vector<22x16xbf16>, vector<16x16xbf16>, vector<22x16xf32> -> vector<22x16xf32>
    %127 = arith.addf %121, %126 : vector<22x16xf32>
    %c2_122 = arith.constant 2 : index
    %c0_123 = arith.constant 0 : index
    %128 = vector.load %arg9[%c2_122, %c0_123] : memref<36x16xf32, #tpu.memory_space<vmem>>, vector<22x16xf32>
    %129 = arith.truncf %128 : vector<22x16xf32> to vector<22x16xbf16>
    %c2_124 = arith.constant 2 : index
    %c0_125 = arith.constant 0 : index
    %c0_126 = arith.constant 0 : index
    %130 = vector.load %arg4[%c2_124, %c0_125, %c0_126] : memref<9x16x16xbf16, #tpu.memory_space<vmem>>, vector<1x16x16xbf16>
    %131 = vector.shape_cast %130 : vector<1x16x16xbf16> to vector<16x16xbf16>
    %cst_127 = arith.constant dense<0.000000e+00> : vector<22x16xf32>
    %132 = tpu.matmul %129, %131, %cst_127 {dimension_numbers = #tpu.dot_dimension_numbers<[1], [0], [0], [1], [0, 0, 1, 1], [], []>} : vector<22x16xbf16>, vector<16x16xbf16>, vector<22x16xf32> -> vector<22x16xf32>
    %133 = arith.addf %127, %132 : vector<22x16xf32>
    %c6_128 = arith.constant 6 : index
    %c0_129 = arith.constant 0 : index
    %134 = vector.load %arg9[%c6_128, %c0_129] : memref<36x16xf32, #tpu.memory_space<vmem>>, vector<22x16xf32>
    %135 = arith.truncf %134 : vector<22x16xf32> to vector<22x16xbf16>
    %c3_130 = arith.constant 3 : index
    %c0_131 = arith.constant 0 : index
    %c0_132 = arith.constant 0 : index
    %136 = vector.load %arg4[%c3_130, %c0_131, %c0_132] : memref<9x16x16xbf16, #tpu.memory_space<vmem>>, vector<1x16x16xbf16>
    %137 = vector.shape_cast %136 : vector<1x16x16xbf16> to vector<16x16xbf16>
    %cst_133 = arith.constant dense<0.000000e+00> : vector<22x16xf32>
    %138 = tpu.matmul %135, %137, %cst_133 {dimension_numbers = #tpu.dot_dimension_numbers<[1], [0], [0], [1], [0, 0, 1, 1], [], []>} : vector<22x16xbf16>, vector<16x16xbf16>, vector<22x16xf32> -> vector<22x16xf32>
    %139 = arith.addf %133, %138 : vector<22x16xf32>
    %c7_134 = arith.constant 7 : index
    %c0_135 = arith.constant 0 : index
    %140 = vector.load %arg9[%c7_134, %c0_135] : memref<36x16xf32, #tpu.memory_space<vmem>>, vector<22x16xf32>
    %141 = arith.truncf %140 : vector<22x16xf32> to vector<22x16xbf16>
    %c4_136 = arith.constant 4 : index
    %c0_137 = arith.constant 0 : index
    %c0_138 = arith.constant 0 : index
    %142 = vector.load %arg4[%c4_136, %c0_137, %c0_138] : memref<9x16x16xbf16, #tpu.memory_space<vmem>>, vector<1x16x16xbf16>
    %143 = vector.shape_cast %142 : vector<1x16x16xbf16> to vector<16x16xbf16>
    %cst_139 = arith.constant dense<0.000000e+00> : vector<22x16xf32>
    %144 = tpu.matmul %141, %143, %cst_139 {dimension_numbers = #tpu.dot_dimension_numbers<[1], [0], [0], [1], [0, 0, 1, 1], [], []>} : vector<22x16xbf16>, vector<16x16xbf16>, vector<22x16xf32> -> vector<22x16xf32>
    %145 = arith.addf %139, %144 : vector<22x16xf32>
    %c8_140 = arith.constant 8 : index
    %c0_141 = arith.constant 0 : index
    %146 = vector.load %arg9[%c8_140, %c0_141] : memref<36x16xf32, #tpu.memory_space<vmem>>, vector<22x16xf32>
    %147 = arith.truncf %146 : vector<22x16xf32> to vector<22x16xbf16>
    %c5_142 = arith.constant 5 : index
    %c0_143 = arith.constant 0 : index
    %c0_144 = arith.constant 0 : index
    %148 = vector.load %arg4[%c5_142, %c0_143, %c0_144] : memref<9x16x16xbf16, #tpu.memory_space<vmem>>, vector<1x16x16xbf16>
    %149 = vector.shape_cast %148 : vector<1x16x16xbf16> to vector<16x16xbf16>
    %cst_145 = arith.constant dense<0.000000e+00> : vector<22x16xf32>
    %150 = tpu.matmul %147, %149, %cst_145 {dimension_numbers = #tpu.dot_dimension_numbers<[1], [0], [0], [1], [0, 0, 1, 1], [], []>} : vector<22x16xbf16>, vector<16x16xbf16>, vector<22x16xf32> -> vector<22x16xf32>
    %151 = arith.addf %145, %150 : vector<22x16xf32>
    %c12_146 = arith.constant 12 : index
    %c0_147 = arith.constant 0 : index
    %152 = vector.load %arg9[%c12_146, %c0_147] : memref<36x16xf32, #tpu.memory_space<vmem>>, vector<22x16xf32>
    %153 = arith.truncf %152 : vector<22x16xf32> to vector<22x16xbf16>
    %c6_148 = arith.constant 6 : index
    %c0_149 = arith.constant 0 : index
    %c0_150 = arith.constant 0 : index
    %154 = vector.load %arg4[%c6_148, %c0_149, %c0_150] : memref<9x16x16xbf16, #tpu.memory_space<vmem>>, vector<1x16x16xbf16>
    %155 = vector.shape_cast %154 : vector<1x16x16xbf16> to vector<16x16xbf16>
    %cst_151 = arith.constant dense<0.000000e+00> : vector<22x16xf32>
    %156 = tpu.matmul %153, %155, %cst_151 {dimension_numbers = #tpu.dot_dimension_numbers<[1], [0], [0], [1], [0, 0, 1, 1], [], []>} : vector<22x16xbf16>, vector<16x16xbf16>, vector<22x16xf32> -> vector<22x16xf32>
    %157 = arith.addf %151, %156 : vector<22x16xf32>
    %c13_152 = arith.constant 13 : index
    %c0_153 = arith.constant 0 : index
    %158 = vector.load %arg9[%c13_152, %c0_153] : memref<36x16xf32, #tpu.memory_space<vmem>>, vector<22x16xf32>
    %159 = arith.truncf %158 : vector<22x16xf32> to vector<22x16xbf16>
    %c7_154 = arith.constant 7 : index
    %c0_155 = arith.constant 0 : index
    %c0_156 = arith.constant 0 : index
    %160 = vector.load %arg4[%c7_154, %c0_155, %c0_156] : memref<9x16x16xbf16, #tpu.memory_space<vmem>>, vector<1x16x16xbf16>
    %161 = vector.shape_cast %160 : vector<1x16x16xbf16> to vector<16x16xbf16>
    %cst_157 = arith.constant dense<0.000000e+00> : vector<22x16xf32>
    %162 = tpu.matmul %159, %161, %cst_157 {dimension_numbers = #tpu.dot_dimension_numbers<[1], [0], [0], [1], [0, 0, 1, 1], [], []>} : vector<22x16xbf16>, vector<16x16xbf16>, vector<22x16xf32> -> vector<22x16xf32>
    %163 = arith.addf %157, %162 : vector<22x16xf32>
    %c14_158 = arith.constant 14 : index
    %c0_159 = arith.constant 0 : index
    %164 = vector.load %arg9[%c14_158, %c0_159] : memref<36x16xf32, #tpu.memory_space<vmem>>, vector<22x16xf32>
    %165 = arith.truncf %164 : vector<22x16xf32> to vector<22x16xbf16>
    %c8_160 = arith.constant 8 : index
    %c0_161 = arith.constant 0 : index
    %c0_162 = arith.constant 0 : index
    %166 = vector.load %arg4[%c8_160, %c0_161, %c0_162] : memref<9x16x16xbf16, #tpu.memory_space<vmem>>, vector<1x16x16xbf16>
    %167 = vector.shape_cast %166 : vector<1x16x16xbf16> to vector<16x16xbf16>
    %cst_163 = arith.constant dense<0.000000e+00> : vector<22x16xf32>
    %168 = tpu.matmul %165, %167, %cst_163 {dimension_numbers = #tpu.dot_dimension_numbers<[1], [0], [0], [1], [0, 0, 1, 1], [], []>} : vector<22x16xbf16>, vector<16x16xbf16>, vector<22x16xf32> -> vector<22x16xf32>
    %169 = arith.addf %163, %168 : vector<22x16xf32>
    %c0_164 = arith.constant 0 : index
    %c0_165 = arith.constant 0 : index
    %170 = vector.load %arg5[%c0_164, %c0_165] : memref<1x16xf32, #tpu.memory_space<vmem>>, vector<1x16xf32>
    %171 = vector.broadcast %170 : vector<1x16xf32> to vector<22x16xf32>
    %172 = arith.addf %169, %171 : vector<22x16xf32>
    %cst_166 = arith.constant 0.000000e+00 : f32
    %173 = vector.broadcast %cst_166 : f32 to vector<22x16xf32>
    %174 = arith.cmpf oge, %172, %173 : vector<22x16xf32>
    %cst_167 = arith.constant 2.000000e-01 : f32
    %175 = vector.broadcast %cst_167 : f32 to vector<22x16xf32>
    %176 = arith.mulf %175, %172 : vector<22x16xf32>
    %177 = arith.select %174, %172, %176 : vector<22x16xi1>, vector<22x16xf32>
    %178 = vector.extract_strided_slice %177 {offsets = [0, 0], sizes = [4, 16], strides = [1, 1]} : vector<22x16xf32> to vector<4x16xf32>
    %c7_168 = arith.constant 7 : index
    %c0_169 = arith.constant 0 : index
    %179 = vector.load %arg9[%c7_168, %c0_169] : memref<36x16xf32, #tpu.memory_space<vmem>>, vector<4x16xf32>
    tpu.vector_store %arg9[%c7_168, %c0_169], %178 {strides = array<i32>} : memref<36x16xf32, #tpu.memory_space<vmem>>, vector<4x16xf32>,
    %180 = vector.extract_strided_slice %177 {offsets = [6, 0], sizes = [4, 16], strides = [1, 1]} : vector<22x16xf32> to vector<4x16xf32>
    %c13_170 = arith.constant 13 : index
    %c0_171 = arith.constant 0 : index
    %181 = vector.load %arg9[%c13_170, %c0_171] : memref<36x16xf32, #tpu.memory_space<vmem>>, vector<4x16xf32>
    tpu.vector_store %arg9[%c13_170, %c0_171], %180 {strides = array<i32>} : memref<36x16xf32, #tpu.memory_space<vmem>>, vector<4x16xf32>,
    %182 = vector.extract_strided_slice %177 {offsets = [12, 0], sizes = [4, 16], strides = [1, 1]} : vector<22x16xf32> to vector<4x16xf32>
    %c19_172 = arith.constant 19 : index
    %c0_173 = arith.constant 0 : index
    %183 = vector.load %arg9[%c19_172, %c0_173] : memref<36x16xf32, #tpu.memory_space<vmem>>, vector<4x16xf32>
    tpu.vector_store %arg9[%c19_172, %c0_173], %182 {strides = array<i32>} : memref<36x16xf32, #tpu.memory_space<vmem>>, vector<4x16xf32>,
    %184 = vector.extract_strided_slice %177 {offsets = [18, 0], sizes = [4, 16], strides = [1, 1]} : vector<22x16xf32> to vector<4x16xf32>
    %c25_174 = arith.constant 25 : index
    %c0_175 = arith.constant 0 : index
    %185 = vector.load %arg9[%c25_174, %c0_175] : memref<36x16xf32, #tpu.memory_space<vmem>>, vector<4x16xf32>
    tpu.vector_store %arg9[%c25_174, %c0_175], %184 {strides = array<i32>} : memref<36x16xf32, #tpu.memory_space<vmem>>, vector<4x16xf32>,
    %cst_176 = arith.constant 0.000000e+00 : f32
    %186 = vector.broadcast %cst_176 : f32 to vector<22x16xf32>
    %c0_177 = arith.constant 0 : index
    %c0_178 = arith.constant 0 : index
    %187 = vector.load %arg9[%c0_177, %c0_178] : memref<36x16xf32, #tpu.memory_space<vmem>>, vector<22x16xf32>
    %188 = arith.truncf %187 : vector<22x16xf32> to vector<22x16xbf16>
    %c0_179 = arith.constant 0 : index
    %c0_180 = arith.constant 0 : index
    %c0_181 = arith.constant 0 : index
    %189 = vector.load %arg6[%c0_179, %c0_180, %c0_181] : memref<9x16x16xbf16, #tpu.memory_space<vmem>>, vector<1x16x16xbf16>
    %190 = vector.shape_cast %189 : vector<1x16x16xbf16> to vector<16x16xbf16>
    %cst_182 = arith.constant dense<0.000000e+00> : vector<22x16xf32>
    %191 = tpu.matmul %188, %190, %cst_182 {dimension_numbers = #tpu.dot_dimension_numbers<[1], [0], [0], [1], [0, 0, 1, 1], [], []>} : vector<22x16xbf16>, vector<16x16xbf16>, vector<22x16xf32> -> vector<22x16xf32>
    %192 = arith.addf %186, %191 : vector<22x16xf32>
    %c1_183 = arith.constant 1 : index
    %c0_184 = arith.constant 0 : index
    %193 = vector.load %arg9[%c1_183, %c0_184] : memref<36x16xf32, #tpu.memory_space<vmem>>, vector<22x16xf32>
    %194 = arith.truncf %193 : vector<22x16xf32> to vector<22x16xbf16>
    %c1_185 = arith.constant 1 : index
    %c0_186 = arith.constant 0 : index
    %c0_187 = arith.constant 0 : index
    %195 = vector.load %arg6[%c1_185, %c0_186, %c0_187] : memref<9x16x16xbf16, #tpu.memory_space<vmem>>, vector<1x16x16xbf16>
    %196 = vector.shape_cast %195 : vector<1x16x16xbf16> to vector<16x16xbf16>
    %cst_188 = arith.constant dense<0.000000e+00> : vector<22x16xf32>
    %197 = tpu.matmul %194, %196, %cst_188 {dimension_numbers = #tpu.dot_dimension_numbers<[1], [0], [0], [1], [0, 0, 1, 1], [], []>} : vector<22x16xbf16>, vector<16x16xbf16>, vector<22x16xf32> -> vector<22x16xf32>
    %198 = arith.addf %192, %197 : vector<22x16xf32>
    %c2_189 = arith.constant 2 : index
    %c0_190 = arith.constant 0 : index
    %199 = vector.load %arg9[%c2_189, %c0_190] : memref<36x16xf32, #tpu.memory_space<vmem>>, vector<22x16xf32>
    %200 = arith.truncf %199 : vector<22x16xf32> to vector<22x16xbf16>
    %c2_191 = arith.constant 2 : index
    %c0_192 = arith.constant 0 : index
    %c0_193 = arith.constant 0 : index
    %201 = vector.load %arg6[%c2_191, %c0_192, %c0_193] : memref<9x16x16xbf16, #tpu.memory_space<vmem>>, vector<1x16x16xbf16>
    %202 = vector.shape_cast %201 : vector<1x16x16xbf16> to vector<16x16xbf16>
    %cst_194 = arith.constant dense<0.000000e+00> : vector<22x16xf32>
    %203 = tpu.matmul %200, %202, %cst_194 {dimension_numbers = #tpu.dot_dimension_numbers<[1], [0], [0], [1], [0, 0, 1, 1], [], []>} : vector<22x16xbf16>, vector<16x16xbf16>, vector<22x16xf32> -> vector<22x16xf32>
    %204 = arith.addf %198, %203 : vector<22x16xf32>
    %c6_195 = arith.constant 6 : index
    %c0_196 = arith.constant 0 : index
    %205 = vector.load %arg9[%c6_195, %c0_196] : memref<36x16xf32, #tpu.memory_space<vmem>>, vector<22x16xf32>
    %206 = arith.truncf %205 : vector<22x16xf32> to vector<22x16xbf16>
    %c3_197 = arith.constant 3 : index
    %c0_198 = arith.constant 0 : index
    %c0_199 = arith.constant 0 : index
    %207 = vector.load %arg6[%c3_197, %c0_198, %c0_199] : memref<9x16x16xbf16, #tpu.memory_space<vmem>>, vector<1x16x16xbf16>
    %208 = vector.shape_cast %207 : vector<1x16x16xbf16> to vector<16x16xbf16>
    %cst_200 = arith.constant dense<0.000000e+00> : vector<22x16xf32>
    %209 = tpu.matmul %206, %208, %cst_200 {dimension_numbers = #tpu.dot_dimension_numbers<[1], [0], [0], [1], [0, 0, 1, 1], [], []>} : vector<22x16xbf16>, vector<16x16xbf16>, vector<22x16xf32> -> vector<22x16xf32>
    %210 = arith.addf %204, %209 : vector<22x16xf32>
    %c7_201 = arith.constant 7 : index
    %c0_202 = arith.constant 0 : index
    %211 = vector.load %arg9[%c7_201, %c0_202] : memref<36x16xf32, #tpu.memory_space<vmem>>, vector<22x16xf32>
    %212 = arith.truncf %211 : vector<22x16xf32> to vector<22x16xbf16>
    %c4_203 = arith.constant 4 : index
    %c0_204 = arith.constant 0 : index
    %c0_205 = arith.constant 0 : index
    %213 = vector.load %arg6[%c4_203, %c0_204, %c0_205] : memref<9x16x16xbf16, #tpu.memory_space<vmem>>, vector<1x16x16xbf16>
    %214 = vector.shape_cast %213 : vector<1x16x16xbf16> to vector<16x16xbf16>
    %cst_206 = arith.constant dense<0.000000e+00> : vector<22x16xf32>
    %215 = tpu.matmul %212, %214, %cst_206 {dimension_numbers = #tpu.dot_dimension_numbers<[1], [0], [0], [1], [0, 0, 1, 1], [], []>} : vector<22x16xbf16>, vector<16x16xbf16>, vector<22x16xf32> -> vector<22x16xf32>
    %216 = arith.addf %210, %215 : vector<22x16xf32>
    %c8_207 = arith.constant 8 : index
    %c0_208 = arith.constant 0 : index
    %217 = vector.load %arg9[%c8_207, %c0_208] : memref<36x16xf32, #tpu.memory_space<vmem>>, vector<22x16xf32>
    %218 = arith.truncf %217 : vector<22x16xf32> to vector<22x16xbf16>
    %c5_209 = arith.constant 5 : index
    %c0_210 = arith.constant 0 : index
    %c0_211 = arith.constant 0 : index
    %219 = vector.load %arg6[%c5_209, %c0_210, %c0_211] : memref<9x16x16xbf16, #tpu.memory_space<vmem>>, vector<1x16x16xbf16>
    %220 = vector.shape_cast %219 : vector<1x16x16xbf16> to vector<16x16xbf16>
    %cst_212 = arith.constant dense<0.000000e+00> : vector<22x16xf32>
    %221 = tpu.matmul %218, %220, %cst_212 {dimension_numbers = #tpu.dot_dimension_numbers<[1], [0], [0], [1], [0, 0, 1, 1], [], []>} : vector<22x16xbf16>, vector<16x16xbf16>, vector<22x16xf32> -> vector<22x16xf32>
    %222 = arith.addf %216, %221 : vector<22x16xf32>
    %c12_213 = arith.constant 12 : index
    %c0_214 = arith.constant 0 : index
    %223 = vector.load %arg9[%c12_213, %c0_214] : memref<36x16xf32, #tpu.memory_space<vmem>>, vector<22x16xf32>
    %224 = arith.truncf %223 : vector<22x16xf32> to vector<22x16xbf16>
    %c6_215 = arith.constant 6 : index
    %c0_216 = arith.constant 0 : index
    %c0_217 = arith.constant 0 : index
    %225 = vector.load %arg6[%c6_215, %c0_216, %c0_217] : memref<9x16x16xbf16, #tpu.memory_space<vmem>>, vector<1x16x16xbf16>
    %226 = vector.shape_cast %225 : vector<1x16x16xbf16> to vector<16x16xbf16>
    %cst_218 = arith.constant dense<0.000000e+00> : vector<22x16xf32>
    %227 = tpu.matmul %224, %226, %cst_218 {dimension_numbers = #tpu.dot_dimension_numbers<[1], [0], [0], [1], [0, 0, 1, 1], [], []>} : vector<22x16xbf16>, vector<16x16xbf16>, vector<22x16xf32> -> vector<22x16xf32>
    %228 = arith.addf %222, %227 : vector<22x16xf32>
    %c13_219 = arith.constant 13 : index
    %c0_220 = arith.constant 0 : index
    %229 = vector.load %arg9[%c13_219, %c0_220] : memref<36x16xf32, #tpu.memory_space<vmem>>, vector<22x16xf32>
    %230 = arith.truncf %229 : vector<22x16xf32> to vector<22x16xbf16>
    %c7_221 = arith.constant 7 : index
    %c0_222 = arith.constant 0 : index
    %c0_223 = arith.constant 0 : index
    %231 = vector.load %arg6[%c7_221, %c0_222, %c0_223] : memref<9x16x16xbf16, #tpu.memory_space<vmem>>, vector<1x16x16xbf16>
    %232 = vector.shape_cast %231 : vector<1x16x16xbf16> to vector<16x16xbf16>
    %cst_224 = arith.constant dense<0.000000e+00> : vector<22x16xf32>
    %233 = tpu.matmul %230, %232, %cst_224 {dimension_numbers = #tpu.dot_dimension_numbers<[1], [0], [0], [1], [0, 0, 1, 1], [], []>} : vector<22x16xbf16>, vector<16x16xbf16>, vector<22x16xf32> -> vector<22x16xf32>
    %234 = arith.addf %228, %233 : vector<22x16xf32>
    %c14_225 = arith.constant 14 : index
    %c0_226 = arith.constant 0 : index
    %235 = vector.load %arg9[%c14_225, %c0_226] : memref<36x16xf32, #tpu.memory_space<vmem>>, vector<22x16xf32>
    %236 = arith.truncf %235 : vector<22x16xf32> to vector<22x16xbf16>
    %c8_227 = arith.constant 8 : index
    %c0_228 = arith.constant 0 : index
    %c0_229 = arith.constant 0 : index
    %237 = vector.load %arg6[%c8_227, %c0_228, %c0_229] : memref<9x16x16xbf16, #tpu.memory_space<vmem>>, vector<1x16x16xbf16>
    %238 = vector.shape_cast %237 : vector<1x16x16xbf16> to vector<16x16xbf16>
    %cst_230 = arith.constant dense<0.000000e+00> : vector<22x16xf32>
    %239 = tpu.matmul %236, %238, %cst_230 {dimension_numbers = #tpu.dot_dimension_numbers<[1], [0], [0], [1], [0, 0, 1, 1], [], []>} : vector<22x16xbf16>, vector<16x16xbf16>, vector<22x16xf32> -> vector<22x16xf32>
    %240 = arith.addf %234, %239 : vector<22x16xf32>
    %c0_231 = arith.constant 0 : index
    %c0_232 = arith.constant 0 : index
    %241 = vector.load %arg7[%c0_231, %c0_232] : memref<1x16xf32, #tpu.memory_space<vmem>>, vector<1x16xf32>
    %242 = vector.broadcast %241 : vector<1x16xf32> to vector<22x16xf32>
    %243 = arith.addf %240, %242 : vector<22x16xf32>
    %244 = vector.extract_strided_slice %243 {offsets = [0, 0], sizes = [4, 16], strides = [1, 1]} : vector<22x16xf32> to vector<4x16xf32>
    %245 = vector.extract_strided_slice %104 {offsets = [0, 0], sizes = [4, 16], strides = [1, 1]} : vector<19x16xf32> to vector<4x16xf32>
    %246 = arith.addf %244, %245 : vector<4x16xf32>
    %c0_233 = arith.constant 0 : index
    %c0_234 = arith.constant 0 : index
    %c0_235 = arith.constant 0 : index
    %c0_236 = arith.constant 0 : index
    %247 = vector.load %arg8[%c0_233, %c0_234, %c0_235, %c0_236] : memref<1x4x4x16xf32, #tpu.memory_space<vmem>>, vector<1x1x4x16xf32>
    %248 = vector.shape_cast %247 : vector<1x1x4x16xf32> to vector<4x16xf32>
    %249 = vector.shape_cast %246 : vector<4x16xf32> to vector<1x1x4x16xf32>
    tpu.vector_store %arg8[%c0_233, %c0_234, %c0_235, %c0_236], %249 {strides = array<i32>} : memref<1x4x4x16xf32, #tpu.memory_space<vmem>>, vector<1x1x4x16xf32>,
    %250 = vector.extract_strided_slice %243 {offsets = [6, 0], sizes = [4, 16], strides = [1, 1]} : vector<22x16xf32> to vector<4x16xf32>
    %251 = vector.extract_strided_slice %104 {offsets = [5, 0], sizes = [4, 16], strides = [1, 1]} : vector<19x16xf32> to vector<4x16xf32>
    %252 = arith.addf %250, %251 : vector<4x16xf32>
    %c0_237 = arith.constant 0 : index
    %c1_238 = arith.constant 1 : index
    %c0_239 = arith.constant 0 : index
    %c0_240 = arith.constant 0 : index
    %253 = vector.load %arg8[%c0_237, %c1_238, %c0_239, %c0_240] : memref<1x4x4x16xf32, #tpu.memory_space<vmem>>, vector<1x1x4x16xf32>
    %254 = vector.shape_cast %253 : vector<1x1x4x16xf32> to vector<4x16xf32>
    %255 = vector.shape_cast %252 : vector<4x16xf32> to vector<1x1x4x16xf32>
    tpu.vector_store %arg8[%c0_237, %c1_238, %c0_239, %c0_240], %255 {strides = array<i32>} : memref<1x4x4x16xf32, #tpu.memory_space<vmem>>, vector<1x1x4x16xf32>,
    %256 = vector.extract_strided_slice %243 {offsets = [12, 0], sizes = [4, 16], strides = [1, 1]} : vector<22x16xf32> to vector<4x16xf32>
    %257 = vector.extract_strided_slice %104 {offsets = [10, 0], sizes = [4, 16], strides = [1, 1]} : vector<19x16xf32> to vector<4x16xf32>
    %258 = arith.addf %256, %257 : vector<4x16xf32>
    %c0_241 = arith.constant 0 : index
    %c2_242 = arith.constant 2 : index
    %c0_243 = arith.constant 0 : index
    %c0_244 = arith.constant 0 : index
    %259 = vector.load %arg8[%c0_241, %c2_242, %c0_243, %c0_244] : memref<1x4x4x16xf32, #tpu.memory_space<vmem>>, vector<1x1x4x16xf32>
    %260 = vector.shape_cast %259 : vector<1x1x4x16xf32> to vector<4x16xf32>
    %261 = vector.shape_cast %258 : vector<4x16xf32> to vector<1x1x4x16xf32>
    tpu.vector_store %arg8[%c0_241, %c2_242, %c0_243, %c0_244], %261 {strides = array<i32>} : memref<1x4x4x16xf32, #tpu.memory_space<vmem>>, vector<1x1x4x16xf32>,
    %262 = vector.extract_strided_slice %243 {offsets = [18, 0], sizes = [4, 16], strides = [1, 1]} : vector<22x16xf32> to vector<4x16xf32>
    %263 = vector.extract_strided_slice %104 {offsets = [15, 0], sizes = [4, 16], strides = [1, 1]} : vector<19x16xf32> to vector<4x16xf32>
    %264 = arith.addf %262, %263 : vector<4x16xf32>
    %c0_245 = arith.constant 0 : index
    %c3_246 = arith.constant 3 : index
    %c0_247 = arith.constant 0 : index
    %c0_248 = arith.constant 0 : index
    %265 = vector.load %arg8[%c0_245, %c3_246, %c0_247, %c0_248] : memref<1x4x4x16xf32, #tpu.memory_space<vmem>>, vector<1x1x4x16xf32>
    %266 = vector.shape_cast %265 : vector<1x1x4x16xf32> to vector<4x16xf32>
    %267 = vector.shape_cast %264 : vector<4x16xf32> to vector<1x1x4x16xf32>
    tpu.vector_store %arg8[%c0_245, %c3_246, %c0_247, %c0_248], %267 {strides = array<i32>} : memref<1x4x4x16xf32, #tpu.memory_space<vmem>>, vector<1x1x4x16xf32>,
    return
  }
  func.func @transform_0(%arg0: i32) -> (i32, i32, i32) {
    %c0_i32 = arith.constant 0 : i32
    %c0_i32_0 = arith.constant 0 : i32
    %c0_i32_1 = arith.constant 0 : i32
    return %arg0, %c0_i32, %c0_i32_0 : i32, i32, i32
  }
  func.func @transform_1(%arg0: i32) -> (i32, i32, i32) {
    %c0_i32 = arith.constant 0 : i32
    %c0_i32_0 = arith.constant 0 : i32
    %c0_i32_1 = arith.constant 0 : i32
    %c0_i32_2 = arith.constant 0 : i32
    return %c0_i32, %c0_i32_0, %c0_i32_1 : i32, i32, i32
  }
  func.func @transform_2(%arg0: i32) -> (i32, i32) {
    %c0_i32 = arith.constant 0 : i32
    %c0_i32_0 = arith.constant 0 : i32
    %c0_i32_1 = arith.constant 0 : i32
    return %c0_i32, %c0_i32_0 : i32, i32
  }
  func.func @transform_3(%arg0: i32) -> (i32, i32, i32) {
    %c0_i32 = arith.constant 0 : i32
    %c0_i32_0 = arith.constant 0 : i32
    %c0_i32_1 = arith.constant 0 : i32
    %c0_i32_2 = arith.constant 0 : i32
    return %c0_i32, %c0_i32_0, %c0_i32_1 : i32, i32, i32
  }
  func.func @transform_4(%arg0: i32) -> (i32, i32) {
    %c0_i32 = arith.constant 0 : i32
    %c0_i32_0 = arith.constant 0 : i32
    %c0_i32_1 = arith.constant 0 : i32
    return %c0_i32, %c0_i32_0 : i32, i32
  }
  func.func @transform_5(%arg0: i32) -> (i32, i32, i32) {
    %c0_i32 = arith.constant 0 : i32
    %c0_i32_0 = arith.constant 0 : i32
    %c0_i32_1 = arith.constant 0 : i32
    %c0_i32_2 = arith.constant 0 : i32
    return %c0_i32, %c0_i32_0, %c0_i32_1 : i32, i32, i32
  }
  func.func @transform_6(%arg0: i32) -> (i32, i32) {
    %c0_i32 = arith.constant 0 : i32
    %c0_i32_0 = arith.constant 0 : i32
    %c0_i32_1 = arith.constant 0 : i32
    return %c0_i32, %c0_i32_0 : i32, i32
  }
  func.func @transform_7(%arg0: i32) -> (i32, i32, i32, i32) {
    %c0_i32 = arith.constant 0 : i32
    %c0_i32_0 = arith.constant 0 : i32
    %c0_i32_1 = arith.constant 0 : i32
    %c0_i32_2 = arith.constant 0 : i32
    return %arg0, %c0_i32, %c0_i32_0, %c0_i32_1 : i32, i32, i32, i32
  }
}

module attributes {stable_mosaic.version = 11 : i64} {
  func.func @_mid_kernel(%arg0: i32, %arg1: memref<1x16x16xf32, #tpu.memory_space<vmem>>, %arg2: memref<2x16x16xbf16, #tpu.memory_space<vmem>>, %arg3: memref<2x1x16xf32, #tpu.memory_space<vmem>>, %arg4: memref<2x16x16xbf16, #tpu.memory_space<vmem>>, %arg5: memref<2x1x16xf32, #tpu.memory_space<vmem>>, %arg6: memref<2x16x16xbf16, #tpu.memory_space<vmem>>, %arg7: memref<2x1x16xf32, #tpu.memory_space<vmem>>, %arg8: memref<2x16x16xbf16, #tpu.memory_space<vmem>>, %arg9: memref<1x16xf32, #tpu.memory_space<vmem>>, %arg10: memref<9x16x16xbf16, #tpu.memory_space<vmem>>, %arg11: memref<1x16xf32, #tpu.memory_space<vmem>>, %arg12: memref<9x16x16xbf16, #tpu.memory_space<vmem>>, %arg13: memref<1x16xf32, #tpu.memory_space<vmem>>, %arg14: memref<9x16x8xbf16, #tpu.memory_space<vmem>>, %arg15: memref<1x8xf32, #tpu.memory_space<vmem>>, %arg16: memref<1x4x4x8xf32, #tpu.memory_space<vmem>>, %arg17: memref<36x16xf32, #tpu.memory_space<vmem>>) attributes {dimension_semantics = [#tpu.dimension_semantics<parallel>], iteration_bounds = array<i64: 2>, scalar_prefetch = 0 : i64, scratch_operands = 1 : i64, tpu.core_type = #tpu.core_type<tc>, window_params = [{transform_indices = @transform_0, window_bounds = array<i64: 1, 16, 16>}, {pipeline_mode = #tpu.pipeline_mode<synchronous>, transform_indices = @transform_1, window_bounds = array<i64: 2, 16, 16>}, {pipeline_mode = #tpu.pipeline_mode<synchronous>, transform_indices = @transform_2, window_bounds = array<i64: 2, 1, 16>}, {pipeline_mode = #tpu.pipeline_mode<synchronous>, transform_indices = @transform_3, window_bounds = array<i64: 2, 16, 16>}, {pipeline_mode = #tpu.pipeline_mode<synchronous>, transform_indices = @transform_4, window_bounds = array<i64: 2, 1, 16>}, {pipeline_mode = #tpu.pipeline_mode<synchronous>, transform_indices = @transform_5, window_bounds = array<i64: 2, 16, 16>}, {pipeline_mode = #tpu.pipeline_mode<synchronous>, transform_indices = @transform_6, window_bounds = array<i64: 2, 1, 16>}, {pipeline_mode = #tpu.pipeline_mode<synchronous>, transform_indices = @transform_7, window_bounds = array<i64: 2, 16, 16>}, {pipeline_mode = #tpu.pipeline_mode<synchronous>, transform_indices = @transform_8, window_bounds = array<i64: 1, 16>}, {pipeline_mode = #tpu.pipeline_mode<synchronous>, transform_indices = @transform_9, window_bounds = array<i64: 9, 16, 16>}, {pipeline_mode = #tpu.pipeline_mode<synchronous>, transform_indices = @transform_10, window_bounds = array<i64: 1, 16>}, {pipeline_mode = #tpu.pipeline_mode<synchronous>, transform_indices = @transform_11, window_bounds = array<i64: 9, 16, 16>}, {pipeline_mode = #tpu.pipeline_mode<synchronous>, transform_indices = @transform_12, window_bounds = array<i64: 1, 16>}, {pipeline_mode = #tpu.pipeline_mode<synchronous>, transform_indices = @transform_13, window_bounds = array<i64: 9, 16, 8>}, {pipeline_mode = #tpu.pipeline_mode<synchronous>, transform_indices = @transform_14, window_bounds = array<i64: 1, 8>}, {transform_indices = @transform_15, window_bounds = array<i64: 1, 4, 4, 8>}]} {
    %c0 = arith.constant 0 : index
    %c0_0 = arith.constant 0 : index
    %c0_1 = arith.constant 0 : index
    %0 = vector.load %arg1[%c0, %c0_0, %c0_1] : memref<1x16x16xf32, #tpu.memory_space<vmem>>, vector<1x16x16xf32>
    %1 = vector.shape_cast %0 : vector<1x16x16xf32> to vector<16x16xf32>
    %2 = arith.truncf %1 : vector<16x16xf32> to vector<16x16xbf16>
    %cst = arith.constant 0.000000e+00 : f32
    %3 = vector.broadcast %cst : f32 to vector<16x16xf32>
    %c0_2 = arith.constant 0 : index
    %c0_3 = arith.constant 0 : index
    %c0_4 = arith.constant 0 : index
    %4 = vector.load %arg2[%c0_2, %c0_3, %c0_4] : memref<2x16x16xbf16, #tpu.memory_space<vmem>>, vector<1x16x16xbf16>
    %5 = vector.shape_cast %4 : vector<1x16x16xbf16> to vector<16x16xbf16>
    %cst_5 = arith.constant dense<0.000000e+00> : vector<16x16xf32>
    %6 = tpu.matmul %2, %5, %cst_5 {dimension_numbers = #tpu.dot_dimension_numbers<[1], [0], [0], [1], [0, 0, 1, 1], [], []>} : vector<16x16xbf16>, vector<16x16xbf16>, vector<16x16xf32> -> vector<16x16xf32>
    %c0_6 = arith.constant 0 : index
    %c0_7 = arith.constant 0 : index
    %c0_8 = arith.constant 0 : index
    %7 = vector.load %arg3[%c0_6, %c0_7, %c0_8] : memref<2x1x16xf32, #tpu.memory_space<vmem>>, vector<1x1x16xf32>
    %8 = vector.shape_cast %7 : vector<1x1x16xf32> to vector<1x16xf32>
    %9 = vector.broadcast %8 : vector<1x16xf32> to vector<16x16xf32>
    %10 = arith.addf %6, %9 : vector<16x16xf32>
    %c0_9 = arith.constant 0 : index
    %c0_10 = arith.constant 0 : index
    %c0_11 = arith.constant 0 : index
    %11 = vector.load %arg4[%c0_9, %c0_10, %c0_11] : memref<2x16x16xbf16, #tpu.memory_space<vmem>>, vector<1x16x16xbf16>
    %12 = vector.shape_cast %11 : vector<1x16x16xbf16> to vector<16x16xbf16>
    %cst_12 = arith.constant dense<0.000000e+00> : vector<16x16xf32>
    %13 = tpu.matmul %2, %12, %cst_12 {dimension_numbers = #tpu.dot_dimension_numbers<[1], [0], [0], [1], [0, 0, 1, 1], [], []>} : vector<16x16xbf16>, vector<16x16xbf16>, vector<16x16xf32> -> vector<16x16xf32>
    %c0_13 = arith.constant 0 : index
    %c0_14 = arith.constant 0 : index
    %c0_15 = arith.constant 0 : index
    %14 = vector.load %arg5[%c0_13, %c0_14, %c0_15] : memref<2x1x16xf32, #tpu.memory_space<vmem>>, vector<1x1x16xf32>
    %15 = vector.shape_cast %14 : vector<1x1x16xf32> to vector<1x16xf32>
    %16 = vector.broadcast %15 : vector<1x16xf32> to vector<16x16xf32>
    %17 = arith.addf %13, %16 : vector<16x16xf32>
    %c0_16 = arith.constant 0 : index
    %c0_17 = arith.constant 0 : index
    %c0_18 = arith.constant 0 : index
    %18 = vector.load %arg6[%c0_16, %c0_17, %c0_18] : memref<2x16x16xbf16, #tpu.memory_space<vmem>>, vector<1x16x16xbf16>
    %19 = vector.shape_cast %18 : vector<1x16x16xbf16> to vector<16x16xbf16>
    %cst_19 = arith.constant dense<0.000000e+00> : vector<16x16xf32>
    %20 = tpu.matmul %2, %19, %cst_19 {dimension_numbers = #tpu.dot_dimension_numbers<[1], [0], [0], [1], [0, 0, 1, 1], [], []>} : vector<16x16xbf16>, vector<16x16xbf16>, vector<16x16xf32> -> vector<16x16xf32>
    %c0_20 = arith.constant 0 : index
    %c0_21 = arith.constant 0 : index
    %c0_22 = arith.constant 0 : index
    %21 = vector.load %arg7[%c0_20, %c0_21, %c0_22] : memref<2x1x16xf32, #tpu.memory_space<vmem>>, vector<1x1x16xf32>
    %22 = vector.shape_cast %21 : vector<1x1x16xf32> to vector<1x16xf32>
    %23 = vector.broadcast %22 : vector<1x16xf32> to vector<16x16xf32>
    %24 = arith.addf %20, %23 : vector<16x16xf32>
    %25 = arith.truncf %10 : vector<16x16xf32> to vector<16x16xbf16>
    %26 = arith.truncf %17 : vector<16x16xf32> to vector<16x16xbf16>
    %cst_23 = arith.constant dense<0.000000e+00> : vector<16x16xf32>
    %27 = tpu.matmul %25, %26, %cst_23 {dimension_numbers = #tpu.dot_dimension_numbers<[1], [1], [0], [0], [0, 0, 1, 0], [], []>} : vector<16x16xbf16>, vector<16x16xbf16>, vector<16x16xf32> -> vector<16x16xf32>
    %cst_24 = arith.constant 2.500000e-01 : f32
    %28 = vector.broadcast %cst_24 : f32 to vector<16x16xf32>
    %29 = arith.mulf %27, %28 : vector<16x16xf32>
    %cst_25 = arith.constant dense<0xFF800000> : vector<16xf32>
    %30 = vector.multi_reduction <maximumf>, %29, %cst_25 [1] : vector<16x16xf32> to vector<16xf32>
    %31 = vector.shape_cast %30 : vector<16xf32> to vector<16x1xf32>
    %32 = vector.broadcast %31 : vector<16x1xf32> to vector<16x16xf32>
    %33 = arith.subf %29, %32 : vector<16x16xf32>
    %34 = math.exp %33 : vector<16x16xf32>
    %cst_26 = arith.constant dense<0.000000e+00> : vector<16xf32>
    %35 = vector.multi_reduction <add>, %34, %cst_26 [1] : vector<16x16xf32> to vector<16xf32>
    %36 = vector.shape_cast %35 : vector<16xf32> to vector<16x1xf32>
    %37 = tpu.reciprocal %36 {approx = true} : vector<16x1xf32> -> vector<16x1xf32>
    %38 = vector.broadcast %37 : vector<16x1xf32> to vector<16x16xf32>
    %39 = arith.mulf %34, %38 : vector<16x16xf32>
    %40 = arith.truncf %39 : vector<16x16xf32> to vector<16x16xbf16>
    %41 = arith.truncf %24 : vector<16x16xf32> to vector<16x16xbf16>
    %cst_27 = arith.constant dense<0.000000e+00> : vector<16x16xf32>
    %42 = tpu.matmul %40, %41, %cst_27 {dimension_numbers = #tpu.dot_dimension_numbers<[1], [0], [0], [1], [0, 0, 1, 1], [], []>} : vector<16x16xbf16>, vector<16x16xbf16>, vector<16x16xf32> -> vector<16x16xf32>
    %43 = arith.truncf %42 : vector<16x16xf32> to vector<16x16xbf16>
    %c0_28 = arith.constant 0 : index
    %c0_29 = arith.constant 0 : index
    %c0_30 = arith.constant 0 : index
    %44 = vector.load %arg8[%c0_28, %c0_29, %c0_30] : memref<2x16x16xbf16, #tpu.memory_space<vmem>>, vector<1x16x16xbf16>
    %45 = vector.shape_cast %44 : vector<1x16x16xbf16> to vector<16x16xbf16>
    %cst_31 = arith.constant dense<0.000000e+00> : vector<16x16xf32>
    %46 = tpu.matmul %43, %45, %cst_31 {dimension_numbers = #tpu.dot_dimension_numbers<[1], [0], [0], [1], [0, 0, 1, 1], [], []>} : vector<16x16xbf16>, vector<16x16xbf16>, vector<16x16xf32> -> vector<16x16xf32>
    %47 = arith.addf %3, %46 : vector<16x16xf32>
    %c1 = arith.constant 1 : index
    %c0_32 = arith.constant 0 : index
    %c0_33 = arith.constant 0 : index
    %48 = vector.load %arg2[%c1, %c0_32, %c0_33] : memref<2x16x16xbf16, #tpu.memory_space<vmem>>, vector<1x16x16xbf16>
    %49 = vector.shape_cast %48 : vector<1x16x16xbf16> to vector<16x16xbf16>
    %cst_34 = arith.constant dense<0.000000e+00> : vector<16x16xf32>
    %50 = tpu.matmul %2, %49, %cst_34 {dimension_numbers = #tpu.dot_dimension_numbers<[1], [0], [0], [1], [0, 0, 1, 1], [], []>} : vector<16x16xbf16>, vector<16x16xbf16>, vector<16x16xf32> -> vector<16x16xf32>
    %c1_35 = arith.constant 1 : index
    %c0_36 = arith.constant 0 : index
    %c0_37 = arith.constant 0 : index
    %51 = vector.load %arg3[%c1_35, %c0_36, %c0_37] : memref<2x1x16xf32, #tpu.memory_space<vmem>>, vector<1x1x16xf32>
    %52 = vector.shape_cast %51 : vector<1x1x16xf32> to vector<1x16xf32>
    %53 = vector.broadcast %52 : vector<1x16xf32> to vector<16x16xf32>
    %54 = arith.addf %50, %53 : vector<16x16xf32>
    %c1_38 = arith.constant 1 : index
    %c0_39 = arith.constant 0 : index
    %c0_40 = arith.constant 0 : index
    %55 = vector.load %arg4[%c1_38, %c0_39, %c0_40] : memref<2x16x16xbf16, #tpu.memory_space<vmem>>, vector<1x16x16xbf16>
    %56 = vector.shape_cast %55 : vector<1x16x16xbf16> to vector<16x16xbf16>
    %cst_41 = arith.constant dense<0.000000e+00> : vector<16x16xf32>
    %57 = tpu.matmul %2, %56, %cst_41 {dimension_numbers = #tpu.dot_dimension_numbers<[1], [0], [0], [1], [0, 0, 1, 1], [], []>} : vector<16x16xbf16>, vector<16x16xbf16>, vector<16x16xf32> -> vector<16x16xf32>
    %c1_42 = arith.constant 1 : index
    %c0_43 = arith.constant 0 : index
    %c0_44 = arith.constant 0 : index
    %58 = vector.load %arg5[%c1_42, %c0_43, %c0_44] : memref<2x1x16xf32, #tpu.memory_space<vmem>>, vector<1x1x16xf32>
    %59 = vector.shape_cast %58 : vector<1x1x16xf32> to vector<1x16xf32>
    %60 = vector.broadcast %59 : vector<1x16xf32> to vector<16x16xf32>
    %61 = arith.addf %57, %60 : vector<16x16xf32>
    %c1_45 = arith.constant 1 : index
    %c0_46 = arith.constant 0 : index
    %c0_47 = arith.constant 0 : index
    %62 = vector.load %arg6[%c1_45, %c0_46, %c0_47] : memref<2x16x16xbf16, #tpu.memory_space<vmem>>, vector<1x16x16xbf16>
    %63 = vector.shape_cast %62 : vector<1x16x16xbf16> to vector<16x16xbf16>
    %cst_48 = arith.constant dense<0.000000e+00> : vector<16x16xf32>
    %64 = tpu.matmul %2, %63, %cst_48 {dimension_numbers = #tpu.dot_dimension_numbers<[1], [0], [0], [1], [0, 0, 1, 1], [], []>} : vector<16x16xbf16>, vector<16x16xbf16>, vector<16x16xf32> -> vector<16x16xf32>
    %c1_49 = arith.constant 1 : index
    %c0_50 = arith.constant 0 : index
    %c0_51 = arith.constant 0 : index
    %65 = vector.load %arg7[%c1_49, %c0_50, %c0_51] : memref<2x1x16xf32, #tpu.memory_space<vmem>>, vector<1x1x16xf32>
    %66 = vector.shape_cast %65 : vector<1x1x16xf32> to vector<1x16xf32>
    %67 = vector.broadcast %66 : vector<1x16xf32> to vector<16x16xf32>
    %68 = arith.addf %64, %67 : vector<16x16xf32>
    %69 = arith.truncf %54 : vector<16x16xf32> to vector<16x16xbf16>
    %70 = arith.truncf %61 : vector<16x16xf32> to vector<16x16xbf16>
    %cst_52 = arith.constant dense<0.000000e+00> : vector<16x16xf32>
    %71 = tpu.matmul %69, %70, %cst_52 {dimension_numbers = #tpu.dot_dimension_numbers<[1], [1], [0], [0], [0, 0, 1, 0], [], []>} : vector<16x16xbf16>, vector<16x16xbf16>, vector<16x16xf32> -> vector<16x16xf32>
    %cst_53 = arith.constant 2.500000e-01 : f32
    %72 = vector.broadcast %cst_53 : f32 to vector<16x16xf32>
    %73 = arith.mulf %71, %72 : vector<16x16xf32>
    %cst_54 = arith.constant dense<0xFF800000> : vector<16xf32>
    %74 = vector.multi_reduction <maximumf>, %73, %cst_54 [1] : vector<16x16xf32> to vector<16xf32>
    %75 = vector.shape_cast %74 : vector<16xf32> to vector<16x1xf32>
    %76 = vector.broadcast %75 : vector<16x1xf32> to vector<16x16xf32>
    %77 = arith.subf %73, %76 : vector<16x16xf32>
    %78 = math.exp %77 : vector<16x16xf32>
    %cst_55 = arith.constant dense<0.000000e+00> : vector<16xf32>
    %79 = vector.multi_reduction <add>, %78, %cst_55 [1] : vector<16x16xf32> to vector<16xf32>
    %80 = vector.shape_cast %79 : vector<16xf32> to vector<16x1xf32>
    %81 = tpu.reciprocal %80 {approx = true} : vector<16x1xf32> -> vector<16x1xf32>
    %82 = vector.broadcast %81 : vector<16x1xf32> to vector<16x16xf32>
    %83 = arith.mulf %78, %82 : vector<16x16xf32>
    %84 = arith.truncf %83 : vector<16x16xf32> to vector<16x16xbf16>
    %85 = arith.truncf %68 : vector<16x16xf32> to vector<16x16xbf16>
    %cst_56 = arith.constant dense<0.000000e+00> : vector<16x16xf32>
    %86 = tpu.matmul %84, %85, %cst_56 {dimension_numbers = #tpu.dot_dimension_numbers<[1], [0], [0], [1], [0, 0, 1, 1], [], []>} : vector<16x16xbf16>, vector<16x16xbf16>, vector<16x16xf32> -> vector<16x16xf32>
    %87 = arith.truncf %86 : vector<16x16xf32> to vector<16x16xbf16>
    %c1_57 = arith.constant 1 : index
    %c0_58 = arith.constant 0 : index
    %c0_59 = arith.constant 0 : index
    %88 = vector.load %arg8[%c1_57, %c0_58, %c0_59] : memref<2x16x16xbf16, #tpu.memory_space<vmem>>, vector<1x16x16xbf16>
    %89 = vector.shape_cast %88 : vector<1x16x16xbf16> to vector<16x16xbf16>
    %cst_60 = arith.constant dense<0.000000e+00> : vector<16x16xf32>
    %90 = tpu.matmul %87, %89, %cst_60 {dimension_numbers = #tpu.dot_dimension_numbers<[1], [0], [0], [1], [0, 0, 1, 1], [], []>} : vector<16x16xbf16>, vector<16x16xbf16>, vector<16x16xf32> -> vector<16x16xf32>
    %91 = arith.addf %47, %90 : vector<16x16xf32>
    %c0_61 = arith.constant 0 : index
    %c0_62 = arith.constant 0 : index
    %92 = vector.load %arg9[%c0_61, %c0_62] : memref<1x16xf32, #tpu.memory_space<vmem>>, vector<1x16xf32>
    %93 = vector.broadcast %92 : vector<1x16xf32> to vector<16x16xf32>
    %94 = arith.addf %91, %93 : vector<16x16xf32>
    %95 = arith.addf %94, %1 : vector<16x16xf32>
    %cst_63 = arith.constant 0.000000e+00 : f32
    %96 = vector.broadcast %cst_63 : f32 to vector<36x16xf32>
    %c0_64 = arith.constant 0 : index
    %c0_65 = arith.constant 0 : index
    %97 = vector.load %arg17[%c0_64, %c0_65] : memref<36x16xf32, #tpu.memory_space<vmem>>, vector<36x16xf32>
    tpu.vector_store %arg17[%c0_64, %c0_65], %96 {strides = array<i32>} : memref<36x16xf32, #tpu.memory_space<vmem>>, vector<36x16xf32>,
    %98 = vector.extract_strided_slice %95 {offsets = [0, 0], sizes = [4, 16], strides = [1, 1]} : vector<16x16xf32> to vector<4x16xf32>
    %c7 = arith.constant 7 : index
    %c0_66 = arith.constant 0 : index
    %99 = vector.load %arg17[%c7, %c0_66] : memref<36x16xf32, #tpu.memory_space<vmem>>, vector<4x16xf32>
    tpu.vector_store %arg17[%c7, %c0_66], %98 {strides = array<i32>} : memref<36x16xf32, #tpu.memory_space<vmem>>, vector<4x16xf32>,
    %100 = vector.extract_strided_slice %95 {offsets = [4, 0], sizes = [4, 16], strides = [1, 1]} : vector<16x16xf32> to vector<4x16xf32>
    %c13 = arith.constant 13 : index
    %c0_67 = arith.constant 0 : index
    %101 = vector.load %arg17[%c13, %c0_67] : memref<36x16xf32, #tpu.memory_space<vmem>>, vector<4x16xf32>
    tpu.vector_store %arg17[%c13, %c0_67], %100 {strides = array<i32>} : memref<36x16xf32, #tpu.memory_space<vmem>>, vector<4x16xf32>,
    %102 = vector.extract_strided_slice %95 {offsets = [8, 0], sizes = [4, 16], strides = [1, 1]} : vector<16x16xf32> to vector<4x16xf32>
    %c19 = arith.constant 19 : index
    %c0_68 = arith.constant 0 : index
    %103 = vector.load %arg17[%c19, %c0_68] : memref<36x16xf32, #tpu.memory_space<vmem>>, vector<4x16xf32>
    tpu.vector_store %arg17[%c19, %c0_68], %102 {strides = array<i32>} : memref<36x16xf32, #tpu.memory_space<vmem>>, vector<4x16xf32>,
    %104 = vector.extract_strided_slice %95 {offsets = [12, 0], sizes = [4, 16], strides = [1, 1]} : vector<16x16xf32> to vector<4x16xf32>
    %c25 = arith.constant 25 : index
    %c0_69 = arith.constant 0 : index
    %105 = vector.load %arg17[%c25, %c0_69] : memref<36x16xf32, #tpu.memory_space<vmem>>, vector<4x16xf32>
    tpu.vector_store %arg17[%c25, %c0_69], %104 {strides = array<i32>} : memref<36x16xf32, #tpu.memory_space<vmem>>, vector<4x16xf32>,
    %cst_70 = arith.constant 0.000000e+00 : f32
    %106 = vector.broadcast %cst_70 : f32 to vector<22x16xf32>
    %c0_71 = arith.constant 0 : index
    %c0_72 = arith.constant 0 : index
    %107 = vector.load %arg17[%c0_71, %c0_72] : memref<36x16xf32, #tpu.memory_space<vmem>>, vector<22x16xf32>
    %108 = arith.truncf %107 : vector<22x16xf32> to vector<22x16xbf16>
    %c0_73 = arith.constant 0 : index
    %c0_74 = arith.constant 0 : index
    %c0_75 = arith.constant 0 : index
    %109 = vector.load %arg10[%c0_73, %c0_74, %c0_75] : memref<9x16x16xbf16, #tpu.memory_space<vmem>>, vector<1x16x16xbf16>
    %110 = vector.shape_cast %109 : vector<1x16x16xbf16> to vector<16x16xbf16>
    %cst_76 = arith.constant dense<0.000000e+00> : vector<22x16xf32>
    %111 = tpu.matmul %108, %110, %cst_76 {dimension_numbers = #tpu.dot_dimension_numbers<[1], [0], [0], [1], [0, 0, 1, 1], [], []>} : vector<22x16xbf16>, vector<16x16xbf16>, vector<22x16xf32> -> vector<22x16xf32>
    %112 = arith.addf %106, %111 : vector<22x16xf32>
    %c1_77 = arith.constant 1 : index
    %c0_78 = arith.constant 0 : index
    %113 = vector.load %arg17[%c1_77, %c0_78] : memref<36x16xf32, #tpu.memory_space<vmem>>, vector<22x16xf32>
    %114 = arith.truncf %113 : vector<22x16xf32> to vector<22x16xbf16>
    %c1_79 = arith.constant 1 : index
    %c0_80 = arith.constant 0 : index
    %c0_81 = arith.constant 0 : index
    %115 = vector.load %arg10[%c1_79, %c0_80, %c0_81] : memref<9x16x16xbf16, #tpu.memory_space<vmem>>, vector<1x16x16xbf16>
    %116 = vector.shape_cast %115 : vector<1x16x16xbf16> to vector<16x16xbf16>
    %cst_82 = arith.constant dense<0.000000e+00> : vector<22x16xf32>
    %117 = tpu.matmul %114, %116, %cst_82 {dimension_numbers = #tpu.dot_dimension_numbers<[1], [0], [0], [1], [0, 0, 1, 1], [], []>} : vector<22x16xbf16>, vector<16x16xbf16>, vector<22x16xf32> -> vector<22x16xf32>
    %118 = arith.addf %112, %117 : vector<22x16xf32>
    %c2 = arith.constant 2 : index
    %c0_83 = arith.constant 0 : index
    %119 = vector.load %arg17[%c2, %c0_83] : memref<36x16xf32, #tpu.memory_space<vmem>>, vector<22x16xf32>
    %120 = arith.truncf %119 : vector<22x16xf32> to vector<22x16xbf16>
    %c2_84 = arith.constant 2 : index
    %c0_85 = arith.constant 0 : index
    %c0_86 = arith.constant 0 : index
    %121 = vector.load %arg10[%c2_84, %c0_85, %c0_86] : memref<9x16x16xbf16, #tpu.memory_space<vmem>>, vector<1x16x16xbf16>
    %122 = vector.shape_cast %121 : vector<1x16x16xbf16> to vector<16x16xbf16>
    %cst_87 = arith.constant dense<0.000000e+00> : vector<22x16xf32>
    %123 = tpu.matmul %120, %122, %cst_87 {dimension_numbers = #tpu.dot_dimension_numbers<[1], [0], [0], [1], [0, 0, 1, 1], [], []>} : vector<22x16xbf16>, vector<16x16xbf16>, vector<22x16xf32> -> vector<22x16xf32>
    %124 = arith.addf %118, %123 : vector<22x16xf32>
    %c6 = arith.constant 6 : index
    %c0_88 = arith.constant 0 : index
    %125 = vector.load %arg17[%c6, %c0_88] : memref<36x16xf32, #tpu.memory_space<vmem>>, vector<22x16xf32>
    %126 = arith.truncf %125 : vector<22x16xf32> to vector<22x16xbf16>
    %c3 = arith.constant 3 : index
    %c0_89 = arith.constant 0 : index
    %c0_90 = arith.constant 0 : index
    %127 = vector.load %arg10[%c3, %c0_89, %c0_90] : memref<9x16x16xbf16, #tpu.memory_space<vmem>>, vector<1x16x16xbf16>
    %128 = vector.shape_cast %127 : vector<1x16x16xbf16> to vector<16x16xbf16>
    %cst_91 = arith.constant dense<0.000000e+00> : vector<22x16xf32>
    %129 = tpu.matmul %126, %128, %cst_91 {dimension_numbers = #tpu.dot_dimension_numbers<[1], [0], [0], [1], [0, 0, 1, 1], [], []>} : vector<22x16xbf16>, vector<16x16xbf16>, vector<22x16xf32> -> vector<22x16xf32>
    %130 = arith.addf %124, %129 : vector<22x16xf32>
    %c7_92 = arith.constant 7 : index
    %c0_93 = arith.constant 0 : index
    %131 = vector.load %arg17[%c7_92, %c0_93] : memref<36x16xf32, #tpu.memory_space<vmem>>, vector<22x16xf32>
    %132 = arith.truncf %131 : vector<22x16xf32> to vector<22x16xbf16>
    %c4 = arith.constant 4 : index
    %c0_94 = arith.constant 0 : index
    %c0_95 = arith.constant 0 : index
    %133 = vector.load %arg10[%c4, %c0_94, %c0_95] : memref<9x16x16xbf16, #tpu.memory_space<vmem>>, vector<1x16x16xbf16>
    %134 = vector.shape_cast %133 : vector<1x16x16xbf16> to vector<16x16xbf16>
    %cst_96 = arith.constant dense<0.000000e+00> : vector<22x16xf32>
    %135 = tpu.matmul %132, %134, %cst_96 {dimension_numbers = #tpu.dot_dimension_numbers<[1], [0], [0], [1], [0, 0, 1, 1], [], []>} : vector<22x16xbf16>, vector<16x16xbf16>, vector<22x16xf32> -> vector<22x16xf32>
    %136 = arith.addf %130, %135 : vector<22x16xf32>
    %c8 = arith.constant 8 : index
    %c0_97 = arith.constant 0 : index
    %137 = vector.load %arg17[%c8, %c0_97] : memref<36x16xf32, #tpu.memory_space<vmem>>, vector<22x16xf32>
    %138 = arith.truncf %137 : vector<22x16xf32> to vector<22x16xbf16>
    %c5 = arith.constant 5 : index
    %c0_98 = arith.constant 0 : index
    %c0_99 = arith.constant 0 : index
    %139 = vector.load %arg10[%c5, %c0_98, %c0_99] : memref<9x16x16xbf16, #tpu.memory_space<vmem>>, vector<1x16x16xbf16>
    %140 = vector.shape_cast %139 : vector<1x16x16xbf16> to vector<16x16xbf16>
    %cst_100 = arith.constant dense<0.000000e+00> : vector<22x16xf32>
    %141 = tpu.matmul %138, %140, %cst_100 {dimension_numbers = #tpu.dot_dimension_numbers<[1], [0], [0], [1], [0, 0, 1, 1], [], []>} : vector<22x16xbf16>, vector<16x16xbf16>, vector<22x16xf32> -> vector<22x16xf32>
    %142 = arith.addf %136, %141 : vector<22x16xf32>
    %c12 = arith.constant 12 : index
    %c0_101 = arith.constant 0 : index
    %143 = vector.load %arg17[%c12, %c0_101] : memref<36x16xf32, #tpu.memory_space<vmem>>, vector<22x16xf32>
    %144 = arith.truncf %143 : vector<22x16xf32> to vector<22x16xbf16>
    %c6_102 = arith.constant 6 : index
    %c0_103 = arith.constant 0 : index
    %c0_104 = arith.constant 0 : index
    %145 = vector.load %arg10[%c6_102, %c0_103, %c0_104] : memref<9x16x16xbf16, #tpu.memory_space<vmem>>, vector<1x16x16xbf16>
    %146 = vector.shape_cast %145 : vector<1x16x16xbf16> to vector<16x16xbf16>
    %cst_105 = arith.constant dense<0.000000e+00> : vector<22x16xf32>
    %147 = tpu.matmul %144, %146, %cst_105 {dimension_numbers = #tpu.dot_dimension_numbers<[1], [0], [0], [1], [0, 0, 1, 1], [], []>} : vector<22x16xbf16>, vector<16x16xbf16>, vector<22x16xf32> -> vector<22x16xf32>
    %148 = arith.addf %142, %147 : vector<22x16xf32>
    %c13_106 = arith.constant 13 : index
    %c0_107 = arith.constant 0 : index
    %149 = vector.load %arg17[%c13_106, %c0_107] : memref<36x16xf32, #tpu.memory_space<vmem>>, vector<22x16xf32>
    %150 = arith.truncf %149 : vector<22x16xf32> to vector<22x16xbf16>
    %c7_108 = arith.constant 7 : index
    %c0_109 = arith.constant 0 : index
    %c0_110 = arith.constant 0 : index
    %151 = vector.load %arg10[%c7_108, %c0_109, %c0_110] : memref<9x16x16xbf16, #tpu.memory_space<vmem>>, vector<1x16x16xbf16>
    %152 = vector.shape_cast %151 : vector<1x16x16xbf16> to vector<16x16xbf16>
    %cst_111 = arith.constant dense<0.000000e+00> : vector<22x16xf32>
    %153 = tpu.matmul %150, %152, %cst_111 {dimension_numbers = #tpu.dot_dimension_numbers<[1], [0], [0], [1], [0, 0, 1, 1], [], []>} : vector<22x16xbf16>, vector<16x16xbf16>, vector<22x16xf32> -> vector<22x16xf32>
    %154 = arith.addf %148, %153 : vector<22x16xf32>
    %c14 = arith.constant 14 : index
    %c0_112 = arith.constant 0 : index
    %155 = vector.load %arg17[%c14, %c0_112] : memref<36x16xf32, #tpu.memory_space<vmem>>, vector<22x16xf32>
    %156 = arith.truncf %155 : vector<22x16xf32> to vector<22x16xbf16>
    %c8_113 = arith.constant 8 : index
    %c0_114 = arith.constant 0 : index
    %c0_115 = arith.constant 0 : index
    %157 = vector.load %arg10[%c8_113, %c0_114, %c0_115] : memref<9x16x16xbf16, #tpu.memory_space<vmem>>, vector<1x16x16xbf16>
    %158 = vector.shape_cast %157 : vector<1x16x16xbf16> to vector<16x16xbf16>
    %cst_116 = arith.constant dense<0.000000e+00> : vector<22x16xf32>
    %159 = tpu.matmul %156, %158, %cst_116 {dimension_numbers = #tpu.dot_dimension_numbers<[1], [0], [0], [1], [0, 0, 1, 1], [], []>} : vector<22x16xbf16>, vector<16x16xbf16>, vector<22x16xf32> -> vector<22x16xf32>
    %160 = arith.addf %154, %159 : vector<22x16xf32>
    %c0_117 = arith.constant 0 : index
    %c0_118 = arith.constant 0 : index
    %161 = vector.load %arg11[%c0_117, %c0_118] : memref<1x16xf32, #tpu.memory_space<vmem>>, vector<1x16xf32>
    %162 = vector.broadcast %161 : vector<1x16xf32> to vector<22x16xf32>
    %163 = arith.addf %160, %162 : vector<22x16xf32>
    %cst_119 = arith.constant 0.000000e+00 : f32
    %164 = vector.broadcast %cst_119 : f32 to vector<22x16xf32>
    %165 = arith.cmpf oge, %163, %164 : vector<22x16xf32>
    %cst_120 = arith.constant 2.000000e-01 : f32
    %166 = vector.broadcast %cst_120 : f32 to vector<22x16xf32>
    %167 = arith.mulf %166, %163 : vector<22x16xf32>
    %168 = arith.select %165, %163, %167 : vector<22x16xi1>, vector<22x16xf32>
    %169 = vector.extract_strided_slice %168 {offsets = [0, 0], sizes = [4, 16], strides = [1, 1]} : vector<22x16xf32> to vector<4x16xf32>
    %c7_121 = arith.constant 7 : index
    %c0_122 = arith.constant 0 : index
    %170 = vector.load %arg17[%c7_121, %c0_122] : memref<36x16xf32, #tpu.memory_space<vmem>>, vector<4x16xf32>
    tpu.vector_store %arg17[%c7_121, %c0_122], %169 {strides = array<i32>} : memref<36x16xf32, #tpu.memory_space<vmem>>, vector<4x16xf32>,
    %171 = vector.extract_strided_slice %168 {offsets = [6, 0], sizes = [4, 16], strides = [1, 1]} : vector<22x16xf32> to vector<4x16xf32>
    %c13_123 = arith.constant 13 : index
    %c0_124 = arith.constant 0 : index
    %172 = vector.load %arg17[%c13_123, %c0_124] : memref<36x16xf32, #tpu.memory_space<vmem>>, vector<4x16xf32>
    tpu.vector_store %arg17[%c13_123, %c0_124], %171 {strides = array<i32>} : memref<36x16xf32, #tpu.memory_space<vmem>>, vector<4x16xf32>,
    %173 = vector.extract_strided_slice %168 {offsets = [12, 0], sizes = [4, 16], strides = [1, 1]} : vector<22x16xf32> to vector<4x16xf32>
    %c19_125 = arith.constant 19 : index
    %c0_126 = arith.constant 0 : index
    %174 = vector.load %arg17[%c19_125, %c0_126] : memref<36x16xf32, #tpu.memory_space<vmem>>, vector<4x16xf32>
    tpu.vector_store %arg17[%c19_125, %c0_126], %173 {strides = array<i32>} : memref<36x16xf32, #tpu.memory_space<vmem>>, vector<4x16xf32>,
    %175 = vector.extract_strided_slice %168 {offsets = [18, 0], sizes = [4, 16], strides = [1, 1]} : vector<22x16xf32> to vector<4x16xf32>
    %c25_127 = arith.constant 25 : index
    %c0_128 = arith.constant 0 : index
    %176 = vector.load %arg17[%c25_127, %c0_128] : memref<36x16xf32, #tpu.memory_space<vmem>>, vector<4x16xf32>
    tpu.vector_store %arg17[%c25_127, %c0_128], %175 {strides = array<i32>} : memref<36x16xf32, #tpu.memory_space<vmem>>, vector<4x16xf32>,
    %cst_129 = arith.constant 0.000000e+00 : f32
    %177 = vector.broadcast %cst_129 : f32 to vector<22x16xf32>
    %c0_130 = arith.constant 0 : index
    %c0_131 = arith.constant 0 : index
    %178 = vector.load %arg17[%c0_130, %c0_131] : memref<36x16xf32, #tpu.memory_space<vmem>>, vector<22x16xf32>
    %179 = arith.truncf %178 : vector<22x16xf32> to vector<22x16xbf16>
    %c0_132 = arith.constant 0 : index
    %c0_133 = arith.constant 0 : index
    %c0_134 = arith.constant 0 : index
    %180 = vector.load %arg12[%c0_132, %c0_133, %c0_134] : memref<9x16x16xbf16, #tpu.memory_space<vmem>>, vector<1x16x16xbf16>
    %181 = vector.shape_cast %180 : vector<1x16x16xbf16> to vector<16x16xbf16>
    %cst_135 = arith.constant dense<0.000000e+00> : vector<22x16xf32>
    %182 = tpu.matmul %179, %181, %cst_135 {dimension_numbers = #tpu.dot_dimension_numbers<[1], [0], [0], [1], [0, 0, 1, 1], [], []>} : vector<22x16xbf16>, vector<16x16xbf16>, vector<22x16xf32> -> vector<22x16xf32>
    %183 = arith.addf %177, %182 : vector<22x16xf32>
    %c1_136 = arith.constant 1 : index
    %c0_137 = arith.constant 0 : index
    %184 = vector.load %arg17[%c1_136, %c0_137] : memref<36x16xf32, #tpu.memory_space<vmem>>, vector<22x16xf32>
    %185 = arith.truncf %184 : vector<22x16xf32> to vector<22x16xbf16>
    %c1_138 = arith.constant 1 : index
    %c0_139 = arith.constant 0 : index
    %c0_140 = arith.constant 0 : index
    %186 = vector.load %arg12[%c1_138, %c0_139, %c0_140] : memref<9x16x16xbf16, #tpu.memory_space<vmem>>, vector<1x16x16xbf16>
    %187 = vector.shape_cast %186 : vector<1x16x16xbf16> to vector<16x16xbf16>
    %cst_141 = arith.constant dense<0.000000e+00> : vector<22x16xf32>
    %188 = tpu.matmul %185, %187, %cst_141 {dimension_numbers = #tpu.dot_dimension_numbers<[1], [0], [0], [1], [0, 0, 1, 1], [], []>} : vector<22x16xbf16>, vector<16x16xbf16>, vector<22x16xf32> -> vector<22x16xf32>
    %189 = arith.addf %183, %188 : vector<22x16xf32>
    %c2_142 = arith.constant 2 : index
    %c0_143 = arith.constant 0 : index
    %190 = vector.load %arg17[%c2_142, %c0_143] : memref<36x16xf32, #tpu.memory_space<vmem>>, vector<22x16xf32>
    %191 = arith.truncf %190 : vector<22x16xf32> to vector<22x16xbf16>
    %c2_144 = arith.constant 2 : index
    %c0_145 = arith.constant 0 : index
    %c0_146 = arith.constant 0 : index
    %192 = vector.load %arg12[%c2_144, %c0_145, %c0_146] : memref<9x16x16xbf16, #tpu.memory_space<vmem>>, vector<1x16x16xbf16>
    %193 = vector.shape_cast %192 : vector<1x16x16xbf16> to vector<16x16xbf16>
    %cst_147 = arith.constant dense<0.000000e+00> : vector<22x16xf32>
    %194 = tpu.matmul %191, %193, %cst_147 {dimension_numbers = #tpu.dot_dimension_numbers<[1], [0], [0], [1], [0, 0, 1, 1], [], []>} : vector<22x16xbf16>, vector<16x16xbf16>, vector<22x16xf32> -> vector<22x16xf32>
    %195 = arith.addf %189, %194 : vector<22x16xf32>
    %c6_148 = arith.constant 6 : index
    %c0_149 = arith.constant 0 : index
    %196 = vector.load %arg17[%c6_148, %c0_149] : memref<36x16xf32, #tpu.memory_space<vmem>>, vector<22x16xf32>
    %197 = arith.truncf %196 : vector<22x16xf32> to vector<22x16xbf16>
    %c3_150 = arith.constant 3 : index
    %c0_151 = arith.constant 0 : index
    %c0_152 = arith.constant 0 : index
    %198 = vector.load %arg12[%c3_150, %c0_151, %c0_152] : memref<9x16x16xbf16, #tpu.memory_space<vmem>>, vector<1x16x16xbf16>
    %199 = vector.shape_cast %198 : vector<1x16x16xbf16> to vector<16x16xbf16>
    %cst_153 = arith.constant dense<0.000000e+00> : vector<22x16xf32>
    %200 = tpu.matmul %197, %199, %cst_153 {dimension_numbers = #tpu.dot_dimension_numbers<[1], [0], [0], [1], [0, 0, 1, 1], [], []>} : vector<22x16xbf16>, vector<16x16xbf16>, vector<22x16xf32> -> vector<22x16xf32>
    %201 = arith.addf %195, %200 : vector<22x16xf32>
    %c7_154 = arith.constant 7 : index
    %c0_155 = arith.constant 0 : index
    %202 = vector.load %arg17[%c7_154, %c0_155] : memref<36x16xf32, #tpu.memory_space<vmem>>, vector<22x16xf32>
    %203 = arith.truncf %202 : vector<22x16xf32> to vector<22x16xbf16>
    %c4_156 = arith.constant 4 : index
    %c0_157 = arith.constant 0 : index
    %c0_158 = arith.constant 0 : index
    %204 = vector.load %arg12[%c4_156, %c0_157, %c0_158] : memref<9x16x16xbf16, #tpu.memory_space<vmem>>, vector<1x16x16xbf16>
    %205 = vector.shape_cast %204 : vector<1x16x16xbf16> to vector<16x16xbf16>
    %cst_159 = arith.constant dense<0.000000e+00> : vector<22x16xf32>
    %206 = tpu.matmul %203, %205, %cst_159 {dimension_numbers = #tpu.dot_dimension_numbers<[1], [0], [0], [1], [0, 0, 1, 1], [], []>} : vector<22x16xbf16>, vector<16x16xbf16>, vector<22x16xf32> -> vector<22x16xf32>
    %207 = arith.addf %201, %206 : vector<22x16xf32>
    %c8_160 = arith.constant 8 : index
    %c0_161 = arith.constant 0 : index
    %208 = vector.load %arg17[%c8_160, %c0_161] : memref<36x16xf32, #tpu.memory_space<vmem>>, vector<22x16xf32>
    %209 = arith.truncf %208 : vector<22x16xf32> to vector<22x16xbf16>
    %c5_162 = arith.constant 5 : index
    %c0_163 = arith.constant 0 : index
    %c0_164 = arith.constant 0 : index
    %210 = vector.load %arg12[%c5_162, %c0_163, %c0_164] : memref<9x16x16xbf16, #tpu.memory_space<vmem>>, vector<1x16x16xbf16>
    %211 = vector.shape_cast %210 : vector<1x16x16xbf16> to vector<16x16xbf16>
    %cst_165 = arith.constant dense<0.000000e+00> : vector<22x16xf32>
    %212 = tpu.matmul %209, %211, %cst_165 {dimension_numbers = #tpu.dot_dimension_numbers<[1], [0], [0], [1], [0, 0, 1, 1], [], []>} : vector<22x16xbf16>, vector<16x16xbf16>, vector<22x16xf32> -> vector<22x16xf32>
    %213 = arith.addf %207, %212 : vector<22x16xf32>
    %c12_166 = arith.constant 12 : index
    %c0_167 = arith.constant 0 : index
    %214 = vector.load %arg17[%c12_166, %c0_167] : memref<36x16xf32, #tpu.memory_space<vmem>>, vector<22x16xf32>
    %215 = arith.truncf %214 : vector<22x16xf32> to vector<22x16xbf16>
    %c6_168 = arith.constant 6 : index
    %c0_169 = arith.constant 0 : index
    %c0_170 = arith.constant 0 : index
    %216 = vector.load %arg12[%c6_168, %c0_169, %c0_170] : memref<9x16x16xbf16, #tpu.memory_space<vmem>>, vector<1x16x16xbf16>
    %217 = vector.shape_cast %216 : vector<1x16x16xbf16> to vector<16x16xbf16>
    %cst_171 = arith.constant dense<0.000000e+00> : vector<22x16xf32>
    %218 = tpu.matmul %215, %217, %cst_171 {dimension_numbers = #tpu.dot_dimension_numbers<[1], [0], [0], [1], [0, 0, 1, 1], [], []>} : vector<22x16xbf16>, vector<16x16xbf16>, vector<22x16xf32> -> vector<22x16xf32>
    %219 = arith.addf %213, %218 : vector<22x16xf32>
    %c13_172 = arith.constant 13 : index
    %c0_173 = arith.constant 0 : index
    %220 = vector.load %arg17[%c13_172, %c0_173] : memref<36x16xf32, #tpu.memory_space<vmem>>, vector<22x16xf32>
    %221 = arith.truncf %220 : vector<22x16xf32> to vector<22x16xbf16>
    %c7_174 = arith.constant 7 : index
    %c0_175 = arith.constant 0 : index
    %c0_176 = arith.constant 0 : index
    %222 = vector.load %arg12[%c7_174, %c0_175, %c0_176] : memref<9x16x16xbf16, #tpu.memory_space<vmem>>, vector<1x16x16xbf16>
    %223 = vector.shape_cast %222 : vector<1x16x16xbf16> to vector<16x16xbf16>
    %cst_177 = arith.constant dense<0.000000e+00> : vector<22x16xf32>
    %224 = tpu.matmul %221, %223, %cst_177 {dimension_numbers = #tpu.dot_dimension_numbers<[1], [0], [0], [1], [0, 0, 1, 1], [], []>} : vector<22x16xbf16>, vector<16x16xbf16>, vector<22x16xf32> -> vector<22x16xf32>
    %225 = arith.addf %219, %224 : vector<22x16xf32>
    %c14_178 = arith.constant 14 : index
    %c0_179 = arith.constant 0 : index
    %226 = vector.load %arg17[%c14_178, %c0_179] : memref<36x16xf32, #tpu.memory_space<vmem>>, vector<22x16xf32>
    %227 = arith.truncf %226 : vector<22x16xf32> to vector<22x16xbf16>
    %c8_180 = arith.constant 8 : index
    %c0_181 = arith.constant 0 : index
    %c0_182 = arith.constant 0 : index
    %228 = vector.load %arg12[%c8_180, %c0_181, %c0_182] : memref<9x16x16xbf16, #tpu.memory_space<vmem>>, vector<1x16x16xbf16>
    %229 = vector.shape_cast %228 : vector<1x16x16xbf16> to vector<16x16xbf16>
    %cst_183 = arith.constant dense<0.000000e+00> : vector<22x16xf32>
    %230 = tpu.matmul %227, %229, %cst_183 {dimension_numbers = #tpu.dot_dimension_numbers<[1], [0], [0], [1], [0, 0, 1, 1], [], []>} : vector<22x16xbf16>, vector<16x16xbf16>, vector<22x16xf32> -> vector<22x16xf32>
    %231 = arith.addf %225, %230 : vector<22x16xf32>
    %c0_184 = arith.constant 0 : index
    %c0_185 = arith.constant 0 : index
    %232 = vector.load %arg13[%c0_184, %c0_185] : memref<1x16xf32, #tpu.memory_space<vmem>>, vector<1x16xf32>
    %233 = vector.broadcast %232 : vector<1x16xf32> to vector<22x16xf32>
    %234 = arith.addf %231, %233 : vector<22x16xf32>
    %235 = vector.extract_strided_slice %234 {offsets = [0, 0], sizes = [4, 16], strides = [1, 1]} : vector<22x16xf32> to vector<4x16xf32>
    %236 = vector.extract_strided_slice %95 {offsets = [0, 0], sizes = [4, 16], strides = [1, 1]} : vector<16x16xf32> to vector<4x16xf32>
    %237 = arith.addf %235, %236 : vector<4x16xf32>
    %c7_186 = arith.constant 7 : index
    %c0_187 = arith.constant 0 : index
    %238 = vector.load %arg17[%c7_186, %c0_187] : memref<36x16xf32, #tpu.memory_space<vmem>>, vector<4x16xf32>
    tpu.vector_store %arg17[%c7_186, %c0_187], %237 {strides = array<i32>} : memref<36x16xf32, #tpu.memory_space<vmem>>, vector<4x16xf32>,
    %239 = vector.extract_strided_slice %234 {offsets = [6, 0], sizes = [4, 16], strides = [1, 1]} : vector<22x16xf32> to vector<4x16xf32>
    %240 = vector.extract_strided_slice %95 {offsets = [4, 0], sizes = [4, 16], strides = [1, 1]} : vector<16x16xf32> to vector<4x16xf32>
    %241 = arith.addf %239, %240 : vector<4x16xf32>
    %c13_188 = arith.constant 13 : index
    %c0_189 = arith.constant 0 : index
    %242 = vector.load %arg17[%c13_188, %c0_189] : memref<36x16xf32, #tpu.memory_space<vmem>>, vector<4x16xf32>
    tpu.vector_store %arg17[%c13_188, %c0_189], %241 {strides = array<i32>} : memref<36x16xf32, #tpu.memory_space<vmem>>, vector<4x16xf32>,
    %243 = vector.extract_strided_slice %234 {offsets = [12, 0], sizes = [4, 16], strides = [1, 1]} : vector<22x16xf32> to vector<4x16xf32>
    %244 = vector.extract_strided_slice %95 {offsets = [8, 0], sizes = [4, 16], strides = [1, 1]} : vector<16x16xf32> to vector<4x16xf32>
    %245 = arith.addf %243, %244 : vector<4x16xf32>
    %c19_190 = arith.constant 19 : index
    %c0_191 = arith.constant 0 : index
    %246 = vector.load %arg17[%c19_190, %c0_191] : memref<36x16xf32, #tpu.memory_space<vmem>>, vector<4x16xf32>
    tpu.vector_store %arg17[%c19_190, %c0_191], %245 {strides = array<i32>} : memref<36x16xf32, #tpu.memory_space<vmem>>, vector<4x16xf32>,
    %247 = vector.extract_strided_slice %234 {offsets = [18, 0], sizes = [4, 16], strides = [1, 1]} : vector<22x16xf32> to vector<4x16xf32>
    %248 = vector.extract_strided_slice %95 {offsets = [12, 0], sizes = [4, 16], strides = [1, 1]} : vector<16x16xf32> to vector<4x16xf32>
    %249 = arith.addf %247, %248 : vector<4x16xf32>
    %c25_192 = arith.constant 25 : index
    %c0_193 = arith.constant 0 : index
    %250 = vector.load %arg17[%c25_192, %c0_193] : memref<36x16xf32, #tpu.memory_space<vmem>>, vector<4x16xf32>
    tpu.vector_store %arg17[%c25_192, %c0_193], %249 {strides = array<i32>} : memref<36x16xf32, #tpu.memory_space<vmem>>, vector<4x16xf32>,
    %cst_194 = arith.constant 0.000000e+00 : f32
    %251 = vector.broadcast %cst_194 : f32 to vector<22x8xf32>
    %c0_195 = arith.constant 0 : index
    %c0_196 = arith.constant 0 : index
    %252 = vector.load %arg17[%c0_195, %c0_196] : memref<36x16xf32, #tpu.memory_space<vmem>>, vector<22x16xf32>
    %253 = arith.truncf %252 : vector<22x16xf32> to vector<22x16xbf16>
    %c0_197 = arith.constant 0 : index
    %c0_198 = arith.constant 0 : index
    %c0_199 = arith.constant 0 : index
    %254 = vector.load %arg14[%c0_197, %c0_198, %c0_199] : memref<9x16x8xbf16, #tpu.memory_space<vmem>>, vector<1x16x8xbf16>
    %255 = vector.shape_cast %254 : vector<1x16x8xbf16> to vector<16x8xbf16>
    %cst_200 = arith.constant dense<0.000000e+00> : vector<22x8xf32>
    %256 = tpu.matmul %253, %255, %cst_200 {dimension_numbers = #tpu.dot_dimension_numbers<[1], [0], [0], [1], [0, 0, 1, 1], [], []>} : vector<22x16xbf16>, vector<16x8xbf16>, vector<22x8xf32> -> vector<22x8xf32>
    %257 = arith.addf %251, %256 : vector<22x8xf32>
    %c1_201 = arith.constant 1 : index
    %c0_202 = arith.constant 0 : index
    %258 = vector.load %arg17[%c1_201, %c0_202] : memref<36x16xf32, #tpu.memory_space<vmem>>, vector<22x16xf32>
    %259 = arith.truncf %258 : vector<22x16xf32> to vector<22x16xbf16>
    %c1_203 = arith.constant 1 : index
    %c0_204 = arith.constant 0 : index
    %c0_205 = arith.constant 0 : index
    %260 = vector.load %arg14[%c1_203, %c0_204, %c0_205] : memref<9x16x8xbf16, #tpu.memory_space<vmem>>, vector<1x16x8xbf16>
    %261 = vector.shape_cast %260 : vector<1x16x8xbf16> to vector<16x8xbf16>
    %cst_206 = arith.constant dense<0.000000e+00> : vector<22x8xf32>
    %262 = tpu.matmul %259, %261, %cst_206 {dimension_numbers = #tpu.dot_dimension_numbers<[1], [0], [0], [1], [0, 0, 1, 1], [], []>} : vector<22x16xbf16>, vector<16x8xbf16>, vector<22x8xf32> -> vector<22x8xf32>
    %263 = arith.addf %257, %262 : vector<22x8xf32>
    %c2_207 = arith.constant 2 : index
    %c0_208 = arith.constant 0 : index
    %264 = vector.load %arg17[%c2_207, %c0_208] : memref<36x16xf32, #tpu.memory_space<vmem>>, vector<22x16xf32>
    %265 = arith.truncf %264 : vector<22x16xf32> to vector<22x16xbf16>
    %c2_209 = arith.constant 2 : index
    %c0_210 = arith.constant 0 : index
    %c0_211 = arith.constant 0 : index
    %266 = vector.load %arg14[%c2_209, %c0_210, %c0_211] : memref<9x16x8xbf16, #tpu.memory_space<vmem>>, vector<1x16x8xbf16>
    %267 = vector.shape_cast %266 : vector<1x16x8xbf16> to vector<16x8xbf16>
    %cst_212 = arith.constant dense<0.000000e+00> : vector<22x8xf32>
    %268 = tpu.matmul %265, %267, %cst_212 {dimension_numbers = #tpu.dot_dimension_numbers<[1], [0], [0], [1], [0, 0, 1, 1], [], []>} : vector<22x16xbf16>, vector<16x8xbf16>, vector<22x8xf32> -> vector<22x8xf32>
    %269 = arith.addf %263, %268 : vector<22x8xf32>
    %c6_213 = arith.constant 6 : index
    %c0_214 = arith.constant 0 : index
    %270 = vector.load %arg17[%c6_213, %c0_214] : memref<36x16xf32, #tpu.memory_space<vmem>>, vector<22x16xf32>
    %271 = arith.truncf %270 : vector<22x16xf32> to vector<22x16xbf16>
    %c3_215 = arith.constant 3 : index
    %c0_216 = arith.constant 0 : index
    %c0_217 = arith.constant 0 : index
    %272 = vector.load %arg14[%c3_215, %c0_216, %c0_217] : memref<9x16x8xbf16, #tpu.memory_space<vmem>>, vector<1x16x8xbf16>
    %273 = vector.shape_cast %272 : vector<1x16x8xbf16> to vector<16x8xbf16>
    %cst_218 = arith.constant dense<0.000000e+00> : vector<22x8xf32>
    %274 = tpu.matmul %271, %273, %cst_218 {dimension_numbers = #tpu.dot_dimension_numbers<[1], [0], [0], [1], [0, 0, 1, 1], [], []>} : vector<22x16xbf16>, vector<16x8xbf16>, vector<22x8xf32> -> vector<22x8xf32>
    %275 = arith.addf %269, %274 : vector<22x8xf32>
    %c7_219 = arith.constant 7 : index
    %c0_220 = arith.constant 0 : index
    %276 = vector.load %arg17[%c7_219, %c0_220] : memref<36x16xf32, #tpu.memory_space<vmem>>, vector<22x16xf32>
    %277 = arith.truncf %276 : vector<22x16xf32> to vector<22x16xbf16>
    %c4_221 = arith.constant 4 : index
    %c0_222 = arith.constant 0 : index
    %c0_223 = arith.constant 0 : index
    %278 = vector.load %arg14[%c4_221, %c0_222, %c0_223] : memref<9x16x8xbf16, #tpu.memory_space<vmem>>, vector<1x16x8xbf16>
    %279 = vector.shape_cast %278 : vector<1x16x8xbf16> to vector<16x8xbf16>
    %cst_224 = arith.constant dense<0.000000e+00> : vector<22x8xf32>
    %280 = tpu.matmul %277, %279, %cst_224 {dimension_numbers = #tpu.dot_dimension_numbers<[1], [0], [0], [1], [0, 0, 1, 1], [], []>} : vector<22x16xbf16>, vector<16x8xbf16>, vector<22x8xf32> -> vector<22x8xf32>
    %281 = arith.addf %275, %280 : vector<22x8xf32>
    %c8_225 = arith.constant 8 : index
    %c0_226 = arith.constant 0 : index
    %282 = vector.load %arg17[%c8_225, %c0_226] : memref<36x16xf32, #tpu.memory_space<vmem>>, vector<22x16xf32>
    %283 = arith.truncf %282 : vector<22x16xf32> to vector<22x16xbf16>
    %c5_227 = arith.constant 5 : index
    %c0_228 = arith.constant 0 : index
    %c0_229 = arith.constant 0 : index
    %284 = vector.load %arg14[%c5_227, %c0_228, %c0_229] : memref<9x16x8xbf16, #tpu.memory_space<vmem>>, vector<1x16x8xbf16>
    %285 = vector.shape_cast %284 : vector<1x16x8xbf16> to vector<16x8xbf16>
    %cst_230 = arith.constant dense<0.000000e+00> : vector<22x8xf32>
    %286 = tpu.matmul %283, %285, %cst_230 {dimension_numbers = #tpu.dot_dimension_numbers<[1], [0], [0], [1], [0, 0, 1, 1], [], []>} : vector<22x16xbf16>, vector<16x8xbf16>, vector<22x8xf32> -> vector<22x8xf32>
    %287 = arith.addf %281, %286 : vector<22x8xf32>
    %c12_231 = arith.constant 12 : index
    %c0_232 = arith.constant 0 : index
    %288 = vector.load %arg17[%c12_231, %c0_232] : memref<36x16xf32, #tpu.memory_space<vmem>>, vector<22x16xf32>
    %289 = arith.truncf %288 : vector<22x16xf32> to vector<22x16xbf16>
    %c6_233 = arith.constant 6 : index
    %c0_234 = arith.constant 0 : index
    %c0_235 = arith.constant 0 : index
    %290 = vector.load %arg14[%c6_233, %c0_234, %c0_235] : memref<9x16x8xbf16, #tpu.memory_space<vmem>>, vector<1x16x8xbf16>
    %291 = vector.shape_cast %290 : vector<1x16x8xbf16> to vector<16x8xbf16>
    %cst_236 = arith.constant dense<0.000000e+00> : vector<22x8xf32>
    %292 = tpu.matmul %289, %291, %cst_236 {dimension_numbers = #tpu.dot_dimension_numbers<[1], [0], [0], [1], [0, 0, 1, 1], [], []>} : vector<22x16xbf16>, vector<16x8xbf16>, vector<22x8xf32> -> vector<22x8xf32>
    %293 = arith.addf %287, %292 : vector<22x8xf32>
    %c13_237 = arith.constant 13 : index
    %c0_238 = arith.constant 0 : index
    %294 = vector.load %arg17[%c13_237, %c0_238] : memref<36x16xf32, #tpu.memory_space<vmem>>, vector<22x16xf32>
    %295 = arith.truncf %294 : vector<22x16xf32> to vector<22x16xbf16>
    %c7_239 = arith.constant 7 : index
    %c0_240 = arith.constant 0 : index
    %c0_241 = arith.constant 0 : index
    %296 = vector.load %arg14[%c7_239, %c0_240, %c0_241] : memref<9x16x8xbf16, #tpu.memory_space<vmem>>, vector<1x16x8xbf16>
    %297 = vector.shape_cast %296 : vector<1x16x8xbf16> to vector<16x8xbf16>
    %cst_242 = arith.constant dense<0.000000e+00> : vector<22x8xf32>
    %298 = tpu.matmul %295, %297, %cst_242 {dimension_numbers = #tpu.dot_dimension_numbers<[1], [0], [0], [1], [0, 0, 1, 1], [], []>} : vector<22x16xbf16>, vector<16x8xbf16>, vector<22x8xf32> -> vector<22x8xf32>
    %299 = arith.addf %293, %298 : vector<22x8xf32>
    %c14_243 = arith.constant 14 : index
    %c0_244 = arith.constant 0 : index
    %300 = vector.load %arg17[%c14_243, %c0_244] : memref<36x16xf32, #tpu.memory_space<vmem>>, vector<22x16xf32>
    %301 = arith.truncf %300 : vector<22x16xf32> to vector<22x16xbf16>
    %c8_245 = arith.constant 8 : index
    %c0_246 = arith.constant 0 : index
    %c0_247 = arith.constant 0 : index
    %302 = vector.load %arg14[%c8_245, %c0_246, %c0_247] : memref<9x16x8xbf16, #tpu.memory_space<vmem>>, vector<1x16x8xbf16>
    %303 = vector.shape_cast %302 : vector<1x16x8xbf16> to vector<16x8xbf16>
    %cst_248 = arith.constant dense<0.000000e+00> : vector<22x8xf32>
    %304 = tpu.matmul %301, %303, %cst_248 {dimension_numbers = #tpu.dot_dimension_numbers<[1], [0], [0], [1], [0, 0, 1, 1], [], []>} : vector<22x16xbf16>, vector<16x8xbf16>, vector<22x8xf32> -> vector<22x8xf32>
    %305 = arith.addf %299, %304 : vector<22x8xf32>
    %c0_249 = arith.constant 0 : index
    %c0_250 = arith.constant 0 : index
    %306 = vector.load %arg15[%c0_249, %c0_250] : memref<1x8xf32, #tpu.memory_space<vmem>>, vector<1x8xf32>
    %307 = vector.broadcast %306 : vector<1x8xf32> to vector<22x8xf32>
    %308 = arith.addf %305, %307 : vector<22x8xf32>
    %309 = vector.extract_strided_slice %308 {offsets = [0, 0], sizes = [4, 8], strides = [1, 1]} : vector<22x8xf32> to vector<4x8xf32>
    %c0_251 = arith.constant 0 : index
    %c0_252 = arith.constant 0 : index
    %c0_253 = arith.constant 0 : index
    %c0_254 = arith.constant 0 : index
    %310 = vector.load %arg16[%c0_251, %c0_252, %c0_253, %c0_254] : memref<1x4x4x8xf32, #tpu.memory_space<vmem>>, vector<1x1x4x8xf32>
    %311 = vector.shape_cast %310 : vector<1x1x4x8xf32> to vector<4x8xf32>
    %312 = vector.shape_cast %309 : vector<4x8xf32> to vector<1x1x4x8xf32>
    tpu.vector_store %arg16[%c0_251, %c0_252, %c0_253, %c0_254], %312 {strides = array<i32>} : memref<1x4x4x8xf32, #tpu.memory_space<vmem>>, vector<1x1x4x8xf32>,
    %313 = vector.extract_strided_slice %308 {offsets = [6, 0], sizes = [4, 8], strides = [1, 1]} : vector<22x8xf32> to vector<4x8xf32>
    %c0_255 = arith.constant 0 : index
    %c1_256 = arith.constant 1 : index
    %c0_257 = arith.constant 0 : index
    %c0_258 = arith.constant 0 : index
    %314 = vector.load %arg16[%c0_255, %c1_256, %c0_257, %c0_258] : memref<1x4x4x8xf32, #tpu.memory_space<vmem>>, vector<1x1x4x8xf32>
    %315 = vector.shape_cast %314 : vector<1x1x4x8xf32> to vector<4x8xf32>
    %316 = vector.shape_cast %313 : vector<4x8xf32> to vector<1x1x4x8xf32>
    tpu.vector_store %arg16[%c0_255, %c1_256, %c0_257, %c0_258], %316 {strides = array<i32>} : memref<1x4x4x8xf32, #tpu.memory_space<vmem>>, vector<1x1x4x8xf32>,
    %317 = vector.extract_strided_slice %308 {offsets = [12, 0], sizes = [4, 8], strides = [1, 1]} : vector<22x8xf32> to vector<4x8xf32>
    %c0_259 = arith.constant 0 : index
    %c2_260 = arith.constant 2 : index
    %c0_261 = arith.constant 0 : index
    %c0_262 = arith.constant 0 : index
    %318 = vector.load %arg16[%c0_259, %c2_260, %c0_261, %c0_262] : memref<1x4x4x8xf32, #tpu.memory_space<vmem>>, vector<1x1x4x8xf32>
    %319 = vector.shape_cast %318 : vector<1x1x4x8xf32> to vector<4x8xf32>
    %320 = vector.shape_cast %317 : vector<4x8xf32> to vector<1x1x4x8xf32>
    tpu.vector_store %arg16[%c0_259, %c2_260, %c0_261, %c0_262], %320 {strides = array<i32>} : memref<1x4x4x8xf32, #tpu.memory_space<vmem>>, vector<1x1x4x8xf32>,
    %321 = vector.extract_strided_slice %308 {offsets = [18, 0], sizes = [4, 8], strides = [1, 1]} : vector<22x8xf32> to vector<4x8xf32>
    %c0_263 = arith.constant 0 : index
    %c3_264 = arith.constant 3 : index
    %c0_265 = arith.constant 0 : index
    %c0_266 = arith.constant 0 : index
    %322 = vector.load %arg16[%c0_263, %c3_264, %c0_265, %c0_266] : memref<1x4x4x8xf32, #tpu.memory_space<vmem>>, vector<1x1x4x8xf32>
    %323 = vector.shape_cast %322 : vector<1x1x4x8xf32> to vector<4x8xf32>
    %324 = vector.shape_cast %321 : vector<4x8xf32> to vector<1x1x4x8xf32>
    tpu.vector_store %arg16[%c0_263, %c3_264, %c0_265, %c0_266], %324 {strides = array<i32>} : memref<1x4x4x8xf32, #tpu.memory_space<vmem>>, vector<1x1x4x8xf32>,
    return
  }
  func.func @transform_0(%arg0: i32) -> (i32, i32, i32) {
    %c0_i32 = arith.constant 0 : i32
    %c0_i32_0 = arith.constant 0 : i32
    %c0_i32_1 = arith.constant 0 : i32
    return %arg0, %c0_i32, %c0_i32_0 : i32, i32, i32
  }
  func.func @transform_1(%arg0: i32) -> (i32, i32, i32) {
    %c0_i32 = arith.constant 0 : i32
    %c0_i32_0 = arith.constant 0 : i32
    %c0_i32_1 = arith.constant 0 : i32
    %c0_i32_2 = arith.constant 0 : i32
    return %c0_i32, %c0_i32_0, %c0_i32_1 : i32, i32, i32
  }
  func.func @transform_2(%arg0: i32) -> (i32, i32, i32) {
    %c0_i32 = arith.constant 0 : i32
    %c0_i32_0 = arith.constant 0 : i32
    %c0_i32_1 = arith.constant 0 : i32
    %c0_i32_2 = arith.constant 0 : i32
    return %c0_i32, %c0_i32_0, %c0_i32_1 : i32, i32, i32
  }
  func.func @transform_3(%arg0: i32) -> (i32, i32, i32) {
    %c0_i32 = arith.constant 0 : i32
    %c0_i32_0 = arith.constant 0 : i32
    %c0_i32_1 = arith.constant 0 : i32
    %c0_i32_2 = arith.constant 0 : i32
    return %c0_i32, %c0_i32_0, %c0_i32_1 : i32, i32, i32
  }
  func.func @transform_4(%arg0: i32) -> (i32, i32, i32) {
    %c0_i32 = arith.constant 0 : i32
    %c0_i32_0 = arith.constant 0 : i32
    %c0_i32_1 = arith.constant 0 : i32
    %c0_i32_2 = arith.constant 0 : i32
    return %c0_i32, %c0_i32_0, %c0_i32_1 : i32, i32, i32
  }
  func.func @transform_5(%arg0: i32) -> (i32, i32, i32) {
    %c0_i32 = arith.constant 0 : i32
    %c0_i32_0 = arith.constant 0 : i32
    %c0_i32_1 = arith.constant 0 : i32
    %c0_i32_2 = arith.constant 0 : i32
    return %c0_i32, %c0_i32_0, %c0_i32_1 : i32, i32, i32
  }
  func.func @transform_6(%arg0: i32) -> (i32, i32, i32) {
    %c0_i32 = arith.constant 0 : i32
    %c0_i32_0 = arith.constant 0 : i32
    %c0_i32_1 = arith.constant 0 : i32
    %c0_i32_2 = arith.constant 0 : i32
    return %c0_i32, %c0_i32_0, %c0_i32_1 : i32, i32, i32
  }
  func.func @transform_7(%arg0: i32) -> (i32, i32, i32) {
    %c0_i32 = arith.constant 0 : i32
    %c0_i32_0 = arith.constant 0 : i32
    %c0_i32_1 = arith.constant 0 : i32
    %c0_i32_2 = arith.constant 0 : i32
    return %c0_i32, %c0_i32_0, %c0_i32_1 : i32, i32, i32
  }
  func.func @transform_8(%arg0: i32) -> (i32, i32) {
    %c0_i32 = arith.constant 0 : i32
    %c0_i32_0 = arith.constant 0 : i32
    %c0_i32_1 = arith.constant 0 : i32
    return %c0_i32, %c0_i32_0 : i32, i32
  }
  func.func @transform_9(%arg0: i32) -> (i32, i32, i32) {
    %c0_i32 = arith.constant 0 : i32
    %c0_i32_0 = arith.constant 0 : i32
    %c0_i32_1 = arith.constant 0 : i32
    %c0_i32_2 = arith.constant 0 : i32
    return %c0_i32, %c0_i32_0, %c0_i32_1 : i32, i32, i32
  }
  func.func @transform_10(%arg0: i32) -> (i32, i32) {
    %c0_i32 = arith.constant 0 : i32
    %c0_i32_0 = arith.constant 0 : i32
    %c0_i32_1 = arith.constant 0 : i32
    return %c0_i32, %c0_i32_0 : i32, i32
  }
  func.func @transform_11(%arg0: i32) -> (i32, i32, i32) {
    %c0_i32 = arith.constant 0 : i32
    %c0_i32_0 = arith.constant 0 : i32
    %c0_i32_1 = arith.constant 0 : i32
    %c0_i32_2 = arith.constant 0 : i32
    return %c0_i32, %c0_i32_0, %c0_i32_1 : i32, i32, i32
  }
  func.func @transform_12(%arg0: i32) -> (i32, i32) {
    %c0_i32 = arith.constant 0 : i32
    %c0_i32_0 = arith.constant 0 : i32
    %c0_i32_1 = arith.constant 0 : i32
    return %c0_i32, %c0_i32_0 : i32, i32
  }
  func.func @transform_13(%arg0: i32) -> (i32, i32, i32) {
    %c0_i32 = arith.constant 0 : i32
    %c0_i32_0 = arith.constant 0 : i32
    %c0_i32_1 = arith.constant 0 : i32
    %c0_i32_2 = arith.constant 0 : i32
    return %c0_i32, %c0_i32_0, %c0_i32_1 : i32, i32, i32
  }
  func.func @transform_14(%arg0: i32) -> (i32, i32) {
    %c0_i32 = arith.constant 0 : i32
    %c0_i32_0 = arith.constant 0 : i32
    %c0_i32_1 = arith.constant 0 : i32
    return %c0_i32, %c0_i32_0 : i32, i32
  }
  func.func @transform_15(%arg0: i32) -> (i32, i32, i32, i32) {
    %c0_i32 = arith.constant 0 : i32
    %c0_i32_0 = arith.constant 0 : i32
    %c0_i32_1 = arith.constant 0 : i32
    %c0_i32_2 = arith.constant 0 : i32
    return %arg0, %c0_i32, %c0_i32_0, %c0_i32_1 : i32, i32, i32, i32
  }
}

</mosaic_0001>

<llo_original>
// kernel: _lambda_.4
$region0: #{_lambda_.4}
  #allocation0 [shape = 'u32[]', space=smem, size = 0x4, offset = 0x4, fixed_abs, tag = 'smem constant byte address 0x4 - core index']
  #allocation1 [shape = 'u32[72,128]{1,0:T(1,128)}', space=vmem, size = 0x9000, scoped, tag = 'internal scratch']
  #allocation2 [shape = 'f32[36,16]{1,0:T(8,128)}', space=vmem, size = 0x5000, scoped, tag = 'scratch operand']
  %s0 = inlined_call_operand.vmem [shape: bf16[8,25,8], index: 0, kind: input, shape index: {}]
  %s1 = inlined_call_operand.vmem [shape: bf16[16,8,16], index: 1, kind: input, shape index: {}]
  %s2 = inlined_call_operand.vmem [shape: f32[1,16], index: 2, kind: input, shape index: {}]
  %s3 = inlined_call_operand.vmem [shape: bf16[9,16,16], index: 3, kind: input, shape index: {}]
  %s4 = inlined_call_operand.vmem [shape: f32[1,16], index: 4, kind: input, shape index: {}]
  %s5 = inlined_call_operand.vmem [shape: bf16[9,16,16], index: 5, kind: input, shape index: {}]
  %s6 = inlined_call_operand.vmem [shape: f32[1,16], index: 6, kind: input, shape index: {}]
  %s7 = inlined_call_operand.vmem [shape: f32[2,4,4,16], index: 7, kind: output, shape index: {}]
  %s8 = sld [smem:[#allocation0]]
  $region61: #{_lambda_.4} parent=0
    _
  %s10 = ssub.s32 1, %s8
  %s11 = scalar_select 0, %s10, %s8
  loop: start=0, step=1, limit=4
  $region2: #{_lambda_.4} parent=0 // loop_pre_header
    _
  $region3: #{_lambda_.4} parent=0 // loop_header
    %s13 = sphi 0, %s17
    %p14 = scmp.ge.s32.totalorder %s13, 4
    %s23 = sphi 0, %s25
    %s26 = sphi 0, %s23
    %s27 = sphi 0, %s26
    %s43 = sphi 0, %s27
    %s47 = sphi 0, %s47
    %s49 = sphi 0, %s47
    %s50 = sphi 0, %s49
    %s64 = sphi 0, %s50
    %s68 = sphi 0, %s68
    %s70 = sphi 0, %s68
    %s71 = sphi 0, %s70
    %s85 = sphi 0, %s71
    %s89 = sphi 0, %s89
    %s91 = sphi 0, %s89
    %s92 = sphi 0, %s91
    %s106 = sphi 0, %s92
    %s110 = sphi 0, %s110
    %s112 = sphi 0, %s110
    %s113 = sphi 0, %s112
    %s127 = sphi 0, %s113
    %s131 = sphi 0, %s131
    %s133 = sphi 0, %s131
    %s134 = sphi 0, %s133
    %s148 = sphi 0, %s134
    %s152 = sphi 0, %s152
    %s154 = sphi 0, %s152
    %s155 = sphi 0, %s154
    %s169 = sphi 0, %s155
    %s175 = sphi 0, %s177
    %s178 = sphi 0, %s175
    %s179 = sphi 0, %s178
    %s195 = sphi 0, %s179
  $region4: #{_lambda_.4} parent=0 // loop_header_branch
    %16 = sbr.rel (%p14) target = $region8
  $region5: #{_lambda_.4} parent=0 // loop_body
    %s18 = ssub.s32 %s13, 1
    %s19 = ssub.s32 %s13, 2
    %s20 = sadd.s32 %s13, 1
    %s21 = ssub.s32 %s13, %s20
    %p22 = scmp.eq.s32.totalorder %s21, 0
    %s24 = sadd.s32 %s23, 1
    %s25 = scalar_select %p22, %s23, %s24
    %p28 = pneg %p22
    %p29 = scmp.eq.s32.totalorder %s13, 1
    %p30 = por %p28, %p29
    %p31 = scmp.ne.s32.totalorder %s23, %s26
    %p32 = scmp.eq.s32.totalorder %s13, 0
    %p33 = por %p31, %p32
    %p34 = scmp.ne.s32.totalorder %s23, %s26
    %p35 = scmp.eq.s32.totalorder %s18, 1
    %p36 = por %p34, %p35
    %p37 = scmp.ne.s32.totalorder %s26, %s27
    %p38 = scmp.eq.s32.totalorder %s18, 0
    %p39 = por %p37, %p38
    %p40 = scmp.ne.s32.totalorder %s26, %s27
    %p41 = scmp.eq.s32.totalorder %s19, 1
    %p42 = por %p40, %p41
    %p44 = scmp.ne.s32.totalorder %s27, %s43
    %p45 = scmp.eq.s32.totalorder %s19, 0
    %p46 = por %p44, %p45
    %s48 = sadd.s32 %s47, 1
    %p51 = scmp.eq.s32.totalorder %s13, 1
    %p52 = scmp.ne.s32.totalorder %s47, %s49
    %p53 = scmp.eq.s32.totalorder %s13, 0
    %p54 = por %p52, %p53
    %p55 = scmp.ne.s32.totalorder %s47, %s49
    %p56 = scmp.eq.s32.totalorder %s18, 1
    %p57 = por %p55, %p56
    %p58 = scmp.ne.s32.totalorder %s49, %s50
    %p59 = scmp.eq.s32.totalorder %s18, 0
    %p60 = por %p58, %p59
    %p61 = scmp.ne.s32.totalorder %s49, %s50
    %p62 = scmp.eq.s32.totalorder %s19, 1
    %p63 = por %p61, %p62
    %p65 = scmp.ne.s32.totalorder %s50, %s64
    %p66 = scmp.eq.s32.totalorder %s19, 0
    %p67 = por %p65, %p66
    %s69 = sadd.s32 %s68, 1
    %p72 = scmp.eq.s32.totalorder %s13, 1
    %p73 = scmp.ne.s32.totalorder %s68, %s70
    %p74 = scmp.eq.s32.totalorder %s13, 0
    %p75 = por %p73, %p74
    %p76 = scmp.ne.s32.totalorder %s68, %s70
    %p77 = scmp.eq.s32.totalorder %s18, 1
    %p78 = por %p76, %p77
    %p79 = scmp.ne.s32.totalorder %s70, %s71
    %p80 = scmp.eq.s32.totalorder %s18, 0
    %p81 = por %p79, %p80
    %p82 = scmp.ne.s32.totalorder %s70, %s71
    %p83 = scmp.eq.s32.totalorder %s19, 1
    %p84 = por %p82, %p83
    %p86 = scmp.ne.s32.totalorder %s71, %s85
    %p87 = scmp.eq.s32.totalorder %s19, 0
    %p88 = por %p86, %p87
    %s90 = sadd.s32 %s89, 1
    %p93 = scmp.eq.s32.totalorder %s13, 1
    %p94 = scmp.ne.s32.totalorder %s89, %s91
    %p95 = scmp.eq.s32.totalorder %s13, 0
    %p96 = por %p94, %p95
    %p97 = scmp.ne.s32.totalorder %s89, %s91
    %p98 = scmp.eq.s32.totalorder %s18, 1
    %p99 = por %p97, %p98
    %p100 = scmp.ne.s32.totalorder %s91, %s92
    %p101 = scmp.eq.s32.totalorder %s18, 0
    %p102 = por %p100, %p101
    %p103 = scmp.ne.s32.totalorder %s91, %s92
    %p104 = scmp.eq.s32.totalorder %s19, 1
    %p105 = por %p103, %p104
    %p107 = scmp.ne.s32.totalorder %s92, %s106
    %p108 = scmp.eq.s32.totalorder %s19, 0
    %p109 = por %p107, %p108
    %s111 = sadd.s32 %s110, 1
    %p114 = scmp.eq.s32.totalorder %s13, 1
    %p115 = scmp.ne.s32.totalorder %s110, %s112
    %p116 = scmp.eq.s32.totalorder %s13, 0
    %p117 = por %p115, %p116
    %p118 = scmp.ne.s32.totalorder %s110, %s112
    %p119 = scmp.eq.s32.totalorder %s18, 1
    %p120 = por %p118, %p119
    %p121 = scmp.ne.s32.totalorder %s112, %s113
    %p122 = scmp.eq.s32.totalorder %s18, 0
    %p123 = por %p121, %p122
    %p124 = scmp.ne.s32.totalorder %s112, %s113
    %p125 = scmp.eq.s32.totalorder %s19, 1
    %p126 = por %p124, %p125
    %p128 = scmp.ne.s32.totalorder %s113, %s127
    %p129 = scmp.eq.s32.totalorder %s19, 0
    %p130 = por %p128, %p129
    %s132 = sadd.s32 %s131, 1
    %p135 = scmp.eq.s32.totalorder %s13, 1
    %p136 = scmp.ne.s32.totalorder %s131, %s133
    %p137 = scmp.eq.s32.totalorder %s13, 0
    %p138 = por %p136, %p137
    %p139 = scmp.ne.s32.totalorder %s131, %s133
    %p140 = scmp.eq.s32.totalorder %s18, 1
    %p141 = por %p139, %p140
    %p142 = scmp.ne.s32.totalorder %s133, %s134
    %p143 = scmp.eq.s32.totalorder %s18, 0
    %p144 = por %p142, %p143
    %p145 = scmp.ne.s32.totalorder %s133, %s134
    %p146 = scmp.eq.s32.totalorder %s19, 1
    %p147 = por %p145, %p146
    %p149 = scmp.ne.s32.totalorder %s134, %s148
    %p150 = scmp.eq.s32.totalorder %s19, 0
    %p151 = por %p149, %p150
    %s153 = sadd.s32 %s152, 1
    %p156 = scmp.eq.s32.totalorder %s13, 1
    %p157 = scmp.ne.s32.totalorder %s152, %s154
    %p158 = scmp.eq.s32.totalorder %s13, 0
    %p159 = por %p157, %p158
    %p160 = scmp.ne.s32.totalorder %s152, %s154
    %p161 = scmp.eq.s32.totalorder %s18, 1
    %p162 = por %p160, %p161
    %p163 = scmp.ne.s32.totalorder %s154, %s155
    %p164 = scmp.eq.s32.totalorder %s18, 0
    %p165 = por %p163, %p164
    %p166 = scmp.ne.s32.totalorder %s154, %s155
    %p167 = scmp.eq.s32.totalorder %s19, 1
    %p168 = por %p166, %p167
    %p170 = scmp.ne.s32.totalorder %s155, %s169
    %p171 = scmp.eq.s32.totalorder %s19, 0
    %p172 = por %p170, %p171
    %s173 = ssub.s32 %s13, %s20
    %p174 = scmp.eq.s32.totalorder %s173, 0
    %s176 = sadd.s32 %s175, 1
    %s177 = scalar_select %p174, %s175, %s176
    %p180 = pneg %p174
    %p181 = scmp.eq.s32.totalorder %s13, 1
    %p182 = por %p180, %p181
    %p183 = scmp.ne.s32.totalorder %s175, %s178
    %p184 = scmp.eq.s32.totalorder %s13, 0
    %p185 = por %p183, %p184
    %p186 = scmp.ne.s32.totalorder %s175, %s178
    %p187 = scmp.eq.s32.totalorder %s18, 1
    %p188 = por %p186, %p187
    %p189 = scmp.ne.s32.totalorder %s178, %s179
    %p190 = scmp.eq.s32.totalorder %s18, 0
    %p191 = por %p189, %p190
    %p192 = scmp.ne.s32.totalorder %s178, %s179
    %p193 = scmp.eq.s32.totalorder %s19, 1
    %p194 = por %p192, %p193
    %p196 = scmp.ne.s32.totalorder %s179, %s195
    %p197 = scmp.eq.s32.totalorder %s19, 0
    %p198 = por %p196, %p197
    %p199 = scmp.le.s32.totalorder 1, %s13
    %p200 = scmp.lt.s32.totalorder %s13, 3
    %p201 = pnand %p199, %p200
    %p202 = pneg %p201
    // Predicated region
    $region9: #{_lambda_.4} parent=5 // pred_check
      _
    $region10: #{_lambda_.4} parent=5 // pred_check_branch
      %204 = sbr.rel (%p201) target = $region12
    $region11: #{_lambda_.4} parent=5 // pred_region
      %s205 = ssub.s32 %s13, 1
      // Predicated region
      $region13: #{_lambda_.4} parent=11 // pred_check
        %p206 = pneg %p60
      $region14: #{_lambda_.4} parent=11 // pred_check_branch
        %208 = sbr.rel (%p206) target = $region16
      $region15: #{_lambda_.4} parent=11 // pred_region
        _
      $region16: #{_lambda_.4} parent=11 // pred_fallthru
        _
      // Predicated region
      $region17: #{_lambda_.4} parent=11 // pred_check
        %p209 = pneg %p81
      $region18: #{_lambda_.4} parent=11 // pred_check_branch
        %211 = sbr.rel (%p209) target = $region20
      $region19: #{_lambda_.4} parent=11 // pred_region
        _
      $region20: #{_lambda_.4} parent=11 // pred_fallthru
        _
      // Predicated region
      $region21: #{_lambda_.4} parent=11 // pred_check
        %p212 = pneg %p102
      $region22: #{_lambda_.4} parent=11 // pred_check_branch
        %214 = sbr.rel (%p212) target = $region24
      $region23: #{_lambda_.4} parent=11 // pred_region
        _
      $region24: #{_lambda_.4} parent=11 // pred_fallthru
        _
      // Predicated region
      $region25: #{_lambda_.4} parent=11 // pred_check
        %p215 = pneg %p123
      $region26: #{_lambda_.4} parent=11 // pred_check_branch
        %217 = sbr.rel (%p215) target = $region28
      $region27: #{_lambda_.4} parent=11 // pred_region
        _
      $region28: #{_lambda_.4} parent=11 // pred_fallthru
        _
      // Predicated region
      $region29: #{_lambda_.4} parent=11 // pred_check
        %p218 = pneg %p144
      $region30: #{_lambda_.4} parent=11 // pred_check_branch
        %220 = sbr.rel (%p218) target = $region32
      $region31: #{_lambda_.4} parent=11 // pred_region
        _
      $region32: #{_lambda_.4} parent=11 // pred_fallthru
        _
      // Predicated region
      $region33: #{_lambda_.4} parent=11 // pred_check
        %p221 = pneg %p165
      $region34: #{_lambda_.4} parent=11 // pred_check_branch
        %223 = sbr.rel (%p221) target = $region36
      $region35: #{_lambda_.4} parent=11 // pred_region
        _
      $region36: #{_lambda_.4} parent=11 // pred_fallthru
        _
    $region12: #{_lambda_.4} parent=5 // pred_fallthru
      _
    %p224 = scmp.lt.s32.totalorder %s13, 2
    // Predicated region
    $region37: #{_lambda_.4} parent=5 // pred_check
      %p225 = pneg %p224
    $region38: #{_lambda_.4} parent=5 // pred_check_branch
      %227 = sbr.rel (%p225) target = $region40
    $region39: #{_lambda_.4} parent=5 // pred_region
      // Predicated region
      $region41: #{_lambda_.4} parent=39 // pred_check
        %p228 = pneg %p33
      $region42: #{_lambda_.4} parent=39 // pred_check_branch
        %230 = sbr.rel (%p228) target = $region44
      $region43: #{_lambda_.4} parent=39 // pred_region
        %s231 = smul.u32 4, %s13
        %p232 = scmp.lt.s32.totalorder %s231, 7
        %s233 = scalar_select %p232, %s231, 7
        %s234 = smul.addr %s233, 4
        %s235 = smul.addr %s234, 4
        %s236 = scalar_lea.vmem %s0, %s235
        %s237 = smul.u32 4, %s13
      $region44: #{_lambda_.4} parent=39 // pred_fallthru
        _
    $region40: #{_lambda_.4} parent=5 // pred_fallthru
      _
    %p238 = scmp.le.s32.totalorder 1, %s13
    %p239 = scmp.lt.s32.totalorder %s13, 3
    %p240 = pnand %p238, %p239
    %p241 = pneg %p240
    // Predicated region
    $region45: #{_lambda_.4} parent=5 // pred_check
      _
    $region46: #{_lambda_.4} parent=5 // pred_check_branch
      %243 = sbr.rel (%p240) target = $region48
    $region47: #{_lambda_.4} parent=5 // pred_region
      %s244 = ssub.s32 %s13, 1
      %s245 = smul.u32 4, %s18
      %p246 = scmp.lt.s32.totalorder %s245, 7
      %s247 = scalar_select %p246, %s245, 7
      %s248 = smul.addr %s247, 4
      %s249 = smul.addr %s248, 4
      %s250 = scalar_lea.vmem %s0, %s249
      %p251 = pneg %p39
      %p252 = pneg %p36
      %p253 = pneg %p60
      %p254 = pneg %p57
      %p255 = pneg %p81
      %p256 = pneg %p78
      %p257 = pneg %p102
      %p258 = pneg %p99
      %p259 = pneg %p123
      %p260 = pneg %p120
      %p261 = pneg %p144
      %p262 = pneg %p141
      %p263 = pneg %p165
      %p264 = pneg %p162
      %p265 = pneg %p191
      %p266 = pneg %p188
      %p267 = scmp.lt.s32.totalorder %s18, 1
      %s268 = scalar_select %p267, %s18, 1
      %s269 = smul.addr %s268, 4
      %s270 = smul.addr %s269, 4
      %s271 = scalar_lea.vmem %s7, %s270
      %s272 = smul.u32 4, %s18
      %p273 = scmp.lt.s32.totalorder %s272, 7
      %s274 = scalar_select %p273, %s272, 7
      %s275 = smul.addr %s274, 4
      %s276 = smul.addr %s275, 4
      %s277 = scalar_lea.vmem %s0, %s276
      %s278 = smul.u32 4, %s18
      %p279 = scmp.lt.s32.totalorder %s18, 1
      %s280 = scalar_select %p279, %s18, 1
      %s281 = smul.addr %s280, 4
      %s282 = smul.addr %s281, 4
      %s283 = scalar_lea.vmem %s7, %s282
      %v285 = vld [vmem:[%s277] sm:$0xf]
      %v286 = vld [vmem:[%s277 + $0x4] sm:$0xf]
      %v287 = vld [vmem:[%s277 + $0x8] sm:$0x3]
      %v288 = vld [vmem:[%s1] sm:$0xf]
      %s289 = scalar_lea.vmem %s1, 4
      %v290 = vld [vmem:[%s289] sm:$0xf]
      %v294 = vunpack.c.l.b16 %v285
      %v295 = vunpack.c.l.b16 %v286
      %v296 = vunpack.c.l.b16 %v287
      %v297 = vpack.c.b16 %v295, %v294
      %v298 = vpack.c.b16 %v296, %v296
      %vm299 = vsmask.f32 7424
      %v301 = vshrl.u32 %v297, 16
      %v303 = vshll.u32 %v297, 16
      %v305 = vrot.slane %v303, 1
      %v306 = vor.u32 %v301, %v305
      %v308 = vshll.u32 %v298, 16
      %v310 = vrot.slane %v308, 1
      %v311 = vsel %vm299, %v306, %v310
      %v312 = vshrl.u32 %v298, 16
      %v314 = vor.u32 %v312, %v310
      %vm315 = vcmask 64512
      %v317 = vsel %vm315, %v311, 0
      %v320 = vsel %vm315, %v314, 0
      %vm322 = vcmask 1043456
      %v324 = vsel %vm322, %v290, 0
      %326 = vmatpush.bf16.msra.mxu0 0
      %327 = vmatpush.bf16.msra.mxu0 0
      %328 = vmatpush.bf16.msra.mxu0 0
      %329 = vmatpush.bf16.msra.mxu0 0
      %330 = vmatpush.bf16.msra.mxu0 0
      %331 = vmatpush.bf16.msra.mxu0 0
      %332 = vmatpush.bf16.msra.mxu0 0
      %333 = vmatpush.bf16.msra.mxu0 %v324
      %334 = vmatmul.bf16.gmra.mxu0 %v317
      %v335 = vpop.f32.mrf.mxu0
      %v336 = vadd.f32 0.0, %v335
      %v337 = vpop.f32.mrf.mxu0
      %v338 = vadd.f32 0.0, %v337
      %339 = vmatmul.bf16.gmra.mxu0 %v320
      %v340 = vpop.f32.mrf.mxu0
      %v341 = vadd.f32 0.0, %v340
      %v342 = vpop.f32.mrf.mxu0
      %343 = vdwg.mxu0
      %v344 = vsel %vm315, %v297, 0
      %v346 = vsel %vm315, %v298, 0
      %v349 = vsel %vm322, %v288, 0
      %351 = vmatpush.bf16.msra.mxu0 0
      %352 = vmatpush.bf16.msra.mxu0 0
      %353 = vmatpush.bf16.msra.mxu0 0
      %354 = vmatpush.bf16.msra.mxu0 0
      %355 = vmatpush.bf16.msra.mxu0 0
      %356 = vmatpush.bf16.msra.mxu0 0
      %357 = vmatpush.bf16.msra.mxu0 0
      %358 = vmatpush.bf16.msra.mxu0 %v349
      %359 = vmatmul.bf16.gmra.mxu0 %v344
      %v360 = vpop.f32.mrf.mxu0
      %v361 = vadd.f32 %v336, %v360
      %v362 = vpop.f32.mrf.mxu0
      %v363 = vadd.f32 %v338, %v362
      %364 = vmatmul.bf16.gmra.mxu0 %v346
      %v365 = vpop.f32.mrf.mxu0
      %v366 = vadd.f32 %v341, %v365
      %v367 = vpop.f32.mrf.mxu0
      %368 = vdwg.mxu0
      %v369 = vld [vmem:[%s277] sm:$0xc]
      %v370 = vld [vmem:[%s277 + $0x8] sm:$0xf]
      %s371 = scalar_lea.vmem %s1, 8
      %v372 = vld [vmem:[%s371] sm:$0xf]
      %v375 = vunpack.c.l.b16 %v369
      %v376 = vunpack.c.l.b16 %v370
      %v377 = vpack.c.b16 %v295, %v375
      %v378 = vpack.c.b16 %v376, %v376
      %vm379 = vsmask.f32 5376
      %v381 = vshrl.u32 %v377, 16
      %v383 = vrot.slane %v381, 2
      %v384 = vshll.u32 %v377, 16
      %v386 = vrot.slane %v384, 3
      %v387 = vor.u32 %v383, %v386
      %v389 = vshrl.u32 %v378, 16
      %v391 = vrot.slane %v389, 2
      %v392 = vshll.u32 %v378, 16
      %v394 = vrot.slane %v392, 3
      %v395 = vor.u32 %v391, %v394
      %v396 = vsel %vm379, %v387, %v395
      %v398 = vsel %vm315, %v396, 0
      %v401 = vsel %vm315, %v395, 0
      %v404 = vsel %vm322, %v372, 0
      %406 = vmatpush.bf16.msra.mxu0 0
      %407 = vmatpush.bf16.msra.mxu0 0
      %408 = vmatpush.bf16.msra.mxu0 0
      %409 = vmatpush.bf16.msra.mxu0 0
      %410 = vmatpush.bf16.msra.mxu0 0
      %411 = vmatpush.bf16.msra.mxu0 0
      %412 = vmatpush.bf16.msra.mxu0 0
      %413 = vmatpush.bf16.msra.mxu0 %v404
      %414 = vmatmul.bf16.gmra.mxu0 %v398
      %v415 = vpop.f32.mrf.mxu0
      %v416 = vadd.f32 0.0, %v415
      %v417 = vpop.f32.mrf.mxu0
      %v418 = vadd.f32 0.0, %v417
      %419 = vmatmul.bf16.gmra.mxu0 %v401
      %v420 = vpop.f32.mrf.mxu0
      %v421 = vadd.f32 0.0, %v420
      %v422 = vpop.f32.mrf.mxu0
      %423 = vdwg.mxu0
      %v424 = vadd.f32 %v361, %v416
      %v425 = vadd.f32 %v363, %v418
      %v426 = vadd.f32 %v366, %v421
      %v427 = vld [vmem:[%s277] sm:$0x8]
      %v428 = vld [vmem:[%s277 + $0x4] sm:$0xf]
      %v429 = vld [vmem:[%s277 + $0x8] sm:$0xf]
      %v430 = vld [vmem:[%s277 + $0xc] sm:$0x1]
      %s431 = scalar_lea.vmem %s1, 12
      %v432 = vld [vmem:[%s431] sm:$0xf]
      %v437 = vunpack.c.l.b16 %v427
      %v438 = vunpack.c.l.b16 %v428
      %v439 = vunpack.c.l.b16 %v429
      %v440 = vunpack.c.l.b16 %v430
      %v441 = vpack.c.b16 %v438, %v437
      %v442 = vpack.c.b16 %v440, %v439
      %vm443 = vcmask 1044480
      %v444 = vrot.slane %v441, 3
      %v445 = vrot.slane %v442, 3
      %v446 = vsel %vm443, %v444, %v445
      %v448 = vsel %vm315, %v446, 0
      %v451 = vsel %vm315, %v445, 0
      %v454 = vsel %vm322, %v432, 0
      %456 = vmatpush.bf16.msra.mxu0 0
      %457 = vmatpush.bf16.msra.mxu0 0
      %458 = vmatpush.bf16.msra.mxu0 0
      %459 = vmatpush.bf16.msra.mxu0 0
      %460 = vmatpush.bf16.msra.mxu0 0
      %461 = vmatpush.bf16.msra.mxu0 0
      %462 = vmatpush.bf16.msra.mxu0 0
      %463 = vmatpush.bf16.msra.mxu0 %v454
      %464 = vmatmul.bf16.gmra.mxu0 %v448
      %v465 = vpop.f32.mrf.mxu0
      %v466 = vadd.f32 0.0, %v465
      %v467 = vpop.f32.mrf.mxu0
      %v468 = vadd.f32 0.0, %v467
      %469 = vmatmul.bf16.gmra.mxu0 %v451
      %v470 = vpop.f32.mrf.mxu0
      %v471 = vadd.f32 0.0, %v470
      %v472 = vpop.f32.mrf.mxu0
      %473 = vdwg.mxu0
      %v474 = vadd.f32 %v424, %v466
      %v475 = vadd.f32 %v425, %v468
      %v476 = vadd.f32 %v426, %v471
      %s477 = scalar_lea.vmem %s277, 16
      %v478 = vld [vmem:[%s477] sm:$0xf]
      %v479 = vld [vmem:[%s477 + $0x4] sm:$0xf]
      %v480 = vld [vmem:[%s477 + $0x8] sm:$0x3]
      %s481 = scalar_lea.vmem %s1, 16
      %v482 = vld [vmem:[%s481] sm:$0xf]
      %v486 = vunpack.c.l.b16 %v478
      %v487 = vunpack.c.l.b16 %v479
      %v488 = vunpack.c.l.b16 %v480
      %v489 = vpack.c.b16 %v487, %v486
      %v490 = vpack.c.b16 %v488, %v488
      %v492 = vsel %vm315, %v489, 0
      %v495 = vsel %vm315, %v490, 0
      %v498 = vsel %vm322, %v482, 0
      %500 = vmatpush.bf16.msra.mxu0 0
      %501 = vmatpush.bf16.msra.mxu0 0
      %502 = vmatpush.bf16.msra.mxu0 0
      %503 = vmatpush.bf16.msra.mxu0 0
      %504 = vmatpush.bf16.msra.mxu0 0
      %505 = vmatpush.bf16.msra.mxu0 0
      %506 = vmatpush.bf16.msra.mxu0 0
      %507 = vmatpush.bf16.msra.mxu0 %v498
      %508 = vmatmul.bf16.gmra.mxu0 %v492
      %v509 = vpop.f32.mrf.mxu0
      %v510 = vadd.f32 0.0, %v509
      %v511 = vpop.f32.mrf.mxu0
      %v512 = vadd.f32 0.0, %v511
      %513 = vmatmul.bf16.gmra.mxu0 %v495
      %v514 = vpop.f32.mrf.mxu0
      %v515 = vadd.f32 0.0, %v514
      %v516 = vpop.f32.mrf.mxu0
      %517 = vdwg.mxu0
      %v518 = vadd.f32 %v474, %v510
      %v519 = vadd.f32 %v475, %v512
      %v520 = vadd.f32 %v476, %v515
      %s521 = scalar_lea.vmem %s1, 20
      %v522 = vld [vmem:[%s521] sm:$0xf]
      %v523 = vshrl.u32 %v489, 16
      %v525 = vshll.u32 %v489, 16
      %v527 = vrot.slane %v525, 1
      %v528 = vor.u32 %v523, %v527
      %v529 = vshll.u32 %v490, 16
      %v531 = vrot.slane %v529, 1
      %v532 = vsel %vm299, %v528, %v531
      %v533 = vshrl.u32 %v490, 16
      %v535 = vor.u32 %v533, %v531
      %v537 = vsel %vm315, %v532, 0
      %v540 = vsel %vm315, %v535, 0
      %v543 = vsel %vm322, %v522, 0
      %545 = vmatpush.bf16.msra.mxu0 0
      %546 = vmatpush.bf16.msra.mxu0 0
      %547 = vmatpush.bf16.msra.mxu0 0
      %548 = vmatpush.bf16.msra.mxu0 0
      %549 = vmatpush.bf16.msra.mxu0 0
      %550 = vmatpush.bf16.msra.mxu0 0
      %551 = vmatpush.bf16.msra.mxu0 0
      %552 = vmatpush.bf16.msra.mxu0 %v543
      %553 = vmatmul.bf16.gmra.mxu0 %v537
      %v554 = vpop.f32.mrf.mxu0
      %v555 = vadd.f32 0.0, %v554
      %v556 = vpop.f32.mrf.mxu0
      %v557 = vadd.f32 0.0, %v556
      %558 = vmatmul.bf16.gmra.mxu0 %v540
      %v559 = vpop.f32.mrf.mxu0
      %v560 = vadd.f32 0.0, %v559
      %v561 = vpop.f32.mrf.mxu0
      %562 = vdwg.mxu0
      %v563 = vadd.f32 %v518, %v555
      %v564 = vadd.f32 %v519, %v557
      %v565 = vadd.f32 %v520, %v560
      %v566 = vld [vmem:[%s477] sm:$0xc]
      %v567 = vld [vmem:[%s477 + $0x8] sm:$0xf]
      %s568 = scalar_lea.vmem %s1, 24
      %v569 = vld [vmem:[%s568] sm:$0xf]
      %v572 = vunpack.c.l.b16 %v566
      %v573 = vunpack.c.l.b16 %v567
      %v574 = vpack.c.b16 %v487, %v572
      %v575 = vpack.c.b16 %v573, %v573
      %v577 = vshrl.u32 %v574, 16
      %v579 = vrot.slane %v577, 2
      %v580 = vshll.u32 %v574, 16
      %v582 = vrot.slane %v580, 3
      %v583 = vor.u32 %v579, %v582
      %v585 = vshrl.u32 %v575, 16
      %v587 = vrot.slane %v585, 2
      %v588 = vshll.u32 %v575, 16
      %v590 = vrot.slane %v588, 3
      %v591 = vor.u32 %v587, %v590
      %v592 = vsel %vm379, %v583, %v591
      %v594 = vsel %vm315, %v592, 0
      %v597 = vsel %vm315, %v591, 0
      %v600 = vsel %vm322, %v569, 0
      %602 = vmatpush.bf16.msra.mxu0 0
      %603 = vmatpush.bf16.msra.mxu0 0
      %604 = vmatpush.bf16.msra.mxu0 0
      %605 = vmatpush.bf16.msra.mxu0 0
      %606 = vmatpush.bf16.msra.mxu0 0
      %607 = vmatpush.bf16.msra.mxu0 0
      %608 = vmatpush.bf16.msra.mxu0 0
      %609 = vmatpush.bf16.msra.mxu0 %v600
      %610 = vmatmul.bf16.gmra.mxu0 %v594
      %v611 = vpop.f32.mrf.mxu0
      %v612 = vadd.f32 0.0, %v611
      %v613 = vpop.f32.mrf.mxu0
      %v614 = vadd.f32 0.0, %v613
      %615 = vmatmul.bf16.gmra.mxu0 %v597
      %v616 = vpop.f32.mrf.mxu0
      %v617 = vadd.f32 0.0, %v616
      %v618 = vpop.f32.mrf.mxu0
      %619 = vdwg.mxu0
      %v620 = vadd.f32 %v563, %v612
      %v621 = vadd.f32 %v564, %v614
      %v622 = vadd.f32 %v565, %v617
      %v623 = vld [vmem:[%s477] sm:$0x8]
      %v624 = vld [vmem:[%s477 + $0x4] sm:$0xf]
      %v625 = vld [vmem:[%s477 + $0x8] sm:$0xf]
      %v626 = vld [vmem:[%s477 + $0xc] sm:$0x1]
      %s627 = scalar_lea.vmem %s1, 28
      %v628 = vld [vmem:[%s627] sm:$0xf]
      %v633 = vunpack.c.l.b16 %v623
      %v634 = vunpack.c.l.b16 %v624
      %v635 = vunpack.c.l.b16 %v625
      %v636 = vunpack.c.l.b16 %v626
      %v637 = vpack.c.b16 %v634, %v633
      %v638 = vpack.c.b16 %v636, %v635
      %v639 = vrot.slane %v637, 3
      %v640 = vrot.slane %v638, 3
      %v641 = vsel %vm443, %v639, %v640
      %v643 = vsel %vm315, %v641, 0
      %v646 = vsel %vm315, %v640, 0
      %v649 = vsel %vm322, %v628, 0
      %651 = vmatpush.bf16.msra.mxu0 0
      %652 = vmatpush.bf16.msra.mxu0 0
      %653 = vmatpush.bf16.msra.mxu0 0
      %654 = vmatpush.bf16.msra.mxu0 0
      %655 = vmatpush.bf16.msra.mxu0 0
      %656 = vmatpush.bf16.msra.mxu0 0
      %657 = vmatpush.bf16.msra.mxu0 0
      %658 = vmatpush.bf16.msra.mxu0 %v649
      %659 = vmatmul.bf16.gmra.mxu0 %v643
      %v660 = vpop.f32.mrf.mxu0
      %v661 = vadd.f32 0.0, %v660
      %v662 = vpop.f32.mrf.mxu0
      %v663 = vadd.f32 0.0, %v662
      %664 = vmatmul.bf16.gmra.mxu0 %v646
      %v665 = vpop.f32.mrf.mxu0
      %v666 = vadd.f32 0.0, %v665
      %v667 = vpop.f32.mrf.mxu0
      %668 = vdwg.mxu0
      %v669 = vadd.f32 %v620, %v661
      %v670 = vadd.f32 %v621, %v663
      %v671 = vadd.f32 %v622, %v666
      %s672 = scalar_lea.vmem %s277, 32
      %v673 = vld [vmem:[%s672] sm:$0xf]
      %v674 = vld [vmem:[%s672 + $0x4] sm:$0xf]
      %v675 = vld [vmem:[%s672 + $0x8] sm:$0x3]
      %s676 = scalar_lea.vmem %s1, 32
      %v677 = vld [vmem:[%s676] sm:$0xf]
      %v681 = vunpack.c.l.b16 %v673
      %v682 = vunpack.c.l.b16 %v674
      %v683 = vunpack.c.l.b16 %v675
      %v684 = vpack.c.b16 %v682, %v681
      %v685 = vpack.c.b16 %v683, %v683
      %v687 = vsel %vm315, %v684, 0
      %v690 = vsel %vm315, %v685, 0
      %v693 = vsel %vm322, %v677, 0
      %695 = vmatpush.bf16.msra.mxu0 0
      %696 = vmatpush.bf16.msra.mxu0 0
      %697 = vmatpush.bf16.msra.mxu0 0
      %698 = vmatpush.bf16.msra.mxu0 0
      %699 = vmatpush.bf16.msra.mxu0 0
      %700 = vmatpush.bf16.msra.mxu0 0
      %701 = vmatpush.bf16.msra.mxu0 0
      %702 = vmatpush.bf16.msra.mxu0 %v693
      %703 = vmatmul.bf16.gmra.mxu0 %v687
      %v704 = vpop.f32.mrf.mxu0
      %v705 = vadd.f32 0.0, %v704
      %v706 = vpop.f32.mrf.mxu0
      %v707 = vadd.f32 0.0, %v706
      %708 = vmatmul.bf16.gmra.mxu0 %v690
      %v709 = vpop.f32.mrf.mxu0
      %v710 = vadd.f32 0.0, %v709
      %v711 = vpop.f32.mrf.mxu0
      %712 = vdwg.mxu0
      %v713 = vadd.f32 %v669, %v705
      %v714 = vadd.f32 %v670, %v707
      %v715 = vadd.f32 %v671, %v710
      %s716 = scalar_lea.vmem %s1, 36
      %v717 = vld [vmem:[%s716] sm:$0xf]
      %v718 = vshrl.u32 %v684, 16
      %v720 = vshll.u32 %v684, 16
      %v722 = vrot.slane %v720, 1
      %v723 = vor.u32 %v718, %v722
      %v724 = vshll.u32 %v685, 16
      %v726 = vrot.slane %v724, 1
      %v727 = vsel %vm299, %v723, %v726
      %v728 = vshrl.u32 %v685, 16
      %v730 = vor.u32 %v728, %v726
      %v732 = vsel %vm315, %v727, 0
      %v735 = vsel %vm315, %v730, 0
      %v738 = vsel %vm322, %v717, 0
      %740 = vmatpush.bf16.msra.mxu0 0
      %741 = vmatpush.bf16.msra.mxu0 0
      %742 = vmatpush.bf16.msra.mxu0 0
      %743 = vmatpush.bf16.msra.mxu0 0
      %744 = vmatpush.bf16.msra.mxu0 0
      %745 = vmatpush.bf16.msra.mxu0 0
      %746 = vmatpush.bf16.msra.mxu0 0
      %747 = vmatpush.bf16.msra.mxu0 %v738
      %748 = vmatmul.bf16.gmra.mxu0 %v732
      %v749 = vpop.f32.mrf.mxu0
      %v750 = vadd.f32 0.0, %v749
      %v751 = vpop.f32.mrf.mxu0
      %v752 = vadd.f32 0.0, %v751
      %753 = vmatmul.bf16.gmra.mxu0 %v735
      %v754 = vpop.f32.mrf.mxu0
      %v755 = vadd.f32 0.0, %v754
      %v756 = vpop.f32.mrf.mxu0
      %757 = vdwg.mxu0
      %v758 = vadd.f32 %v713, %v750
      %v759 = vadd.f32 %v714, %v752
      %v760 = vadd.f32 %v715, %v755
      %v761 = vld [vmem:[%s672] sm:$0xc]
      %v762 = vld [vmem:[%s672 + $0x8] sm:$0xf]
      %s763 = scalar_lea.vmem %s1, 40
      %v764 = vld [vmem:[%s763] sm:$0xf]
      %v767 = vunpack.c.l.b16 %v761
      %v768 = vunpack.c.l.b16 %v762
      %v769 = vpack.c.b16 %v682, %v767
      %v770 = vpack.c.b16 %v768, %v768
      %v772 = vshrl.u32 %v769, 16
      %v774 = vrot.slane %v772, 2
      %v775 = vshll.u32 %v769, 16
      %v777 = vrot.slane %v775, 3
      %v778 = vor.u32 %v774, %v777
      %v780 = vshrl.u32 %v770, 16
      %v782 = vrot.slane %v780, 2
      %v783 = vshll.u32 %v770, 16
      %v785 = vrot.slane %v783, 3
      %v786 = vor.u32 %v782, %v785
      %v787 = vsel %vm379, %v778, %v786
      %v789 = vsel %vm315, %v787, 0
      %v792 = vsel %vm315, %v786, 0
      %v795 = vsel %vm322, %v764, 0
      %797 = vmatpush.bf16.msra.mxu0 0
      %798 = vmatpush.bf16.msra.mxu0 0
      %799 = vmatpush.bf16.msra.mxu0 0
      %800 = vmatpush.bf16.msra.mxu0 0
      %801 = vmatpush.bf16.msra.mxu0 0
      %802 = vmatpush.bf16.msra.mxu0 0
      %803 = vmatpush.bf16.msra.mxu0 0
      %804 = vmatpush.bf16.msra.mxu0 %v795
      %805 = vmatmul.bf16.gmra.mxu0 %v789
      %v806 = vpop.f32.mrf.mxu0
      %v807 = vadd.f32 0.0, %v806
      %v808 = vpop.f32.mrf.mxu0
      %v809 = vadd.f32 0.0, %v808
      %810 = vmatmul.bf16.gmra.mxu0 %v792
      %v811 = vpop.f32.mrf.mxu0
      %v812 = vadd.f32 0.0, %v811
      %v813 = vpop.f32.mrf.mxu0
      %814 = vdwg.mxu0
      %v815 = vadd.f32 %v758, %v807
      %v816 = vadd.f32 %v759, %v809
      %v817 = vadd.f32 %v760, %v812
      %v818 = vld [vmem:[%s672] sm:$0x8]
      %v819 = vld [vmem:[%s672 + $0x4] sm:$0xf]
      %v820 = vld [vmem:[%s672 + $0x8] sm:$0xf]
      %v821 = vld [vmem:[%s672 + $0xc] sm:$0x1]
      %s822 = scalar_lea.vmem %s1, 44
      %v823 = vld [vmem:[%s822] sm:$0xf]
      %v828 = vunpack.c.l.b16 %v818
      %v829 = vunpack.c.l.b16 %v819
      %v830 = vunpack.c.l.b16 %v820
      %v831 = vunpack.c.l.b16 %v821
      %v832 = vpack.c.b16 %v829, %v828
      %v833 = vpack.c.b16 %v831, %v830
      %v834 = vrot.slane %v832, 3
      %v835 = vrot.slane %v833, 3
      %v836 = vsel %vm443, %v834, %v835
      %v838 = vsel %vm315, %v836, 0
      %v841 = vsel %vm315, %v835, 0
      %v844 = vsel %vm322, %v823, 0
      %846 = vmatpush.bf16.msra.mxu0 0
      %847 = vmatpush.bf16.msra.mxu0 0
      %848 = vmatpush.bf16.msra.mxu0 0
      %849 = vmatpush.bf16.msra.mxu0 0
      %850 = vmatpush.bf16.msra.mxu0 0
      %851 = vmatpush.bf16.msra.mxu0 0
      %852 = vmatpush.bf16.msra.mxu0 0
      %853 = vmatpush.bf16.msra.mxu0 %v844
      %854 = vmatmul.bf16.gmra.mxu0 %v838
      %v855 = vpop.f32.mrf.mxu0
      %v856 = vadd.f32 0.0, %v855
      %v857 = vpop.f32.mrf.mxu0
      %v858 = vadd.f32 0.0, %v857
      %859 = vmatmul.bf16.gmra.mxu0 %v841
      %v860 = vpop.f32.mrf.mxu0
      %v861 = vadd.f32 0.0, %v860
      %v862 = vpop.f32.mrf.mxu0
      %863 = vdwg.mxu0
      %v864 = vadd.f32 %v815, %v856
      %v865 = vadd.f32 %v816, %v858
      %v866 = vadd.f32 %v817, %v861
      %s867 = scalar_lea.vmem %s277, 48
      %v868 = vld [vmem:[%s867] sm:$0xf]
      %v869 = vld [vmem:[%s867 + $0x4] sm:$0xf]
      %v870 = vld [vmem:[%s867 + $0x8] sm:$0x3]
      %s871 = scalar_lea.vmem %s1, 48
      %v872 = vld [vmem:[%s871] sm:$0xf]
      %v876 = vunpack.c.l.b16 %v868
      %v877 = vunpack.c.l.b16 %v869
      %v878 = vunpack.c.l.b16 %v870
      %v879 = vpack.c.b16 %v877, %v876
      %v880 = vpack.c.b16 %v878, %v878
      %v882 = vsel %vm315, %v879, 0
      %v885 = vsel %vm315, %v880, 0
      %v888 = vsel %vm322, %v872, 0
      %890 = vmatpush.bf16.msra.mxu0 0
      %891 = vmatpush.bf16.msra.mxu0 0
      %892 = vmatpush.bf16.msra.mxu0 0
      %893 = vmatpush.bf16.msra.mxu0 0
      %894 = vmatpush.bf16.msra.mxu0 0
      %895 = vmatpush.bf16.msra.mxu0 0
      %896 = vmatpush.bf16.msra.mxu0 0
      %897 = vmatpush.bf16.msra.mxu0 %v888
      %898 = vmatmul.bf16.gmra.mxu0 %v882
      %v899 = vpop.f32.mrf.mxu0
      %v900 = vadd.f32 0.0, %v899
      %v901 = vpop.f32.mrf.mxu0
      %v902 = vadd.f32 0.0, %v901
      %903 = vmatmul.bf16.gmra.mxu0 %v885
      %v904 = vpop.f32.mrf.mxu0
      %v905 = vadd.f32 0.0, %v904
      %v906 = vpop.f32.mrf.mxu0
      %907 = vdwg.mxu0
      %v908 = vadd.f32 %v864, %v900
      %v909 = vadd.f32 %v865, %v902
      %v910 = vadd.f32 %v866, %v905
      %s911 = scalar_lea.vmem %s1, 52
      %v912 = vld [vmem:[%s911] sm:$0xf]
      %v913 = vshrl.u32 %v879, 16
      %v915 = vshll.u32 %v879, 16
      %v917 = vrot.slane %v915, 1
      %v918 = vor.u32 %v913, %v917
      %v919 = vshll.u32 %v880, 16
      %v921 = vrot.slane %v919, 1
      %v922 = vsel %vm299, %v918, %v921
      %v923 = vshrl.u32 %v880, 16
      %v925 = vor.u32 %v923, %v921
      %v927 = vsel %vm315, %v922, 0
      %v930 = vsel %vm315, %v925, 0
      %v933 = vsel %vm322, %v912, 0
      %935 = vmatpush.bf16.msra.mxu0 0
      %936 = vmatpush.bf16.msra.mxu0 0
      %937 = vmatpush.bf16.msra.mxu0 0
      %938 = vmatpush.bf16.msra.mxu0 0
      %939 = vmatpush.bf16.msra.mxu0 0
      %940 = vmatpush.bf16.msra.mxu0 0
      %941 = vmatpush.bf16.msra.mxu0 0
      %942 = vmatpush.bf16.msra.mxu0 %v933
      %943 = vmatmul.bf16.gmra.mxu0 %v927
      %v944 = vpop.f32.mrf.mxu0
      %v945 = vadd.f32 0.0, %v944
      %v946 = vpop.f32.mrf.mxu0
      %v947 = vadd.f32 0.0, %v946
      %948 = vmatmul.bf16.gmra.mxu0 %v930
      %v949 = vpop.f32.mrf.mxu0
      %v950 = vadd.f32 0.0, %v949
      %v951 = vpop.f32.mrf.mxu0
      %952 = vdwg.mxu0
      %v953 = vadd.f32 %v908, %v945
      %v954 = vadd.f32 %v909, %v947
      %v955 = vadd.f32 %v910, %v950
      %v956 = vld [vmem:[%s867] sm:$0xc]
      %v957 = vld [vmem:[%s867 + $0x8] sm:$0xf]
      %s958 = scalar_lea.vmem %s1, 56
      %v959 = vld [vmem:[%s958] sm:$0xf]
      %v962 = vunpack.c.l.b16 %v956
      %v963 = vunpack.c.l.b16 %v957
      %v964 = vpack.c.b16 %v877, %v962
      %v965 = vpack.c.b16 %v963, %v963
      %v967 = vshrl.u32 %v964, 16
      %v969 = vrot.slane %v967, 2
      %v970 = vshll.u32 %v964, 16
      %v972 = vrot.slane %v970, 3
      %v973 = vor.u32 %v969, %v972
      %v975 = vshrl.u32 %v965, 16
      %v977 = vrot.slane %v975, 2
      %v978 = vshll.u32 %v965, 16
      %v980 = vrot.slane %v978, 3
      %v981 = vor.u32 %v977, %v980
      %v982 = vsel %vm379, %v973, %v981
      %v984 = vsel %vm315, %v982, 0
      %v987 = vsel %vm315, %v981, 0
      %v990 = vsel %vm322, %v959, 0
      %992 = vmatpush.bf16.msra.mxu0 0
      %993 = vmatpush.bf16.msra.mxu0 0
      %994 = vmatpush.bf16.msra.mxu0 0
      %995 = vmatpush.bf16.msra.mxu0 0
      %996 = vmatpush.bf16.msra.mxu0 0
      %997 = vmatpush.bf16.msra.mxu0 0
      %998 = vmatpush.bf16.msra.mxu0 0
      %999 = vmatpush.bf16.msra.mxu0 %v990
      %1000 = vmatmul.bf16.gmra.mxu0 %v984
      %v1001 = vpop.f32.mrf.mxu0
      %v1002 = vadd.f32 0.0, %v1001
      %v1003 = vpop.f32.mrf.mxu0
      %v1004 = vadd.f32 0.0, %v1003
      %1005 = vmatmul.bf16.gmra.mxu0 %v987
      %v1006 = vpop.f32.mrf.mxu0
      %v1007 = vadd.f32 0.0, %v1006
      %v1008 = vpop.f32.mrf.mxu0
      %1009 = vdwg.mxu0
      %v1010 = vadd.f32 %v953, %v1002
      %v1011 = vadd.f32 %v954, %v1004
      %v1012 = vadd.f32 %v955, %v1007
      %v1013 = vld [vmem:[%s867] sm:$0x8]
      %v1014 = vld [vmem:[%s867 + $0x4] sm:$0xf]
      %v1015 = vld [vmem:[%s867 + $0x8] sm:$0xf]
      %v1016 = vld [vmem:[%s867 + $0xc] sm:$0x1]
      %s1017 = scalar_lea.vmem %s1, 60
      %v1018 = vld [vmem:[%s1017] sm:$0xf]
      %v1023 = vunpack.c.l.b16 %v1013
      %v1024 = vunpack.c.l.b16 %v1014
      %v1025 = vunpack.c.l.b16 %v1015
      %v1026 = vunpack.c.l.b16 %v1016
      %v1027 = vpack.c.b16 %v1024, %v1023
      %v1028 = vpack.c.b16 %v1026, %v1025
      %v1029 = vrot.slane %v1027, 3
      %v1030 = vrot.slane %v1028, 3
      %v1031 = vsel %vm443, %v1029, %v1030
      %v1033 = vsel %vm315, %v1031, 0
      %v1036 = vsel %vm315, %v1030, 0
      %v1039 = vsel %vm322, %v1018, 0
      %1041 = vmatpush.bf16.msra.mxu0 0
      %1042 = vmatpush.bf16.msra.mxu0 0
      %1043 = vmatpush.bf16.msra.mxu0 0
      %1044 = vmatpush.bf16.msra.mxu0 0
      %1045 = vmatpush.bf16.msra.mxu0 0
      %1046 = vmatpush.bf16.msra.mxu0 0
      %1047 = vmatpush.bf16.msra.mxu0 0
      %1048 = vmatpush.bf16.msra.mxu0 %v1039
      %1049 = vmatmul.bf16.gmra.mxu0 %v1033
      %v1050 = vpop.f32.mrf.mxu0
      %v1051 = vadd.f32 0.0, %v1050
      %v1052 = vpop.f32.mrf.mxu0
      %v1053 = vadd.f32 0.0, %v1052
      %1054 = vmatmul.bf16.gmra.mxu0 %v1036
      %v1055 = vpop.f32.mrf.mxu0
      %v1056 = vadd.f32 0.0, %v1055
      %v1057 = vpop.f32.mrf.mxu0
      %1058 = vdwg.mxu0
      %v1059 = vadd.f32 %v1010, %v1051
      %v1060 = vadd.f32 %v1011, %v1053
      %v1061 = vadd.f32 %v1012, %v1056
      %v1062 = vld [vmem:[%s2] sm:$0x1]
      %v1064 = vperm.slane %v1062, 0
      %v1066 = vadd.f32 %v1059, %v1064
      %v1067 = vadd.f32 %v1060, %v1064
      %v1068 = vadd.f32 %v1061, %v1064
      %vm1069 = vcmp.ge.f32.partialorder %v1066, 0.0
      %vm1070 = vcmp.ge.f32.partialorder %v1067, 0.0
      %vm1071 = vcmp.ge.f32.partialorder %v1068, 0.0
      %v1072 = vmul.f32 %v1066, 0.2
      %v1073 = vmul.f32 %v1067, 0.2
      %v1074 = vmul.f32 %v1068, 0.2
      %v1075 = vsel %vm1069, %v1066, %v1072
      %v1076 = vsel %vm1070, %v1067, %v1073
      %v1077 = vsel %vm1071, %v1068, %v1074
      %vm1078 = vcmask 130048
      %1079 = vst.msk [vmem:[#allocation2] sm:$0xff] %vm1078, 0.0
      %1080 = vst.msk [vmem:[#allocation2 + $0x8] sm:$0xff] %vm1078, 0.0
      %1081 = vst.msk [vmem:[#allocation2 + $0x10] sm:$0xff] %vm1078, 0.0
      %1082 = vst.msk [vmem:[#allocation2 + $0x18] sm:$0xff] %vm1078, 0.0
      %vm1083 = vcmask 125952
      %1084 = vst.msk [vmem:[#allocation2 + $0x20] sm:$0xf] %vm1083, 0.0
      %1085 = vst.msk [vmem:[#allocation2 + $0x7] sm:$0xf] %vm1083, %v1075
      %vm1086 = vcmask 130053
      %1087 = vst.msk [vmem:[#allocation2 + $0x8] sm:$0xe0] %vm1086, %v1075
      %vm1088 = vcmask 122880
      %1089 = vst.msk [vmem:[#allocation2 + $0x10] sm:$0x1] %vm1088, %v1076
      %vm1090 = vcmask 128002
      %1091 = vst.msk [vmem:[#allocation2 + $0x11] sm:$0x3c] %vm1090, %v1076
      %vm1092 = vcmask 130055
      %1093 = vst.msk [vmem:[#allocation2 + $0x12] sm:$0x80] %vm1092, %v1076
      %vm1094 = vcmask 124928
      %1095 = vst.msk [vmem:[#allocation2 + $0x1a] sm:$0x7] %vm1094, %v1077
      %v1096 = vld [vmem:[#allocation2] sm:$0xff]
      %v1097 = vld [vmem:[#allocation2 + $0x8] sm:$0xff]
      %v1098 = vld [vmem:[#allocation2 + $0x10] sm:$0x3f]
      %v1099 = vpack.c.bf16 %v1097, %v1096
      %v1100 = vpack.c.bf16 %v1098, %v1098
      %v1101 = vld [vmem:[%s3] sm:$0xf]
      %v1102 = vld [vmem:[%s3 + $0x4] sm:$0xf]
      %v1103 = vld [vmem:[#allocation2 + $0x1] sm:$0xff]
      %v1104 = vld [vmem:[#allocation2 + $0x9] sm:$0xff]
      %v1105 = vld [vmem:[#allocation2 + $0x11] sm:$0x3f]
      %v1106 = vpack.c.bf16 %v1104, %v1103
      %v1107 = vpack.c.bf16 %v1105, %v1105
      %s1108 = scalar_lea.vmem %s3, 8
      %v1109 = vld [vmem:[%s1108] sm:$0xf]
      %v1110 = vld [vmem:[%s1108 + $0x4] sm:$0xf]
      %v1113 = vunpack.c.l.b16 %v1109
      %v1114 = vunpack.c.l.b16 %v1110
      %v1115 = vpack.c.b16 %v1114, %v1113
      %v1118 = vsel %vm1078, %v1106, 0
      %v1121 = vsel %vm1078, %v1107, 0
      %1123 = vmatpush.bf16.msra.mxu0 0
      %1124 = vmatpush.bf16.msra.mxu0 0
      %1125 = vmatpush.bf16.msra.mxu0 0
      %1126 = vmatpush.bf16.msra.mxu0 0
      %1127 = vmatpush.bf16.msra.mxu0 0
      %1128 = vmatpush.bf16.msra.mxu0 0
      %1129 = vmatpush.bf16.msra.mxu0 0
      %1130 = vmatpush.bf16.msra.mxu0 %v1115
      %1131 = vmatmul.bf16.gmra.mxu0 %v1118
      %v1132 = vpop.f32.mrf.mxu0
      %v1133 = vadd.f32 0.0, %v1132
      %v1134 = vpop.f32.mrf.mxu0
      %v1135 = vadd.f32 0.0, %v1134
      %1136 = vmatmul.bf16.gmra.mxu0 %v1121
      %v1137 = vpop.f32.mrf.mxu0
      %v1138 = vadd.f32 0.0, %v1137
      %v1139 = vpop.f32.mrf.mxu0
      %1140 = vdwg.mxu0
      %v1143 = vunpack.c.l.b16 %v1101
      %v1144 = vunpack.c.l.b16 %v1102
      %v1145 = vpack.c.b16 %v1144, %v1143
      %v1148 = vsel %vm1078, %v1099, 0
      %v1151 = vsel %vm1078, %v1100, 0
      %1153 = vmatpush.bf16.msra.mxu0 0
      %1154 = vmatpush.bf16.msra.mxu0 0
      %1155 = vmatpush.bf16.msra.mxu0 0
      %1156 = vmatpush.bf16.msra.mxu0 0
      %1157 = vmatpush.bf16.msra.mxu0 0
      %1158 = vmatpush.bf16.msra.mxu0 0
      %1159 = vmatpush.bf16.msra.mxu0 0
      %1160 = vmatpush.bf16.msra.mxu0 %v1145
      %1161 = vmatmul.bf16.gmra.mxu0 %v1148
      %v1162 = vpop.f32.mrf.mxu0
      %v1163 = vadd.f32 %v1133, %v1162
      %v1164 = vpop.f32.mrf.mxu0
      %v1165 = vadd.f32 %v1135, %v1164
      %1166 = vmatmul.bf16.gmra.mxu0 %v1151
      %v1167 = vpop.f32.mrf.mxu0
      %v1168 = vadd.f32 %v1138, %v1167
      %v1169 = vpop.f32.mrf.mxu0
      %1170 = vdwg.mxu0
      %v1171 = vld [vmem:[#allocation2 + $0x2] sm:$0xff]
      %v1172 = vld [vmem:[#allocation2 + $0xa] sm:$0xff]
      %v1173 = vld [vmem:[#allocation2 + $0x12] sm:$0x3f]
      %v1174 = vpack.c.bf16 %v1172, %v1171
      %v1175 = vpack.c.bf16 %v1173, %v1173
      %s1176 = scalar_lea.vmem %s3, 16
      %v1177 = vld [vmem:[%s1176] sm:$0xf]
      %v1178 = vld [vmem:[%s1176 + $0x4] sm:$0xf]
      %v1181 = vunpack.c.l.b16 %v1177
      %v1182 = vunpack.c.l.b16 %v1178
      %v1183 = vpack.c.b16 %v1182, %v1181
      %v1186 = vsel %vm1078, %v1174, 0
      %v1189 = vsel %vm1078, %v1175, 0
      %1191 = vmatpush.bf16.msra.mxu0 0
      %1192 = vmatpush.bf16.msra.mxu0 0
      %1193 = vmatpush.bf16.msra.mxu0 0
      %1194 = vmatpush.bf16.msra.mxu0 0
      %1195 = vmatpush.bf16.msra.mxu0 0
      %1196 = vmatpush.bf16.msra.mxu0 0
      %1197 = vmatpush.bf16.msra.mxu0 0
      %1198 = vmatpush.bf16.msra.mxu0 %v1183
      %1199 = vmatmul.bf16.gmra.mxu0 %v1186
      %v1200 = vpop.f32.mrf.mxu0
      %v1201 = vadd.f32 0.0, %v1200
      %v1202 = vpop.f32.mrf.mxu0
      %v1203 = vadd.f32 0.0, %v1202
      %1204 = vmatmul.bf16.gmra.mxu0 %v1189
      %v1205 = vpop.f32.mrf.mxu0
      %v1206 = vadd.f32 0.0, %v1205
      %v1207 = vpop.f32.mrf.mxu0
      %1208 = vdwg.mxu0
      %v1209 = vadd.f32 %v1163, %v1201
      %v1210 = vadd.f32 %v1165, %v1203
      %v1211 = vadd.f32 %v1168, %v1206
      %v1212 = vld [vmem:[#allocation2 + $0x6] sm:$0xff]
      %v1213 = vld [vmem:[#allocation2 + $0xe] sm:$0xff]
      %v1214 = vld [vmem:[#allocation2 + $0x16] sm:$0x3f]
      %v1215 = vpack.c.bf16 %v1213, %v1212
      %v1216 = vpack.c.bf16 %v1214, %v1214
      %s1217 = scalar_lea.vmem %s3, 24
      %v1218 = vld [vmem:[%s1217] sm:$0xf]
      %v1219 = vld [vmem:[%s1217 + $0x4] sm:$0xf]
      %v1222 = vunpack.c.l.b16 %v1218
      %v1223 = vunpack.c.l.b16 %v1219
      %v1224 = vpack.c.b16 %v1223, %v1222
      %v1227 = vsel %vm1078, %v1215, 0
      %v1230 = vsel %vm1078, %v1216, 0
      %1232 = vmatpush.bf16.msra.mxu0 0
      %1233 = vmatpush.bf16.msra.mxu0 0
      %1234 = vmatpush.bf16.msra.mxu0 0
      %1235 = vmatpush.bf16.msra.mxu0 0
      %1236 = vmatpush.bf16.msra.mxu0 0
      %1237 = vmatpush.bf16.msra.mxu0 0
      %1238 = vmatpush.bf16.msra.mxu0 0
      %1239 = vmatpush.bf16.msra.mxu0 %v1224
      %1240 = vmatmul.bf16.gmra.mxu0 %v1227
      %v1241 = vpop.f32.mrf.mxu0
      %v1242 = vadd.f32 0.0, %v1241
      %v1243 = vpop.f32.mrf.mxu0
      %v1244 = vadd.f32 0.0, %v1243
      %1245 = vmatmul.bf16.gmra.mxu0 %v1230
      %v1246 = vpop.f32.mrf.mxu0
      %v1247 = vadd.f32 0.0, %v1246
      %v1248 = vpop.f32.mrf.mxu0
      %1249 = vdwg.mxu0
      %v1250 = vadd.f32 %v1209, %v1242
      %v1251 = vadd.f32 %v1210, %v1244
      %v1252 = vadd.f32 %v1211, %v1247
      %v1253 = vld [vmem:[#allocation2 + $0x7] sm:$0xff]
      %v1254 = vld [vmem:[#allocation2 + $0xf] sm:$0xff]
      %v1255 = vld [vmem:[#allocation2 + $0x17] sm:$0x3f]
      %v1256 = vpack.c.bf16 %v1254, %v1253
      %v1257 = vpack.c.bf16 %v1255, %v1255
      %s1258 = scalar_lea.vmem %s3, 32
      %v1259 = vld [vmem:[%s1258] sm:$0xf]
      %v1260 = vld [vmem:[%s1258 + $0x4] sm:$0xf]
      %v1263 = vunpack.c.l.b16 %v1259
      %v1264 = vunpack.c.l.b16 %v1260
      %v1265 = vpack.c.b16 %v1264, %v1263
      %v1268 = vsel %vm1078, %v1256, 0
      %v1271 = vsel %vm1078, %v1257, 0
      %1273 = vmatpush.bf16.msra.mxu0 0
      %1274 = vmatpush.bf16.msra.mxu0 0
      %1275 = vmatpush.bf16.msra.mxu0 0
      %1276 = vmatpush.bf16.msra.mxu0 0
      %1277 = vmatpush.bf16.msra.mxu0 0
      %1278 = vmatpush.bf16.msra.mxu0 0
      %1279 = vmatpush.bf16.msra.mxu0 0
      %1280 = vmatpush.bf16.msra.mxu0 %v1265
      %1281 = vmatmul.bf16.gmra.mxu0 %v1268
      %v1282 = vpop.f32.mrf.mxu0
      %v1283 = vadd.f32 0.0, %v1282
      %v1284 = vpop.f32.mrf.mxu0
      %v1285 = vadd.f32 0.0, %v1284
      %1286 = vmatmul.bf16.gmra.mxu0 %v1271
      %v1287 = vpop.f32.mrf.mxu0
      %v1288 = vadd.f32 0.0, %v1287
      %v1289 = vpop.f32.mrf.mxu0
      %1290 = vdwg.mxu0
      %v1291 = vadd.f32 %v1250, %v1283
      %v1292 = vadd.f32 %v1251, %v1285
      %v1293 = vadd.f32 %v1252, %v1288
      %v1294 = vld [vmem:[#allocation2 + $0x8] sm:$0xff]
      %v1295 = vld [vmem:[#allocation2 + $0x10] sm:$0xff]
      %v1296 = vld [vmem:[#allocation2 + $0x18] sm:$0x3f]
      %v1297 = vpack.c.bf16 %v1295, %v1294
      %v1298 = vpack.c.bf16 %v1296, %v1296
      %s1299 = scalar_lea.vmem %s3, 40
      %v1300 = vld [vmem:[%s1299] sm:$0xf]
      %v1301 = vld [vmem:[%s1299 + $0x4] sm:$0xf]
      %v1304 = vunpack.c.l.b16 %v1300
      %v1305 = vunpack.c.l.b16 %v1301
      %v1306 = vpack.c.b16 %v1305, %v1304
      %v1309 = vsel %vm1078, %v1297, 0
      %v1312 = vsel %vm1078, %v1298, 0
      %1314 = vmatpush.bf16.msra.mxu0 0
      %1315 = vmatpush.bf16.msra.mxu0 0
      %1316 = vmatpush.bf16.msra.mxu0 0
      %1317 = vmatpush.bf16.msra.mxu0 0
      %1318 = vmatpush.bf16.msra.mxu0 0
      %1319 = vmatpush.bf16.msra.mxu0 0
      %1320 = vmatpush.bf16.msra.mxu0 0
      %1321 = vmatpush.bf16.msra.mxu0 %v1306
      %1322 = vmatmul.bf16.gmra.mxu0 %v1309
      %v1323 = vpop.f32.mrf.mxu0
      %v1324 = vadd.f32 0.0, %v1323
      %v1325 = vpop.f32.mrf.mxu0
      %v1326 = vadd.f32 0.0, %v1325
      %1327 = vmatmul.bf16.gmra.mxu0 %v1312
      %v1328 = vpop.f32.mrf.mxu0
      %v1329 = vadd.f32 0.0, %v1328
      %v1330 = vpop.f32.mrf.mxu0
      %1331 = vdwg.mxu0
      %v1332 = vadd.f32 %v1291, %v1324
      %v1333 = vadd.f32 %v1292, %v1326
      %v1334 = vadd.f32 %v1293, %v1329
      %v1335 = vld [vmem:[#allocation2 + $0xc] sm:$0xff]
      %v1336 = vld [vmem:[#allocation2 + $0x14] sm:$0xff]
      %v1337 = vld [vmem:[#allocation2 + $0x1c] sm:$0x3f]
      %v1338 = vpack.c.bf16 %v1336, %v1335
      %v1339 = vpack.c.bf16 %v1337, %v1337
      %s1340 = scalar_lea.vmem %s3, 48
      %v1341 = vld [vmem:[%s1340] sm:$0xf]
      %v1342 = vld [vmem:[%s1340 + $0x4] sm:$0xf]
      %v1345 = vunpack.c.l.b16 %v1341
      %v1346 = vunpack.c.l.b16 %v1342
      %v1347 = vpack.c.b16 %v1346, %v1345
      %v1350 = vsel %vm1078, %v1338, 0
      %v1353 = vsel %vm1078, %v1339, 0
      %1355 = vmatpush.bf16.msra.mxu0 0
      %1356 = vmatpush.bf16.msra.mxu0 0
      %1357 = vmatpush.bf16.msra.mxu0 0
      %1358 = vmatpush.bf16.msra.mxu0 0
      %1359 = vmatpush.bf16.msra.mxu0 0
      %1360 = vmatpush.bf16.msra.mxu0 0
      %1361 = vmatpush.bf16.msra.mxu0 0
      %1362 = vmatpush.bf16.msra.mxu0 %v1347
      %1363 = vmatmul.bf16.gmra.mxu0 %v1350
      %v1364 = vpop.f32.mrf.mxu0
      %v1365 = vadd.f32 0.0, %v1364
      %v1366 = vpop.f32.mrf.mxu0
      %v1367 = vadd.f32 0.0, %v1366
      %1368 = vmatmul.bf16.gmra.mxu0 %v1353
      %v1369 = vpop.f32.mrf.mxu0
      %v1370 = vadd.f32 0.0, %v1369
      %v1371 = vpop.f32.mrf.mxu0
      %1372 = vdwg.mxu0
      %v1373 = vadd.f32 %v1332, %v1365
      %v1374 = vadd.f32 %v1333, %v1367
      %v1375 = vadd.f32 %v1334, %v1370
      %v1376 = vld [vmem:[#allocation2 + $0xd] sm:$0xff]
      %v1377 = vld [vmem:[#allocation2 + $0x15] sm:$0xff]
      %v1378 = vld [vmem:[#allocation2 + $0x1d] sm:$0x3f]
      %v1379 = vpack.c.bf16 %v1377, %v1376
      %v1380 = vpack.c.bf16 %v1378, %v1378
      %s1381 = scalar_lea.vmem %s3, 56
      %v1382 = vld [vmem:[%s1381] sm:$0xf]
      %v1383 = vld [vmem:[%s1381 + $0x4] sm:$0xf]
      %v1386 = vunpack.c.l.b16 %v1382
      %v1387 = vunpack.c.l.b16 %v1383
      %v1388 = vpack.c.b16 %v1387, %v1386
      %v1391 = vsel %vm1078, %v1379, 0
      %v1394 = vsel %vm1078, %v1380, 0
      %1396 = vmatpush.bf16.msra.mxu0 0
      %1397 = vmatpush.bf16.msra.mxu0 0
      %1398 = vmatpush.bf16.msra.mxu0 0
      %1399 = vmatpush.bf16.msra.mxu0 0
      %1400 = vmatpush.bf16.msra.mxu0 0
      %1401 = vmatpush.bf16.msra.mxu0 0
      %1402 = vmatpush.bf16.msra.mxu0 0
      %1403 = vmatpush.bf16.msra.mxu0 %v1388
      %1404 = vmatmul.bf16.gmra.mxu0 %v1391
      %v1405 = vpop.f32.mrf.mxu0
      %v1406 = vadd.f32 0.0, %v1405
      %v1407 = vpop.f32.mrf.mxu0
      %v1408 = vadd.f32 0.0, %v1407
      %1409 = vmatmul.bf16.gmra.mxu0 %v1394
      %v1410 = vpop.f32.mrf.mxu0
      %v1411 = vadd.f32 0.0, %v1410
      %v1412 = vpop.f32.mrf.mxu0
      %1413 = vdwg.mxu0
      %v1414 = vadd.f32 %v1373, %v1406
      %v1415 = vadd.f32 %v1374, %v1408
      %v1416 = vadd.f32 %v1375, %v1411
      %v1417 = vld [vmem:[#allocation2 + $0xe] sm:$0xff]
      %v1418 = vld [vmem:[#allocation2 + $0x16] sm:$0xff]
      %v1419 = vld [vmem:[#allocation2 + $0x1e] sm:$0x3f]
      %v1420 = vpack.c.bf16 %v1418, %v1417
      %v1421 = vpack.c.bf16 %v1419, %v1419
      %s1422 = scalar_lea.vmem %s3, 64
      %v1423 = vld [vmem:[%s1422] sm:$0xf]
      %v1424 = vld [vmem:[%s1422 + $0x4] sm:$0xf]
      %v1427 = vunpack.c.l.b16 %v1423
      %v1428 = vunpack.c.l.b16 %v1424
      %v1429 = vpack.c.b16 %v1428, %v1427
      %v1432 = vsel %vm1078, %v1420, 0
      %v1435 = vsel %vm1078, %v1421, 0
      %1437 = vmatpush.bf16.msra.mxu0 0
      %1438 = vmatpush.bf16.msra.mxu0 0
      %1439 = vmatpush.bf16.msra.mxu0 0
      %1440 = vmatpush.bf16.msra.mxu0 0
      %1441 = vmatpush.bf16.msra.mxu0 0
      %1442 = vmatpush.bf16.msra.mxu0 0
      %1443 = vmatpush.bf16.msra.mxu0 0
      %1444 = vmatpush.bf16.msra.mxu0 %v1429
      %1445 = vmatmul.bf16.gmra.mxu0 %v1432
      %v1446 = vpop.f32.mrf.mxu0
      %v1447 = vadd.f32 0.0, %v1446
      %v1448 = vpop.f32.mrf.mxu0
      %v1449 = vadd.f32 0.0, %v1448
      %1450 = vmatmul.bf16.gmra.mxu0 %v1435
      %v1451 = vpop.f32.mrf.mxu0
      %v1452 = vadd.f32 0.0, %v1451
      %v1453 = vpop.f32.mrf.mxu0
      %1454 = vdwg.mxu0
      %v1455 = vadd.f32 %v1414, %v1447
      %v1456 = vadd.f32 %v1415, %v1449
      %v1457 = vadd.f32 %v1416, %v1452
      %v1458 = vld [vmem:[%s4] sm:$0x1]
      %v1460 = vperm.slane %v1458, 0
      %v1462 = vadd.f32 %v1455, %v1460
      %v1463 = vadd.f32 %v1456, %v1460
      %v1464 = vadd.f32 %v1457, %v1460
      %vm1465 = vcmp.ge.f32.partialorder %v1462, 0.0
      %vm1466 = vcmp.ge.f32.partialorder %v1463, 0.0
      %vm1467 = vcmp.ge.f32.partialorder %v1464, 0.0
      %v1468 = vmul.f32 %v1462, 0.2
      %v1469 = vmul.f32 %v1463, 0.2
      %v1470 = vmul.f32 %v1464, 0.2
      %v1471 = vsel %vm1465, %v1462, %v1468
      %v1472 = vsel %vm1466, %v1463, %v1469
      %v1473 = vsel %vm1467, %v1464, %v1470
      %1474 = vst.msk [vmem:[#allocation2 + $0x7] sm:$0xf] %vm1083, %v1471
      %vm1475 = vcmask 130054
      %1476 = vst.msk [vmem:[#allocation2 + $0x7] sm:$0xc0] %vm1475, %v1471
      %vm1477 = vcmask 123904
      %1478 = vst.msk [vmem:[#allocation2 + $0xf] sm:$0x3] %vm1477, %v1472
      %vm1479 = vcmask 130052
      %1480 = vst.msk [vmem:[#allocation2 + $0xf] sm:$0xf0] %vm1479, %v1472
      %1481 = vst.msk [vmem:[#allocation2 + $0x17] sm:$0x3c] %vm1090, %v1473
      %v1482 = vld [vmem:[#allocation2] sm:$0xff]
      %v1483 = vld [vmem:[#allocation2 + $0x8] sm:$0xff]
      %v1484 = vld [vmem:[#allocation2 + $0x10] sm:$0x3f]
      %v1485 = vpack.c.bf16 %v1483, %v1482
      %v1486 = vpack.c.bf16 %v1484, %v1484
      %v1487 = vld [vmem:[%s5] sm:$0xf]
      %v1488 = vld [vmem:[%s5 + $0x4] sm:$0xf]
      %v1489 = vld [vmem:[#allocation2 + $0x1] sm:$0xff]
      %v1490 = vld [vmem:[#allocation2 + $0x9] sm:$0xff]
      %v1491 = vld [vmem:[#allocation2 + $0x11] sm:$0x3f]
      %v1492 = vpack.c.bf16 %v1490, %v1489
      %v1493 = vpack.c.bf16 %v1491, %v1491
      %s1494 = scalar_lea.vmem %s5, 8
      %v1495 = vld [vmem:[%s1494] sm:$0xf]
      %v1496 = vld [vmem:[%s1494 + $0x4] sm:$0xf]
      %v1499 = vunpack.c.l.b16 %v1495
      %v1500 = vunpack.c.l.b16 %v1496
      %v1501 = vpack.c.b16 %v1500, %v1499
      %v1504 = vsel %vm1078, %v1492, 0
      %v1507 = vsel %vm1078, %v1493, 0
      %1509 = vmatpush.bf16.msra.mxu0 0
      %1510 = vmatpush.bf16.msra.mxu0 0
      %1511 = vmatpush.bf16.msra.mxu0 0
      %1512 = vmatpush.bf16.msra.mxu0 0
      %1513 = vmatpush.bf16.msra.mxu0 0
      %1514 = vmatpush.bf16.msra.mxu0 0
      %1515 = vmatpush.bf16.msra.mxu0 0
      %1516 = vmatpush.bf16.msra.mxu0 %v1501
      %1517 = vmatmul.bf16.gmra.mxu0 %v1504
      %v1518 = vpop.f32.mrf.mxu0
      %v1519 = vadd.f32 0.0, %v1518
      %v1520 = vpop.f32.mrf.mxu0
      %v1521 = vadd.f32 0.0, %v1520
      %1522 = vmatmul.bf16.gmra.mxu0 %v1507
      %v1523 = vpop.f32.mrf.mxu0
      %v1524 = vadd.f32 0.0, %v1523
      %v1525 = vpop.f32.mrf.mxu0
      %1526 = vdwg.mxu0
      %v1529 = vunpack.c.l.b16 %v1487
      %v1530 = vunpack.c.l.b16 %v1488
      %v1531 = vpack.c.b16 %v1530, %v1529
      %v1534 = vsel %vm1078, %v1485, 0
      %v1537 = vsel %vm1078, %v1486, 0
      %1539 = vmatpush.bf16.msra.mxu0 0
      %1540 = vmatpush.bf16.msra.mxu0 0
      %1541 = vmatpush.bf16.msra.mxu0 0
      %1542 = vmatpush.bf16.msra.mxu0 0
      %1543 = vmatpush.bf16.msra.mxu0 0
      %1544 = vmatpush.bf16.msra.mxu0 0
      %1545 = vmatpush.bf16.msra.mxu0 0
      %1546 = vmatpush.bf16.msra.mxu0 %v1531
      %1547 = vmatmul.bf16.gmra.mxu0 %v1534
      %v1548 = vpop.f32.mrf.mxu0
      %v1549 = vadd.f32 %v1519, %v1548
      %v1550 = vpop.f32.mrf.mxu0
      %v1551 = vadd.f32 %v1521, %v1550
      %1552 = vmatmul.bf16.gmra.mxu0 %v1537
      %v1553 = vpop.f32.mrf.mxu0
      %v1554 = vadd.f32 %v1524, %v1553
      %v1555 = vpop.f32.mrf.mxu0
      %1556 = vdwg.mxu0
      %v1557 = vld [vmem:[#allocation2 + $0x2] sm:$0xff]
      %v1558 = vld [vmem:[#allocation2 + $0xa] sm:$0xff]
      %v1559 = vld [vmem:[#allocation2 + $0x12] sm:$0x3f]
      %v1560 = vpack.c.bf16 %v1558, %v1557
      %v1561 = vpack.c.bf16 %v1559, %v1559
      %s1562 = scalar_lea.vmem %s5, 16
      %v1563 = vld [vmem:[%s1562] sm:$0xf]
      %v1564 = vld [vmem:[%s1562 + $0x4] sm:$0xf]
      %v1567 = vunpack.c.l.b16 %v1563
      %v1568 = vunpack.c.l.b16 %v1564
      %v1569 = vpack.c.b16 %v1568, %v1567
      %v1572 = vsel %vm1078, %v1560, 0
      %v1575 = vsel %vm1078, %v1561, 0
      %1577 = vmatpush.bf16.msra.mxu0 0
      %1578 = vmatpush.bf16.msra.mxu0 0
      %1579 = vmatpush.bf16.msra.mxu0 0
      %1580 = vmatpush.bf16.msra.mxu0 0
      %1581 = vmatpush.bf16.msra.mxu0 0
      %1582 = vmatpush.bf16.msra.mxu0 0
      %1583 = vmatpush.bf16.msra.mxu0 0
      %1584 = vmatpush.bf16.msra.mxu0 %v1569
      %1585 = vmatmul.bf16.gmra.mxu0 %v1572
      %v1586 = vpop.f32.mrf.mxu0
      %v1587 = vadd.f32 0.0, %v1586
      %v1588 = vpop.f32.mrf.mxu0
      %v1589 = vadd.f32 0.0, %v1588
      %1590 = vmatmul.bf16.gmra.mxu0 %v1575
      %v1591 = vpop.f32.mrf.mxu0
      %v1592 = vadd.f32 0.0, %v1591
      %v1593 = vpop.f32.mrf.mxu0
      %1594 = vdwg.mxu0
      %v1595 = vadd.f32 %v1549, %v1587
      %v1596 = vadd.f32 %v1551, %v1589
      %v1597 = vadd.f32 %v1554, %v1592
      %v1598 = vld [vmem:[#allocation2 + $0x6] sm:$0xff]
      %v1599 = vld [vmem:[#allocation2 + $0xe] sm:$0xff]
      %v1600 = vld [vmem:[#allocation2 + $0x16] sm:$0x3f]
      %v1601 = vpack.c.bf16 %v1599, %v1598
      %v1602 = vpack.c.bf16 %v1600, %v1600
      %s1603 = scalar_lea.vmem %s5, 24
      %v1604 = vld [vmem:[%s1603] sm:$0xf]
      %v1605 = vld [vmem:[%s1603 + $0x4] sm:$0xf]
      %v1608 = vunpack.c.l.b16 %v1604
      %v1609 = vunpack.c.l.b16 %v1605
      %v1610 = vpack.c.b16 %v1609, %v1608
      %v1613 = vsel %vm1078, %v1601, 0
      %v1616 = vsel %vm1078, %v1602, 0
      %1618 = vmatpush.bf16.msra.mxu0 0
      %1619 = vmatpush.bf16.msra.mxu0 0
      %1620 = vmatpush.bf16.msra.mxu0 0
      %1621 = vmatpush.bf16.msra.mxu0 0
      %1622 = vmatpush.bf16.msra.mxu0 0
      %1623 = vmatpush.bf16.msra.mxu0 0
      %1624 = vmatpush.bf16.msra.mxu0 0
      %1625 = vmatpush.bf16.msra.mxu0 %v1610
      %1626 = vmatmul.bf16.gmra.mxu0 %v1613
      %v1627 = vpop.f32.mrf.mxu0
      %v1628 = vadd.f32 0.0, %v1627
      %v1629 = vpop.f32.mrf.mxu0
      %v1630 = vadd.f32 0.0, %v1629
      %1631 = vmatmul.bf16.gmra.mxu0 %v1616
      %v1632 = vpop.f32.mrf.mxu0
      %v1633 = vadd.f32 0.0, %v1632
      %v1634 = vpop.f32.mrf.mxu0
      %1635 = vdwg.mxu0
      %v1636 = vadd.f32 %v1595, %v1628
      %v1637 = vadd.f32 %v1596, %v1630
      %v1638 = vadd.f32 %v1597, %v1633
      %v1639 = vld [vmem:[#allocation2 + $0x7] sm:$0xff]
      %v1640 = vld [vmem:[#allocation2 + $0xf] sm:$0xff]
      %v1641 = vld [vmem:[#allocation2 + $0x17] sm:$0x3f]
      %v1642 = vpack.c.bf16 %v1640, %v1639
      %v1643 = vpack.c.bf16 %v1641, %v1641
      %s1644 = scalar_lea.vmem %s5, 32
      %v1645 = vld [vmem:[%s1644] sm:$0xf]
      %v1646 = vld [vmem:[%s1644 + $0x4] sm:$0xf]
      %v1649 = vunpack.c.l.b16 %v1645
      %v1650 = vunpack.c.l.b16 %v1646
      %v1651 = vpack.c.b16 %v1650, %v1649
      %v1654 = vsel %vm1078, %v1642, 0
      %v1657 = vsel %vm1078, %v1643, 0
      %1659 = vmatpush.bf16.msra.mxu0 0
      %1660 = vmatpush.bf16.msra.mxu0 0
      %1661 = vmatpush.bf16.msra.mxu0 0
      %1662 = vmatpush.bf16.msra.mxu0 0
      %1663 = vmatpush.bf16.msra.mxu0 0
      %1664 = vmatpush.bf16.msra.mxu0 0
      %1665 = vmatpush.bf16.msra.mxu0 0
      %1666 = vmatpush.bf16.msra.mxu0 %v1651
      %1667 = vmatmul.bf16.gmra.mxu0 %v1654
      %v1668 = vpop.f32.mrf.mxu0
      %v1669 = vadd.f32 0.0, %v1668
      %v1670 = vpop.f32.mrf.mxu0
      %v1671 = vadd.f32 0.0, %v1670
      %1672 = vmatmul.bf16.gmra.mxu0 %v1657
      %v1673 = vpop.f32.mrf.mxu0
      %v1674 = vadd.f32 0.0, %v1673
      %v1675 = vpop.f32.mrf.mxu0
      %1676 = vdwg.mxu0
      %v1677 = vadd.f32 %v1636, %v1669
      %v1678 = vadd.f32 %v1637, %v1671
      %v1679 = vadd.f32 %v1638, %v1674
      %v1680 = vld [vmem:[#allocation2 + $0x8] sm:$0xff]
      %v1681 = vld [vmem:[#allocation2 + $0x10] sm:$0xff]
      %v1682 = vld [vmem:[#allocation2 + $0x18] sm:$0x3f]
      %v1683 = vpack.c.bf16 %v1681, %v1680
      %v1684 = vpack.c.bf16 %v1682, %v1682
      %s1685 = scalar_lea.vmem %s5, 40
      %v1686 = vld [vmem:[%s1685] sm:$0xf]
      %v1687 = vld [vmem:[%s1685 + $0x4] sm:$0xf]
      %v1690 = vunpack.c.l.b16 %v1686
      %v1691 = vunpack.c.l.b16 %v1687
      %v1692 = vpack.c.b16 %v1691, %v1690
      %v1695 = vsel %vm1078, %v1683, 0
      %v1698 = vsel %vm1078, %v1684, 0
      %1700 = vmatpush.bf16.msra.mxu0 0
      %1701 = vmatpush.bf16.msra.mxu0 0
      %1702 = vmatpush.bf16.msra.mxu0 0
      %1703 = vmatpush.bf16.msra.mxu0 0
      %1704 = vmatpush.bf16.msra.mxu0 0
      %1705 = vmatpush.bf16.msra.mxu0 0
      %1706 = vmatpush.bf16.msra.mxu0 0
      %1707 = vmatpush.bf16.msra.mxu0 %v1692
      %1708 = vmatmul.bf16.gmra.mxu0 %v1695
      %v1709 = vpop.f32.mrf.mxu0
      %v1710 = vadd.f32 0.0, %v1709
      %v1711 = vpop.f32.mrf.mxu0
      %v1712 = vadd.f32 0.0, %v1711
      %1713 = vmatmul.bf16.gmra.mxu0 %v1698
      %v1714 = vpop.f32.mrf.mxu0
      %v1715 = vadd.f32 0.0, %v1714
      %v1716 = vpop.f32.mrf.mxu0
      %1717 = vdwg.mxu0
      %v1718 = vadd.f32 %v1677, %v1710
      %v1719 = vadd.f32 %v1678, %v1712
      %v1720 = vadd.f32 %v1679, %v1715
      %v1721 = vld [vmem:[#allocation2 + $0xc] sm:$0xff]
      %v1722 = vld [vmem:[#allocation2 + $0x14] sm:$0xff]
      %v1723 = vld [vmem:[#allocation2 + $0x1c] sm:$0x3f]
      %v1724 = vpack.c.bf16 %v1722, %v1721
      %v1725 = vpack.c.bf16 %v1723, %v1723
      %s1726 = scalar_lea.vmem %s5, 48
      %v1727 = vld [vmem:[%s1726] sm:$0xf]
      %v1728 = vld [vmem:[%s1726 + $0x4] sm:$0xf]
      %v1731 = vunpack.c.l.b16 %v1727
      %v1732 = vunpack.c.l.b16 %v1728
      %v1733 = vpack.c.b16 %v1732, %v1731
      %v1736 = vsel %vm1078, %v1724, 0
      %v1739 = vsel %vm1078, %v1725, 0
      %1741 = vmatpush.bf16.msra.mxu0 0
      %1742 = vmatpush.bf16.msra.mxu0 0
      %1743 = vmatpush.bf16.msra.mxu0 0
      %1744 = vmatpush.bf16.msra.mxu0 0
      %1745 = vmatpush.bf16.msra.mxu0 0
      %1746 = vmatpush.bf16.msra.mxu0 0
      %1747 = vmatpush.bf16.msra.mxu0 0
      %1748 = vmatpush.bf16.msra.mxu0 %v1733
      %1749 = vmatmul.bf16.gmra.mxu0 %v1736
      %v1750 = vpop.f32.mrf.mxu0
      %v1751 = vadd.f32 0.0, %v1750
      %v1752 = vpop.f32.mrf.mxu0
      %v1753 = vadd.f32 0.0, %v1752
      %1754 = vmatmul.bf16.gmra.mxu0 %v1739
      %v1755 = vpop.f32.mrf.mxu0
      %v1756 = vadd.f32 0.0, %v1755
      %v1757 = vpop.f32.mrf.mxu0
      %1758 = vdwg.mxu0
      %v1759 = vadd.f32 %v1718, %v1751
      %v1760 = vadd.f32 %v1719, %v1753
      %v1761 = vadd.f32 %v1720, %v1756
      %v1762 = vld [vmem:[#allocation2 + $0xd] sm:$0xff]
      %v1763 = vld [vmem:[#allocation2 + $0x15] sm:$0xff]
      %v1764 = vld [vmem:[#allocation2 + $0x1d] sm:$0x3f]
      %v1765 = vpack.c.bf16 %v1763, %v1762
      %v1766 = vpack.c.bf16 %v1764, %v1764
      %s1767 = scalar_lea.vmem %s5, 56
      %v1768 = vld [vmem:[%s1767] sm:$0xf]
      %v1769 = vld [vmem:[%s1767 + $0x4] sm:$0xf]
      %v1772 = vunpack.c.l.b16 %v1768
      %v1773 = vunpack.c.l.b16 %v1769
      %v1774 = vpack.c.b16 %v1773, %v1772
      %v1777 = vsel %vm1078, %v1765, 0
      %v1780 = vsel %vm1078, %v1766, 0
      %1782 = vmatpush.bf16.msra.mxu0 0
      %1783 = vmatpush.bf16.msra.mxu0 0
      %1784 = vmatpush.bf16.msra.mxu0 0
      %1785 = vmatpush.bf16.msra.mxu0 0
      %1786 = vmatpush.bf16.msra.mxu0 0
      %1787 = vmatpush.bf16.msra.mxu0 0
      %1788 = vmatpush.bf16.msra.mxu0 0
      %1789 = vmatpush.bf16.msra.mxu0 %v1774
      %1790 = vmatmul.bf16.gmra.mxu0 %v1777
      %v1791 = vpop.f32.mrf.mxu0
      %v1792 = vadd.f32 0.0, %v1791
      %v1793 = vpop.f32.mrf.mxu0
      %v1794 = vadd.f32 0.0, %v1793
      %1795 = vmatmul.bf16.gmra.mxu0 %v1780
      %v1796 = vpop.f32.mrf.mxu0
      %v1797 = vadd.f32 0.0, %v1796
      %v1798 = vpop.f32.mrf.mxu0
      %1799 = vdwg.mxu0
      %v1800 = vadd.f32 %v1759, %v1792
      %v1801 = vadd.f32 %v1760, %v1794
      %v1802 = vadd.f32 %v1761, %v1797
      %v1803 = vld [vmem:[#allocation2 + $0xe] sm:$0xff]
      %v1804 = vld [vmem:[#allocation2 + $0x16] sm:$0xff]
      %v1805 = vld [vmem:[#allocation2 + $0x1e] sm:$0x3f]
      %v1806 = vpack.c.bf16 %v1804, %v1803
      %v1807 = vpack.c.bf16 %v1805, %v1805
      %s1808 = scalar_lea.vmem %s5, 64
      %v1809 = vld [vmem:[%s1808] sm:$0xf]
      %v1810 = vld [vmem:[%s1808 + $0x4] sm:$0xf]
      %v1813 = vunpack.c.l.b16 %v1809
      %v1814 = vunpack.c.l.b16 %v1810
      %v1815 = vpack.c.b16 %v1814, %v1813
      %v1818 = vsel %vm1078, %v1806, 0
      %v1821 = vsel %vm1078, %v1807, 0
      %1823 = vmatpush.bf16.msra.mxu0 0
      %1824 = vmatpush.bf16.msra.mxu0 0
      %1825 = vmatpush.bf16.msra.mxu0 0
      %1826 = vmatpush.bf16.msra.mxu0 0
      %1827 = vmatpush.bf16.msra.mxu0 0
      %1828 = vmatpush.bf16.msra.mxu0 0
      %1829 = vmatpush.bf16.msra.mxu0 0
      %1830 = vmatpush.bf16.msra.mxu0 %v1815
      %1831 = vmatmul.bf16.gmra.mxu0 %v1818
      %v1832 = vpop.f32.mrf.mxu0
      %v1833 = vadd.f32 0.0, %v1832
      %v1834 = vpop.f32.mrf.mxu0
      %v1835 = vadd.f32 0.0, %v1834
      %1836 = vmatmul.bf16.gmra.mxu0 %v1821
      %v1837 = vpop.f32.mrf.mxu0
      %v1838 = vadd.f32 0.0, %v1837
      %v1839 = vpop.f32.mrf.mxu0
      %1840 = vdwg.mxu0
      %v1841 = vadd.f32 %v1800, %v1833
      %v1842 = vadd.f32 %v1801, %v1835
      %v1843 = vadd.f32 %v1802, %v1838
      %v1844 = vld [vmem:[%s6] sm:$0x1]
      %v1846 = vperm.slane %v1844, 0
      %v1848 = vadd.f32 %v1841, %v1846
      %v1849 = vadd.f32 %v1842, %v1846
      %v1850 = vadd.f32 %v1843, %v1846
      %v1851 = vadd.f32 %v1848, %v1075
      %1852 = vst.msk [vmem:[%s283] sm:$0xf] %vm1083, %v1851
      %vm1855 = vcmask 1040384
      %v1856 = vrot.slane %v1075, 7
      %v1857 = vrot.slane %v1076, 7
      %v1858 = vsel %vm1855, %v1856, %v1857
      %v1861 = vadd.f32 %v1848, %v1856
      %v1862 = vadd.f32 %v1849, %v1858
      %s1863 = scalar_lea.vmem %s283, 4
      %1864 = vst.msk [vmem:[%s1863 - $0x6] sm:$0xc0] %vm1475, %v1861
      %1865 = vst.msk [vmem:[%s1863 + $0x2] sm:$0x3] %vm1477, %v1862
      %v1866 = vrot.slane %v1076, 6
      %v1868 = vadd.f32 %v1849, %v1866
      %s1869 = scalar_lea.vmem %s283, 8
      %1870 = vst.msk [vmem:[%s1869 - $0x4] sm:$0xf0] %vm1479, %v1868
      %vm1872 = vcmask 1042432
      %v1873 = vrot.slane %v1076, 5
      %v1874 = vrot.slane %v1077, 5
      %v1875 = vsel %vm1872, %v1873, %v1874
      %v1877 = vadd.f32 %v1850, %v1875
      %s1878 = scalar_lea.vmem %s283, 12
      %1879 = vst.msk [vmem:[%s1878 - $0x2] sm:$0x3c] %vm1090, %v1877
      %p1880 = scmp.lt.s32.totalorder %s18, 1
      %s1881 = scalar_select %p1880, %s18, 1
      %s1882 = smul.addr %s1881, 4
      %s1883 = smul.addr %s1882, 4
      %s1884 = scalar_lea.vmem %s7, %s1883
      // Predicated region
      $region49: #{_lambda_.4} parent=47 // pred_check
        %p1885 = pneg %p188
      $region50: #{_lambda_.4} parent=47 // pred_check_branch
        %1887 = sbr.rel (%p1885) target = $region52
      $region51: #{_lambda_.4} parent=47 // pred_region
        _
      $region52: #{_lambda_.4} parent=47 // pred_fallthru
        _
    $region48: #{_lambda_.4} parent=5 // pred_fallthru
      _
    %p1888 = scmp.le.s32.totalorder 2, %s13
    // Predicated region
    $region53: #{_lambda_.4} parent=5 // pred_check
      %p1889 = pneg %p1888
    $region54: #{_lambda_.4} parent=5 // pred_check_branch
      %1891 = sbr.rel (%p1889) target = $region56
    $region55: #{_lambda_.4} parent=5 // pred_region
      %s1892 = ssub.s32 %s13, 2
      // Predicated region
      $region57: #{_lambda_.4} parent=55 // pred_check
        %p1893 = pneg %p194
      $region58: #{_lambda_.4} parent=55 // pred_check_branch
        %1895 = sbr.rel (%p1893) target = $region60
      $region59: #{_lambda_.4} parent=55 // pred_region
        %p1896 = scmp.lt.s32.totalorder %s19, 1
        %s1897 = scalar_select %p1896, %s19, 1
        %s1898 = smul.addr %s1897, 4
        %s1899 = smul.addr %s1898, 4
        %s1900 = scalar_lea.vmem %s7, %s1899
      $region60: #{_lambda_.4} parent=55 // pred_fallthru
        _
    $region56: #{_lambda_.4} parent=5 // pred_fallthru
      _
  $region6: #{_lambda_.4} parent=0 // loop_footer
    %s17 = sadd.s32 1, %s13
  $region7: #{_lambda_.4} parent=0 // loop_footer_branch
    %12 = sbr.rel target = $region3
  $region8: #{_lambda_.4} parent=0 // loop_exit
    _

// kernel: _lambda_.5
$region0: #{_lambda_.5}
  #allocation0 [shape = 'u32[]', space=smem, size = 0x4, offset = 0x4, fixed_abs, tag = 'smem constant byte address 0x4 - core index']
  #allocation1 [shape = 'u32[72,128]{1,0:T(1,128)}', space=vmem, size = 0x9000, scoped, tag = 'internal scratch']
  #allocation2 [shape = 'f32[36,16]{1,0:T(8,128)}', space=vmem, size = 0x5000, scoped, tag = 'scratch operand']
  %s0 = inlined_call_operand.vmem [shape: f32[2,16,16], index: 0, kind: input, shape index: {}]
  %s1 = inlined_call_operand.vmem [shape: bf16[2,16,16], index: 1, kind: input, shape index: {}]
  %s2 = inlined_call_operand.vmem [shape: f32[2,1,16], index: 2, kind: input, shape index: {}]
  %s3 = inlined_call_operand.vmem [shape: bf16[2,16,16], index: 3, kind: input, shape index: {}]
  %s4 = inlined_call_operand.vmem [shape: f32[2,1,16], index: 4, kind: input, shape index: {}]
  %s5 = inlined_call_operand.vmem [shape: bf16[2,16,16], index: 5, kind: input, shape index: {}]
  %s6 = inlined_call_operand.vmem [shape: f32[2,1,16], index: 6, kind: input, shape index: {}]
  %s7 = inlined_call_operand.vmem [shape: bf16[2,16,16], index: 7, kind: input, shape index: {}]
  %s8 = inlined_call_operand.vmem [shape: f32[1,16], index: 8, kind: input, shape index: {}]
  %s9 = inlined_call_operand.vmem [shape: bf16[9,16,16], index: 9, kind: input, shape index: {}]
  %s10 = inlined_call_operand.vmem [shape: f32[1,16], index: 10, kind: input, shape index: {}]
  %s11 = inlined_call_operand.vmem [shape: bf16[9,16,16], index: 11, kind: input, shape index: {}]
  %s12 = inlined_call_operand.vmem [shape: f32[1,16], index: 12, kind: input, shape index: {}]
  %s13 = inlined_call_operand.vmem [shape: bf16[9,16,8], index: 13, kind: input, shape index: {}]
  %s14 = inlined_call_operand.vmem [shape: f32[1,8], index: 14, kind: input, shape index: {}]
  %s15 = inlined_call_operand.hbm [shape: f32[2,4,4,8], index: 15, kind: output, shape index: {}]
  %s16 = sld [smem:[#allocation0]]
  $region93: #{_lambda_.5} parent=0
    _
  %s18 = ssub.s32 1, %s16
  %s19 = scalar_select 0, %s18, %s16
  $region1: #{_lambda_.5} parent=0
    #allocation3 [shape = 'u8[16384]{0}', space=vmem, size = 0x4000, scoped, tag = 'output window, operand 0']
    #allocation4 [shape = 's32[2]{0}', space=sflag, size = 0x8, scoped, tag = 'scoped memory for _lambda_.5']
    %20 = vsyncpa [#allocation4], 0
    %s21 = scalar_lea.sflag [#allocation4], 1
    %22 = vsyncpa %s21, 0
    loop: start=0, step=1, limit=4
    $region2: #{_lambda_.5} parent=1 // loop_pre_header
      _
    $region3: #{_lambda_.5} parent=1 // loop_header
      %s24 = sphi 0, %s28
      %p25 = scmp.ge.s32.totalorder %s24, 4
      %s34 = sphi 0, %s36
      %s37 = sphi 0, %s34
      %s38 = sphi 0, %s37
      %s54 = sphi 0, %s38
      %s58 = sphi 0, %s58
      %s60 = sphi 0, %s58
      %s61 = sphi 0, %s60
      %s75 = sphi 0, %s61
      %s79 = sphi 0, %s79
      %s81 = sphi 0, %s79
      %s82 = sphi 0, %s81
      %s96 = sphi 0, %s82
      %s100 = sphi 0, %s100
      %s102 = sphi 0, %s100
      %s103 = sphi 0, %s102
      %s117 = sphi 0, %s103
      %s121 = sphi 0, %s121
      %s123 = sphi 0, %s121
      %s124 = sphi 0, %s123
      %s138 = sphi 0, %s124
      %s142 = sphi 0, %s142
      %s144 = sphi 0, %s142
      %s145 = sphi 0, %s144
      %s159 = sphi 0, %s145
      %s163 = sphi 0, %s163
      %s165 = sphi 0, %s163
      %s166 = sphi 0, %s165
      %s180 = sphi 0, %s166
      %s184 = sphi 0, %s184
      %s186 = sphi 0, %s184
      %s187 = sphi 0, %s186
      %s201 = sphi 0, %s187
      %s205 = sphi 0, %s205
      %s207 = sphi 0, %s205
      %s208 = sphi 0, %s207
      %s222 = sphi 0, %s208
      %s226 = sphi 0, %s226
      %s228 = sphi 0, %s226
      %s229 = sphi 0, %s228
      %s243 = sphi 0, %s229
      %s247 = sphi 0, %s247
      %s249 = sphi 0, %s247
      %s250 = sphi 0, %s249
      %s264 = sphi 0, %s250
      %s268 = sphi 0, %s268
      %s270 = sphi 0, %s268
      %s271 = sphi 0, %s270
      %s285 = sphi 0, %s271
      %s289 = sphi 0, %s289
      %s291 = sphi 0, %s289
      %s292 = sphi 0, %s291
      %s306 = sphi 0, %s292
      %s310 = sphi 0, %s310
      %s312 = sphi 0, %s310
      %s313 = sphi 0, %s312
      %s327 = sphi 0, %s313
      %s331 = sphi 0, %s331
      %s333 = sphi 0, %s331
      %s334 = sphi 0, %s333
      %s348 = sphi 0, %s334
      %s354 = sphi 0, %s356
      %s357 = sphi 0, %s354
      %s358 = sphi 0, %s357
      %s374 = sphi 0, %s358
    $region4: #{_lambda_.5} parent=1 // loop_header_branch
      %27 = sbr.rel (%p25) target = $region8
    $region5: #{_lambda_.5} parent=1 // loop_body
      %s29 = ssub.s32 %s24, 1
      %s30 = ssub.s32 %s24, 2
      %s31 = sadd.s32 %s24, 1
      %s32 = ssub.s32 %s24, %s31
      %p33 = scmp.eq.s32.totalorder %s32, 0
      %s35 = sadd.s32 %s34, 1
      %s36 = scalar_select %p33, %s34, %s35
      %p39 = pneg %p33
      %p40 = scmp.eq.s32.totalorder %s24, 1
      %p41 = por %p39, %p40
      %p42 = scmp.ne.s32.totalorder %s34, %s37
      %p43 = scmp.eq.s32.totalorder %s24, 0
      %p44 = por %p42, %p43
      %p45 = scmp.ne.s32.totalorder %s34, %s37
      %p46 = scmp.eq.s32.totalorder %s29, 1
      %p47 = por %p45, %p46
      %p48 = scmp.ne.s32.totalorder %s37, %s38
      %p49 = scmp.eq.s32.totalorder %s29, 0
      %p50 = por %p48, %p49
      %p51 = scmp.ne.s32.totalorder %s37, %s38
      %p52 = scmp.eq.s32.totalorder %s30, 1
      %p53 = por %p51, %p52
      %p55 = scmp.ne.s32.totalorder %s38, %s54
      %p56 = scmp.eq.s32.totalorder %s30, 0
      %p57 = por %p55, %p56
      %s59 = sadd.s32 %s58, 1
      %p62 = scmp.eq.s32.totalorder %s24, 1
      %p63 = scmp.ne.s32.totalorder %s58, %s60
      %p64 = scmp.eq.s32.totalorder %s24, 0
      %p65 = por %p63, %p64
      %p66 = scmp.ne.s32.totalorder %s58, %s60
      %p67 = scmp.eq.s32.totalorder %s29, 1
      %p68 = por %p66, %p67
      %p69 = scmp.ne.s32.totalorder %s60, %s61
      %p70 = scmp.eq.s32.totalorder %s29, 0
      %p71 = por %p69, %p70
      %p72 = scmp.ne.s32.totalorder %s60, %s61
      %p73 = scmp.eq.s32.totalorder %s30, 1
      %p74 = por %p72, %p73
      %p76 = scmp.ne.s32.totalorder %s61, %s75
      %p77 = scmp.eq.s32.totalorder %s30, 0
      %p78 = por %p76, %p77
      %s80 = sadd.s32 %s79, 1
      %p83 = scmp.eq.s32.totalorder %s24, 1
      %p84 = scmp.ne.s32.totalorder %s79, %s81
      %p85 = scmp.eq.s32.totalorder %s24, 0
      %p86 = por %p84, %p85
      %p87 = scmp.ne.s32.totalorder %s79, %s81
      %p88 = scmp.eq.s32.totalorder %s29, 1
      %p89 = por %p87, %p88
      %p90 = scmp.ne.s32.totalorder %s81, %s82
      %p91 = scmp.eq.s32.totalorder %s29, 0
      %p92 = por %p90, %p91
      %p93 = scmp.ne.s32.totalorder %s81, %s82
      %p94 = scmp.eq.s32.totalorder %s30, 1
      %p95 = por %p93, %p94
      %p97 = scmp.ne.s32.totalorder %s82, %s96
      %p98 = scmp.eq.s32.totalorder %s30, 0
      %p99 = por %p97, %p98
      %s101 = sadd.s32 %s100, 1
      %p104 = scmp.eq.s32.totalorder %s24, 1
      %p105 = scmp.ne.s32.totalorder %s100, %s102
      %p106 = scmp.eq.s32.totalorder %s24, 0
      %p107 = por %p105, %p106
      %p108 = scmp.ne.s32.totalorder %s100, %s102
      %p109 = scmp.eq.s32.totalorder %s29, 1
      %p110 = por %p108, %p109
      %p111 = scmp.ne.s32.totalorder %s102, %s103
      %p112 = scmp.eq.s32.totalorder %s29, 0
      %p113 = por %p111, %p112
      %p114 = scmp.ne.s32.totalorder %s102, %s103
      %p115 = scmp.eq.s32.totalorder %s30, 1
      %p116 = por %p114, %p115
      %p118 = scmp.ne.s32.totalorder %s103, %s117
      %p119 = scmp.eq.s32.totalorder %s30, 0
      %p120 = por %p118, %p119
      %s122 = sadd.s32 %s121, 1
      %p125 = scmp.eq.s32.totalorder %s24, 1
      %p126 = scmp.ne.s32.totalorder %s121, %s123
      %p127 = scmp.eq.s32.totalorder %s24, 0
      %p128 = por %p126, %p127
      %p129 = scmp.ne.s32.totalorder %s121, %s123
      %p130 = scmp.eq.s32.totalorder %s29, 1
      %p131 = por %p129, %p130
      %p132 = scmp.ne.s32.totalorder %s123, %s124
      %p133 = scmp.eq.s32.totalorder %s29, 0
      %p134 = por %p132, %p133
      %p135 = scmp.ne.s32.totalorder %s123, %s124
      %p136 = scmp.eq.s32.totalorder %s30, 1
      %p137 = por %p135, %p136
      %p139 = scmp.ne.s32.totalorder %s124, %s138
      %p140 = scmp.eq.s32.totalorder %s30, 0
      %p141 = por %p139, %p140
      %s143 = sadd.s32 %s142, 1
      %p146 = scmp.eq.s32.totalorder %s24, 1
      %p147 = scmp.ne.s32.totalorder %s142, %s144
      %p148 = scmp.eq.s32.totalorder %s24, 0
      %p149 = por %p147, %p148
      %p150 = scmp.ne.s32.totalorder %s142, %s144
      %p151 = scmp.eq.s32.totalorder %s29, 1
      %p152 = por %p150, %p151
      %p153 = scmp.ne.s32.totalorder %s144, %s145
      %p154 = scmp.eq.s32.totalorder %s29, 0
      %p155 = por %p153, %p154
      %p156 = scmp.ne.s32.totalorder %s144, %s145
      %p157 = scmp.eq.s32.totalorder %s30, 1
      %p158 = por %p156, %p157
      %p160 = scmp.ne.s32.totalorder %s145, %s159
      %p161 = scmp.eq.s32.totalorder %s30, 0
      %p162 = por %p160, %p161
      %s164 = sadd.s32 %s163, 1
      %p167 = scmp.eq.s32.totalorder %s24, 1
      %p168 = scmp.ne.s32.totalorder %s163, %s165
      %p169 = scmp.eq.s32.totalorder %s24, 0
      %p170 = por %p168, %p169
      %p171 = scmp.ne.s32.totalorder %s163, %s165
      %p172 = scmp.eq.s32.totalorder %s29, 1
      %p173 = por %p171, %p172
      %p174 = scmp.ne.s32.totalorder %s165, %s166
      %p175 = scmp.eq.s32.totalorder %s29, 0
      %p176 = por %p174, %p175
      %p177 = scmp.ne.s32.totalorder %s165, %s166
      %p178 = scmp.eq.s32.totalorder %s30, 1
      %p179 = por %p177, %p178
      %p181 = scmp.ne.s32.totalorder %s166, %s180
      %p182 = scmp.eq.s32.totalorder %s30, 0
      %p183 = por %p181, %p182
      %s185 = sadd.s32 %s184, 1
      %p188 = scmp.eq.s32.totalorder %s24, 1
      %p189 = scmp.ne.s32.totalorder %s184, %s186
      %p190 = scmp.eq.s32.totalorder %s24, 0
      %p191 = por %p189, %p190
      %p192 = scmp.ne.s32.totalorder %s184, %s186
      %p193 = scmp.eq.s32.totalorder %s29, 1
      %p194 = por %p192, %p193
      %p195 = scmp.ne.s32.totalorder %s186, %s187
      %p196 = scmp.eq.s32.totalorder %s29, 0
      %p197 = por %p195, %p196
      %p198 = scmp.ne.s32.totalorder %s186, %s187
      %p199 = scmp.eq.s32.totalorder %s30, 1
      %p200 = por %p198, %p199
      %p202 = scmp.ne.s32.totalorder %s187, %s201
      %p203 = scmp.eq.s32.totalorder %s30, 0
      %p204 = por %p202, %p203
      %s206 = sadd.s32 %s205, 1
      %p209 = scmp.eq.s32.totalorder %s24, 1
      %p210 = scmp.ne.s32.totalorder %s205, %s207
      %p211 = scmp.eq.s32.totalorder %s24, 0
      %p212 = por %p210, %p211
      %p213 = scmp.ne.s32.totalorder %s205, %s207
      %p214 = scmp.eq.s32.totalorder %s29, 1
      %p215 = por %p213, %p214
      %p216 = scmp.ne.s32.totalorder %s207, %s208
      %p217 = scmp.eq.s32.totalorder %s29, 0
      %p218 = por %p216, %p217
      %p219 = scmp.ne.s32.totalorder %s207, %s208
      %p220 = scmp.eq.s32.totalorder %s30, 1
      %p221 = por %p219, %p220
      %p223 = scmp.ne.s32.totalorder %s208, %s222
      %p224 = scmp.eq.s32.totalorder %s30, 0
      %p225 = por %p223, %p224
      %s227 = sadd.s32 %s226, 1
      %p230 = scmp.eq.s32.totalorder %s24, 1
      %p231 = scmp.ne.s32.totalorder %s226, %s228
      %p232 = scmp.eq.s32.totalorder %s24, 0
      %p233 = por %p231, %p232
      %p234 = scmp.ne.s32.totalorder %s226, %s228
      %p235 = scmp.eq.s32.totalorder %s29, 1
      %p236 = por %p234, %p235
      %p237 = scmp.ne.s32.totalorder %s228, %s229
      %p238 = scmp.eq.s32.totalorder %s29, 0
      %p239 = por %p237, %p238
      %p240 = scmp.ne.s32.totalorder %s228, %s229
      %p241 = scmp.eq.s32.totalorder %s30, 1
      %p242 = por %p240, %p241
      %p244 = scmp.ne.s32.totalorder %s229, %s243
      %p245 = scmp.eq.s32.totalorder %s30, 0
      %p246 = por %p244, %p245
      %s248 = sadd.s32 %s247, 1
      %p251 = scmp.eq.s32.totalorder %s24, 1
      %p252 = scmp.ne.s32.totalorder %s247, %s249
      %p253 = scmp.eq.s32.totalorder %s24, 0
      %p254 = por %p252, %p253
      %p255 = scmp.ne.s32.totalorder %s247, %s249
      %p256 = scmp.eq.s32.totalorder %s29, 1
      %p257 = por %p255, %p256
      %p258 = scmp.ne.s32.totalorder %s249, %s250
      %p259 = scmp.eq.s32.totalorder %s29, 0
      %p260 = por %p258, %p259
      %p261 = scmp.ne.s32.totalorder %s249, %s250
      %p262 = scmp.eq.s32.totalorder %s30, 1
      %p263 = por %p261, %p262
      %p265 = scmp.ne.s32.totalorder %s250, %s264
      %p266 = scmp.eq.s32.totalorder %s30, 0
      %p267 = por %p265, %p266
      %s269 = sadd.s32 %s268, 1
      %p272 = scmp.eq.s32.totalorder %s24, 1
      %p273 = scmp.ne.s32.totalorder %s268, %s270
      %p274 = scmp.eq.s32.totalorder %s24, 0
      %p275 = por %p273, %p274
      %p276 = scmp.ne.s32.totalorder %s268, %s270
      %p277 = scmp.eq.s32.totalorder %s29, 1
      %p278 = por %p276, %p277
      %p279 = scmp.ne.s32.totalorder %s270, %s271
      %p280 = scmp.eq.s32.totalorder %s29, 0
      %p281 = por %p279, %p280
      %p282 = scmp.ne.s32.totalorder %s270, %s271
      %p283 = scmp.eq.s32.totalorder %s30, 1
      %p284 = por %p282, %p283
      %p286 = scmp.ne.s32.totalorder %s271, %s285
      %p287 = scmp.eq.s32.totalorder %s30, 0
      %p288 = por %p286, %p287
      %s290 = sadd.s32 %s289, 1
      %p293 = scmp.eq.s32.totalorder %s24, 1
      %p294 = scmp.ne.s32.totalorder %s289, %s291
      %p295 = scmp.eq.s32.totalorder %s24, 0
      %p296 = por %p294, %p295
      %p297 = scmp.ne.s32.totalorder %s289, %s291
      %p298 = scmp.eq.s32.totalorder %s29, 1
      %p299 = por %p297, %p298
      %p300 = scmp.ne.s32.totalorder %s291, %s292
      %p301 = scmp.eq.s32.totalorder %s29, 0
      %p302 = por %p300, %p301
      %p303 = scmp.ne.s32.totalorder %s291, %s292
      %p304 = scmp.eq.s32.totalorder %s30, 1
      %p305 = por %p303, %p304
      %p307 = scmp.ne.s32.totalorder %s292, %s306
      %p308 = scmp.eq.s32.totalorder %s30, 0
      %p309 = por %p307, %p308
      %s311 = sadd.s32 %s310, 1
      %p314 = scmp.eq.s32.totalorder %s24, 1
      %p315 = scmp.ne.s32.totalorder %s310, %s312
      %p316 = scmp.eq.s32.totalorder %s24, 0
      %p317 = por %p315, %p316
      %p318 = scmp.ne.s32.totalorder %s310, %s312
      %p319 = scmp.eq.s32.totalorder %s29, 1
      %p320 = por %p318, %p319
      %p321 = scmp.ne.s32.totalorder %s312, %s313
      %p322 = scmp.eq.s32.totalorder %s29, 0
      %p323 = por %p321, %p322
      %p324 = scmp.ne.s32.totalorder %s312, %s313
      %p325 = scmp.eq.s32.totalorder %s30, 1
      %p326 = por %p324, %p325
      %p328 = scmp.ne.s32.totalorder %s313, %s327
      %p329 = scmp.eq.s32.totalorder %s30, 0
      %p330 = por %p328, %p329
      %s332 = sadd.s32 %s331, 1
      %p335 = scmp.eq.s32.totalorder %s24, 1
      %p336 = scmp.ne.s32.totalorder %s331, %s333
      %p337 = scmp.eq.s32.totalorder %s24, 0
      %p338 = por %p336, %p337
      %p339 = scmp.ne.s32.totalorder %s331, %s333
      %p340 = scmp.eq.s32.totalorder %s29, 1
      %p341 = por %p339, %p340
      %p342 = scmp.ne.s32.totalorder %s333, %s334
      %p343 = scmp.eq.s32.totalorder %s29, 0
      %p344 = por %p342, %p343
      %p345 = scmp.ne.s32.totalorder %s333, %s334
      %p346 = scmp.eq.s32.totalorder %s30, 1
      %p347 = por %p345, %p346
      %p349 = scmp.ne.s32.totalorder %s334, %s348
      %p350 = scmp.eq.s32.totalorder %s30, 0
      %p351 = por %p349, %p350
      %s352 = ssub.s32 %s24, %s31
      %p353 = scmp.eq.s32.totalorder %s352, 0
      %s355 = sadd.s32 %s354, 1
      %s356 = scalar_select %p353, %s354, %s355
      %p359 = pneg %p353
      %p360 = scmp.eq.s32.totalorder %s24, 1
      %p361 = por %p359, %p360
      %p362 = scmp.ne.s32.totalorder %s354, %s357
      %p363 = scmp.eq.s32.totalorder %s24, 0
      %p364 = por %p362, %p363
      %p365 = scmp.ne.s32.totalorder %s354, %s357
      %p366 = scmp.eq.s32.totalorder %s29, 1
      %p367 = por %p365, %p366
      %p368 = scmp.ne.s32.totalorder %s357, %s358
      %p369 = scmp.eq.s32.totalorder %s29, 0
      %p370 = por %p368, %p369
      %p371 = scmp.ne.s32.totalorder %s357, %s358
      %p372 = scmp.eq.s32.totalorder %s30, 1
      %p373 = por %p371, %p372
      %p375 = scmp.ne.s32.totalorder %s358, %s374
      %p376 = scmp.eq.s32.totalorder %s30, 0
      %p377 = por %p375, %p376
      %p378 = scmp.le.s32.totalorder 1, %s24
      %p379 = scmp.lt.s32.totalorder %s24, 3
      %p380 = pnand %p378, %p379
      %p381 = pneg %p380
      // Predicated region
      $region9: #{_lambda_.5} parent=5 // pred_check
        _
      $region10: #{_lambda_.5} parent=5 // pred_check_branch
        %383 = sbr.rel (%p380) target = $region12
      $region11: #{_lambda_.5} parent=5 // pred_region
        %s384 = ssub.s32 %s24, 1
        // Predicated region
        $region13: #{_lambda_.5} parent=11 // pred_check
          %p385 = pneg %p71
        $region14: #{_lambda_.5} parent=11 // pred_check_branch
          %387 = sbr.rel (%p385) target = $region16
        $region15: #{_lambda_.5} parent=11 // pred_region
          _
        $region16: #{_lambda_.5} parent=11 // pred_fallthru
          _
        // Predicated region
        $region17: #{_lambda_.5} parent=11 // pred_check
          %p388 = pneg %p92
        $region18: #{_lambda_.5} parent=11 // pred_check_branch
          %390 = sbr.rel (%p388) target = $region20
        $region19: #{_lambda_.5} parent=11 // pred_region
          _
        $region20: #{_lambda_.5} parent=11 // pred_fallthru
          _
        // Predicated region
        $region21: #{_lambda_.5} parent=11 // pred_check
          %p391 = pneg %p113
        $region22: #{_lambda_.5} parent=11 // pred_check_branch
          %393 = sbr.rel (%p391) target = $region24
        $region23: #{_lambda_.5} parent=11 // pred_region
          _
        $region24: #{_lambda_.5} parent=11 // pred_fallthru
          _
        // Predicated region
        $region25: #{_lambda_.5} parent=11 // pred_check
          %p394 = pneg %p134
        $region26: #{_lambda_.5} parent=11 // pred_check_branch
          %396 = sbr.rel (%p394) target = $region28
        $region27: #{_lambda_.5} parent=11 // pred_region
          _
        $region28: #{_lambda_.5} parent=11 // pred_fallthru
          _
        // Predicated region
        $region29: #{_lambda_.5} parent=11 // pred_check
          %p397 = pneg %p155
        $region30: #{_lambda_.5} parent=11 // pred_check_branch
          %399 = sbr.rel (%p397) target = $region32
        $region31: #{_lambda_.5} parent=11 // pred_region
          _
        $region32: #{_lambda_.5} parent=11 // pred_fallthru
          _
        // Predicated region
        $region33: #{_lambda_.5} parent=11 // pred_check
          %p400 = pneg %p176
        $region34: #{_lambda_.5} parent=11 // pred_check_branch
          %402 = sbr.rel (%p400) target = $region36
        $region35: #{_lambda_.5} parent=11 // pred_region
          _
        $region36: #{_lambda_.5} parent=11 // pred_fallthru
          _
        // Predicated region
        $region37: #{_lambda_.5} parent=11 // pred_check
          %p403 = pneg %p197
        $region38: #{_lambda_.5} parent=11 // pred_check_branch
          %405 = sbr.rel (%p403) target = $region40
        $region39: #{_lambda_.5} parent=11 // pred_region
          _
        $region40: #{_lambda_.5} parent=11 // pred_fallthru
          _
        // Predicated region
        $region41: #{_lambda_.5} parent=11 // pred_check
          %p406 = pneg %p218
        $region42: #{_lambda_.5} parent=11 // pred_check_branch
          %408 = sbr.rel (%p406) target = $region44
        $region43: #{_lambda_.5} parent=11 // pred_region
          _
        $region44: #{_lambda_.5} parent=11 // pred_fallthru
          _
        // Predicated region
        $region45: #{_lambda_.5} parent=11 // pred_check
          %p409 = pneg %p239
        $region46: #{_lambda_.5} parent=11 // pred_check_branch
          %411 = sbr.rel (%p409) target = $region48
        $region47: #{_lambda_.5} parent=11 // pred_region
          _
        $region48: #{_lambda_.5} parent=11 // pred_fallthru
          _
        // Predicated region
        $region49: #{_lambda_.5} parent=11 // pred_check
          %p412 = pneg %p260
        $region50: #{_lambda_.5} parent=11 // pred_check_branch
          %414 = sbr.rel (%p412) target = $region52
        $region51: #{_lambda_.5} parent=11 // pred_region
          _
        $region52: #{_lambda_.5} parent=11 // pred_fallthru
          _
        // Predicated region
        $region53: #{_lambda_.5} parent=11 // pred_check
          %p415 = pneg %p281
        $region54: #{_lambda_.5} parent=11 // pred_check_branch
          %417 = sbr.rel (%p415) target = $region56
        $region55: #{_lambda_.5} parent=11 // pred_region
          _
        $region56: #{_lambda_.5} parent=11 // pred_fallthru
          _
        // Predicated region
        $region57: #{_lambda_.5} parent=11 // pred_check
          %p418 = pneg %p302
        $region58: #{_lambda_.5} parent=11 // pred_check_branch
          %420 = sbr.rel (%p418) target = $region60
        $region59: #{_lambda_.5} parent=11 // pred_region
          _
        $region60: #{_lambda_.5} parent=11 // pred_fallthru
          _
        // Predicated region
        $region61: #{_lambda_.5} parent=11 // pred_check
          %p421 = pneg %p323
        $region62: #{_lambda_.5} parent=11 // pred_check_branch
          %423 = sbr.rel (%p421) target = $region64
        $region63: #{_lambda_.5} parent=11 // pred_region
          _
        $region64: #{_lambda_.5} parent=11 // pred_fallthru
          _
        // Predicated region
        $region65: #{_lambda_.5} parent=11 // pred_check
          %p424 = pneg %p344
        $region66: #{_lambda_.5} parent=11 // pred_check_branch
          %426 = sbr.rel (%p424) target = $region68
        $region67: #{_lambda_.5} parent=11 // pred_region
          _
        $region68: #{_lambda_.5} parent=11 // pred_fallthru
          _
      $region12: #{_lambda_.5} parent=5 // pred_fallthru
        _
      %p427 = scmp.lt.s32.totalorder %s24, 2
      // Predicated region
      $region69: #{_lambda_.5} parent=5 // pred_check
        %p428 = pneg %p427
      $region70: #{_lambda_.5} parent=5 // pred_check_branch
        %430 = sbr.rel (%p428) target = $region72
      $region71: #{_lambda_.5} parent=5 // pred_region
        // Predicated region
        $region73: #{_lambda_.5} parent=71 // pred_check
          %p431 = pneg %p44
        $region74: #{_lambda_.5} parent=71 // pred_check_branch
          %433 = sbr.rel (%p431) target = $region76
        $region75: #{_lambda_.5} parent=71 // pred_region
          %p434 = scmp.lt.s32.totalorder %s24, 1
          %s435 = scalar_select %p434, %s24, 1
          %s436 = smul.addr %s435, 2
          %s437 = smul.addr %s436, 8
          %s438 = scalar_lea.vmem %s0, %s437
        $region76: #{_lambda_.5} parent=71 // pred_fallthru
          _
      $region72: #{_lambda_.5} parent=5 // pred_fallthru
        _
      %p439 = scmp.le.s32.totalorder 1, %s24
      %p440 = scmp.lt.s32.totalorder %s24, 3
      %p441 = pnand %p439, %p440
      %p442 = pneg %p441
      // Predicated region
      $region77: #{_lambda_.5} parent=5 // pred_check
        _
      $region78: #{_lambda_.5} parent=5 // pred_check_branch
        %444 = sbr.rel (%p441) target = $region80
      $region79: #{_lambda_.5} parent=5 // pred_region
        %s445 = ssub.s32 %s24, 1
        %p446 = scmp.lt.s32.totalorder %s29, 1
        %s447 = scalar_select %p446, %s29, 1
        %s448 = smul.addr %s447, 2
        %s449 = smul.addr %s448, 8
        %s450 = scalar_lea.vmem %s0, %s449
        %p451 = pneg %p50
        %p452 = pneg %p47
        %p453 = pneg %p71
        %p454 = pneg %p68
        %p455 = pneg %p92
        %p456 = pneg %p89
        %p457 = pneg %p113
        %p458 = pneg %p110
        %p459 = pneg %p134
        %p460 = pneg %p131
        %p461 = pneg %p155
        %p462 = pneg %p152
        %p463 = pneg %p176
        %p464 = pneg %p173
        %p465 = pneg %p197
        %p466 = pneg %p194
        %p467 = pneg %p218
        %p468 = pneg %p215
        %p469 = pneg %p239
        %p470 = pneg %p236
        %p471 = pneg %p260
        %p472 = pneg %p257
        %p473 = pneg %p281
        %p474 = pneg %p278
        %p475 = pneg %p302
        %p476 = pneg %p299
        %p477 = pneg %p323
        %p478 = pneg %p320
        %p479 = pneg %p344
        %p480 = pneg %p341
        %p481 = pneg %p370
        %p482 = pneg %p367
        %s483 = sand.u32 %s357, 1
        %s484 = scalar_lea.sflag [#allocation4], %s483
        %s485 = sand.u32 %s357, 1
        %s486 = smul.addr %s485, 16
        %s487 = scalar_lea.vmem [#allocation3], %s486
        %p488 = scmp.lt.s32.totalorder %s29, 1
        %s489 = scalar_select %p488, %s29, 1
        %s490 = smul.addr %s489, 2
        %s491 = smul.addr %s490, 8
        %s492 = scalar_lea.vmem %s0, %s491
        %v494 = vld [vmem:[%s492] sm:$0xff]
        %v495 = vld [vmem:[%s492 + $0x8] sm:$0xff]
        %v496 = vpack.c.bf16 %v495, %v494
        %v497 = vld [vmem:[%s1] sm:$0xf]
        %v498 = vld [vmem:[%s1 + $0x4] sm:$0xf]
        %v499 = vld [vmem:[%s2] sm:$0x1]
        %v501 = vperm.slane %v499, 0
        %v505 = vunpack.c.l.b16 %v497
        %v506 = vunpack.c.l.b16 %v498
        %v507 = vpack.c.b16 %v506, %v505
        %vm509 = vcmask 130048
        %v511 = vsel %vm509, %v496, 0
        %513 = vmatpush.bf16.msra.mxu0 0
        %514 = vmatpush.bf16.msra.mxu0 0
        %515 = vmatpush.bf16.msra.mxu0 0
        %516 = vmatpush.bf16.msra.mxu0 0
        %517 = vmatpush.bf16.msra.mxu0 0
        %518 = vmatpush.bf16.msra.mxu0 0
        %519 = vmatpush.bf16.msra.mxu0 0
        %520 = vmatpush.bf16.msra.mxu0 %v507
        %521 = vmatmul.bf16.gmra.mxu0 %v511
        %v522 = vpop.f32.mrf.mxu0
        %v523 = vadd.f32 %v501, %v522
        %v524 = vpop.f32.mrf.mxu0
        %v525 = vadd.f32 %v501, %v524
        %526 = vdwg.mxu0
        %v527 = vld [vmem:[%s3] sm:$0xf]
        %v528 = vld [vmem:[%s3 + $0x4] sm:$0xf]
        %v529 = vld [vmem:[%s4] sm:$0x1]
        %v531 = vperm.slane %v529, 0
        %v535 = vunpack.c.l.b16 %v527
        %v536 = vunpack.c.l.b16 %v528
        %v537 = vpack.c.b16 %v536, %v535
        %539 = vmatpush.bf16.msra.mxu0 0
        %540 = vmatpush.bf16.msra.mxu0 0
        %541 = vmatpush.bf16.msra.mxu0 0
        %542 = vmatpush.bf16.msra.mxu0 0
        %543 = vmatpush.bf16.msra.mxu0 0
        %544 = vmatpush.bf16.msra.mxu0 0
        %545 = vmatpush.bf16.msra.mxu0 0
        %546 = vmatpush.bf16.msra.mxu0 %v537
        %547 = vmatmul.bf16.gmra.mxu0 %v511
        %v548 = vpop.f32.mrf.mxu0
        %v549 = vadd.f32 %v531, %v548
        %v550 = vpop.f32.mrf.mxu0
        %v551 = vadd.f32 %v531, %v550
        %552 = vdwg.mxu0
        %v553 = vld [vmem:[%s5] sm:$0xf]
        %v554 = vld [vmem:[%s5 + $0x4] sm:$0xf]
        %v555 = vld [vmem:[%s6] sm:$0x1]
        %v557 = vperm.slane %v555, 0
        %v561 = vunpack.c.l.b16 %v553
        %v562 = vunpack.c.l.b16 %v554
        %v563 = vpack.c.b16 %v562, %v561
        %565 = vmatpush.bf16.msra.mxu0 0
        %566 = vmatpush.bf16.msra.mxu0 0
        %567 = vmatpush.bf16.msra.mxu0 0
        %568 = vmatpush.bf16.msra.mxu0 0
        %569 = vmatpush.bf16.msra.mxu0 0
        %570 = vmatpush.bf16.msra.mxu0 0
        %571 = vmatpush.bf16.msra.mxu0 0
        %572 = vmatpush.bf16.msra.mxu0 %v563
        %573 = vmatmul.bf16.gmra.mxu0 %v511
        %v574 = vpop.f32.mrf.mxu0
        %v575 = vadd.f32 %v557, %v574
        %v576 = vpop.f32.mrf.mxu0
        %v577 = vadd.f32 %v557, %v576
        %578 = vdwg.mxu0
        %v579 = vpack.c.bf16 %v525, %v523
        %v580 = vpack.c.bf16 %v551, %v549
        %v582 = vsel %vm509, %v579, 0
        %v585 = vsel %vm509, %v580, 0
        %587 = vmatpush.bf16.xpose.msra.mxu0 0
        %588 = vmatpush.bf16.xpose.msra.mxu0 0
        %589 = vmatpush.bf16.xpose.msra.mxu0 0
        %590 = vmatpush.bf16.xpose.msra.mxu0 0
        %591 = vmatpush.bf16.xpose.msra.mxu0 0
        %592 = vmatpush.bf16.xpose.msra.mxu0 0
        %593 = vmatpush.bf16.xpose.msra.mxu0 0
        %594 = vmatpush.bf16.xpose.msra.mxu0 %v585
        %595 = vmatmul.bf16.gmra.mxu0 %v582
        %v596 = vpop.f32.mrf.mxu0
        %v597 = vadd.f32 0.0, %v596
        %v598 = vpop.f32.mrf.mxu0
        %v599 = vadd.f32 0.0, %v598
        %600 = vdwg.mxu0
        %v601 = vmul.f32 %v597, 0.25
        %v602 = vmul.f32 %v599, 0.25
        %v603 = vsel %vm509, %v601, -inf
        %604 = vmax.xlane.f32.xlu0 %v603
        %v605 = vpop.xlane.xlu0 %604
        %v606 = vsel %vm509, %v602, -inf
        %607 = vmax.xlane.f32.xlu0 %v606
        %v608 = vpop.xlane.xlu0 %607
        %v609 = vsub.f32 %v601, %v605
        %v610 = vsub.f32 %v602, %v608
        %v611 = vmul.f32 %v609, 1.442695
        %v612 = vpow.pop %v611
        %v613 = vmul.f32 %v610, 1.442695
        %v614 = vpow.pop %v613
        %v615 = vsel %vm509, %v612, 0.0
        %616 = vadd.xlane.f32.xlu0 %v615
        %v617 = vpop.xlane.xlu0 %616
        %v618 = vsel %vm509, %v614, 0.0
        %619 = vadd.xlane.f32.xlu0 %v618
        %v620 = vpop.xlane.xlu0 %619
        %v621 = vrcp.pop %v617
        %v622 = vrcp.pop %v620
        %v623 = vmul.f32 %v612, %v621
        %v624 = vmul.f32 %v614, %v622
        %v625 = vpack.c.bf16 %v624, %v623
        %v626 = vpack.c.bf16 %v577, %v575
        %v628 = vsel %vm509, %v625, 0
        %630 = vmatpush.bf16.msra.mxu0 0
        %631 = vmatpush.bf16.msra.mxu0 0
        %632 = vmatpush.bf16.msra.mxu0 0
        %633 = vmatpush.bf16.msra.mxu0 0
        %634 = vmatpush.bf16.msra.mxu0 0
        %635 = vmatpush.bf16.msra.mxu0 0
        %636 = vmatpush.bf16.msra.mxu0 0
        %637 = vmatpush.bf16.msra.mxu0 %v626
        %638 = vmatmul.bf16.gmra.mxu0 %v628
        %v639 = vpop.f32.mrf.mxu0
        %v640 = vadd.f32 0.0, %v639
        %v641 = vpop.f32.mrf.mxu0
        %v642 = vadd.f32 0.0, %v641
        %643 = vdwg.mxu0
        %v644 = vpack.c.bf16 %v642, %v640
        %v645 = vld [vmem:[%s7] sm:$0xf]
        %v646 = vld [vmem:[%s7 + $0x4] sm:$0xf]
        %s647 = scalar_lea.vmem %s1, 8
        %v648 = vld [vmem:[%s647] sm:$0xf]
        %v649 = vld [vmem:[%s647 + $0x4] sm:$0xf]
        %s650 = scalar_lea.vmem %s2, 1
        %v651 = vld [vmem:[%s650] sm:$0x1]
        %v653 = vperm.slane %v651, 0
        %v657 = vunpack.c.l.b16 %v648
        %v658 = vunpack.c.l.b16 %v649
        %v659 = vpack.c.b16 %v658, %v657
        %661 = vmatpush.bf16.msra.mxu0 0
        %662 = vmatpush.bf16.msra.mxu0 0
        %663 = vmatpush.bf16.msra.mxu0 0
        %664 = vmatpush.bf16.msra.mxu0 0
        %665 = vmatpush.bf16.msra.mxu0 0
        %666 = vmatpush.bf16.msra.mxu0 0
        %667 = vmatpush.bf16.msra.mxu0 0
        %668 = vmatpush.bf16.msra.mxu0 %v659
        %669 = vmatmul.bf16.gmra.mxu0 %v511
        %v670 = vpop.f32.mrf.mxu0
        %v671 = vadd.f32 %v653, %v670
        %v672 = vpop.f32.mrf.mxu0
        %v673 = vadd.f32 %v653, %v672
        %674 = vdwg.mxu0
        %s675 = scalar_lea.vmem %s3, 8
        %v676 = vld [vmem:[%s675] sm:$0xf]
        %v677 = vld [vmem:[%s675 + $0x4] sm:$0xf]
        %s678 = scalar_lea.vmem %s4, 1
        %v679 = vld [vmem:[%s678] sm:$0x1]
        %v681 = vperm.slane %v679, 0
        %v685 = vunpack.c.l.b16 %v676
        %v686 = vunpack.c.l.b16 %v677
        %v687 = vpack.c.b16 %v686, %v685
        %689 = vmatpush.bf16.msra.mxu0 0
        %690 = vmatpush.bf16.msra.mxu0 0
        %691 = vmatpush.bf16.msra.mxu0 0
        %692 = vmatpush.bf16.msra.mxu0 0
        %693 = vmatpush.bf16.msra.mxu0 0
        %694 = vmatpush.bf16.msra.mxu0 0
        %695 = vmatpush.bf16.msra.mxu0 0
        %696 = vmatpush.bf16.msra.mxu0 %v687
        %697 = vmatmul.bf16.gmra.mxu0 %v511
        %v698 = vpop.f32.mrf.mxu0
        %v699 = vadd.f32 %v681, %v698
        %v700 = vpop.f32.mrf.mxu0
        %v701 = vadd.f32 %v681, %v700
        %702 = vdwg.mxu0
        %s703 = scalar_lea.vmem %s5, 8
        %v704 = vld [vmem:[%s703] sm:$0xf]
        %v705 = vld [vmem:[%s703 + $0x4] sm:$0xf]
        %s706 = scalar_lea.vmem %s6, 1
        %v707 = vld [vmem:[%s706] sm:$0x1]
        %v709 = vperm.slane %v707, 0
        %v713 = vunpack.c.l.b16 %v704
        %v714 = vunpack.c.l.b16 %v705
        %v715 = vpack.c.b16 %v714, %v713
        %717 = vmatpush.bf16.msra.mxu0 0
        %718 = vmatpush.bf16.msra.mxu0 0
        %719 = vmatpush.bf16.msra.mxu0 0
        %720 = vmatpush.bf16.msra.mxu0 0
        %721 = vmatpush.bf16.msra.mxu0 0
        %722 = vmatpush.bf16.msra.mxu0 0
        %723 = vmatpush.bf16.msra.mxu0 0
        %724 = vmatpush.bf16.msra.mxu0 %v715
        %725 = vmatmul.bf16.gmra.mxu0 %v511
        %v726 = vpop.f32.mrf.mxu0
        %v727 = vadd.f32 %v709, %v726
        %v728 = vpop.f32.mrf.mxu0
        %v729 = vadd.f32 %v709, %v728
        %730 = vdwg.mxu0
        %v731 = vpack.c.bf16 %v673, %v671
        %v732 = vpack.c.bf16 %v701, %v699
        %v734 = vsel %vm509, %v731, 0
        %v737 = vsel %vm509, %v732, 0
        %739 = vmatpush.bf16.xpose.msra.mxu0 0
        %740 = vmatpush.bf16.xpose.msra.mxu0 0
        %741 = vmatpush.bf16.xpose.msra.mxu0 0
        %742 = vmatpush.bf16.xpose.msra.mxu0 0
        %743 = vmatpush.bf16.xpose.msra.mxu0 0
        %744 = vmatpush.bf16.xpose.msra.mxu0 0
        %745 = vmatpush.bf16.xpose.msra.mxu0 0
        %746 = vmatpush.bf16.xpose.msra.mxu0 %v737
        %747 = vmatmul.bf16.gmra.mxu0 %v734
        %v748 = vpop.f32.mrf.mxu0
        %v749 = vadd.f32 0.0, %v748
        %v750 = vpop.f32.mrf.mxu0
        %v751 = vadd.f32 0.0, %v750
        %752 = vdwg.mxu0
        %v753 = vmul.f32 %v749, 0.25
        %v754 = vmul.f32 %v751, 0.25
        %v755 = vsel %vm509, %v753, -inf
        %756 = vmax.xlane.f32.xlu0 %v755
        %v757 = vpop.xlane.xlu0 %756
        %v758 = vsel %vm509, %v754, -inf
        %759 = vmax.xlane.f32.xlu0 %v758
        %v760 = vpop.xlane.xlu0 %759
        %v761 = vsub.f32 %v753, %v757
        %v762 = vsub.f32 %v754, %v760
        %v763 = vmul.f32 %v761, 1.442695
        %v764 = vpow.pop %v763
        %v765 = vmul.f32 %v762, 1.442695
        %v766 = vpow.pop %v765
        %v767 = vsel %vm509, %v764, 0.0
        %768 = vadd.xlane.f32.xlu0 %v767
        %v769 = vpop.xlane.xlu0 %768
        %v770 = vsel %vm509, %v766, 0.0
        %771 = vadd.xlane.f32.xlu0 %v770
        %v772 = vpop.xlane.xlu0 %771
        %v773 = vrcp.pop %v769
        %v774 = vrcp.pop %v772
        %v775 = vmul.f32 %v764, %v773
        %v776 = vmul.f32 %v766, %v774
        %v777 = vpack.c.bf16 %v776, %v775
        %v778 = vpack.c.bf16 %v729, %v727
        %v780 = vsel %vm509, %v777, 0
        %782 = vmatpush.bf16.msra.mxu0 0
        %783 = vmatpush.bf16.msra.mxu0 0
        %784 = vmatpush.bf16.msra.mxu0 0
        %785 = vmatpush.bf16.msra.mxu0 0
        %786 = vmatpush.bf16.msra.mxu0 0
        %787 = vmatpush.bf16.msra.mxu0 0
        %788 = vmatpush.bf16.msra.mxu0 0
        %789 = vmatpush.bf16.msra.mxu0 %v778
        %790 = vmatmul.bf16.gmra.mxu0 %v780
        %v791 = vpop.f32.mrf.mxu0
        %v792 = vadd.f32 0.0, %v791
        %v793 = vpop.f32.mrf.mxu0
        %v794 = vadd.f32 0.0, %v793
        %795 = vdwg.mxu0
        %v796 = vpack.c.bf16 %v794, %v792
        %s797 = scalar_lea.vmem %s7, 8
        %v798 = vld [vmem:[%s797] sm:$0xf]
        %v799 = vld [vmem:[%s797 + $0x4] sm:$0xf]
        %v802 = vunpack.c.l.b16 %v798
        %v803 = vunpack.c.l.b16 %v799
        %v804 = vpack.c.b16 %v803, %v802
        %v807 = vsel %vm509, %v796, 0
        %809 = vmatpush.bf16.msra.mxu0 0
        %810 = vmatpush.bf16.msra.mxu0 0
        %811 = vmatpush.bf16.msra.mxu0 0
        %812 = vmatpush.bf16.msra.mxu0 0
        %813 = vmatpush.bf16.msra.mxu0 0
        %814 = vmatpush.bf16.msra.mxu0 0
        %815 = vmatpush.bf16.msra.mxu0 0
        %816 = vmatpush.bf16.msra.mxu0 %v804
        %817 = vmatmul.bf16.gmra.mxu0 %v807
        %v818 = vpop.f32.mrf.mxu0
        %v819 = vadd.f32 0.0, %v818
        %v820 = vpop.f32.mrf.mxu0
        %v821 = vadd.f32 0.0, %v820
        %822 = vdwg.mxu0
        %v825 = vunpack.c.l.b16 %v645
        %v826 = vunpack.c.l.b16 %v646
        %v827 = vpack.c.b16 %v826, %v825
        %v830 = vsel %vm509, %v644, 0
        %832 = vmatpush.bf16.msra.mxu0 0
        %833 = vmatpush.bf16.msra.mxu0 0
        %834 = vmatpush.bf16.msra.mxu0 0
        %835 = vmatpush.bf16.msra.mxu0 0
        %836 = vmatpush.bf16.msra.mxu0 0
        %837 = vmatpush.bf16.msra.mxu0 0
        %838 = vmatpush.bf16.msra.mxu0 0
        %839 = vmatpush.bf16.msra.mxu0 %v827
        %840 = vmatmul.bf16.gmra.mxu0 %v830
        %v841 = vpop.f32.mrf.mxu0
        %v842 = vadd.f32 %v819, %v841
        %v843 = vpop.f32.mrf.mxu0
        %v844 = vadd.f32 %v821, %v843
        %845 = vdwg.mxu0
        %v846 = vld [vmem:[%s8] sm:$0x1]
        %v848 = vperm.slane %v846, 0
        %v850 = vadd.f32 %v842, %v848
        %v851 = vadd.f32 %v844, %v848
        %v852 = vadd.f32 %v850, %v494
        %v853 = vadd.f32 %v851, %v495
        %854 = vst.msk [vmem:[#allocation2] sm:$0xff] %vm509, 0.0
        %855 = vst.msk [vmem:[#allocation2 + $0x8] sm:$0xff] %vm509, 0.0
        %856 = vst.msk [vmem:[#allocation2 + $0x10] sm:$0xff] %vm509, 0.0
        %857 = vst.msk [vmem:[#allocation2 + $0x18] sm:$0xff] %vm509, 0.0
        %vm858 = vcmask 125952
        %859 = vst.msk [vmem:[#allocation2 + $0x20] sm:$0xf] %vm858, 0.0
        %860 = vst.msk [vmem:[#allocation2 + $0x7] sm:$0xf] %vm858, %v852
        %vm861 = vcmask 130052
        %862 = vst.msk [vmem:[#allocation2 + $0x9] sm:$0xf0] %vm861, %v852
        %863 = vst.msk [vmem:[#allocation2 + $0x13] sm:$0xf] %vm858, %v853
        %864 = vst.msk [vmem:[#allocation2 + $0x15] sm:$0xf0] %vm861, %v853
        %v865 = vld [vmem:[#allocation2] sm:$0xff]
        %v866 = vld [vmem:[#allocation2 + $0x8] sm:$0xff]
        %v867 = vld [vmem:[#allocation2 + $0x10] sm:$0x3f]
        %v868 = vpack.c.bf16 %v866, %v865
        %v869 = vpack.c.bf16 %v867, %v867
        %v870 = vld [vmem:[%s9] sm:$0xf]
        %v871 = vld [vmem:[%s9 + $0x4] sm:$0xf]
        %v872 = vld [vmem:[#allocation2 + $0x1] sm:$0xff]
        %v873 = vld [vmem:[#allocation2 + $0x9] sm:$0xff]
        %v874 = vld [vmem:[#allocation2 + $0x11] sm:$0x3f]
        %v875 = vpack.c.bf16 %v873, %v872
        %v876 = vpack.c.bf16 %v874, %v874
        %s877 = scalar_lea.vmem %s9, 8
        %v878 = vld [vmem:[%s877] sm:$0xf]
        %v879 = vld [vmem:[%s877 + $0x4] sm:$0xf]
        %v882 = vunpack.c.l.b16 %v878
        %v883 = vunpack.c.l.b16 %v879
        %v884 = vpack.c.b16 %v883, %v882
        %v887 = vsel %vm509, %v875, 0
        %v890 = vsel %vm509, %v876, 0
        %892 = vmatpush.bf16.msra.mxu0 0
        %893 = vmatpush.bf16.msra.mxu0 0
        %894 = vmatpush.bf16.msra.mxu0 0
        %895 = vmatpush.bf16.msra.mxu0 0
        %896 = vmatpush.bf16.msra.mxu0 0
        %897 = vmatpush.bf16.msra.mxu0 0
        %898 = vmatpush.bf16.msra.mxu0 0
        %899 = vmatpush.bf16.msra.mxu0 %v884
        %900 = vmatmul.bf16.gmra.mxu0 %v887
        %v901 = vpop.f32.mrf.mxu0
        %v902 = vadd.f32 0.0, %v901
        %v903 = vpop.f32.mrf.mxu0
        %v904 = vadd.f32 0.0, %v903
        %905 = vmatmul.bf16.gmra.mxu0 %v890
        %v906 = vpop.f32.mrf.mxu0
        %v907 = vadd.f32 0.0, %v906
        %v908 = vpop.f32.mrf.mxu0
        %909 = vdwg.mxu0
        %v912 = vunpack.c.l.b16 %v870
        %v913 = vunpack.c.l.b16 %v871
        %v914 = vpack.c.b16 %v913, %v912
        %v917 = vsel %vm509, %v868, 0
        %v920 = vsel %vm509, %v869, 0
        %922 = vmatpush.bf16.msra.mxu0 0
        %923 = vmatpush.bf16.msra.mxu0 0
        %924 = vmatpush.bf16.msra.mxu0 0
        %925 = vmatpush.bf16.msra.mxu0 0
        %926 = vmatpush.bf16.msra.mxu0 0
        %927 = vmatpush.bf16.msra.mxu0 0
        %928 = vmatpush.bf16.msra.mxu0 0
        %929 = vmatpush.bf16.msra.mxu0 %v914
        %930 = vmatmul.bf16.gmra.mxu0 %v917
        %v931 = vpop.f32.mrf.mxu0
        %v932 = vadd.f32 %v902, %v931
        %v933 = vpop.f32.mrf.mxu0
        %v934 = vadd.f32 %v904, %v933
        %935 = vmatmul.bf16.gmra.mxu0 %v920
        %v936 = vpop.f32.mrf.mxu0
        %v937 = vadd.f32 %v907, %v936
        %v938 = vpop.f32.mrf.mxu0
        %939 = vdwg.mxu0
        %v940 = vld [vmem:[#allocation2 + $0x2] sm:$0xff]
        %v941 = vld [vmem:[#allocation2 + $0xa] sm:$0xff]
        %v942 = vld [vmem:[#allocation2 + $0x12] sm:$0x3f]
        %v943 = vpack.c.bf16 %v941, %v940
        %v944 = vpack.c.bf16 %v942, %v942
        %s945 = scalar_lea.vmem %s9, 16
        %v946 = vld [vmem:[%s945] sm:$0xf]
        %v947 = vld [vmem:[%s945 + $0x4] sm:$0xf]
        %v950 = vunpack.c.l.b16 %v946
        %v951 = vunpack.c.l.b16 %v947
        %v952 = vpack.c.b16 %v951, %v950
        %v955 = vsel %vm509, %v943, 0
        %v958 = vsel %vm509, %v944, 0
        %960 = vmatpush.bf16.msra.mxu0 0
        %961 = vmatpush.bf16.msra.mxu0 0
        %962 = vmatpush.bf16.msra.mxu0 0
        %963 = vmatpush.bf16.msra.mxu0 0
        %964 = vmatpush.bf16.msra.mxu0 0
        %965 = vmatpush.bf16.msra.mxu0 0
        %966 = vmatpush.bf16.msra.mxu0 0
        %967 = vmatpush.bf16.msra.mxu0 %v952
        %968 = vmatmul.bf16.gmra.mxu0 %v955
        %v969 = vpop.f32.mrf.mxu0
        %v970 = vadd.f32 0.0, %v969
        %v971 = vpop.f32.mrf.mxu0
        %v972 = vadd.f32 0.0, %v971
        %973 = vmatmul.bf16.gmra.mxu0 %v958
        %v974 = vpop.f32.mrf.mxu0
        %v975 = vadd.f32 0.0, %v974
        %v976 = vpop.f32.mrf.mxu0
        %977 = vdwg.mxu0
        %v978 = vadd.f32 %v932, %v970
        %v979 = vadd.f32 %v934, %v972
        %v980 = vadd.f32 %v937, %v975
        %v981 = vld [vmem:[#allocation2 + $0x6] sm:$0xff]
        %v982 = vld [vmem:[#allocation2 + $0xe] sm:$0xff]
        %v983 = vld [vmem:[#allocation2 + $0x16] sm:$0x3f]
        %v984 = vpack.c.bf16 %v982, %v981
        %v985 = vpack.c.bf16 %v983, %v983
        %s986 = scalar_lea.vmem %s9, 24
        %v987 = vld [vmem:[%s986] sm:$0xf]
        %v988 = vld [vmem:[%s986 + $0x4] sm:$0xf]
        %v991 = vunpack.c.l.b16 %v987
        %v992 = vunpack.c.l.b16 %v988
        %v993 = vpack.c.b16 %v992, %v991
        %v996 = vsel %vm509, %v984, 0
        %v999 = vsel %vm509, %v985, 0
        %1001 = vmatpush.bf16.msra.mxu0 0
        %1002 = vmatpush.bf16.msra.mxu0 0
        %1003 = vmatpush.bf16.msra.mxu0 0
        %1004 = vmatpush.bf16.msra.mxu0 0
        %1005 = vmatpush.bf16.msra.mxu0 0
        %1006 = vmatpush.bf16.msra.mxu0 0
        %1007 = vmatpush.bf16.msra.mxu0 0
        %1008 = vmatpush.bf16.msra.mxu0 %v993
        %1009 = vmatmul.bf16.gmra.mxu0 %v996
        %v1010 = vpop.f32.mrf.mxu0
        %v1011 = vadd.f32 0.0, %v1010
        %v1012 = vpop.f32.mrf.mxu0
        %v1013 = vadd.f32 0.0, %v1012
        %1014 = vmatmul.bf16.gmra.mxu0 %v999
        %v1015 = vpop.f32.mrf.mxu0
        %v1016 = vadd.f32 0.0, %v1015
        %v1017 = vpop.f32.mrf.mxu0
        %1018 = vdwg.mxu0
        %v1019 = vadd.f32 %v978, %v1011
        %v1020 = vadd.f32 %v979, %v1013
        %v1021 = vadd.f32 %v980, %v1016
        %v1022 = vld [vmem:[#allocation2 + $0x7] sm:$0xff]
        %v1023 = vld [vmem:[#allocation2 + $0xf] sm:$0xff]
        %v1024 = vld [vmem:[#allocation2 + $0x17] sm:$0x3f]
        %v1025 = vpack.c.bf16 %v1023, %v1022
        %v1026 = vpack.c.bf16 %v1024, %v1024
        %s1027 = scalar_lea.vmem %s9, 32
        %v1028 = vld [vmem:[%s1027] sm:$0xf]
        %v1029 = vld [vmem:[%s1027 + $0x4] sm:$0xf]
        %v1032 = vunpack.c.l.b16 %v1028
        %v1033 = vunpack.c.l.b16 %v1029
        %v1034 = vpack.c.b16 %v1033, %v1032
        %v1037 = vsel %vm509, %v1025, 0
        %v1040 = vsel %vm509, %v1026, 0
        %1042 = vmatpush.bf16.msra.mxu0 0
        %1043 = vmatpush.bf16.msra.mxu0 0
        %1044 = vmatpush.bf16.msra.mxu0 0
        %1045 = vmatpush.bf16.msra.mxu0 0
        %1046 = vmatpush.bf16.msra.mxu0 0
        %1047 = vmatpush.bf16.msra.mxu0 0
        %1048 = vmatpush.bf16.msra.mxu0 0
        %1049 = vmatpush.bf16.msra.mxu0 %v1034
        %1050 = vmatmul.bf16.gmra.mxu0 %v1037
        %v1051 = vpop.f32.mrf.mxu0
        %v1052 = vadd.f32 0.0, %v1051
        %v1053 = vpop.f32.mrf.mxu0
        %v1054 = vadd.f32 0.0, %v1053
        %1055 = vmatmul.bf16.gmra.mxu0 %v1040
        %v1056 = vpop.f32.mrf.mxu0
        %v1057 = vadd.f32 0.0, %v1056
        %v1058 = vpop.f32.mrf.mxu0
        %1059 = vdwg.mxu0
        %v1060 = vadd.f32 %v1019, %v1052
        %v1061 = vadd.f32 %v1020, %v1054
        %v1062 = vadd.f32 %v1021, %v1057
        %v1063 = vld [vmem:[#allocation2 + $0x8] sm:$0xff]
        %v1064 = vld [vmem:[#allocation2 + $0x10] sm:$0xff]
        %v1065 = vld [vmem:[#allocation2 + $0x18] sm:$0x3f]
        %v1066 = vpack.c.bf16 %v1064, %v1063
        %v1067 = vpack.c.bf16 %v1065, %v1065
        %s1068 = scalar_lea.vmem %s9, 40
        %v1069 = vld [vmem:[%s1068] sm:$0xf]
        %v1070 = vld [vmem:[%s1068 + $0x4] sm:$0xf]
        %v1073 = vunpack.c.l.b16 %v1069
        %v1074 = vunpack.c.l.b16 %v1070
        %v1075 = vpack.c.b16 %v1074, %v1073
        %v1078 = vsel %vm509, %v1066, 0
        %v1081 = vsel %vm509, %v1067, 0
        %1083 = vmatpush.bf16.msra.mxu0 0
        %1084 = vmatpush.bf16.msra.mxu0 0
        %1085 = vmatpush.bf16.msra.mxu0 0
        %1086 = vmatpush.bf16.msra.mxu0 0
        %1087 = vmatpush.bf16.msra.mxu0 0
        %1088 = vmatpush.bf16.msra.mxu0 0
        %1089 = vmatpush.bf16.msra.mxu0 0
        %1090 = vmatpush.bf16.msra.mxu0 %v1075
        %1091 = vmatmul.bf16.gmra.mxu0 %v1078
        %v1092 = vpop.f32.mrf.mxu0
        %v1093 = vadd.f32 0.0, %v1092
        %v1094 = vpop.f32.mrf.mxu0
        %v1095 = vadd.f32 0.0, %v1094
        %1096 = vmatmul.bf16.gmra.mxu0 %v1081
        %v1097 = vpop.f32.mrf.mxu0
        %v1098 = vadd.f32 0.0, %v1097
        %v1099 = vpop.f32.mrf.mxu0
        %1100 = vdwg.mxu0
        %v1101 = vadd.f32 %v1060, %v1093
        %v1102 = vadd.f32 %v1061, %v1095
        %v1103 = vadd.f32 %v1062, %v1098
        %v1104 = vld [vmem:[#allocation2 + $0xc] sm:$0xff]
        %v1105 = vld [vmem:[#allocation2 + $0x14] sm:$0xff]
        %v1106 = vld [vmem:[#allocation2 + $0x1c] sm:$0x3f]
        %v1107 = vpack.c.bf16 %v1105, %v1104
        %v1108 = vpack.c.bf16 %v1106, %v1106
        %s1109 = scalar_lea.vmem %s9, 48
        %v1110 = vld [vmem:[%s1109] sm:$0xf]
        %v1111 = vld [vmem:[%s1109 + $0x4] sm:$0xf]
        %v1114 = vunpack.c.l.b16 %v1110
        %v1115 = vunpack.c.l.b16 %v1111
        %v1116 = vpack.c.b16 %v1115, %v1114
        %v1119 = vsel %vm509, %v1107, 0
        %v1122 = vsel %vm509, %v1108, 0
        %1124 = vmatpush.bf16.msra.mxu0 0
        %1125 = vmatpush.bf16.msra.mxu0 0
        %1126 = vmatpush.bf16.msra.mxu0 0
        %1127 = vmatpush.bf16.msra.mxu0 0
        %1128 = vmatpush.bf16.msra.mxu0 0
        %1129 = vmatpush.bf16.msra.mxu0 0
        %1130 = vmatpush.bf16.msra.mxu0 0
        %1131 = vmatpush.bf16.msra.mxu0 %v1116
        %1132 = vmatmul.bf16.gmra.mxu0 %v1119
        %v1133 = vpop.f32.mrf.mxu0
        %v1134 = vadd.f32 0.0, %v1133
        %v1135 = vpop.f32.mrf.mxu0
        %v1136 = vadd.f32 0.0, %v1135
        %1137 = vmatmul.bf16.gmra.mxu0 %v1122
        %v1138 = vpop.f32.mrf.mxu0
        %v1139 = vadd.f32 0.0, %v1138
        %v1140 = vpop.f32.mrf.mxu0
        %1141 = vdwg.mxu0
        %v1142 = vadd.f32 %v1101, %v1134
        %v1143 = vadd.f32 %v1102, %v1136
        %v1144 = vadd.f32 %v1103, %v1139
        %v1145 = vld [vmem:[#allocation2 + $0xd] sm:$0xff]
        %v1146 = vld [vmem:[#allocation2 + $0x15] sm:$0xff]
        %v1147 = vld [vmem:[#allocation2 + $0x1d] sm:$0x3f]
        %v1148 = vpack.c.bf16 %v1146, %v1145
        %v1149 = vpack.c.bf16 %v1147, %v1147
        %s1150 = scalar_lea.vmem %s9, 56
        %v1151 = vld [vmem:[%s1150] sm:$0xf]
        %v1152 = vld [vmem:[%s1150 + $0x4] sm:$0xf]
        %v1155 = vunpack.c.l.b16 %v1151
        %v1156 = vunpack.c.l.b16 %v1152
        %v1157 = vpack.c.b16 %v1156, %v1155
        %v1160 = vsel %vm509, %v1148, 0
        %v1163 = vsel %vm509, %v1149, 0
        %1165 = vmatpush.bf16.msra.mxu0 0
        %1166 = vmatpush.bf16.msra.mxu0 0
        %1167 = vmatpush.bf16.msra.mxu0 0
        %1168 = vmatpush.bf16.msra.mxu0 0
        %1169 = vmatpush.bf16.msra.mxu0 0
        %1170 = vmatpush.bf16.msra.mxu0 0
        %1171 = vmatpush.bf16.msra.mxu0 0
        %1172 = vmatpush.bf16.msra.mxu0 %v1157
        %1173 = vmatmul.bf16.gmra.mxu0 %v1160
        %v1174 = vpop.f32.mrf.mxu0
        %v1175 = vadd.f32 0.0, %v1174
        %v1176 = vpop.f32.mrf.mxu0
        %v1177 = vadd.f32 0.0, %v1176
        %1178 = vmatmul.bf16.gmra.mxu0 %v1163
        %v1179 = vpop.f32.mrf.mxu0
        %v1180 = vadd.f32 0.0, %v1179
        %v1181 = vpop.f32.mrf.mxu0
        %1182 = vdwg.mxu0
        %v1183 = vadd.f32 %v1142, %v1175
        %v1184 = vadd.f32 %v1143, %v1177
        %v1185 = vadd.f32 %v1144, %v1180
        %v1186 = vld [vmem:[#allocation2 + $0xe] sm:$0xff]
        %v1187 = vld [vmem:[#allocation2 + $0x16] sm:$0xff]
        %v1188 = vld [vmem:[#allocation2 + $0x1e] sm:$0x3f]
        %v1189 = vpack.c.bf16 %v1187, %v1186
        %v1190 = vpack.c.bf16 %v1188, %v1188
        %s1191 = scalar_lea.vmem %s9, 64
        %v1192 = vld [vmem:[%s1191] sm:$0xf]
        %v1193 = vld [vmem:[%s1191 + $0x4] sm:$0xf]
        %v1196 = vunpack.c.l.b16 %v1192
        %v1197 = vunpack.c.l.b16 %v1193
        %v1198 = vpack.c.b16 %v1197, %v1196
        %v1201 = vsel %vm509, %v1189, 0
        %v1204 = vsel %vm509, %v1190, 0
        %1206 = vmatpush.bf16.msra.mxu0 0
        %1207 = vmatpush.bf16.msra.mxu0 0
        %1208 = vmatpush.bf16.msra.mxu0 0
        %1209 = vmatpush.bf16.msra.mxu0 0
        %1210 = vmatpush.bf16.msra.mxu0 0
        %1211 = vmatpush.bf16.msra.mxu0 0
        %1212 = vmatpush.bf16.msra.mxu0 0
        %1213 = vmatpush.bf16.msra.mxu0 %v1198
        %1214 = vmatmul.bf16.gmra.mxu0 %v1201
        %v1215 = vpop.f32.mrf.mxu0
        %v1216 = vadd.f32 0.0, %v1215
        %v1217 = vpop.f32.mrf.mxu0
        %v1218 = vadd.f32 0.0, %v1217
        %1219 = vmatmul.bf16.gmra.mxu0 %v1204
        %v1220 = vpop.f32.mrf.mxu0
        %v1221 = vadd.f32 0.0, %v1220
        %v1222 = vpop.f32.mrf.mxu0
        %1223 = vdwg.mxu0
        %v1224 = vadd.f32 %v1183, %v1216
        %v1225 = vadd.f32 %v1184, %v1218
        %v1226 = vadd.f32 %v1185, %v1221
        %v1227 = vld [vmem:[%s10] sm:$0x1]
        %v1229 = vperm.slane %v1227, 0
        %v1231 = vadd.f32 %v1224, %v1229
        %v1232 = vadd.f32 %v1225, %v1229
        %v1233 = vadd.f32 %v1226, %v1229
        %vm1234 = vcmp.ge.f32.partialorder %v1231, 0.0
        %vm1235 = vcmp.ge.f32.partialorder %v1232, 0.0
        %vm1236 = vcmp.ge.f32.partialorder %v1233, 0.0
        %v1237 = vmul.f32 %v1231, 0.2
        %v1238 = vmul.f32 %v1232, 0.2
        %v1239 = vmul.f32 %v1233, 0.2
        %v1240 = vsel %vm1234, %v1231, %v1237
        %v1241 = vsel %vm1235, %v1232, %v1238
        %v1242 = vsel %vm1236, %v1233, %v1239
        %1243 = vst.msk [vmem:[#allocation2 + $0x7] sm:$0xf] %vm858, %v1240
        %vm1244 = vcmask 130054
        %1245 = vst.msk [vmem:[#allocation2 + $0x7] sm:$0xc0] %vm1244, %v1240
        %vm1246 = vcmask 123904
        %1247 = vst.msk [vmem:[#allocation2 + $0xf] sm:$0x3] %vm1246, %v1241
        %1248 = vst.msk [vmem:[#allocation2 + $0xf] sm:$0xf0] %vm861, %v1241
        %vm1249 = vcmask 128002
        %1250 = vst.msk [vmem:[#allocation2 + $0x17] sm:$0x3c] %vm1249, %v1242
        %v1251 = vld [vmem:[#allocation2] sm:$0xff]
        %v1252 = vld [vmem:[#allocation2 + $0x8] sm:$0xff]
        %v1253 = vld [vmem:[#allocation2 + $0x10] sm:$0x3f]
        %v1254 = vpack.c.bf16 %v1252, %v1251
        %v1255 = vpack.c.bf16 %v1253, %v1253
        %v1256 = vld [vmem:[%s11] sm:$0xf]
        %v1257 = vld [vmem:[%s11 + $0x4] sm:$0xf]
        %v1258 = vld [vmem:[#allocation2 + $0x1] sm:$0xff]
        %v1259 = vld [vmem:[#allocation2 + $0x9] sm:$0xff]
        %v1260 = vld [vmem:[#allocation2 + $0x11] sm:$0x3f]
        %v1261 = vpack.c.bf16 %v1259, %v1258
        %v1262 = vpack.c.bf16 %v1260, %v1260
        %s1263 = scalar_lea.vmem %s11, 8
        %v1264 = vld [vmem:[%s1263] sm:$0xf]
        %v1265 = vld [vmem:[%s1263 + $0x4] sm:$0xf]
        %v1268 = vunpack.c.l.b16 %v1264
        %v1269 = vunpack.c.l.b16 %v1265
        %v1270 = vpack.c.b16 %v1269, %v1268
        %v1273 = vsel %vm509, %v1261, 0
        %v1276 = vsel %vm509, %v1262, 0
        %1278 = vmatpush.bf16.msra.mxu0 0
        %1279 = vmatpush.bf16.msra.mxu0 0
        %1280 = vmatpush.bf16.msra.mxu0 0
        %1281 = vmatpush.bf16.msra.mxu0 0
        %1282 = vmatpush.bf16.msra.mxu0 0
        %1283 = vmatpush.bf16.msra.mxu0 0
        %1284 = vmatpush.bf16.msra.mxu0 0
        %1285 = vmatpush.bf16.msra.mxu0 %v1270
        %1286 = vmatmul.bf16.gmra.mxu0 %v1273
        %v1287 = vpop.f32.mrf.mxu0
        %v1288 = vadd.f32 0.0, %v1287
        %v1289 = vpop.f32.mrf.mxu0
        %v1290 = vadd.f32 0.0, %v1289
        %1291 = vmatmul.bf16.gmra.mxu0 %v1276
        %v1292 = vpop.f32.mrf.mxu0
        %v1293 = vadd.f32 0.0, %v1292
        %v1294 = vpop.f32.mrf.mxu0
        %1295 = vdwg.mxu0
        %v1298 = vunpack.c.l.b16 %v1256
        %v1299 = vunpack.c.l.b16 %v1257
        %v1300 = vpack.c.b16 %v1299, %v1298
        %v1303 = vsel %vm509, %v1254, 0
        %v1306 = vsel %vm509, %v1255, 0
        %1308 = vmatpush.bf16.msra.mxu0 0
        %1309 = vmatpush.bf16.msra.mxu0 0
        %1310 = vmatpush.bf16.msra.mxu0 0
        %1311 = vmatpush.bf16.msra.mxu0 0
        %1312 = vmatpush.bf16.msra.mxu0 0
        %1313 = vmatpush.bf16.msra.mxu0 0
        %1314 = vmatpush.bf16.msra.mxu0 0
        %1315 = vmatpush.bf16.msra.mxu0 %v1300
        %1316 = vmatmul.bf16.gmra.mxu0 %v1303
        %v1317 = vpop.f32.mrf.mxu0
        %v1318 = vadd.f32 %v1288, %v1317
        %v1319 = vpop.f32.mrf.mxu0
        %v1320 = vadd.f32 %v1290, %v1319
        %1321 = vmatmul.bf16.gmra.mxu0 %v1306
        %v1322 = vpop.f32.mrf.mxu0
        %v1323 = vadd.f32 %v1293, %v1322
        %v1324 = vpop.f32.mrf.mxu0
        %1325 = vdwg.mxu0
        %v1326 = vld [vmem:[#allocation2 + $0x2] sm:$0xff]
        %v1327 = vld [vmem:[#allocation2 + $0xa] sm:$0xff]
        %v1328 = vld [vmem:[#allocation2 + $0x12] sm:$0x3f]
        %v1329 = vpack.c.bf16 %v1327, %v1326
        %v1330 = vpack.c.bf16 %v1328, %v1328
        %s1331 = scalar_lea.vmem %s11, 16
        %v1332 = vld [vmem:[%s1331] sm:$0xf]
        %v1333 = vld [vmem:[%s1331 + $0x4] sm:$0xf]
        %v1336 = vunpack.c.l.b16 %v1332
        %v1337 = vunpack.c.l.b16 %v1333
        %v1338 = vpack.c.b16 %v1337, %v1336
        %v1341 = vsel %vm509, %v1329, 0
        %v1344 = vsel %vm509, %v1330, 0
        %1346 = vmatpush.bf16.msra.mxu0 0
        %1347 = vmatpush.bf16.msra.mxu0 0
        %1348 = vmatpush.bf16.msra.mxu0 0
        %1349 = vmatpush.bf16.msra.mxu0 0
        %1350 = vmatpush.bf16.msra.mxu0 0
        %1351 = vmatpush.bf16.msra.mxu0 0
        %1352 = vmatpush.bf16.msra.mxu0 0
        %1353 = vmatpush.bf16.msra.mxu0 %v1338
        %1354 = vmatmul.bf16.gmra.mxu0 %v1341
        %v1355 = vpop.f32.mrf.mxu0
        %v1356 = vadd.f32 0.0, %v1355
        %v1357 = vpop.f32.mrf.mxu0
        %v1358 = vadd.f32 0.0, %v1357
        %1359 = vmatmul.bf16.gmra.mxu0 %v1344
        %v1360 = vpop.f32.mrf.mxu0
        %v1361 = vadd.f32 0.0, %v1360
        %v1362 = vpop.f32.mrf.mxu0
        %1363 = vdwg.mxu0
        %v1364 = vadd.f32 %v1318, %v1356
        %v1365 = vadd.f32 %v1320, %v1358
        %v1366 = vadd.f32 %v1323, %v1361
        %v1367 = vld [vmem:[#allocation2 + $0x6] sm:$0xff]
        %v1368 = vld [vmem:[#allocation2 + $0xe] sm:$0xff]
        %v1369 = vld [vmem:[#allocation2 + $0x16] sm:$0x3f]
        %v1370 = vpack.c.bf16 %v1368, %v1367
        %v1371 = vpack.c.bf16 %v1369, %v1369
        %s1372 = scalar_lea.vmem %s11, 24
        %v1373 = vld [vmem:[%s1372] sm:$0xf]
        %v1374 = vld [vmem:[%s1372 + $0x4] sm:$0xf]
        %v1377 = vunpack.c.l.b16 %v1373
        %v1378 = vunpack.c.l.b16 %v1374
        %v1379 = vpack.c.b16 %v1378, %v1377
        %v1382 = vsel %vm509, %v1370, 0
        %v1385 = vsel %vm509, %v1371, 0
        %1387 = vmatpush.bf16.msra.mxu0 0
        %1388 = vmatpush.bf16.msra.mxu0 0
        %1389 = vmatpush.bf16.msra.mxu0 0
        %1390 = vmatpush.bf16.msra.mxu0 0
        %1391 = vmatpush.bf16.msra.mxu0 0
        %1392 = vmatpush.bf16.msra.mxu0 0
        %1393 = vmatpush.bf16.msra.mxu0 0
        %1394 = vmatpush.bf16.msra.mxu0 %v1379
        %1395 = vmatmul.bf16.gmra.mxu0 %v1382
        %v1396 = vpop.f32.mrf.mxu0
        %v1397 = vadd.f32 0.0, %v1396
        %v1398 = vpop.f32.mrf.mxu0
        %v1399 = vadd.f32 0.0, %v1398
        %1400 = vmatmul.bf16.gmra.mxu0 %v1385
        %v1401 = vpop.f32.mrf.mxu0
        %v1402 = vadd.f32 0.0, %v1401
        %v1403 = vpop.f32.mrf.mxu0
        %1404 = vdwg.mxu0
        %v1405 = vadd.f32 %v1364, %v1397
        %v1406 = vadd.f32 %v1365, %v1399
        %v1407 = vadd.f32 %v1366, %v1402
        %v1408 = vld [vmem:[#allocation2 + $0x7] sm:$0xff]
        %v1409 = vld [vmem:[#allocation2 + $0xf] sm:$0xff]
        %v1410 = vld [vmem:[#allocation2 + $0x17] sm:$0x3f]
        %v1411 = vpack.c.bf16 %v1409, %v1408
        %v1412 = vpack.c.bf16 %v1410, %v1410
        %s1413 = scalar_lea.vmem %s11, 32
        %v1414 = vld [vmem:[%s1413] sm:$0xf]
        %v1415 = vld [vmem:[%s1413 + $0x4] sm:$0xf]
        %v1418 = vunpack.c.l.b16 %v1414
        %v1419 = vunpack.c.l.b16 %v1415
        %v1420 = vpack.c.b16 %v1419, %v1418
        %v1423 = vsel %vm509, %v1411, 0
        %v1426 = vsel %vm509, %v1412, 0
        %1428 = vmatpush.bf16.msra.mxu0 0
        %1429 = vmatpush.bf16.msra.mxu0 0
        %1430 = vmatpush.bf16.msra.mxu0 0
        %1431 = vmatpush.bf16.msra.mxu0 0
        %1432 = vmatpush.bf16.msra.mxu0 0
        %1433 = vmatpush.bf16.msra.mxu0 0
        %1434 = vmatpush.bf16.msra.mxu0 0
        %1435 = vmatpush.bf16.msra.mxu0 %v1420
        %1436 = vmatmul.bf16.gmra.mxu0 %v1423
        %v1437 = vpop.f32.mrf.mxu0
        %v1438 = vadd.f32 0.0, %v1437
        %v1439 = vpop.f32.mrf.mxu0
        %v1440 = vadd.f32 0.0, %v1439
        %1441 = vmatmul.bf16.gmra.mxu0 %v1426
        %v1442 = vpop.f32.mrf.mxu0
        %v1443 = vadd.f32 0.0, %v1442
        %v1444 = vpop.f32.mrf.mxu0
        %1445 = vdwg.mxu0
        %v1446 = vadd.f32 %v1405, %v1438
        %v1447 = vadd.f32 %v1406, %v1440
        %v1448 = vadd.f32 %v1407, %v1443
        %v1449 = vld [vmem:[#allocation2 + $0x8] sm:$0xff]
        %v1450 = vld [vmem:[#allocation2 + $0x10] sm:$0xff]
        %v1451 = vld [vmem:[#allocation2 + $0x18] sm:$0x3f]
        %v1452 = vpack.c.bf16 %v1450, %v1449
        %v1453 = vpack.c.bf16 %v1451, %v1451
        %s1454 = scalar_lea.vmem %s11, 40
        %v1455 = vld [vmem:[%s1454] sm:$0xf]
        %v1456 = vld [vmem:[%s1454 + $0x4] sm:$0xf]
        %v1459 = vunpack.c.l.b16 %v1455
        %v1460 = vunpack.c.l.b16 %v1456
        %v1461 = vpack.c.b16 %v1460, %v1459
        %v1464 = vsel %vm509, %v1452, 0
        %v1467 = vsel %vm509, %v1453, 0
        %1469 = vmatpush.bf16.msra.mxu0 0
        %1470 = vmatpush.bf16.msra.mxu0 0
        %1471 = vmatpush.bf16.msra.mxu0 0
        %1472 = vmatpush.bf16.msra.mxu0 0
        %1473 = vmatpush.bf16.msra.mxu0 0
        %1474 = vmatpush.bf16.msra.mxu0 0
        %1475 = vmatpush.bf16.msra.mxu0 0
        %1476 = vmatpush.bf16.msra.mxu0 %v1461
        %1477 = vmatmul.bf16.gmra.mxu0 %v1464
        %v1478 = vpop.f32.mrf.mxu0
        %v1479 = vadd.f32 0.0, %v1478
        %v1480 = vpop.f32.mrf.mxu0
        %v1481 = vadd.f32 0.0, %v1480
        %1482 = vmatmul.bf16.gmra.mxu0 %v1467
        %v1483 = vpop.f32.mrf.mxu0
        %v1484 = vadd.f32 0.0, %v1483
        %v1485 = vpop.f32.mrf.mxu0
        %1486 = vdwg.mxu0
        %v1487 = vadd.f32 %v1446, %v1479
        %v1488 = vadd.f32 %v1447, %v1481
        %v1489 = vadd.f32 %v1448, %v1484
        %v1490 = vld [vmem:[#allocation2 + $0xc] sm:$0xff]
        %v1491 = vld [vmem:[#allocation2 + $0x14] sm:$0xff]
        %v1492 = vld [vmem:[#allocation2 + $0x1c] sm:$0x3f]
        %v1493 = vpack.c.bf16 %v1491, %v1490
        %v1494 = vpack.c.bf16 %v1492, %v1492
        %s1495 = scalar_lea.vmem %s11, 48
        %v1496 = vld [vmem:[%s1495] sm:$0xf]
        %v1497 = vld [vmem:[%s1495 + $0x4] sm:$0xf]
        %v1500 = vunpack.c.l.b16 %v1496
        %v1501 = vunpack.c.l.b16 %v1497
        %v1502 = vpack.c.b16 %v1501, %v1500
        %v1505 = vsel %vm509, %v1493, 0
        %v1508 = vsel %vm509, %v1494, 0
        %1510 = vmatpush.bf16.msra.mxu0 0
        %1511 = vmatpush.bf16.msra.mxu0 0
        %1512 = vmatpush.bf16.msra.mxu0 0
        %1513 = vmatpush.bf16.msra.mxu0 0
        %1514 = vmatpush.bf16.msra.mxu0 0
        %1515 = vmatpush.bf16.msra.mxu0 0
        %1516 = vmatpush.bf16.msra.mxu0 0
        %1517 = vmatpush.bf16.msra.mxu0 %v1502
        %1518 = vmatmul.bf16.gmra.mxu0 %v1505
        %v1519 = vpop.f32.mrf.mxu0
        %v1520 = vadd.f32 0.0, %v1519
        %v1521 = vpop.f32.mrf.mxu0
        %v1522 = vadd.f32 0.0, %v1521
        %1523 = vmatmul.bf16.gmra.mxu0 %v1508
        %v1524 = vpop.f32.mrf.mxu0
        %v1525 = vadd.f32 0.0, %v1524
        %v1526 = vpop.f32.mrf.mxu0
        %1527 = vdwg.mxu0
        %v1528 = vadd.f32 %v1487, %v1520
        %v1529 = vadd.f32 %v1488, %v1522
        %v1530 = vadd.f32 %v1489, %v1525
        %v1531 = vld [vmem:[#allocation2 + $0xd] sm:$0xff]
        %v1532 = vld [vmem:[#allocation2 + $0x15] sm:$0xff]
        %v1533 = vld [vmem:[#allocation2 + $0x1d] sm:$0x3f]
        %v1534 = vpack.c.bf16 %v1532, %v1531
        %v1535 = vpack.c.bf16 %v1533, %v1533
        %s1536 = scalar_lea.vmem %s11, 56
        %v1537 = vld [vmem:[%s1536] sm:$0xf]
        %v1538 = vld [vmem:[%s1536 + $0x4] sm:$0xf]
        %v1541 = vunpack.c.l.b16 %v1537
        %v1542 = vunpack.c.l.b16 %v1538
        %v1543 = vpack.c.b16 %v1542, %v1541
        %v1546 = vsel %vm509, %v1534, 0
        %v1549 = vsel %vm509, %v1535, 0
        %1551 = vmatpush.bf16.msra.mxu0 0
        %1552 = vmatpush.bf16.msra.mxu0 0
        %1553 = vmatpush.bf16.msra.mxu0 0
        %1554 = vmatpush.bf16.msra.mxu0 0
        %1555 = vmatpush.bf16.msra.mxu0 0
        %1556 = vmatpush.bf16.msra.mxu0 0
        %1557 = vmatpush.bf16.msra.mxu0 0
        %1558 = vmatpush.bf16.msra.mxu0 %v1543
        %1559 = vmatmul.bf16.gmra.mxu0 %v1546
        %v1560 = vpop.f32.mrf.mxu0
        %v1561 = vadd.f32 0.0, %v1560
        %v1562 = vpop.f32.mrf.mxu0
        %v1563 = vadd.f32 0.0, %v1562
        %1564 = vmatmul.bf16.gmra.mxu0 %v1549
        %v1565 = vpop.f32.mrf.mxu0
        %v1566 = vadd.f32 0.0, %v1565
        %v1567 = vpop.f32.mrf.mxu0
        %1568 = vdwg.mxu0
        %v1569 = vadd.f32 %v1528, %v1561
        %v1570 = vadd.f32 %v1529, %v1563
        %v1571 = vadd.f32 %v1530, %v1566
        %v1572 = vld [vmem:[#allocation2 + $0xe] sm:$0xff]
        %v1573 = vld [vmem:[#allocation2 + $0x16] sm:$0xff]
        %v1574 = vld [vmem:[#allocation2 + $0x1e] sm:$0x3f]
        %v1575 = vpack.c.bf16 %v1573, %v1572
        %v1576 = vpack.c.bf16 %v1574, %v1574
        %s1577 = scalar_lea.vmem %s11, 64
        %v1578 = vld [vmem:[%s1577] sm:$0xf]
        %v1579 = vld [vmem:[%s1577 + $0x4] sm:$0xf]
        %v1582 = vunpack.c.l.b16 %v1578
        %v1583 = vunpack.c.l.b16 %v1579
        %v1584 = vpack.c.b16 %v1583, %v1582
        %v1587 = vsel %vm509, %v1575, 0
        %v1590 = vsel %vm509, %v1576, 0
        %1592 = vmatpush.bf16.msra.mxu0 0
        %1593 = vmatpush.bf16.msra.mxu0 0
        %1594 = vmatpush.bf16.msra.mxu0 0
        %1595 = vmatpush.bf16.msra.mxu0 0
        %1596 = vmatpush.bf16.msra.mxu0 0
        %1597 = vmatpush.bf16.msra.mxu0 0
        %1598 = vmatpush.bf16.msra.mxu0 0
        %1599 = vmatpush.bf16.msra.mxu0 %v1584
        %1600 = vmatmul.bf16.gmra.mxu0 %v1587
        %v1601 = vpop.f32.mrf.mxu0
        %v1602 = vadd.f32 0.0, %v1601
        %v1603 = vpop.f32.mrf.mxu0
        %v1604 = vadd.f32 0.0, %v1603
        %1605 = vmatmul.bf16.gmra.mxu0 %v1590
        %v1606 = vpop.f32.mrf.mxu0
        %v1607 = vadd.f32 0.0, %v1606
        %v1608 = vpop.f32.mrf.mxu0
        %1609 = vdwg.mxu0
        %v1610 = vadd.f32 %v1569, %v1602
        %v1611 = vadd.f32 %v1570, %v1604
        %v1612 = vadd.f32 %v1571, %v1607
        %v1613 = vld [vmem:[%s12] sm:$0x1]
        %v1615 = vperm.slane %v1613, 0
        %v1617 = vadd.f32 %v1610, %v1615
        %v1618 = vadd.f32 %v1611, %v1615
        %v1619 = vadd.f32 %v1612, %v1615
        %v1620 = vadd.f32 %v1617, %v852
        %1621 = vst.msk [vmem:[#allocation2 + $0x7] sm:$0xf] %vm858, %v1620
        %v1623 = vrot.slane %v852, 6
        %v1625 = vadd.f32 %v1617, %v1623
        %v1626 = vadd.f32 %v1618, %v1623
        %1627 = vst.msk [vmem:[#allocation2 + $0x7] sm:$0xc0] %vm1244, %v1625
        %1628 = vst.msk [vmem:[#allocation2 + $0xf] sm:$0x3] %vm1246, %v1626
        %v1630 = vrot.slane %v853, 4
        %v1632 = vadd.f32 %v1618, %v1630
        %1633 = vst.msk [vmem:[#allocation2 + $0xf] sm:$0xf0] %vm861, %v1632
        %v1634 = vrot.slane %v853, 2
        %v1636 = vadd.f32 %v1619, %v1634
        %1637 = vst.msk [vmem:[#allocation2 + $0x17] sm:$0x3c] %vm1249, %v1636
        %v1638 = vld [vmem:[#allocation2] sm:$0xff]
        %v1639 = vld [vmem:[#allocation2 + $0x8] sm:$0xff]
        %v1640 = vld [vmem:[#allocation2 + $0x10] sm:$0x3f]
        %v1641 = vpack.c.bf16 %v1639, %v1638
        %v1642 = vpack.c.bf16 %v1640, %v1640
        %v1643 = vld [vmem:[%s13] sm:$0xf]
        %v1644 = vld [vmem:[%s13 + $0x4] sm:$0xf]
        %v1645 = vld [vmem:[#allocation2 + $0x1] sm:$0xff]
        %v1646 = vld [vmem:[#allocation2 + $0x9] sm:$0xff]
        %v1647 = vld [vmem:[#allocation2 + $0x11] sm:$0x3f]
        %v1648 = vpack.c.bf16 %v1646, %v1645
        %v1649 = vpack.c.bf16 %v1647, %v1647
        %s1650 = scalar_lea.vmem %s13, 8
        %v1651 = vld [vmem:[%s1650] sm:$0xf]
        %v1652 = vld [vmem:[%s1650 + $0x4] sm:$0xf]
        %v1655 = vunpack.c.l.b16 %v1651
        %v1656 = vunpack.c.l.b16 %v1652
        %v1657 = vpack.c.b16 %v1656, %v1655
        %v1660 = vsel %vm509, %v1648, 0
        %v1663 = vsel %vm509, %v1649, 0
        %1665 = vmatpush.bf16.msra.mxu0 0
        %1666 = vmatpush.bf16.msra.mxu0 0
        %1667 = vmatpush.bf16.msra.mxu0 0
        %1668 = vmatpush.bf16.msra.mxu0 0
        %1669 = vmatpush.bf16.msra.mxu0 0
        %1670 = vmatpush.bf16.msra.mxu0 0
        %1671 = vmatpush.bf16.msra.mxu0 0
        %1672 = vmatpush.bf16.msra.mxu0 %v1657
        %1673 = vmatmul.bf16.gmra.mxu0 %v1660
        %v1674 = vpop.f32.mrf.mxu0
        %v1675 = vadd.f32 0.0, %v1674
        %v1676 = vpop.f32.mrf.mxu0
        %v1677 = vadd.f32 0.0, %v1676
        %1678 = vmatmul.bf16.gmra.mxu0 %v1663
        %v1679 = vpop.f32.mrf.mxu0
        %v1680 = vadd.f32 0.0, %v1679
        %v1681 = vpop.f32.mrf.mxu0
        %1682 = vdwg.mxu0
        %v1685 = vunpack.c.l.b16 %v1643
        %v1686 = vunpack.c.l.b16 %v1644
        %v1687 = vpack.c.b16 %v1686, %v1685
        %v1690 = vsel %vm509, %v1641, 0
        %v1693 = vsel %vm509, %v1642, 0
        %1695 = vmatpush.bf16.msra.mxu0 0
        %1696 = vmatpush.bf16.msra.mxu0 0
        %1697 = vmatpush.bf16.msra.mxu0 0
        %1698 = vmatpush.bf16.msra.mxu0 0
        %1699 = vmatpush.bf16.msra.mxu0 0
        %1700 = vmatpush.bf16.msra.mxu0 0
        %1701 = vmatpush.bf16.msra.mxu0 0
        %1702 = vmatpush.bf16.msra.mxu0 %v1687
        %1703 = vmatmul.bf16.gmra.mxu0 %v1690
        %v1704 = vpop.f32.mrf.mxu0
        %v1705 = vadd.f32 %v1675, %v1704
        %v1706 = vpop.f32.mrf.mxu0
        %v1707 = vadd.f32 %v1677, %v1706
        %1708 = vmatmul.bf16.gmra.mxu0 %v1693
        %v1709 = vpop.f32.mrf.mxu0
        %v1710 = vadd.f32 %v1680, %v1709
        %v1711 = vpop.f32.mrf.mxu0
        %1712 = vdwg.mxu0
        %v1713 = vld [vmem:[#allocation2 + $0x2] sm:$0xff]
        %v1714 = vld [vmem:[#allocation2 + $0xa] sm:$0xff]
        %v1715 = vld [vmem:[#allocation2 + $0x12] sm:$0x3f]
        %v1716 = vpack.c.bf16 %v1714, %v1713
        %v1717 = vpack.c.bf16 %v1715, %v1715
        %s1718 = scalar_lea.vmem %s13, 16
        %v1719 = vld [vmem:[%s1718] sm:$0xf]
        %v1720 = vld [vmem:[%s1718 + $0x4] sm:$0xf]
        %v1723 = vunpack.c.l.b16 %v1719
        %v1724 = vunpack.c.l.b16 %v1720
        %v1725 = vpack.c.b16 %v1724, %v1723
        %v1728 = vsel %vm509, %v1716, 0
        %v1731 = vsel %vm509, %v1717, 0
        %1733 = vmatpush.bf16.msra.mxu0 0
        %1734 = vmatpush.bf16.msra.mxu0 0
        %1735 = vmatpush.bf16.msra.mxu0 0
        %1736 = vmatpush.bf16.msra.mxu0 0
        %1737 = vmatpush.bf16.msra.mxu0 0
        %1738 = vmatpush.bf16.msra.mxu0 0
        %1739 = vmatpush.bf16.msra.mxu0 0
        %1740 = vmatpush.bf16.msra.mxu0 %v1725
        %1741 = vmatmul.bf16.gmra.mxu0 %v1728
        %v1742 = vpop.f32.mrf.mxu0
        %v1743 = vadd.f32 0.0, %v1742
        %v1744 = vpop.f32.mrf.mxu0
        %v1745 = vadd.f32 0.0, %v1744
        %1746 = vmatmul.bf16.gmra.mxu0 %v1731
        %v1747 = vpop.f32.mrf.mxu0
        %v1748 = vadd.f32 0.0, %v1747
        %v1749 = vpop.f32.mrf.mxu0
        %1750 = vdwg.mxu0
        %v1751 = vadd.f32 %v1705, %v1743
        %v1752 = vadd.f32 %v1707, %v1745
        %v1753 = vadd.f32 %v1710, %v1748
        %v1754 = vld [vmem:[#allocation2 + $0x6] sm:$0xff]
        %v1755 = vld [vmem:[#allocation2 + $0xe] sm:$0xff]
        %v1756 = vld [vmem:[#allocation2 + $0x16] sm:$0x3f]
        %v1757 = vpack.c.bf16 %v1755, %v1754
        %v1758 = vpack.c.bf16 %v1756, %v1756
        %s1759 = scalar_lea.vmem %s13, 24
        %v1760 = vld [vmem:[%s1759] sm:$0xf]
        %v1761 = vld [vmem:[%s1759 + $0x4] sm:$0xf]
        %v1764 = vunpack.c.l.b16 %v1760
        %v1765 = vunpack.c.l.b16 %v1761
        %v1766 = vpack.c.b16 %v1765, %v1764
        %v1769 = vsel %vm509, %v1757, 0
        %v1772 = vsel %vm509, %v1758, 0
        %1774 = vmatpush.bf16.msra.mxu0 0
        %1775 = vmatpush.bf16.msra.mxu0 0
        %1776 = vmatpush.bf16.msra.mxu0 0
        %1777 = vmatpush.bf16.msra.mxu0 0
        %1778 = vmatpush.bf16.msra.mxu0 0
        %1779 = vmatpush.bf16.msra.mxu0 0
        %1780 = vmatpush.bf16.msra.mxu0 0
        %1781 = vmatpush.bf16.msra.mxu0 %v1766
        %1782 = vmatmul.bf16.gmra.mxu0 %v1769
        %v1783 = vpop.f32.mrf.mxu0
        %v1784 = vadd.f32 0.0, %v1783
        %v1785 = vpop.f32.mrf.mxu0
        %v1786 = vadd.f32 0.0, %v1785
        %1787 = vmatmul.bf16.gmra.mxu0 %v1772
        %v1788 = vpop.f32.mrf.mxu0
        %v1789 = vadd.f32 0.0, %v1788
        %v1790 = vpop.f32.mrf.mxu0
        %1791 = vdwg.mxu0
        %v1792 = vadd.f32 %v1751, %v1784
        %v1793 = vadd.f32 %v1752, %v1786
        %v1794 = vadd.f32 %v1753, %v1789
        %v1795 = vld [vmem:[#allocation2 + $0x7] sm:$0xff]
        %v1796 = vld [vmem:[#allocation2 + $0xf] sm:$0xff]
        %v1797 = vld [vmem:[#allocation2 + $0x17] sm:$0x3f]
        %v1798 = vpack.c.bf16 %v1796, %v1795
        %v1799 = vpack.c.bf16 %v1797, %v1797
        %s1800 = scalar_lea.vmem %s13, 32
        %v1801 = vld [vmem:[%s1800] sm:$0xf]
        %v1802 = vld [vmem:[%s1800 + $0x4] sm:$0xf]
        %v1805 = vunpack.c.l.b16 %v1801
        %v1806 = vunpack.c.l.b16 %v1802
        %v1807 = vpack.c.b16 %v1806, %v1805
        %v1810 = vsel %vm509, %v1798, 0
        %v1813 = vsel %vm509, %v1799, 0
        %1815 = vmatpush.bf16.msra.mxu0 0
        %1816 = vmatpush.bf16.msra.mxu0 0
        %1817 = vmatpush.bf16.msra.mxu0 0
        %1818 = vmatpush.bf16.msra.mxu0 0
        %1819 = vmatpush.bf16.msra.mxu0 0
        %1820 = vmatpush.bf16.msra.mxu0 0
        %1821 = vmatpush.bf16.msra.mxu0 0
        %1822 = vmatpush.bf16.msra.mxu0 %v1807
        %1823 = vmatmul.bf16.gmra.mxu0 %v1810
        %v1824 = vpop.f32.mrf.mxu0
        %v1825 = vadd.f32 0.0, %v1824
        %v1826 = vpop.f32.mrf.mxu0
        %v1827 = vadd.f32 0.0, %v1826
        %1828 = vmatmul.bf16.gmra.mxu0 %v1813
        %v1829 = vpop.f32.mrf.mxu0
        %v1830 = vadd.f32 0.0, %v1829
        %v1831 = vpop.f32.mrf.mxu0
        %1832 = vdwg.mxu0
        %v1833 = vadd.f32 %v1792, %v1825
        %v1834 = vadd.f32 %v1793, %v1827
        %v1835 = vadd.f32 %v1794, %v1830
        %v1836 = vld [vmem:[#allocation2 + $0x8] sm:$0xff]
        %v1837 = vld [vmem:[#allocation2 + $0x10] sm:$0xff]
        %v1838 = vld [vmem:[#allocation2 + $0x18] sm:$0x3f]
        %v1839 = vpack.c.bf16 %v1837, %v1836
        %v1840 = vpack.c.bf16 %v1838, %v1838
        %s1841 = scalar_lea.vmem %s13, 40
        %v1842 = vld [vmem:[%s1841] sm:$0xf]
        %v1843 = vld [vmem:[%s1841 + $0x4] sm:$0xf]
        %v1846 = vunpack.c.l.b16 %v1842
        %v1847 = vunpack.c.l.b16 %v1843
        %v1848 = vpack.c.b16 %v1847, %v1846
        %v1851 = vsel %vm509, %v1839, 0
        %v1854 = vsel %vm509, %v1840, 0
        %1856 = vmatpush.bf16.msra.mxu0 0
        %1857 = vmatpush.bf16.msra.mxu0 0
        %1858 = vmatpush.bf16.msra.mxu0 0
        %1859 = vmatpush.bf16.msra.mxu0 0
        %1860 = vmatpush.bf16.msra.mxu0 0
        %1861 = vmatpush.bf16.msra.mxu0 0
        %1862 = vmatpush.bf16.msra.mxu0 0
        %1863 = vmatpush.bf16.msra.mxu0 %v1848
        %1864 = vmatmul.bf16.gmra.mxu0 %v1851
        %v1865 = vpop.f32.mrf.mxu0
        %v1866 = vadd.f32 0.0, %v1865
        %v1867 = vpop.f32.mrf.mxu0
        %v1868 = vadd.f32 0.0, %v1867
        %1869 = vmatmul.bf16.gmra.mxu0 %v1854
        %v1870 = vpop.f32.mrf.mxu0
        %v1871 = vadd.f32 0.0, %v1870
        %v1872 = vpop.f32.mrf.mxu0
        %1873 = vdwg.mxu0
        %v1874 = vadd.f32 %v1833, %v1866
        %v1875 = vadd.f32 %v1834, %v1868
        %v1876 = vadd.f32 %v1835, %v1871
        %v1877 = vld [vmem:[#allocation2 + $0xc] sm:$0xff]
        %v1878 = vld [vmem:[#allocation2 + $0x14] sm:$0xff]
        %v1879 = vld [vmem:[#allocation2 + $0x1c] sm:$0x3f]
        %v1880 = vpack.c.bf16 %v1878, %v1877
        %v1881 = vpack.c.bf16 %v1879, %v1879
        %s1882 = scalar_lea.vmem %s13, 48
        %v1883 = vld [vmem:[%s1882] sm:$0xf]
        %v1884 = vld [vmem:[%s1882 + $0x4] sm:$0xf]
        %v1887 = vunpack.c.l.b16 %v1883
        %v1888 = vunpack.c.l.b16 %v1884
        %v1889 = vpack.c.b16 %v1888, %v1887
        %v1892 = vsel %vm509, %v1880, 0
        %v1895 = vsel %vm509, %v1881, 0
        %1897 = vmatpush.bf16.msra.mxu0 0
        %1898 = vmatpush.bf16.msra.mxu0 0
        %1899 = vmatpush.bf16.msra.mxu0 0
        %1900 = vmatpush.bf16.msra.mxu0 0
        %1901 = vmatpush.bf16.msra.mxu0 0
        %1902 = vmatpush.bf16.msra.mxu0 0
        %1903 = vmatpush.bf16.msra.mxu0 0
        %1904 = vmatpush.bf16.msra.mxu0 %v1889
        %1905 = vmatmul.bf16.gmra.mxu0 %v1892
        %v1906 = vpop.f32.mrf.mxu0
        %v1907 = vadd.f32 0.0, %v1906
        %v1908 = vpop.f32.mrf.mxu0
        %v1909 = vadd.f32 0.0, %v1908
        %1910 = vmatmul.bf16.gmra.mxu0 %v1895
        %v1911 = vpop.f32.mrf.mxu0
        %v1912 = vadd.f32 0.0, %v1911
        %v1913 = vpop.f32.mrf.mxu0
        %1914 = vdwg.mxu0
        %v1915 = vadd.f32 %v1874, %v1907
        %v1916 = vadd.f32 %v1875, %v1909
        %v1917 = vadd.f32 %v1876, %v1912
        %v1918 = vld [vmem:[#allocation2 + $0xd] sm:$0xff]
        %v1919 = vld [vmem:[#allocation2 + $0x15] sm:$0xff]
        %v1920 = vld [vmem:[#allocation2 + $0x1d] sm:$0x3f]
        %v1921 = vpack.c.bf16 %v1919, %v1918
        %v1922 = vpack.c.bf16 %v1920, %v1920
        %s1923 = scalar_lea.vmem %s13, 56
        %v1924 = vld [vmem:[%s1923] sm:$0xf]
        %v1925 = vld [vmem:[%s1923 + $0x4] sm:$0xf]
        %v1928 = vunpack.c.l.b16 %v1924
        %v1929 = vunpack.c.l.b16 %v1925
        %v1930 = vpack.c.b16 %v1929, %v1928
        %v1933 = vsel %vm509, %v1921, 0
        %v1936 = vsel %vm509, %v1922, 0
        %1938 = vmatpush.bf16.msra.mxu0 0
        %1939 = vmatpush.bf16.msra.mxu0 0
        %1940 = vmatpush.bf16.msra.mxu0 0
        %1941 = vmatpush.bf16.msra.mxu0 0
        %1942 = vmatpush.bf16.msra.mxu0 0
        %1943 = vmatpush.bf16.msra.mxu0 0
        %1944 = vmatpush.bf16.msra.mxu0 0
        %1945 = vmatpush.bf16.msra.mxu0 %v1930
        %1946 = vmatmul.bf16.gmra.mxu0 %v1933
        %v1947 = vpop.f32.mrf.mxu0
        %v1948 = vadd.f32 0.0, %v1947
        %v1949 = vpop.f32.mrf.mxu0
        %v1950 = vadd.f32 0.0, %v1949
        %1951 = vmatmul.bf16.gmra.mxu0 %v1936
        %v1952 = vpop.f32.mrf.mxu0
        %v1953 = vadd.f32 0.0, %v1952
        %v1954 = vpop.f32.mrf.mxu0
        %1955 = vdwg.mxu0
        %v1956 = vadd.f32 %v1915, %v1948
        %v1957 = vadd.f32 %v1916, %v1950
        %v1958 = vadd.f32 %v1917, %v1953
        %v1959 = vld [vmem:[#allocation2 + $0xe] sm:$0xff]
        %v1960 = vld [vmem:[#allocation2 + $0x16] sm:$0xff]
        %v1961 = vld [vmem:[#allocation2 + $0x1e] sm:$0x3f]
        %v1962 = vpack.c.bf16 %v1960, %v1959
        %v1963 = vpack.c.bf16 %v1961, %v1961
        %s1964 = scalar_lea.vmem %s13, 64
        %v1965 = vld [vmem:[%s1964] sm:$0xf]
        %v1966 = vld [vmem:[%s1964 + $0x4] sm:$0xf]
        %v1969 = vunpack.c.l.b16 %v1965
        %v1970 = vunpack.c.l.b16 %v1966
        %v1971 = vpack.c.b16 %v1970, %v1969
        %v1974 = vsel %vm509, %v1962, 0
        %v1977 = vsel %vm509, %v1963, 0
        %1979 = vmatpush.bf16.msra.mxu0 0
        %1980 = vmatpush.bf16.msra.mxu0 0
        %1981 = vmatpush.bf16.msra.mxu0 0
        %1982 = vmatpush.bf16.msra.mxu0 0
        %1983 = vmatpush.bf16.msra.mxu0 0
        %1984 = vmatpush.bf16.msra.mxu0 0
        %1985 = vmatpush.bf16.msra.mxu0 0
        %1986 = vmatpush.bf16.msra.mxu0 %v1971
        %1987 = vmatmul.bf16.gmra.mxu0 %v1974
        %v1988 = vpop.f32.mrf.mxu0
        %v1989 = vadd.f32 0.0, %v1988
        %v1990 = vpop.f32.mrf.mxu0
        %v1991 = vadd.f32 0.0, %v1990
        %1992 = vmatmul.bf16.gmra.mxu0 %v1977
        %v1993 = vpop.f32.mrf.mxu0
        %v1994 = vadd.f32 0.0, %v1993
        %v1995 = vpop.f32.mrf.mxu0
        %1996 = vdwg.mxu0
        %v1997 = vadd.f32 %v1956, %v1989
        %v1998 = vadd.f32 %v1957, %v1991
        %v1999 = vadd.f32 %v1958, %v1994
        %v2000 = vld [vmem:[%s14] sm:$0x1]
        %v2002 = vperm.slane %v2000, 0
        %v2004 = vadd.f32 %v1997, %v2002
        %v2005 = vadd.f32 %v1998, %v2002
        %v2006 = vadd.f32 %v1999, %v2002
        %vm2007 = vcmask 60416
        %2008 = vst.msk [vmem:[%s487] sm:$0xf] %vm2007, %v2004
        %s2009 = scalar_lea.vmem %s487, 4 [#allocation3]
        %vm2010 = vcmask 64518
        %2011 = vst.msk [vmem:[%s2009 - $0x6] sm:$0xc0] %vm2010, %v2004
        %vm2012 = vcmask 58368
        %2013 = vst.msk [vmem:[%s2009 + $0x2] sm:$0x3] %vm2012, %v2005
        %s2014 = scalar_lea.vmem %s487, 8 [#allocation3]
        %vm2015 = vcmask 64516
        %2016 = vst.msk [vmem:[%s2014 - $0x4] sm:$0xf0] %vm2015, %v2005
        %s2017 = scalar_lea.vmem %s487, 12 [#allocation3]
        %vm2018 = vcmask 62466
        %2019 = vst.msk [vmem:[%s2017 - $0x2] sm:$0x3c] %vm2018, %v2006
        %s2020 = sand.u32 %s357, 1
        %s2021 = scalar_lea.sflag [#allocation4], %s2020
        %s2022 = sand.u32 %s357, 1
        %s2023 = smul.addr %s2022, 16
        %s2024 = scalar_lea.vmem [#allocation3], %s2023
        // Predicated region
        $region81: #{_lambda_.5} parent=79 // pred_check
          %p2025 = pneg %p367
        $region82: #{_lambda_.5} parent=79 // pred_check_branch
          %2027 = sbr.rel (%p2025) target = $region84
        $region83: #{_lambda_.5} parent=79 // pred_region
          %2029 = vsyncadd %s2021, 0
          %s2030 = smul.addr %s29, 4
          %s2031 = smul.addr %s2030, 4
          %s2032 = scalar_lea.hbm %s15, %s2031
          %s2033 = sshll.u32 %s2024, 4
          %s2034 = int_to_ptr.vmem [resolvable:$true] %s2033
          %s2035 = sshll.u32 %s2032, 4
          %s2036 = int_to_ptr.hbm [resolvable:$true] %s2035
          %2041 = dma.vmem_to_hbm [thread:$0]  %s2034, 256, %s2036, %s2021, 64, 64, 4
        $region84: #{_lambda_.5} parent=79 // pred_fallthru
          _
      $region80: #{_lambda_.5} parent=5 // pred_fallthru
        _
      %p2042 = scmp.le.s32.totalorder 2, %s24
      // Predicated region
      $region85: #{_lambda_.5} parent=5 // pred_check
        %p2043 = pneg %p2042
      $region86: #{_lambda_.5} parent=5 // pred_check_branch
        %2045 = sbr.rel (%p2043) target = $region88
      $region87: #{_lambda_.5} parent=5 // pred_region
        %s2046 = ssub.s32 %s24, 2
        // Predicated region
        $region89: #{_lambda_.5} parent=87 // pred_check
          %p2047 = pneg %p373
        $region90: #{_lambda_.5} parent=87 // pred_check_branch
          %2049 = sbr.rel (%p2047) target = $region92
        $region91: #{_lambda_.5} parent=87 // pred_region
          %s2050 = sand.u32 %s358, 1
          %s2051 = scalar_lea.sflag [#allocation4], %s2050
          %s2052 = sand.u32 %s358, 1
          %s2053 = smul.addr %s2052, 16
          %s2054 = scalar_lea.vmem [#allocation3], %s2053
          %2056 = dma.done %s2051, 256
        $region92: #{_lambda_.5} parent=87 // pred_fallthru
          _
      $region88: #{_lambda_.5} parent=5 // pred_fallthru
        _
    $region6: #{_lambda_.5} parent=1 // loop_footer
      %s28 = sadd.s32 1, %s24
    $region7: #{_lambda_.5} parent=1 // loop_footer_branch
      %23 = sbr.rel target = $region3
    $region8: #{_lambda_.5} parent=1 // loop_exit
      _
    %2057 = vsyncpa [#allocation4], 1
    %s2058 = scalar_lea.sflag [#allocation4], 1
    %2059 = vsyncpa %s2058, 1

// kernel: _lambda_.3
$region0: #{_lambda_.3}
  #allocation0 [shape = 'u32[]', space=smem, size = 0x4, offset = 0x4, fixed_abs, tag = 'smem constant byte address 0x4 - core index']
  #allocation1 [shape = 'u32[72,128]{1,0:T(1,128)}', space=vmem, size = 0x9000, scoped, tag = 'internal scratch']
  #allocation2 [shape = 'f32[100,8]{1,0:T(8,128)}', space=vmem, size = 0xd000, scoped, tag = 'scratch operand']
  %s0 = inlined_call_operand.vmem [shape: bf16[8,81,3], index: 0, kind: input, shape index: {}]
  %s1 = inlined_call_operand.vmem [shape: bf16[16,3,8], index: 1, kind: input, shape index: {}]
  %s2 = inlined_call_operand.vmem [shape: f32[1,8], index: 2, kind: input, shape index: {}]
  %s3 = inlined_call_operand.vmem [shape: bf16[9,8,8], index: 3, kind: input, shape index: {}]
  %s4 = inlined_call_operand.vmem [shape: f32[1,8], index: 4, kind: input, shape index: {}]
  %s5 = inlined_call_operand.vmem [shape: bf16[9,8,8], index: 5, kind: input, shape index: {}]
  %s6 = inlined_call_operand.vmem [shape: f32[1,8], index: 6, kind: input, shape index: {}]
  %s7 = inlined_call_operand.vmem [shape: f32[2,8,8,8], index: 7, kind: output, shape index: {}]
  %s8 = sld [smem:[#allocation0]]
  $region61: #{_lambda_.3} parent=0
    _
  %s10 = ssub.s32 1, %s8
  %s11 = scalar_select 0, %s10, %s8
  loop: start=0, step=1, limit=4
  $region2: #{_lambda_.3} parent=0 // loop_pre_header
    _
  $region3: #{_lambda_.3} parent=0 // loop_header
    %s13 = sphi 0, %s17
    %p14 = scmp.ge.s32.totalorder %s13, 4
    %s23 = sphi 0, %s25
    %s26 = sphi 0, %s23
    %s27 = sphi 0, %s26
    %s43 = sphi 0, %s27
    %s47 = sphi 0, %s47
    %s49 = sphi 0, %s47
    %s50 = sphi 0, %s49
    %s64 = sphi 0, %s50
    %s68 = sphi 0, %s68
    %s70 = sphi 0, %s68
    %s71 = sphi 0, %s70
    %s85 = sphi 0, %s71
    %s89 = sphi 0, %s89
    %s91 = sphi 0, %s89
    %s92 = sphi 0, %s91
    %s106 = sphi 0, %s92
    %s110 = sphi 0, %s110
    %s112 = sphi 0, %s110
    %s113 = sphi 0, %s112
    %s127 = sphi 0, %s113
    %s131 = sphi 0, %s131
    %s133 = sphi 0, %s131
    %s134 = sphi 0, %s133
    %s148 = sphi 0, %s134
    %s152 = sphi 0, %s152
    %s154 = sphi 0, %s152
    %s155 = sphi 0, %s154
    %s169 = sphi 0, %s155
    %s175 = sphi 0, %s177
    %s178 = sphi 0, %s175
    %s179 = sphi 0, %s178
    %s195 = sphi 0, %s179
  $region4: #{_lambda_.3} parent=0 // loop_header_branch
    %16 = sbr.rel (%p14) target = $region8
  $region5: #{_lambda_.3} parent=0 // loop_body
    %s18 = ssub.s32 %s13, 1
    %s19 = ssub.s32 %s13, 2
    %s20 = sadd.s32 %s13, 1
    %s21 = ssub.s32 %s13, %s20
    %p22 = scmp.eq.s32.totalorder %s21, 0
    %s24 = sadd.s32 %s23, 1
    %s25 = scalar_select %p22, %s23, %s24
    %p28 = pneg %p22
    %p29 = scmp.eq.s32.totalorder %s13, 1
    %p30 = por %p28, %p29
    %p31 = scmp.ne.s32.totalorder %s23, %s26
    %p32 = scmp.eq.s32.totalorder %s13, 0
    %p33 = por %p31, %p32
    %p34 = scmp.ne.s32.totalorder %s23, %s26
    %p35 = scmp.eq.s32.totalorder %s18, 1
    %p36 = por %p34, %p35
    %p37 = scmp.ne.s32.totalorder %s26, %s27
    %p38 = scmp.eq.s32.totalorder %s18, 0
    %p39 = por %p37, %p38
    %p40 = scmp.ne.s32.totalorder %s26, %s27
    %p41 = scmp.eq.s32.totalorder %s19, 1
    %p42 = por %p40, %p41
    %p44 = scmp.ne.s32.totalorder %s27, %s43
    %p45 = scmp.eq.s32.totalorder %s19, 0
    %p46 = por %p44, %p45
    %s48 = sadd.s32 %s47, 1
    %p51 = scmp.eq.s32.totalorder %s13, 1
    %p52 = scmp.ne.s32.totalorder %s47, %s49
    %p53 = scmp.eq.s32.totalorder %s13, 0
    %p54 = por %p52, %p53
    %p55 = scmp.ne.s32.totalorder %s47, %s49
    %p56 = scmp.eq.s32.totalorder %s18, 1
    %p57 = por %p55, %p56
    %p58 = scmp.ne.s32.totalorder %s49, %s50
    %p59 = scmp.eq.s32.totalorder %s18, 0
    %p60 = por %p58, %p59
    %p61 = scmp.ne.s32.totalorder %s49, %s50
    %p62 = scmp.eq.s32.totalorder %s19, 1
    %p63 = por %p61, %p62
    %p65 = scmp.ne.s32.totalorder %s50, %s64
    %p66 = scmp.eq.s32.totalorder %s19, 0
    %p67 = por %p65, %p66
    %s69 = sadd.s32 %s68, 1
    %p72 = scmp.eq.s32.totalorder %s13, 1
    %p73 = scmp.ne.s32.totalorder %s68, %s70
    %p74 = scmp.eq.s32.totalorder %s13, 0
    %p75 = por %p73, %p74
    %p76 = scmp.ne.s32.totalorder %s68, %s70
    %p77 = scmp.eq.s32.totalorder %s18, 1
    %p78 = por %p76, %p77
    %p79 = scmp.ne.s32.totalorder %s70, %s71
    %p80 = scmp.eq.s32.totalorder %s18, 0
    %p81 = por %p79, %p80
    %p82 = scmp.ne.s32.totalorder %s70, %s71
    %p83 = scmp.eq.s32.totalorder %s19, 1
    %p84 = por %p82, %p83
    %p86 = scmp.ne.s32.totalorder %s71, %s85
    %p87 = scmp.eq.s32.totalorder %s19, 0
    %p88 = por %p86, %p87
    %s90 = sadd.s32 %s89, 1
    %p93 = scmp.eq.s32.totalorder %s13, 1
    %p94 = scmp.ne.s32.totalorder %s89, %s91
    %p95 = scmp.eq.s32.totalorder %s13, 0
    %p96 = por %p94, %p95
    %p97 = scmp.ne.s32.totalorder %s89, %s91
    %p98 = scmp.eq.s32.totalorder %s18, 1
    %p99 = por %p97, %p98
    %p100 = scmp.ne.s32.totalorder %s91, %s92
    %p101 = scmp.eq.s32.totalorder %s18, 0
    %p102 = por %p100, %p101
    %p103 = scmp.ne.s32.totalorder %s91, %s92
    %p104 = scmp.eq.s32.totalorder %s19, 1
    %p105 = por %p103, %p104
    %p107 = scmp.ne.s32.totalorder %s92, %s106
    %p108 = scmp.eq.s32.totalorder %s19, 0
    %p109 = por %p107, %p108
    %s111 = sadd.s32 %s110, 1
    %p114 = scmp.eq.s32.totalorder %s13, 1
    %p115 = scmp.ne.s32.totalorder %s110, %s112
    %p116 = scmp.eq.s32.totalorder %s13, 0
    %p117 = por %p115, %p116
    %p118 = scmp.ne.s32.totalorder %s110, %s112
    %p119 = scmp.eq.s32.totalorder %s18, 1
    %p120 = por %p118, %p119
    %p121 = scmp.ne.s32.totalorder %s112, %s113
    %p122 = scmp.eq.s32.totalorder %s18, 0
    %p123 = por %p121, %p122
    %p124 = scmp.ne.s32.totalorder %s112, %s113
    %p125 = scmp.eq.s32.totalorder %s19, 1
    %p126 = por %p124, %p125
    %p128 = scmp.ne.s32.totalorder %s113, %s127
    %p129 = scmp.eq.s32.totalorder %s19, 0
    %p130 = por %p128, %p129
    %s132 = sadd.s32 %s131, 1
    %p135 = scmp.eq.s32.totalorder %s13, 1
    %p136 = scmp.ne.s32.totalorder %s131, %s133
    %p137 = scmp.eq.s32.totalorder %s13, 0
    %p138 = por %p136, %p137
    %p139 = scmp.ne.s32.totalorder %s131, %s133
    %p140 = scmp.eq.s32.totalorder %s18, 1
    %p141 = por %p139, %p140
    %p142 = scmp.ne.s32.totalorder %s133, %s134
    %p143 = scmp.eq.s32.totalorder %s18, 0
    %p144 = por %p142, %p143
    %p145 = scmp.ne.s32.totalorder %s133, %s134
    %p146 = scmp.eq.s32.totalorder %s19, 1
    %p147 = por %p145, %p146
    %p149 = scmp.ne.s32.totalorder %s134, %s148
    %p150 = scmp.eq.s32.totalorder %s19, 0
    %p151 = por %p149, %p150
    %s153 = sadd.s32 %s152, 1
    %p156 = scmp.eq.s32.totalorder %s13, 1
    %p157 = scmp.ne.s32.totalorder %s152, %s154
    %p158 = scmp.eq.s32.totalorder %s13, 0
    %p159 = por %p157, %p158
    %p160 = scmp.ne.s32.totalorder %s152, %s154
    %p161 = scmp.eq.s32.totalorder %s18, 1
    %p162 = por %p160, %p161
    %p163 = scmp.ne.s32.totalorder %s154, %s155
    %p164 = scmp.eq.s32.totalorder %s18, 0
    %p165 = por %p163, %p164
    %p166 = scmp.ne.s32.totalorder %s154, %s155
    %p167 = scmp.eq.s32.totalorder %s19, 1
    %p168 = por %p166, %p167
    %p170 = scmp.ne.s32.totalorder %s155, %s169
    %p171 = scmp.eq.s32.totalorder %s19, 0
    %p172 = por %p170, %p171
    %s173 = ssub.s32 %s13, %s20
    %p174 = scmp.eq.s32.totalorder %s173, 0
    %s176 = sadd.s32 %s175, 1
    %s177 = scalar_select %p174, %s175, %s176
    %p180 = pneg %p174
    %p181 = scmp.eq.s32.totalorder %s13, 1
    %p182 = por %p180, %p181
    %p183 = scmp.ne.s32.totalorder %s175, %s178
    %p184 = scmp.eq.s32.totalorder %s13, 0
    %p185 = por %p183, %p184
    %p186 = scmp.ne.s32.totalorder %s175, %s178
    %p187 = scmp.eq.s32.totalorder %s18, 1
    %p188 = por %p186, %p187
    %p189 = scmp.ne.s32.totalorder %s178, %s179
    %p190 = scmp.eq.s32.totalorder %s18, 0
    %p191 = por %p189, %p190
    %p192 = scmp.ne.s32.totalorder %s178, %s179
    %p193 = scmp.eq.s32.totalorder %s19, 1
    %p194 = por %p192, %p193
    %p196 = scmp.ne.s32.totalorder %s179, %s195
    %p197 = scmp.eq.s32.totalorder %s19, 0
    %p198 = por %p196, %p197
    %p199 = scmp.le.s32.totalorder 1, %s13
    %p200 = scmp.lt.s32.totalorder %s13, 3
    %p201 = pnand %p199, %p200
    %p202 = pneg %p201
    // Predicated region
    $region9: #{_lambda_.3} parent=5 // pred_check
      _
    $region10: #{_lambda_.3} parent=5 // pred_check_branch
      %204 = sbr.rel (%p201) target = $region12
    $region11: #{_lambda_.3} parent=5 // pred_region
      %s205 = ssub.s32 %s13, 1
      // Predicated region
      $region13: #{_lambda_.3} parent=11 // pred_check
        %p206 = pneg %p60
      $region14: #{_lambda_.3} parent=11 // pred_check_branch
        %208 = sbr.rel (%p206) target = $region16
      $region15: #{_lambda_.3} parent=11 // pred_region
        _
      $region16: #{_lambda_.3} parent=11 // pred_fallthru
        _
      // Predicated region
      $region17: #{_lambda_.3} parent=11 // pred_check
        %p209 = pneg %p81
      $region18: #{_lambda_.3} parent=11 // pred_check_branch
        %211 = sbr.rel (%p209) target = $region20
      $region19: #{_lambda_.3} parent=11 // pred_region
        _
      $region20: #{_lambda_.3} parent=11 // pred_fallthru
        _
      // Predicated region
      $region21: #{_lambda_.3} parent=11 // pred_check
        %p212 = pneg %p102
      $region22: #{_lambda_.3} parent=11 // pred_check_branch
        %214 = sbr.rel (%p212) target = $region24
      $region23: #{_lambda_.3} parent=11 // pred_region
        _
      $region24: #{_lambda_.3} parent=11 // pred_fallthru
        _
      // Predicated region
      $region25: #{_lambda_.3} parent=11 // pred_check
        %p215 = pneg %p123
      $region26: #{_lambda_.3} parent=11 // pred_check_branch
        %217 = sbr.rel (%p215) target = $region28
      $region27: #{_lambda_.3} parent=11 // pred_region
        _
      $region28: #{_lambda_.3} parent=11 // pred_fallthru
        _
      // Predicated region
      $region29: #{_lambda_.3} parent=11 // pred_check
        %p218 = pneg %p144
      $region30: #{_lambda_.3} parent=11 // pred_check_branch
        %220 = sbr.rel (%p218) target = $region32
      $region31: #{_lambda_.3} parent=11 // pred_region
        _
      $region32: #{_lambda_.3} parent=11 // pred_fallthru
        _
      // Predicated region
      $region33: #{_lambda_.3} parent=11 // pred_check
        %p221 = pneg %p165
      $region34: #{_lambda_.3} parent=11 // pred_check_branch
        %223 = sbr.rel (%p221) target = $region36
      $region35: #{_lambda_.3} parent=11 // pred_region
        _
      $region36: #{_lambda_.3} parent=11 // pred_fallthru
        _
    $region12: #{_lambda_.3} parent=5 // pred_fallthru
      _
    %p224 = scmp.lt.s32.totalorder %s13, 2
    // Predicated region
    $region37: #{_lambda_.3} parent=5 // pred_check
      %p225 = pneg %p224
    $region38: #{_lambda_.3} parent=5 // pred_check_branch
      %227 = sbr.rel (%p225) target = $region40
    $region39: #{_lambda_.3} parent=5 // pred_region
      // Predicated region
      $region41: #{_lambda_.3} parent=39 // pred_check
        %p228 = pneg %p33
      $region42: #{_lambda_.3} parent=39 // pred_check_branch
        %230 = sbr.rel (%p228) target = $region44
      $region43: #{_lambda_.3} parent=39 // pred_region
        %s231 = smul.u32 4, %s13
        %p232 = scmp.lt.s32.totalorder %s231, 7
        %s233 = scalar_select %p232, %s231, 7
        %s234 = smul.addr %s233, 11
        %s235 = smul.addr %s234, 4
        %s236 = scalar_lea.vmem %s0, %s235
        %s237 = smul.u32 4, %s13
      $region44: #{_lambda_.3} parent=39 // pred_fallthru
        _
    $region40: #{_lambda_.3} parent=5 // pred_fallthru
      _
    %p238 = scmp.le.s32.totalorder 1, %s13
    %p239 = scmp.lt.s32.totalorder %s13, 3
    %p240 = pnand %p238, %p239
    %p241 = pneg %p240
    // Predicated region
    $region45: #{_lambda_.3} parent=5 // pred_check
      _
    $region46: #{_lambda_.3} parent=5 // pred_check_branch
      %243 = sbr.rel (%p240) target = $region48
    $region47: #{_lambda_.3} parent=5 // pred_region
      %s244 = ssub.s32 %s13, 1
      %s245 = smul.u32 4, %s18
      %p246 = scmp.lt.s32.totalorder %s245, 7
      %s247 = scalar_select %p246, %s245, 7
      %s248 = smul.addr %s247, 11
      %s249 = smul.addr %s248, 4
      %s250 = scalar_lea.vmem %s0, %s249
      %p251 = pneg %p39
      %p252 = pneg %p36
      %p253 = pneg %p60
      %p254 = pneg %p57
      %p255 = pneg %p81
      %p256 = pneg %p78
      %p257 = pneg %p102
      %p258 = pneg %p99
      %p259 = pneg %p123
      %p260 = pneg %p120
      %p261 = pneg %p144
      %p262 = pneg %p141
      %p263 = pneg %p165
      %p264 = pneg %p162
      %p265 = pneg %p191
      %p266 = pneg %p188
      %p267 = scmp.lt.s32.totalorder %s18, 1
      %s268 = scalar_select %p267, %s18, 1
      %s269 = smul.addr %s268, 8
      %s270 = smul.addr %s269, 8
      %s271 = scalar_lea.vmem %s7, %s270
      %s272 = smul.u32 4, %s18
      %p273 = scmp.lt.s32.totalorder %s272, 7
      %s274 = scalar_select %p273, %s272, 7
      %s275 = smul.addr %s274, 11
      %s276 = smul.addr %s275, 4
      %s277 = scalar_lea.vmem %s0, %s276
      %s278 = smul.u32 4, %s18
      %p279 = scmp.lt.s32.totalorder %s18, 1
      %s280 = scalar_select %p279, %s18, 1
      %s281 = smul.addr %s280, 8
      %s282 = smul.addr %s281, 8
      %s283 = scalar_lea.vmem %s7, %s282
      %v285 = vld [vmem:[%s277] sm:$0xf]
      %v286 = vld [vmem:[%s277 + $0x4] sm:$0xf]
      %v287 = vld [vmem:[%s277 + $0x8] sm:$0xf]
      %v288 = vld [vmem:[%s277 + $0xc] sm:$0xf]
      %v289 = vld [vmem:[%s277 + $0x10] sm:$0xf]
      %v290 = vld [vmem:[%s277 + $0x14] sm:$0xf]
      %v291 = vld [vmem:[%s277 + $0x18] sm:$0xf]
      %v292 = vld [vmem:[%s277 + $0x1c] sm:$0xf]
      %v293 = vld [vmem:[%s277 + $0x20] sm:$0xf]
      %v294 = vld [vmem:[%s1] sm:$0x3]
      %s295 = scalar_lea.vmem %s1, 2
      %v296 = vld [vmem:[%s295] sm:$0x3]
      %v306 = vunpack.c.l.b16 %v285
      %v307 = vunpack.c.l.b16 %v286
      %v308 = vunpack.c.l.b16 %v287
      %v309 = vunpack.c.l.b16 %v288
      %v310 = vunpack.c.l.b16 %v289
      %v311 = vunpack.c.l.b16 %v290
      %v312 = vunpack.c.l.b16 %v291
      %v313 = vunpack.c.l.b16 %v292
      %v314 = vunpack.c.l.b16 %v293
      %v315 = vpack.c.b16 %v307, %v306
      %v316 = vpack.c.b16 %v309, %v308
      %v317 = vpack.c.b16 %v311, %v310
      %v318 = vpack.c.b16 %v313, %v312
      %v319 = vpack.c.b16 %v314, %v314
      %vm320 = vsmask.f32 7424
      %v322 = vshrl.u32 %v315, 16
      %v324 = vshll.u32 %v315, 16
      %v326 = vrot.slane %v324, 1
      %v327 = vor.u32 %v322, %v326
      %v329 = vshll.u32 %v316, 16
      %v331 = vrot.slane %v329, 1
      %v332 = vsel %vm320, %v327, %v331
      %v333 = vshrl.u32 %v316, 16
      %v335 = vor.u32 %v333, %v331
      %v337 = vshll.u32 %v317, 16
      %v339 = vrot.slane %v337, 1
      %v340 = vsel %vm320, %v335, %v339
      %v341 = vshrl.u32 %v317, 16
      %v343 = vor.u32 %v341, %v339
      %v345 = vshll.u32 %v318, 16
      %v347 = vrot.slane %v345, 1
      %v348 = vsel %vm320, %v343, %v347
      %v349 = vshrl.u32 %v318, 16
      %v351 = vor.u32 %v349, %v347
      %v353 = vshll.u32 %v319, 16
      %v355 = vrot.slane %v353, 1
      %v356 = vsel %vm320, %v351, %v355
      %v357 = vshrl.u32 %v319, 16
      %v359 = vor.u32 %v357, %v355
      %vm360 = vcmask 23552
      %v362 = vsel %vm360, %v332, 0
      %v365 = vsel %vm360, %v340, 0
      %v368 = vsel %vm360, %v348, 0
      %v371 = vsel %vm360, %v356, 0
      %v374 = vsel %vm360, %v359, 0
      %vm376 = vcmask 1040384
      %vm377 = vcmask 1041408
      %v378 = vsel %vm376, 4294967295, 65535
      %v379 = vsel %vm377, %v378, 0
      %v381 = vand.u32 %v296, %v379
      %383 = vmatpush.bf16.msra.mxu0 0
      %384 = vmatpush.bf16.msra.mxu0 0
      %385 = vmatpush.bf16.msra.mxu0 0
      %386 = vmatpush.bf16.msra.mxu0 0
      %387 = vmatpush.bf16.msra.mxu0 0
      %388 = vmatpush.bf16.msra.mxu0 0
      %389 = vmatpush.bf16.msra.mxu0 0
      %390 = vmatpush.bf16.msra.mxu0 %v381
      %391 = vmatmul.bf16.gmra.mxu0 %v362
      %v392 = vpop.f32.mrf.mxu0
      %v393 = vadd.f32 0.0, %v392
      %v394 = vpop.f32.mrf.mxu0
      %v395 = vadd.f32 0.0, %v394
      %396 = vmatmul.bf16.gmra.mxu0 %v365
      %v397 = vpop.f32.mrf.mxu0
      %v398 = vadd.f32 0.0, %v397
      %v399 = vpop.f32.mrf.mxu0
      %v400 = vadd.f32 0.0, %v399
      %401 = vmatmul.bf16.gmra.mxu0 %v368
      %v402 = vpop.f32.mrf.mxu0
      %v403 = vadd.f32 0.0, %v402
      %v404 = vpop.f32.mrf.mxu0
      %v405 = vadd.f32 0.0, %v404
      %406 = vmatmul.bf16.gmra.mxu0 %v371
      %v407 = vpop.f32.mrf.mxu0
      %v408 = vadd.f32 0.0, %v407
      %v409 = vpop.f32.mrf.mxu0
      %v410 = vadd.f32 0.0, %v409
      %411 = vmatmul.bf16.gmra.mxu0 %v374
      %v412 = vpop.f32.mrf.mxu0
      %v413 = vadd.f32 0.0, %v412
      %v414 = vpop.f32.mrf.mxu0
      %415 = vdwg.mxu0
      %v416 = vsel %vm360, %v315, 0
      %v418 = vsel %vm360, %v316, 0
      %v420 = vsel %vm360, %v317, 0
      %v422 = vsel %vm360, %v318, 0
      %v424 = vsel %vm360, %v319, 0
      %v427 = vand.u32 %v294, %v379
      %429 = vmatpush.bf16.msra.mxu0 0
      %430 = vmatpush.bf16.msra.mxu0 0
      %431 = vmatpush.bf16.msra.mxu0 0
      %432 = vmatpush.bf16.msra.mxu0 0
      %433 = vmatpush.bf16.msra.mxu0 0
      %434 = vmatpush.bf16.msra.mxu0 0
      %435 = vmatpush.bf16.msra.mxu0 0
      %436 = vmatpush.bf16.msra.mxu0 %v427
      %437 = vmatmul.bf16.gmra.mxu0 %v416
      %v438 = vpop.f32.mrf.mxu0
      %v439 = vadd.f32 %v393, %v438
      %v440 = vpop.f32.mrf.mxu0
      %v441 = vadd.f32 %v395, %v440
      %442 = vmatmul.bf16.gmra.mxu0 %v418
      %v443 = vpop.f32.mrf.mxu0
      %v444 = vadd.f32 %v398, %v443
      %v445 = vpop.f32.mrf.mxu0
      %v446 = vadd.f32 %v400, %v445
      %447 = vmatmul.bf16.gmra.mxu0 %v420
      %v448 = vpop.f32.mrf.mxu0
      %v449 = vadd.f32 %v403, %v448
      %v450 = vpop.f32.mrf.mxu0
      %v451 = vadd.f32 %v405, %v450
      %452 = vmatmul.bf16.gmra.mxu0 %v422
      %v453 = vpop.f32.mrf.mxu0
      %v454 = vadd.f32 %v408, %v453
      %v455 = vpop.f32.mrf.mxu0
      %v456 = vadd.f32 %v410, %v455
      %457 = vmatmul.bf16.gmra.mxu0 %v424
      %v458 = vpop.f32.mrf.mxu0
      %v459 = vadd.f32 %v413, %v458
      %v460 = vpop.f32.mrf.mxu0
      %461 = vdwg.mxu0
      %v462 = vld [vmem:[%s277 + $0x4] sm:$0xf]
      %v463 = vld [vmem:[%s277 + $0x8] sm:$0xf]
      %v464 = vld [vmem:[%s277 + $0xc] sm:$0xf]
      %v465 = vld [vmem:[%s277 + $0x10] sm:$0xf]
      %v466 = vld [vmem:[%s277 + $0x14] sm:$0xf]
      %v467 = vld [vmem:[%s277 + $0x18] sm:$0xf]
      %v468 = vld [vmem:[%s277 + $0x1c] sm:$0xf]
      %v469 = vld [vmem:[%s277 + $0x20] sm:$0xf]
      %v470 = vld [vmem:[%s277 + $0x24] sm:$0xf]
      %s471 = scalar_lea.vmem %s1, 4
      %v472 = vld [vmem:[%s471] sm:$0x3]
      %v482 = vunpack.c.l.b16 %v462
      %v483 = vunpack.c.l.b16 %v463
      %v484 = vunpack.c.l.b16 %v464
      %v485 = vunpack.c.l.b16 %v465
      %v486 = vunpack.c.l.b16 %v466
      %v487 = vunpack.c.l.b16 %v467
      %v488 = vunpack.c.l.b16 %v468
      %v489 = vunpack.c.l.b16 %v469
      %v490 = vunpack.c.l.b16 %v470
      %v491 = vpack.c.b16 %v483, %v482
      %v492 = vpack.c.b16 %v485, %v484
      %v493 = vpack.c.b16 %v487, %v486
      %v494 = vpack.c.b16 %v489, %v488
      %v495 = vpack.c.b16 %v490, %v490
      %v497 = vshrl.u32 %v491, 16
      %v499 = vshll.u32 %v491, 16
      %v501 = vrot.slane %v499, 1
      %v502 = vor.u32 %v497, %v501
      %v504 = vshll.u32 %v492, 16
      %v506 = vrot.slane %v504, 1
      %v507 = vsel %vm320, %v502, %v506
      %v508 = vshrl.u32 %v492, 16
      %v510 = vor.u32 %v508, %v506
      %v512 = vshll.u32 %v493, 16
      %v514 = vrot.slane %v512, 1
      %v515 = vsel %vm320, %v510, %v514
      %v516 = vshrl.u32 %v493, 16
      %v518 = vor.u32 %v516, %v514
      %v520 = vshll.u32 %v494, 16
      %v522 = vrot.slane %v520, 1
      %v523 = vsel %vm320, %v518, %v522
      %v524 = vshrl.u32 %v494, 16
      %v526 = vor.u32 %v524, %v522
      %v528 = vshll.u32 %v495, 16
      %v530 = vrot.slane %v528, 1
      %v531 = vsel %vm320, %v526, %v530
      %v532 = vshrl.u32 %v495, 16
      %v534 = vor.u32 %v532, %v530
      %v536 = vsel %vm360, %v507, 0
      %v539 = vsel %vm360, %v515, 0
      %v542 = vsel %vm360, %v523, 0
      %v545 = vsel %vm360, %v531, 0
      %v548 = vsel %vm360, %v534, 0
      %v551 = vand.u32 %v472, %v379
      %553 = vmatpush.bf16.msra.mxu0 0
      %554 = vmatpush.bf16.msra.mxu0 0
      %555 = vmatpush.bf16.msra.mxu0 0
      %556 = vmatpush.bf16.msra.mxu0 0
      %557 = vmatpush.bf16.msra.mxu0 0
      %558 = vmatpush.bf16.msra.mxu0 0
      %559 = vmatpush.bf16.msra.mxu0 0
      %560 = vmatpush.bf16.msra.mxu0 %v551
      %561 = vmatmul.bf16.gmra.mxu0 %v536
      %v562 = vpop.f32.mrf.mxu0
      %v563 = vadd.f32 0.0, %v562
      %v564 = vpop.f32.mrf.mxu0
      %v565 = vadd.f32 0.0, %v564
      %566 = vmatmul.bf16.gmra.mxu0 %v539
      %v567 = vpop.f32.mrf.mxu0
      %v568 = vadd.f32 0.0, %v567
      %v569 = vpop.f32.mrf.mxu0
      %v570 = vadd.f32 0.0, %v569
      %571 = vmatmul.bf16.gmra.mxu0 %v542
      %v572 = vpop.f32.mrf.mxu0
      %v573 = vadd.f32 0.0, %v572
      %v574 = vpop.f32.mrf.mxu0
      %v575 = vadd.f32 0.0, %v574
      %576 = vmatmul.bf16.gmra.mxu0 %v545
      %v577 = vpop.f32.mrf.mxu0
      %v578 = vadd.f32 0.0, %v577
      %v579 = vpop.f32.mrf.mxu0
      %v580 = vadd.f32 0.0, %v579
      %581 = vmatmul.bf16.gmra.mxu0 %v548
      %v582 = vpop.f32.mrf.mxu0
      %v583 = vadd.f32 0.0, %v582
      %v584 = vpop.f32.mrf.mxu0
      %585 = vdwg.mxu0
      %v586 = vadd.f32 %v439, %v563
      %v587 = vadd.f32 %v441, %v565
      %v588 = vadd.f32 %v444, %v568
      %v589 = vadd.f32 %v446, %v570
      %v590 = vadd.f32 %v449, %v573
      %v591 = vadd.f32 %v451, %v575
      %v592 = vadd.f32 %v454, %v578
      %v593 = vadd.f32 %v456, %v580
      %v594 = vadd.f32 %v459, %v583
      %v595 = vld [vmem:[%s277 + $0x4] sm:$0xe]
      %v596 = vld [vmem:[%s277 + $0x8] sm:$0xf]
      %v597 = vld [vmem:[%s277 + $0xc] sm:$0xf]
      %v598 = vld [vmem:[%s277 + $0x10] sm:$0xf]
      %v599 = vld [vmem:[%s277 + $0x14] sm:$0xf]
      %v600 = vld [vmem:[%s277 + $0x18] sm:$0xf]
      %v601 = vld [vmem:[%s277 + $0x1c] sm:$0xf]
      %v602 = vld [vmem:[%s277 + $0x20] sm:$0xf]
      %v603 = vld [vmem:[%s277 + $0x24] sm:$0xf]
      %v604 = vld [vmem:[%s277 + $0x28] sm:$0x1]
      %s605 = scalar_lea.vmem %s1, 6
      %v606 = vld [vmem:[%s605] sm:$0x3]
      %v617 = vunpack.c.l.b16 %v595
      %v618 = vunpack.c.l.b16 %v596
      %v619 = vunpack.c.l.b16 %v597
      %v620 = vunpack.c.l.b16 %v598
      %v621 = vunpack.c.l.b16 %v599
      %v622 = vunpack.c.l.b16 %v600
      %v623 = vunpack.c.l.b16 %v601
      %v624 = vunpack.c.l.b16 %v602
      %v625 = vunpack.c.l.b16 %v603
      %v626 = vunpack.c.l.b16 %v604
      %v627 = vpack.c.b16 %v618, %v617
      %v628 = vpack.c.b16 %v620, %v619
      %v629 = vpack.c.b16 %v622, %v621
      %v630 = vpack.c.b16 %v624, %v623
      %v631 = vpack.c.b16 %v626, %v625
      %vm632 = vcmask 1046528
      %v633 = vrot.slane %v627, 1
      %v634 = vrot.slane %v628, 1
      %v635 = vsel %vm632, %v633, %v634
      %v636 = vrot.slane %v629, 1
      %v637 = vsel %vm632, %v634, %v636
      %v638 = vrot.slane %v630, 1
      %v639 = vsel %vm632, %v636, %v638
      %v640 = vrot.slane %v631, 1
      %v641 = vsel %vm632, %v638, %v640
      %v643 = vsel %vm360, %v635, 0
      %v646 = vsel %vm360, %v637, 0
      %v649 = vsel %vm360, %v639, 0
      %v652 = vsel %vm360, %v641, 0
      %v655 = vsel %vm360, %v640, 0
      %v658 = vand.u32 %v606, %v379
      %660 = vmatpush.bf16.msra.mxu0 0
      %661 = vmatpush.bf16.msra.mxu0 0
      %662 = vmatpush.bf16.msra.mxu0 0
      %663 = vmatpush.bf16.msra.mxu0 0
      %664 = vmatpush.bf16.msra.mxu0 0
      %665 = vmatpush.bf16.msra.mxu0 0
      %666 = vmatpush.bf16.msra.mxu0 0
      %667 = vmatpush.bf16.msra.mxu0 %v658
      %668 = vmatmul.bf16.gmra.mxu0 %v643
      %v669 = vpop.f32.mrf.mxu0
      %v670 = vadd.f32 0.0, %v669
      %v671 = vpop.f32.mrf.mxu0
      %v672 = vadd.f32 0.0, %v671
      %673 = vmatmul.bf16.gmra.mxu0 %v646
      %v674 = vpop.f32.mrf.mxu0
      %v675 = vadd.f32 0.0, %v674
      %v676 = vpop.f32.mrf.mxu0
      %v677 = vadd.f32 0.0, %v676
      %678 = vmatmul.bf16.gmra.mxu0 %v649
      %v679 = vpop.f32.mrf.mxu0
      %v680 = vadd.f32 0.0, %v679
      %v681 = vpop.f32.mrf.mxu0
      %v682 = vadd.f32 0.0, %v681
      %683 = vmatmul.bf16.gmra.mxu0 %v652
      %v684 = vpop.f32.mrf.mxu0
      %v685 = vadd.f32 0.0, %v684
      %v686 = vpop.f32.mrf.mxu0
      %v687 = vadd.f32 0.0, %v686
      %688 = vmatmul.bf16.gmra.mxu0 %v655
      %v689 = vpop.f32.mrf.mxu0
      %v690 = vadd.f32 0.0, %v689
      %v691 = vpop.f32.mrf.mxu0
      %692 = vdwg.mxu0
      %v693 = vadd.f32 %v586, %v670
      %v694 = vadd.f32 %v587, %v672
      %v695 = vadd.f32 %v588, %v675
      %v696 = vadd.f32 %v589, %v677
      %v697 = vadd.f32 %v590, %v680
      %v698 = vadd.f32 %v591, %v682
      %v699 = vadd.f32 %v592, %v685
      %v700 = vadd.f32 %v593, %v687
      %v701 = vadd.f32 %v594, %v690
      %s702 = scalar_lea.vmem %s277, 44
      %v703 = vld [vmem:[%s702] sm:$0xf]
      %v704 = vld [vmem:[%s702 + $0x4] sm:$0xf]
      %v705 = vld [vmem:[%s702 + $0x8] sm:$0xf]
      %v706 = vld [vmem:[%s702 + $0xc] sm:$0xf]
      %v707 = vld [vmem:[%s702 + $0x10] sm:$0xf]
      %v708 = vld [vmem:[%s702 + $0x14] sm:$0xf]
      %v709 = vld [vmem:[%s702 + $0x18] sm:$0xf]
      %v710 = vld [vmem:[%s702 + $0x1c] sm:$0xf]
      %v711 = vld [vmem:[%s702 + $0x20] sm:$0xf]
      %s712 = scalar_lea.vmem %s1, 8
      %v713 = vld [vmem:[%s712] sm:$0x3]
      %v723 = vunpack.c.l.b16 %v703
      %v724 = vunpack.c.l.b16 %v704
      %v725 = vunpack.c.l.b16 %v705
      %v726 = vunpack.c.l.b16 %v706
      %v727 = vunpack.c.l.b16 %v707
      %v728 = vunpack.c.l.b16 %v708
      %v729 = vunpack.c.l.b16 %v709
      %v730 = vunpack.c.l.b16 %v710
      %v731 = vunpack.c.l.b16 %v711
      %v732 = vpack.c.b16 %v724, %v723
      %v733 = vpack.c.b16 %v726, %v725
      %v734 = vpack.c.b16 %v728, %v727
      %v735 = vpack.c.b16 %v730, %v729
      %v736 = vpack.c.b16 %v731, %v731
      %v738 = vsel %vm360, %v732, 0
      %v741 = vsel %vm360, %v733, 0
      %v744 = vsel %vm360, %v734, 0
      %v747 = vsel %vm360, %v735, 0
      %v750 = vsel %vm360, %v736, 0
      %v753 = vand.u32 %v713, %v379
      %755 = vmatpush.bf16.msra.mxu0 0
      %756 = vmatpush.bf16.msra.mxu0 0
      %757 = vmatpush.bf16.msra.mxu0 0
      %758 = vmatpush.bf16.msra.mxu0 0
      %759 = vmatpush.bf16.msra.mxu0 0
      %760 = vmatpush.bf16.msra.mxu0 0
      %761 = vmatpush.bf16.msra.mxu0 0
      %762 = vmatpush.bf16.msra.mxu0 %v753
      %763 = vmatmul.bf16.gmra.mxu0 %v738
      %v764 = vpop.f32.mrf.mxu0
      %v765 = vadd.f32 0.0, %v764
      %v766 = vpop.f32.mrf.mxu0
      %v767 = vadd.f32 0.0, %v766
      %768 = vmatmul.bf16.gmra.mxu0 %v741
      %v769 = vpop.f32.mrf.mxu0
      %v770 = vadd.f32 0.0, %v769
      %v771 = vpop.f32.mrf.mxu0
      %v772 = vadd.f32 0.0, %v771
      %773 = vmatmul.bf16.gmra.mxu0 %v744
      %v774 = vpop.f32.mrf.mxu0
      %v775 = vadd.f32 0.0, %v774
      %v776 = vpop.f32.mrf.mxu0
      %v777 = vadd.f32 0.0, %v776
      %778 = vmatmul.bf16.gmra.mxu0 %v747
      %v779 = vpop.f32.mrf.mxu0
      %v780 = vadd.f32 0.0, %v779
      %v781 = vpop.f32.mrf.mxu0
      %v782 = vadd.f32 0.0, %v781
      %783 = vmatmul.bf16.gmra.mxu0 %v750
      %v784 = vpop.f32.mrf.mxu0
      %v785 = vadd.f32 0.0, %v784
      %v786 = vpop.f32.mrf.mxu0
      %787 = vdwg.mxu0
      %v788 = vadd.f32 %v693, %v765
      %v789 = vadd.f32 %v694, %v767
      %v790 = vadd.f32 %v695, %v770
      %v791 = vadd.f32 %v696, %v772
      %v792 = vadd.f32 %v697, %v775
      %v793 = vadd.f32 %v698, %v777
      %v794 = vadd.f32 %v699, %v780
      %v795 = vadd.f32 %v700, %v782
      %v796 = vadd.f32 %v701, %v785
      %s797 = scalar_lea.vmem %s1, 10
      %v798 = vld [vmem:[%s797] sm:$0x3]
      %v799 = vshrl.u32 %v732, 16
      %v801 = vshll.u32 %v732, 16
      %v803 = vrot.slane %v801, 1
      %v804 = vor.u32 %v799, %v803
      %v805 = vshll.u32 %v733, 16
      %v807 = vrot.slane %v805, 1
      %v808 = vsel %vm320, %v804, %v807
      %v809 = vshrl.u32 %v733, 16
      %v811 = vor.u32 %v809, %v807
      %v812 = vshll.u32 %v734, 16
      %v814 = vrot.slane %v812, 1
      %v815 = vsel %vm320, %v811, %v814
      %v816 = vshrl.u32 %v734, 16
      %v818 = vor.u32 %v816, %v814
      %v819 = vshll.u32 %v735, 16
      %v821 = vrot.slane %v819, 1
      %v822 = vsel %vm320, %v818, %v821
      %v823 = vshrl.u32 %v735, 16
      %v825 = vor.u32 %v823, %v821
      %v826 = vshll.u32 %v736, 16
      %v828 = vrot.slane %v826, 1
      %v829 = vsel %vm320, %v825, %v828
      %v830 = vshrl.u32 %v736, 16
      %v832 = vor.u32 %v830, %v828
      %v834 = vsel %vm360, %v808, 0
      %v837 = vsel %vm360, %v815, 0
      %v840 = vsel %vm360, %v822, 0
      %v843 = vsel %vm360, %v829, 0
      %v846 = vsel %vm360, %v832, 0
      %v849 = vand.u32 %v798, %v379
      %851 = vmatpush.bf16.msra.mxu0 0
      %852 = vmatpush.bf16.msra.mxu0 0
      %853 = vmatpush.bf16.msra.mxu0 0
      %854 = vmatpush.bf16.msra.mxu0 0
      %855 = vmatpush.bf16.msra.mxu0 0
      %856 = vmatpush.bf16.msra.mxu0 0
      %857 = vmatpush.bf16.msra.mxu0 0
      %858 = vmatpush.bf16.msra.mxu0 %v849
      %859 = vmatmul.bf16.gmra.mxu0 %v834
      %v860 = vpop.f32.mrf.mxu0
      %v861 = vadd.f32 0.0, %v860
      %v862 = vpop.f32.mrf.mxu0
      %v863 = vadd.f32 0.0, %v862
      %864 = vmatmul.bf16.gmra.mxu0 %v837
      %v865 = vpop.f32.mrf.mxu0
      %v866 = vadd.f32 0.0, %v865
      %v867 = vpop.f32.mrf.mxu0
      %v868 = vadd.f32 0.0, %v867
      %869 = vmatmul.bf16.gmra.mxu0 %v840
      %v870 = vpop.f32.mrf.mxu0
      %v871 = vadd.f32 0.0, %v870
      %v872 = vpop.f32.mrf.mxu0
      %v873 = vadd.f32 0.0, %v872
      %874 = vmatmul.bf16.gmra.mxu0 %v843
      %v875 = vpop.f32.mrf.mxu0
      %v876 = vadd.f32 0.0, %v875
      %v877 = vpop.f32.mrf.mxu0
      %v878 = vadd.f32 0.0, %v877
      %879 = vmatmul.bf16.gmra.mxu0 %v846
      %v880 = vpop.f32.mrf.mxu0
      %v881 = vadd.f32 0.0, %v880
      %v882 = vpop.f32.mrf.mxu0
      %883 = vdwg.mxu0
      %v884 = vadd.f32 %v788, %v861
      %v885 = vadd.f32 %v789, %v863
      %v886 = vadd.f32 %v790, %v866
      %v887 = vadd.f32 %v791, %v868
      %v888 = vadd.f32 %v792, %v871
      %v889 = vadd.f32 %v793, %v873
      %v890 = vadd.f32 %v794, %v876
      %v891 = vadd.f32 %v795, %v878
      %v892 = vadd.f32 %v796, %v881
      %v893 = vld [vmem:[%s702 + $0x4] sm:$0xf]
      %v894 = vld [vmem:[%s702 + $0x8] sm:$0xf]
      %v895 = vld [vmem:[%s702 + $0xc] sm:$0xf]
      %v896 = vld [vmem:[%s702 + $0x10] sm:$0xf]
      %v897 = vld [vmem:[%s702 + $0x14] sm:$0xf]
      %v898 = vld [vmem:[%s702 + $0x18] sm:$0xf]
      %v899 = vld [vmem:[%s702 + $0x1c] sm:$0xf]
      %v900 = vld [vmem:[%s702 + $0x20] sm:$0xf]
      %v901 = vld [vmem:[%s702 + $0x24] sm:$0xf]
      %s902 = scalar_lea.vmem %s1, 12
      %v903 = vld [vmem:[%s902] sm:$0x3]
      %v913 = vunpack.c.l.b16 %v893
      %v914 = vunpack.c.l.b16 %v894
      %v915 = vunpack.c.l.b16 %v895
      %v916 = vunpack.c.l.b16 %v896
      %v917 = vunpack.c.l.b16 %v897
      %v918 = vunpack.c.l.b16 %v898
      %v919 = vunpack.c.l.b16 %v899
      %v920 = vunpack.c.l.b16 %v900
      %v921 = vunpack.c.l.b16 %v901
      %v922 = vpack.c.b16 %v914, %v913
      %v923 = vpack.c.b16 %v916, %v915
      %v924 = vpack.c.b16 %v918, %v917
      %v925 = vpack.c.b16 %v920, %v919
      %v926 = vpack.c.b16 %v921, %v921
      %v928 = vshrl.u32 %v922, 16
      %v930 = vshll.u32 %v922, 16
      %v932 = vrot.slane %v930, 1
      %v933 = vor.u32 %v928, %v932
      %v935 = vshll.u32 %v923, 16
      %v937 = vrot.slane %v935, 1
      %v938 = vsel %vm320, %v933, %v937
      %v939 = vshrl.u32 %v923, 16
      %v941 = vor.u32 %v939, %v937
      %v943 = vshll.u32 %v924, 16
      %v945 = vrot.slane %v943, 1
      %v946 = vsel %vm320, %v941, %v945
      %v947 = vshrl.u32 %v924, 16
      %v949 = vor.u32 %v947, %v945
      %v951 = vshll.u32 %v925, 16
      %v953 = vrot.slane %v951, 1
      %v954 = vsel %vm320, %v949, %v953
      %v955 = vshrl.u32 %v925, 16
      %v957 = vor.u32 %v955, %v953
      %v959 = vshll.u32 %v926, 16
      %v961 = vrot.slane %v959, 1
      %v962 = vsel %vm320, %v957, %v961
      %v963 = vshrl.u32 %v926, 16
      %v965 = vor.u32 %v963, %v961
      %v967 = vsel %vm360, %v938, 0
      %v970 = vsel %vm360, %v946, 0
      %v973 = vsel %vm360, %v954, 0
      %v976 = vsel %vm360, %v962, 0
      %v979 = vsel %vm360, %v965, 0
      %v982 = vand.u32 %v903, %v379
      %984 = vmatpush.bf16.msra.mxu0 0
      %985 = vmatpush.bf16.msra.mxu0 0
      %986 = vmatpush.bf16.msra.mxu0 0
      %987 = vmatpush.bf16.msra.mxu0 0
      %988 = vmatpush.bf16.msra.mxu0 0
      %989 = vmatpush.bf16.msra.mxu0 0
      %990 = vmatpush.bf16.msra.mxu0 0
      %991 = vmatpush.bf16.msra.mxu0 %v982
      %992 = vmatmul.bf16.gmra.mxu0 %v967
      %v993 = vpop.f32.mrf.mxu0
      %v994 = vadd.f32 0.0, %v993
      %v995 = vpop.f32.mrf.mxu0
      %v996 = vadd.f32 0.0, %v995
      %997 = vmatmul.bf16.gmra.mxu0 %v970
      %v998 = vpop.f32.mrf.mxu0
      %v999 = vadd.f32 0.0, %v998
      %v1000 = vpop.f32.mrf.mxu0
      %v1001 = vadd.f32 0.0, %v1000
      %1002 = vmatmul.bf16.gmra.mxu0 %v973
      %v1003 = vpop.f32.mrf.mxu0
      %v1004 = vadd.f32 0.0, %v1003
      %v1005 = vpop.f32.mrf.mxu0
      %v1006 = vadd.f32 0.0, %v1005
      %1007 = vmatmul.bf16.gmra.mxu0 %v976
      %v1008 = vpop.f32.mrf.mxu0
      %v1009 = vadd.f32 0.0, %v1008
      %v1010 = vpop.f32.mrf.mxu0
      %v1011 = vadd.f32 0.0, %v1010
      %1012 = vmatmul.bf16.gmra.mxu0 %v979
      %v1013 = vpop.f32.mrf.mxu0
      %v1014 = vadd.f32 0.0, %v1013
      %v1015 = vpop.f32.mrf.mxu0
      %1016 = vdwg.mxu0
      %v1017 = vadd.f32 %v884, %v994
      %v1018 = vadd.f32 %v885, %v996
      %v1019 = vadd.f32 %v886, %v999
      %v1020 = vadd.f32 %v887, %v1001
      %v1021 = vadd.f32 %v888, %v1004
      %v1022 = vadd.f32 %v889, %v1006
      %v1023 = vadd.f32 %v890, %v1009
      %v1024 = vadd.f32 %v891, %v1011
      %v1025 = vadd.f32 %v892, %v1014
      %v1026 = vld [vmem:[%s702 + $0x4] sm:$0xe]
      %v1027 = vld [vmem:[%s702 + $0x8] sm:$0xf]
      %v1028 = vld [vmem:[%s702 + $0xc] sm:$0xf]
      %v1029 = vld [vmem:[%s702 + $0x10] sm:$0xf]
      %v1030 = vld [vmem:[%s702 + $0x14] sm:$0xf]
      %v1031 = vld [vmem:[%s702 + $0x18] sm:$0xf]
      %v1032 = vld [vmem:[%s702 + $0x1c] sm:$0xf]
      %v1033 = vld [vmem:[%s702 + $0x20] sm:$0xf]
      %v1034 = vld [vmem:[%s702 + $0x24] sm:$0xf]
      %v1035 = vld [vmem:[%s702 + $0x28] sm:$0x1]
      %s1036 = scalar_lea.vmem %s1, 14
      %v1037 = vld [vmem:[%s1036] sm:$0x3]
      %v1048 = vunpack.c.l.b16 %v1026
      %v1049 = vunpack.c.l.b16 %v1027
      %v1050 = vunpack.c.l.b16 %v1028
      %v1051 = vunpack.c.l.b16 %v1029
      %v1052 = vunpack.c.l.b16 %v1030
      %v1053 = vunpack.c.l.b16 %v1031
      %v1054 = vunpack.c.l.b16 %v1032
      %v1055 = vunpack.c.l.b16 %v1033
      %v1056 = vunpack.c.l.b16 %v1034
      %v1057 = vunpack.c.l.b16 %v1035
      %v1058 = vpack.c.b16 %v1049, %v1048
      %v1059 = vpack.c.b16 %v1051, %v1050
      %v1060 = vpack.c.b16 %v1053, %v1052
      %v1061 = vpack.c.b16 %v1055, %v1054
      %v1062 = vpack.c.b16 %v1057, %v1056
      %v1063 = vrot.slane %v1058, 1
      %v1064 = vrot.slane %v1059, 1
      %v1065 = vsel %vm632, %v1063, %v1064
      %v1066 = vrot.slane %v1060, 1
      %v1067 = vsel %vm632, %v1064, %v1066
      %v1068 = vrot.slane %v1061, 1
      %v1069 = vsel %vm632, %v1066, %v1068
      %v1070 = vrot.slane %v1062, 1
      %v1071 = vsel %vm632, %v1068, %v1070
      %v1073 = vsel %vm360, %v1065, 0
      %v1076 = vsel %vm360, %v1067, 0
      %v1079 = vsel %vm360, %v1069, 0
      %v1082 = vsel %vm360, %v1071, 0
      %v1085 = vsel %vm360, %v1070, 0
      %v1088 = vand.u32 %v1037, %v379
      %1090 = vmatpush.bf16.msra.mxu0 0
      %1091 = vmatpush.bf16.msra.mxu0 0
      %1092 = vmatpush.bf16.msra.mxu0 0
      %1093 = vmatpush.bf16.msra.mxu0 0
      %1094 = vmatpush.bf16.msra.mxu0 0
      %1095 = vmatpush.bf16.msra.mxu0 0
      %1096 = vmatpush.bf16.msra.mxu0 0
      %1097 = vmatpush.bf16.msra.mxu0 %v1088
      %1098 = vmatmul.bf16.gmra.mxu0 %v1073
      %v1099 = vpop.f32.mrf.mxu0
      %v1100 = vadd.f32 0.0, %v1099
      %v1101 = vpop.f32.mrf.mxu0
      %v1102 = vadd.f32 0.0, %v1101
      %1103 = vmatmul.bf16.gmra.mxu0 %v1076
      %v1104 = vpop.f32.mrf.mxu0
      %v1105 = vadd.f32 0.0, %v1104
      %v1106 = vpop.f32.mrf.mxu0
      %v1107 = vadd.f32 0.0, %v1106
      %1108 = vmatmul.bf16.gmra.mxu0 %v1079
      %v1109 = vpop.f32.mrf.mxu0
      %v1110 = vadd.f32 0.0, %v1109
      %v1111 = vpop.f32.mrf.mxu0
      %v1112 = vadd.f32 0.0, %v1111
      %1113 = vmatmul.bf16.gmra.mxu0 %v1082
      %v1114 = vpop.f32.mrf.mxu0
      %v1115 = vadd.f32 0.0, %v1114
      %v1116 = vpop.f32.mrf.mxu0
      %v1117 = vadd.f32 0.0, %v1116
      %1118 = vmatmul.bf16.gmra.mxu0 %v1085
      %v1119 = vpop.f32.mrf.mxu0
      %v1120 = vadd.f32 0.0, %v1119
      %v1121 = vpop.f32.mrf.mxu0
      %1122 = vdwg.mxu0
      %v1123 = vadd.f32 %v1017, %v1100
      %v1124 = vadd.f32 %v1018, %v1102
      %v1125 = vadd.f32 %v1019, %v1105
      %v1126 = vadd.f32 %v1020, %v1107
      %v1127 = vadd.f32 %v1021, %v1110
      %v1128 = vadd.f32 %v1022, %v1112
      %v1129 = vadd.f32 %v1023, %v1115
      %v1130 = vadd.f32 %v1024, %v1117
      %v1131 = vadd.f32 %v1025, %v1120
      %s1132 = scalar_lea.vmem %s277, 88
      %v1133 = vld [vmem:[%s1132] sm:$0xf]
      %v1134 = vld [vmem:[%s1132 + $0x4] sm:$0xf]
      %v1135 = vld [vmem:[%s1132 + $0x8] sm:$0xf]
      %v1136 = vld [vmem:[%s1132 + $0xc] sm:$0xf]
      %v1137 = vld [vmem:[%s1132 + $0x10] sm:$0xf]
      %v1138 = vld [vmem:[%s1132 + $0x14] sm:$0xf]
      %v1139 = vld [vmem:[%s1132 + $0x18] sm:$0xf]
      %v1140 = vld [vmem:[%s1132 + $0x1c] sm:$0xf]
      %v1141 = vld [vmem:[%s1132 + $0x20] sm:$0xf]
      %s1142 = scalar_lea.vmem %s1, 16
      %v1143 = vld [vmem:[%s1142] sm:$0x3]
      %v1153 = vunpack.c.l.b16 %v1133
      %v1154 = vunpack.c.l.b16 %v1134
      %v1155 = vunpack.c.l.b16 %v1135
      %v1156 = vunpack.c.l.b16 %v1136
      %v1157 = vunpack.c.l.b16 %v1137
      %v1158 = vunpack.c.l.b16 %v1138
      %v1159 = vunpack.c.l.b16 %v1139
      %v1160 = vunpack.c.l.b16 %v1140
      %v1161 = vunpack.c.l.b16 %v1141
      %v1162 = vpack.c.b16 %v1154, %v1153
      %v1163 = vpack.c.b16 %v1156, %v1155
      %v1164 = vpack.c.b16 %v1158, %v1157
      %v1165 = vpack.c.b16 %v1160, %v1159
      %v1166 = vpack.c.b16 %v1161, %v1161
      %v1168 = vsel %vm360, %v1162, 0
      %v1171 = vsel %vm360, %v1163, 0
      %v1174 = vsel %vm360, %v1164, 0
      %v1177 = vsel %vm360, %v1165, 0
      %v1180 = vsel %vm360, %v1166, 0
      %v1183 = vand.u32 %v1143, %v379
      %1185 = vmatpush.bf16.msra.mxu0 0
      %1186 = vmatpush.bf16.msra.mxu0 0
      %1187 = vmatpush.bf16.msra.mxu0 0
      %1188 = vmatpush.bf16.msra.mxu0 0
      %1189 = vmatpush.bf16.msra.mxu0 0
      %1190 = vmatpush.bf16.msra.mxu0 0
      %1191 = vmatpush.bf16.msra.mxu0 0
      %1192 = vmatpush.bf16.msra.mxu0 %v1183
      %1193 = vmatmul.bf16.gmra.mxu0 %v1168
      %v1194 = vpop.f32.mrf.mxu0
      %v1195 = vadd.f32 0.0, %v1194
      %v1196 = vpop.f32.mrf.mxu0
      %v1197 = vadd.f32 0.0, %v1196
      %1198 = vmatmul.bf16.gmra.mxu0 %v1171
      %v1199 = vpop.f32.mrf.mxu0
      %v1200 = vadd.f32 0.0, %v1199
      %v1201 = vpop.f32.mrf.mxu0
      %v1202 = vadd.f32 0.0, %v1201
      %1203 = vmatmul.bf16.gmra.mxu0 %v1174
      %v1204 = vpop.f32.mrf.mxu0
      %v1205 = vadd.f32 0.0, %v1204
      %v1206 = vpop.f32.mrf.mxu0
      %v1207 = vadd.f32 0.0, %v1206
      %1208 = vmatmul.bf16.gmra.mxu0 %v1177
      %v1209 = vpop.f32.mrf.mxu0
      %v1210 = vadd.f32 0.0, %v1209
      %v1211 = vpop.f32.mrf.mxu0
      %v1212 = vadd.f32 0.0, %v1211
      %1213 = vmatmul.bf16.gmra.mxu0 %v1180
      %v1214 = vpop.f32.mrf.mxu0
      %v1215 = vadd.f32 0.0, %v1214
      %v1216 = vpop.f32.mrf.mxu0
      %1217 = vdwg.mxu0
      %v1218 = vadd.f32 %v1123, %v1195
      %v1219 = vadd.f32 %v1124, %v1197
      %v1220 = vadd.f32 %v1125, %v1200
      %v1221 = vadd.f32 %v1126, %v1202
      %v1222 = vadd.f32 %v1127, %v1205
      %v1223 = vadd.f32 %v1128, %v1207
      %v1224 = vadd.f32 %v1129, %v1210
      %v1225 = vadd.f32 %v1130, %v1212
      %v1226 = vadd.f32 %v1131, %v1215
      %s1227 = scalar_lea.vmem %s1, 18
      %v1228 = vld [vmem:[%s1227] sm:$0x3]
      %v1229 = vshrl.u32 %v1162, 16
      %v1231 = vshll.u32 %v1162, 16
      %v1233 = vrot.slane %v1231, 1
      %v1234 = vor.u32 %v1229, %v1233
      %v1235 = vshll.u32 %v1163, 16
      %v1237 = vrot.slane %v1235, 1
      %v1238 = vsel %vm320, %v1234, %v1237
      %v1239 = vshrl.u32 %v1163, 16
      %v1241 = vor.u32 %v1239, %v1237
      %v1242 = vshll.u32 %v1164, 16
      %v1244 = vrot.slane %v1242, 1
      %v1245 = vsel %vm320, %v1241, %v1244
      %v1246 = vshrl.u32 %v1164, 16
      %v1248 = vor.u32 %v1246, %v1244
      %v1249 = vshll.u32 %v1165, 16
      %v1251 = vrot.slane %v1249, 1
      %v1252 = vsel %vm320, %v1248, %v1251
      %v1253 = vshrl.u32 %v1165, 16
      %v1255 = vor.u32 %v1253, %v1251
      %v1256 = vshll.u32 %v1166, 16
      %v1258 = vrot.slane %v1256, 1
      %v1259 = vsel %vm320, %v1255, %v1258
      %v1260 = vshrl.u32 %v1166, 16
      %v1262 = vor.u32 %v1260, %v1258
      %v1264 = vsel %vm360, %v1238, 0
      %v1267 = vsel %vm360, %v1245, 0
      %v1270 = vsel %vm360, %v1252, 0
      %v1273 = vsel %vm360, %v1259, 0
      %v1276 = vsel %vm360, %v1262, 0
      %v1279 = vand.u32 %v1228, %v379
      %1281 = vmatpush.bf16.msra.mxu0 0
      %1282 = vmatpush.bf16.msra.mxu0 0
      %1283 = vmatpush.bf16.msra.mxu0 0
      %1284 = vmatpush.bf16.msra.mxu0 0
      %1285 = vmatpush.bf16.msra.mxu0 0
      %1286 = vmatpush.bf16.msra.mxu0 0
      %1287 = vmatpush.bf16.msra.mxu0 0
      %1288 = vmatpush.bf16.msra.mxu0 %v1279
      %1289 = vmatmul.bf16.gmra.mxu0 %v1264
      %v1290 = vpop.f32.mrf.mxu0
      %v1291 = vadd.f32 0.0, %v1290
      %v1292 = vpop.f32.mrf.mxu0
      %v1293 = vadd.f32 0.0, %v1292
      %1294 = vmatmul.bf16.gmra.mxu0 %v1267
      %v1295 = vpop.f32.mrf.mxu0
      %v1296 = vadd.f32 0.0, %v1295
      %v1297 = vpop.f32.mrf.mxu0
      %v1298 = vadd.f32 0.0, %v1297
      %1299 = vmatmul.bf16.gmra.mxu0 %v1270
      %v1300 = vpop.f32.mrf.mxu0
      %v1301 = vadd.f32 0.0, %v1300
      %v1302 = vpop.f32.mrf.mxu0
      %v1303 = vadd.f32 0.0, %v1302
      %1304 = vmatmul.bf16.gmra.mxu0 %v1273
      %v1305 = vpop.f32.mrf.mxu0
      %v1306 = vadd.f32 0.0, %v1305
      %v1307 = vpop.f32.mrf.mxu0
      %v1308 = vadd.f32 0.0, %v1307
      %1309 = vmatmul.bf16.gmra.mxu0 %v1276
      %v1310 = vpop.f32.mrf.mxu0
      %v1311 = vadd.f32 0.0, %v1310
      %v1312 = vpop.f32.mrf.mxu0
      %1313 = vdwg.mxu0
      %v1314 = vadd.f32 %v1218, %v1291
      %v1315 = vadd.f32 %v1219, %v1293
      %v1316 = vadd.f32 %v1220, %v1296
      %v1317 = vadd.f32 %v1221, %v1298
      %v1318 = vadd.f32 %v1222, %v1301
      %v1319 = vadd.f32 %v1223, %v1303
      %v1320 = vadd.f32 %v1224, %v1306
      %v1321 = vadd.f32 %v1225, %v1308
      %v1322 = vadd.f32 %v1226, %v1311
      %v1323 = vld [vmem:[%s1132 + $0x4] sm:$0xf]
      %v1324 = vld [vmem:[%s1132 + $0x8] sm:$0xf]
      %v1325 = vld [vmem:[%s1132 + $0xc] sm:$0xf]
      %v1326 = vld [vmem:[%s1132 + $0x10] sm:$0xf]
      %v1327 = vld [vmem:[%s1132 + $0x14] sm:$0xf]
      %v1328 = vld [vmem:[%s1132 + $0x18] sm:$0xf]
      %v1329 = vld [vmem:[%s1132 + $0x1c] sm:$0xf]
      %v1330 = vld [vmem:[%s1132 + $0x20] sm:$0xf]
      %v1331 = vld [vmem:[%s1132 + $0x24] sm:$0xf]
      %s1332 = scalar_lea.vmem %s1, 20
      %v1333 = vld [vmem:[%s1332] sm:$0x3]
      %v1343 = vunpack.c.l.b16 %v1323
      %v1344 = vunpack.c.l.b16 %v1324
      %v1345 = vunpack.c.l.b16 %v1325
      %v1346 = vunpack.c.l.b16 %v1326
      %v1347 = vunpack.c.l.b16 %v1327
      %v1348 = vunpack.c.l.b16 %v1328
      %v1349 = vunpack.c.l.b16 %v1329
      %v1350 = vunpack.c.l.b16 %v1330
      %v1351 = vunpack.c.l.b16 %v1331
      %v1352 = vpack.c.b16 %v1344, %v1343
      %v1353 = vpack.c.b16 %v1346, %v1345
      %v1354 = vpack.c.b16 %v1348, %v1347
      %v1355 = vpack.c.b16 %v1350, %v1349
      %v1356 = vpack.c.b16 %v1351, %v1351
      %v1358 = vshrl.u32 %v1352, 16
      %v1360 = vshll.u32 %v1352, 16
      %v1362 = vrot.slane %v1360, 1
      %v1363 = vor.u32 %v1358, %v1362
      %v1365 = vshll.u32 %v1353, 16
      %v1367 = vrot.slane %v1365, 1
      %v1368 = vsel %vm320, %v1363, %v1367
      %v1369 = vshrl.u32 %v1353, 16
      %v1371 = vor.u32 %v1369, %v1367
      %v1373 = vshll.u32 %v1354, 16
      %v1375 = vrot.slane %v1373, 1
      %v1376 = vsel %vm320, %v1371, %v1375
      %v1377 = vshrl.u32 %v1354, 16
      %v1379 = vor.u32 %v1377, %v1375
      %v1381 = vshll.u32 %v1355, 16
      %v1383 = vrot.slane %v1381, 1
      %v1384 = vsel %vm320, %v1379, %v1383
      %v1385 = vshrl.u32 %v1355, 16
      %v1387 = vor.u32 %v1385, %v1383
      %v1389 = vshll.u32 %v1356, 16
      %v1391 = vrot.slane %v1389, 1
      %v1392 = vsel %vm320, %v1387, %v1391
      %v1393 = vshrl.u32 %v1356, 16
      %v1395 = vor.u32 %v1393, %v1391
      %v1397 = vsel %vm360, %v1368, 0
      %v1400 = vsel %vm360, %v1376, 0
      %v1403 = vsel %vm360, %v1384, 0
      %v1406 = vsel %vm360, %v1392, 0
      %v1409 = vsel %vm360, %v1395, 0
      %v1412 = vand.u32 %v1333, %v379
      %1414 = vmatpush.bf16.msra.mxu0 0
      %1415 = vmatpush.bf16.msra.mxu0 0
      %1416 = vmatpush.bf16.msra.mxu0 0
      %1417 = vmatpush.bf16.msra.mxu0 0
      %1418 = vmatpush.bf16.msra.mxu0 0
      %1419 = vmatpush.bf16.msra.mxu0 0
      %1420 = vmatpush.bf16.msra.mxu0 0
      %1421 = vmatpush.bf16.msra.mxu0 %v1412
      %1422 = vmatmul.bf16.gmra.mxu0 %v1397
      %v1423 = vpop.f32.mrf.mxu0
      %v1424 = vadd.f32 0.0, %v1423
      %v1425 = vpop.f32.mrf.mxu0
      %v1426 = vadd.f32 0.0, %v1425
      %1427 = vmatmul.bf16.gmra.mxu0 %v1400
      %v1428 = vpop.f32.mrf.mxu0
      %v1429 = vadd.f32 0.0, %v1428
      %v1430 = vpop.f32.mrf.mxu0
      %v1431 = vadd.f32 0.0, %v1430
      %1432 = vmatmul.bf16.gmra.mxu0 %v1403
      %v1433 = vpop.f32.mrf.mxu0
      %v1434 = vadd.f32 0.0, %v1433
      %v1435 = vpop.f32.mrf.mxu0
      %v1436 = vadd.f32 0.0, %v1435
      %1437 = vmatmul.bf16.gmra.mxu0 %v1406
      %v1438 = vpop.f32.mrf.mxu0
      %v1439 = vadd.f32 0.0, %v1438
      %v1440 = vpop.f32.mrf.mxu0
      %v1441 = vadd.f32 0.0, %v1440
      %1442 = vmatmul.bf16.gmra.mxu0 %v1409
      %v1443 = vpop.f32.mrf.mxu0
      %v1444 = vadd.f32 0.0, %v1443
      %v1445 = vpop.f32.mrf.mxu0
      %1446 = vdwg.mxu0
      %v1447 = vadd.f32 %v1314, %v1424
      %v1448 = vadd.f32 %v1315, %v1426
      %v1449 = vadd.f32 %v1316, %v1429
      %v1450 = vadd.f32 %v1317, %v1431
      %v1451 = vadd.f32 %v1318, %v1434
      %v1452 = vadd.f32 %v1319, %v1436
      %v1453 = vadd.f32 %v1320, %v1439
      %v1454 = vadd.f32 %v1321, %v1441
      %v1455 = vadd.f32 %v1322, %v1444
      %v1456 = vld [vmem:[%s1132 + $0x4] sm:$0xe]
      %v1457 = vld [vmem:[%s1132 + $0x8] sm:$0xf]
      %v1458 = vld [vmem:[%s1132 + $0xc] sm:$0xf]
      %v1459 = vld [vmem:[%s1132 + $0x10] sm:$0xf]
      %v1460 = vld [vmem:[%s1132 + $0x14] sm:$0xf]
      %v1461 = vld [vmem:[%s1132 + $0x18] sm:$0xf]
      %v1462 = vld [vmem:[%s1132 + $0x1c] sm:$0xf]
      %v1463 = vld [vmem:[%s1132 + $0x20] sm:$0xf]
      %v1464 = vld [vmem:[%s1132 + $0x24] sm:$0xf]
      %v1465 = vld [vmem:[%s1132 + $0x28] sm:$0x1]
      %s1466 = scalar_lea.vmem %s1, 22
      %v1467 = vld [vmem:[%s1466] sm:$0x3]
      %v1478 = vunpack.c.l.b16 %v1456
      %v1479 = vunpack.c.l.b16 %v1457
      %v1480 = vunpack.c.l.b16 %v1458
      %v1481 = vunpack.c.l.b16 %v1459
      %v1482 = vunpack.c.l.b16 %v1460
      %v1483 = vunpack.c.l.b16 %v1461
      %v1484 = vunpack.c.l.b16 %v1462
      %v1485 = vunpack.c.l.b16 %v1463
      %v1486 = vunpack.c.l.b16 %v1464
      %v1487 = vunpack.c.l.b16 %v1465
      %v1488 = vpack.c.b16 %v1479, %v1478
      %v1489 = vpack.c.b16 %v1481, %v1480
      %v1490 = vpack.c.b16 %v1483, %v1482
      %v1491 = vpack.c.b16 %v1485, %v1484
      %v1492 = vpack.c.b16 %v1487, %v1486
      %v1493 = vrot.slane %v1488, 1
      %v1494 = vrot.slane %v1489, 1
      %v1495 = vsel %vm632, %v1493, %v1494
      %v1496 = vrot.slane %v1490, 1
      %v1497 = vsel %vm632, %v1494, %v1496
      %v1498 = vrot.slane %v1491, 1
      %v1499 = vsel %vm632, %v1496, %v1498
      %v1500 = vrot.slane %v1492, 1
      %v1501 = vsel %vm632, %v1498, %v1500
      %v1503 = vsel %vm360, %v1495, 0
      %v1506 = vsel %vm360, %v1497, 0
      %v1509 = vsel %vm360, %v1499, 0
      %v1512 = vsel %vm360, %v1501, 0
      %v1515 = vsel %vm360, %v1500, 0
      %v1518 = vand.u32 %v1467, %v379
      %1520 = vmatpush.bf16.msra.mxu0 0
      %1521 = vmatpush.bf16.msra.mxu0 0
      %1522 = vmatpush.bf16.msra.mxu0 0
      %1523 = vmatpush.bf16.msra.mxu0 0
      %1524 = vmatpush.bf16.msra.mxu0 0
      %1525 = vmatpush.bf16.msra.mxu0 0
      %1526 = vmatpush.bf16.msra.mxu0 0
      %1527 = vmatpush.bf16.msra.mxu0 %v1518
      %1528 = vmatmul.bf16.gmra.mxu0 %v1503
      %v1529 = vpop.f32.mrf.mxu0
      %v1530 = vadd.f32 0.0, %v1529
      %v1531 = vpop.f32.mrf.mxu0
      %v1532 = vadd.f32 0.0, %v1531
      %1533 = vmatmul.bf16.gmra.mxu0 %v1506
      %v1534 = vpop.f32.mrf.mxu0
      %v1535 = vadd.f32 0.0, %v1534
      %v1536 = vpop.f32.mrf.mxu0
      %v1537 = vadd.f32 0.0, %v1536
      %1538 = vmatmul.bf16.gmra.mxu0 %v1509
      %v1539 = vpop.f32.mrf.mxu0
      %v1540 = vadd.f32 0.0, %v1539
      %v1541 = vpop.f32.mrf.mxu0
      %v1542 = vadd.f32 0.0, %v1541
      %1543 = vmatmul.bf16.gmra.mxu0 %v1512
      %v1544 = vpop.f32.mrf.mxu0
      %v1545 = vadd.f32 0.0, %v1544
      %v1546 = vpop.f32.mrf.mxu0
      %v1547 = vadd.f32 0.0, %v1546
      %1548 = vmatmul.bf16.gmra.mxu0 %v1515
      %v1549 = vpop.f32.mrf.mxu0
      %v1550 = vadd.f32 0.0, %v1549
      %v1551 = vpop.f32.mrf.mxu0
      %1552 = vdwg.mxu0
      %v1553 = vadd.f32 %v1447, %v1530
      %v1554 = vadd.f32 %v1448, %v1532
      %v1555 = vadd.f32 %v1449, %v1535
      %v1556 = vadd.f32 %v1450, %v1537
      %v1557 = vadd.f32 %v1451, %v1540
      %v1558 = vadd.f32 %v1452, %v1542
      %v1559 = vadd.f32 %v1453, %v1545
      %v1560 = vadd.f32 %v1454, %v1547
      %v1561 = vadd.f32 %v1455, %v1550
      %s1562 = scalar_lea.vmem %s277, 132
      %v1563 = vld [vmem:[%s1562] sm:$0xf]
      %v1564 = vld [vmem:[%s1562 + $0x4] sm:$0xf]
      %v1565 = vld [vmem:[%s1562 + $0x8] sm:$0xf]
      %v1566 = vld [vmem:[%s1562 + $0xc] sm:$0xf]
      %v1567 = vld [vmem:[%s1562 + $0x10] sm:$0xf]
      %v1568 = vld [vmem:[%s1562 + $0x14] sm:$0xf]
      %v1569 = vld [vmem:[%s1562 + $0x18] sm:$0xf]
      %v1570 = vld [vmem:[%s1562 + $0x1c] sm:$0xf]
      %v1571 = vld [vmem:[%s1562 + $0x20] sm:$0xf]
      %s1572 = scalar_lea.vmem %s1, 24
      %v1573 = vld [vmem:[%s1572] sm:$0x3]
      %v1583 = vunpack.c.l.b16 %v1563
      %v1584 = vunpack.c.l.b16 %v1564
      %v1585 = vunpack.c.l.b16 %v1565
      %v1586 = vunpack.c.l.b16 %v1566
      %v1587 = vunpack.c.l.b16 %v1567
      %v1588 = vunpack.c.l.b16 %v1568
      %v1589 = vunpack.c.l.b16 %v1569
      %v1590 = vunpack.c.l.b16 %v1570
      %v1591 = vunpack.c.l.b16 %v1571
      %v1592 = vpack.c.b16 %v1584, %v1583
      %v1593 = vpack.c.b16 %v1586, %v1585
      %v1594 = vpack.c.b16 %v1588, %v1587
      %v1595 = vpack.c.b16 %v1590, %v1589
      %v1596 = vpack.c.b16 %v1591, %v1591
      %v1598 = vsel %vm360, %v1592, 0
      %v1601 = vsel %vm360, %v1593, 0
      %v1604 = vsel %vm360, %v1594, 0
      %v1607 = vsel %vm360, %v1595, 0
      %v1610 = vsel %vm360, %v1596, 0
      %v1613 = vand.u32 %v1573, %v379
      %1615 = vmatpush.bf16.msra.mxu0 0
      %1616 = vmatpush.bf16.msra.mxu0 0
      %1617 = vmatpush.bf16.msra.mxu0 0
      %1618 = vmatpush.bf16.msra.mxu0 0
      %1619 = vmatpush.bf16.msra.mxu0 0
      %1620 = vmatpush.bf16.msra.mxu0 0
      %1621 = vmatpush.bf16.msra.mxu0 0
      %1622 = vmatpush.bf16.msra.mxu0 %v1613
      %1623 = vmatmul.bf16.gmra.mxu0 %v1598
      %v1624 = vpop.f32.mrf.mxu0
      %v1625 = vadd.f32 0.0, %v1624
      %v1626 = vpop.f32.mrf.mxu0
      %v1627 = vadd.f32 0.0, %v1626
      %1628 = vmatmul.bf16.gmra.mxu0 %v1601
      %v1629 = vpop.f32.mrf.mxu0
      %v1630 = vadd.f32 0.0, %v1629
      %v1631 = vpop.f32.mrf.mxu0
      %v1632 = vadd.f32 0.0, %v1631
      %1633 = vmatmul.bf16.gmra.mxu0 %v1604
      %v1634 = vpop.f32.mrf.mxu0
      %v1635 = vadd.f32 0.0, %v1634
      %v1636 = vpop.f32.mrf.mxu0
      %v1637 = vadd.f32 0.0, %v1636
      %1638 = vmatmul.bf16.gmra.mxu0 %v1607
      %v1639 = vpop.f32.mrf.mxu0
      %v1640 = vadd.f32 0.0, %v1639
      %v1641 = vpop.f32.mrf.mxu0
      %v1642 = vadd.f32 0.0, %v1641
      %1643 = vmatmul.bf16.gmra.mxu0 %v1610
      %v1644 = vpop.f32.mrf.mxu0
      %v1645 = vadd.f32 0.0, %v1644
      %v1646 = vpop.f32.mrf.mxu0
      %1647 = vdwg.mxu0
      %v1648 = vadd.f32 %v1553, %v1625
      %v1649 = vadd.f32 %v1554, %v1627
      %v1650 = vadd.f32 %v1555, %v1630
      %v1651 = vadd.f32 %v1556, %v1632
      %v1652 = vadd.f32 %v1557, %v1635
      %v1653 = vadd.f32 %v1558, %v1637
      %v1654 = vadd.f32 %v1559, %v1640
      %v1655 = vadd.f32 %v1560, %v1642
      %v1656 = vadd.f32 %v1561, %v1645
      %s1657 = scalar_lea.vmem %s1, 26
      %v1658 = vld [vmem:[%s1657] sm:$0x3]
      %v1659 = vshrl.u32 %v1592, 16
      %v1661 = vshll.u32 %v1592, 16
      %v1663 = vrot.slane %v1661, 1
      %v1664 = vor.u32 %v1659, %v1663
      %v1665 = vshll.u32 %v1593, 16
      %v1667 = vrot.slane %v1665, 1
      %v1668 = vsel %vm320, %v1664, %v1667
      %v1669 = vshrl.u32 %v1593, 16
      %v1671 = vor.u32 %v1669, %v1667
      %v1672 = vshll.u32 %v1594, 16
      %v1674 = vrot.slane %v1672, 1
      %v1675 = vsel %vm320, %v1671, %v1674
      %v1676 = vshrl.u32 %v1594, 16
      %v1678 = vor.u32 %v1676, %v1674
      %v1679 = vshll.u32 %v1595, 16
      %v1681 = vrot.slane %v1679, 1
      %v1682 = vsel %vm320, %v1678, %v1681
      %v1683 = vshrl.u32 %v1595, 16
      %v1685 = vor.u32 %v1683, %v1681
      %v1686 = vshll.u32 %v1596, 16
      %v1688 = vrot.slane %v1686, 1
      %v1689 = vsel %vm320, %v1685, %v1688
      %v1690 = vshrl.u32 %v1596, 16
      %v1692 = vor.u32 %v1690, %v1688
      %v1694 = vsel %vm360, %v1668, 0
      %v1697 = vsel %vm360, %v1675, 0
      %v1700 = vsel %vm360, %v1682, 0
      %v1703 = vsel %vm360, %v1689, 0
      %v1706 = vsel %vm360, %v1692, 0
      %v1709 = vand.u32 %v1658, %v379
      %1711 = vmatpush.bf16.msra.mxu0 0
      %1712 = vmatpush.bf16.msra.mxu0 0
      %1713 = vmatpush.bf16.msra.mxu0 0
      %1714 = vmatpush.bf16.msra.mxu0 0
      %1715 = vmatpush.bf16.msra.mxu0 0
      %1716 = vmatpush.bf16.msra.mxu0 0
      %1717 = vmatpush.bf16.msra.mxu0 0
      %1718 = vmatpush.bf16.msra.mxu0 %v1709
      %1719 = vmatmul.bf16.gmra.mxu0 %v1694
      %v1720 = vpop.f32.mrf.mxu0
      %v1721 = vadd.f32 0.0, %v1720
      %v1722 = vpop.f32.mrf.mxu0
      %v1723 = vadd.f32 0.0, %v1722
      %1724 = vmatmul.bf16.gmra.mxu0 %v1697
      %v1725 = vpop.f32.mrf.mxu0
      %v1726 = vadd.f32 0.0, %v1725
      %v1727 = vpop.f32.mrf.mxu0
      %v1728 = vadd.f32 0.0, %v1727
      %1729 = vmatmul.bf16.gmra.mxu0 %v1700
      %v1730 = vpop.f32.mrf.mxu0
      %v1731 = vadd.f32 0.0, %v1730
      %v1732 = vpop.f32.mrf.mxu0
      %v1733 = vadd.f32 0.0, %v1732
      %1734 = vmatmul.bf16.gmra.mxu0 %v1703
      %v1735 = vpop.f32.mrf.mxu0
      %v1736 = vadd.f32 0.0, %v1735
      %v1737 = vpop.f32.mrf.mxu0
      %v1738 = vadd.f32 0.0, %v1737
      %1739 = vmatmul.bf16.gmra.mxu0 %v1706
      %v1740 = vpop.f32.mrf.mxu0
      %v1741 = vadd.f32 0.0, %v1740
      %v1742 = vpop.f32.mrf.mxu0
      %1743 = vdwg.mxu0
      %v1744 = vadd.f32 %v1648, %v1721
      %v1745 = vadd.f32 %v1649, %v1723
      %v1746 = vadd.f32 %v1650, %v1726
      %v1747 = vadd.f32 %v1651, %v1728
      %v1748 = vadd.f32 %v1652, %v1731
      %v1749 = vadd.f32 %v1653, %v1733
      %v1750 = vadd.f32 %v1654, %v1736
      %v1751 = vadd.f32 %v1655, %v1738
      %v1752 = vadd.f32 %v1656, %v1741
      %v1753 = vld [vmem:[%s1562 + $0x4] sm:$0xf]
      %v1754 = vld [vmem:[%s1562 + $0x8] sm:$0xf]
      %v1755 = vld [vmem:[%s1562 + $0xc] sm:$0xf]
      %v1756 = vld [vmem:[%s1562 + $0x10] sm:$0xf]
      %v1757 = vld [vmem:[%s1562 + $0x14] sm:$0xf]
      %v1758 = vld [vmem:[%s1562 + $0x18] sm:$0xf]
      %v1759 = vld [vmem:[%s1562 + $0x1c] sm:$0xf]
      %v1760 = vld [vmem:[%s1562 + $0x20] sm:$0xf]
      %v1761 = vld [vmem:[%s1562 + $0x24] sm:$0xf]
      %s1762 = scalar_lea.vmem %s1, 28
      %v1763 = vld [vmem:[%s1762] sm:$0x3]
      %v1773 = vunpack.c.l.b16 %v1753
      %v1774 = vunpack.c.l.b16 %v1754
      %v1775 = vunpack.c.l.b16 %v1755
      %v1776 = vunpack.c.l.b16 %v1756
      %v1777 = vunpack.c.l.b16 %v1757
      %v1778 = vunpack.c.l.b16 %v1758
      %v1779 = vunpack.c.l.b16 %v1759
      %v1780 = vunpack.c.l.b16 %v1760
      %v1781 = vunpack.c.l.b16 %v1761
      %v1782 = vpack.c.b16 %v1774, %v1773
      %v1783 = vpack.c.b16 %v1776, %v1775
      %v1784 = vpack.c.b16 %v1778, %v1777
      %v1785 = vpack.c.b16 %v1780, %v1779
      %v1786 = vpack.c.b16 %v1781, %v1781
      %v1788 = vshrl.u32 %v1782, 16
      %v1790 = vshll.u32 %v1782, 16
      %v1792 = vrot.slane %v1790, 1
      %v1793 = vor.u32 %v1788, %v1792
      %v1795 = vshll.u32 %v1783, 16
      %v1797 = vrot.slane %v1795, 1
      %v1798 = vsel %vm320, %v1793, %v1797
      %v1799 = vshrl.u32 %v1783, 16
      %v1801 = vor.u32 %v1799, %v1797
      %v1803 = vshll.u32 %v1784, 16
      %v1805 = vrot.slane %v1803, 1
      %v1806 = vsel %vm320, %v1801, %v1805
      %v1807 = vshrl.u32 %v1784, 16
      %v1809 = vor.u32 %v1807, %v1805
      %v1811 = vshll.u32 %v1785, 16
      %v1813 = vrot.slane %v1811, 1
      %v1814 = vsel %vm320, %v1809, %v1813
      %v1815 = vshrl.u32 %v1785, 16
      %v1817 = vor.u32 %v1815, %v1813
      %v1819 = vshll.u32 %v1786, 16
      %v1821 = vrot.slane %v1819, 1
      %v1822 = vsel %vm320, %v1817, %v1821
      %v1823 = vshrl.u32 %v1786, 16
      %v1825 = vor.u32 %v1823, %v1821
      %v1827 = vsel %vm360, %v1798, 0
      %v1830 = vsel %vm360, %v1806, 0
      %v1833 = vsel %vm360, %v1814, 0
      %v1836 = vsel %vm360, %v1822, 0
      %v1839 = vsel %vm360, %v1825, 0
      %v1842 = vand.u32 %v1763, %v379
      %1844 = vmatpush.bf16.msra.mxu0 0
      %1845 = vmatpush.bf16.msra.mxu0 0
      %1846 = vmatpush.bf16.msra.mxu0 0
      %1847 = vmatpush.bf16.msra.mxu0 0
      %1848 = vmatpush.bf16.msra.mxu0 0
      %1849 = vmatpush.bf16.msra.mxu0 0
      %1850 = vmatpush.bf16.msra.mxu0 0
      %1851 = vmatpush.bf16.msra.mxu0 %v1842
      %1852 = vmatmul.bf16.gmra.mxu0 %v1827
      %v1853 = vpop.f32.mrf.mxu0
      %v1854 = vadd.f32 0.0, %v1853
      %v1855 = vpop.f32.mrf.mxu0
      %v1856 = vadd.f32 0.0, %v1855
      %1857 = vmatmul.bf16.gmra.mxu0 %v1830
      %v1858 = vpop.f32.mrf.mxu0
      %v1859 = vadd.f32 0.0, %v1858
      %v1860 = vpop.f32.mrf.mxu0
      %v1861 = vadd.f32 0.0, %v1860
      %1862 = vmatmul.bf16.gmra.mxu0 %v1833
      %v1863 = vpop.f32.mrf.mxu0
      %v1864 = vadd.f32 0.0, %v1863
      %v1865 = vpop.f32.mrf.mxu0
      %v1866 = vadd.f32 0.0, %v1865
      %1867 = vmatmul.bf16.gmra.mxu0 %v1836
      %v1868 = vpop.f32.mrf.mxu0
      %v1869 = vadd.f32 0.0, %v1868
      %v1870 = vpop.f32.mrf.mxu0
      %v1871 = vadd.f32 0.0, %v1870
      %1872 = vmatmul.bf16.gmra.mxu0 %v1839
      %v1873 = vpop.f32.mrf.mxu0
      %v1874 = vadd.f32 0.0, %v1873
      %v1875 = vpop.f32.mrf.mxu0
      %1876 = vdwg.mxu0
      %v1877 = vadd.f32 %v1744, %v1854
      %v1878 = vadd.f32 %v1745, %v1856
      %v1879 = vadd.f32 %v1746, %v1859
      %v1880 = vadd.f32 %v1747, %v1861
      %v1881 = vadd.f32 %v1748, %v1864
      %v1882 = vadd.f32 %v1749, %v1866
      %v1883 = vadd.f32 %v1750, %v1869
      %v1884 = vadd.f32 %v1751, %v1871
      %v1885 = vadd.f32 %v1752, %v1874
      %v1886 = vld [vmem:[%s1562 + $0x4] sm:$0xe]
      %v1887 = vld [vmem:[%s1562 + $0x8] sm:$0xf]
      %v1888 = vld [vmem:[%s1562 + $0xc] sm:$0xf]
      %v1889 = vld [vmem:[%s1562 + $0x10] sm:$0xf]
      %v1890 = vld [vmem:[%s1562 + $0x14] sm:$0xf]
      %v1891 = vld [vmem:[%s1562 + $0x18] sm:$0xf]
      %v1892 = vld [vmem:[%s1562 + $0x1c] sm:$0xf]
      %v1893 = vld [vmem:[%s1562 + $0x20] sm:$0xf]
      %v1894 = vld [vmem:[%s1562 + $0x24] sm:$0xf]
      %v1895 = vld [vmem:[%s1562 + $0x28] sm:$0x1]
      %s1896 = scalar_lea.vmem %s1, 30
      %v1897 = vld [vmem:[%s1896] sm:$0x3]
      %v1908 = vunpack.c.l.b16 %v1886
      %v1909 = vunpack.c.l.b16 %v1887
      %v1910 = vunpack.c.l.b16 %v1888
      %v1911 = vunpack.c.l.b16 %v1889
      %v1912 = vunpack.c.l.b16 %v1890
      %v1913 = vunpack.c.l.b16 %v1891
      %v1914 = vunpack.c.l.b16 %v1892
      %v1915 = vunpack.c.l.b16 %v1893
      %v1916 = vunpack.c.l.b16 %v1894
      %v1917 = vunpack.c.l.b16 %v1895
      %v1918 = vpack.c.b16 %v1909, %v1908
      %v1919 = vpack.c.b16 %v1911, %v1910
      %v1920 = vpack.c.b16 %v1913, %v1912
      %v1921 = vpack.c.b16 %v1915, %v1914
      %v1922 = vpack.c.b16 %v1917, %v1916
      %v1923 = vrot.slane %v1918, 1
      %v1924 = vrot.slane %v1919, 1
      %v1925 = vsel %vm632, %v1923, %v1924
      %v1926 = vrot.slane %v1920, 1
      %v1927 = vsel %vm632, %v1924, %v1926
      %v1928 = vrot.slane %v1921, 1
      %v1929 = vsel %vm632, %v1926, %v1928
      %v1930 = vrot.slane %v1922, 1
      %v1931 = vsel %vm632, %v1928, %v1930
      %v1933 = vsel %vm360, %v1925, 0
      %v1936 = vsel %vm360, %v1927, 0
      %v1939 = vsel %vm360, %v1929, 0
      %v1942 = vsel %vm360, %v1931, 0
      %v1945 = vsel %vm360, %v1930, 0
      %v1948 = vand.u32 %v1897, %v379
      %1950 = vmatpush.bf16.msra.mxu0 0
      %1951 = vmatpush.bf16.msra.mxu0 0
      %1952 = vmatpush.bf16.msra.mxu0 0
      %1953 = vmatpush.bf16.msra.mxu0 0
      %1954 = vmatpush.bf16.msra.mxu0 0
      %1955 = vmatpush.bf16.msra.mxu0 0
      %1956 = vmatpush.bf16.msra.mxu0 0
      %1957 = vmatpush.bf16.msra.mxu0 %v1948
      %1958 = vmatmul.bf16.gmra.mxu0 %v1933
      %v1959 = vpop.f32.mrf.mxu0
      %v1960 = vadd.f32 0.0, %v1959
      %v1961 = vpop.f32.mrf.mxu0
      %v1962 = vadd.f32 0.0, %v1961
      %1963 = vmatmul.bf16.gmra.mxu0 %v1936
      %v1964 = vpop.f32.mrf.mxu0
      %v1965 = vadd.f32 0.0, %v1964
      %v1966 = vpop.f32.mrf.mxu0
      %v1967 = vadd.f32 0.0, %v1966
      %1968 = vmatmul.bf16.gmra.mxu0 %v1939
      %v1969 = vpop.f32.mrf.mxu0
      %v1970 = vadd.f32 0.0, %v1969
      %v1971 = vpop.f32.mrf.mxu0
      %v1972 = vadd.f32 0.0, %v1971
      %1973 = vmatmul.bf16.gmra.mxu0 %v1942
      %v1974 = vpop.f32.mrf.mxu0
      %v1975 = vadd.f32 0.0, %v1974
      %v1976 = vpop.f32.mrf.mxu0
      %v1977 = vadd.f32 0.0, %v1976
      %1978 = vmatmul.bf16.gmra.mxu0 %v1945
      %v1979 = vpop.f32.mrf.mxu0
      %v1980 = vadd.f32 0.0, %v1979
      %v1981 = vpop.f32.mrf.mxu0
      %1982 = vdwg.mxu0
      %v1983 = vadd.f32 %v1877, %v1960
      %v1984 = vadd.f32 %v1878, %v1962
      %v1985 = vadd.f32 %v1879, %v1965
      %v1986 = vadd.f32 %v1880, %v1967
      %v1987 = vadd.f32 %v1881, %v1970
      %v1988 = vadd.f32 %v1882, %v1972
      %v1989 = vadd.f32 %v1883, %v1975
      %v1990 = vadd.f32 %v1884, %v1977
      %v1991 = vadd.f32 %v1885, %v1980
      %v1992 = vld [vmem:[%s2] sm:$0x1]
      %v1994 = vperm.slane %v1992, 0
      %v1996 = vadd.f32 %v1983, %v1994
      %v1997 = vadd.f32 %v1984, %v1994
      %v1998 = vadd.f32 %v1985, %v1994
      %v1999 = vadd.f32 %v1986, %v1994
      %v2000 = vadd.f32 %v1987, %v1994
      %v2001 = vadd.f32 %v1988, %v1994
      %v2002 = vadd.f32 %v1989, %v1994
      %v2003 = vadd.f32 %v1990, %v1994
      %v2004 = vadd.f32 %v1991, %v1994
      %vm2005 = vcmp.ge.f32.partialorder %v1996, 0.0
      %vm2006 = vcmp.ge.f32.partialorder %v1997, 0.0
      %vm2007 = vcmp.ge.f32.partialorder %v1998, 0.0
      %vm2008 = vcmp.ge.f32.partialorder %v1999, 0.0
      %vm2009 = vcmp.ge.f32.partialorder %v2000, 0.0
      %vm2010 = vcmp.ge.f32.partialorder %v2001, 0.0
      %vm2011 = vcmp.ge.f32.partialorder %v2002, 0.0
      %vm2012 = vcmp.ge.f32.partialorder %v2003, 0.0
      %vm2013 = vcmp.ge.f32.partialorder %v2004, 0.0
      %v2014 = vmul.f32 %v1996, 0.2
      %v2015 = vmul.f32 %v1997, 0.2
      %v2016 = vmul.f32 %v1998, 0.2
      %v2017 = vmul.f32 %v1999, 0.2
      %v2018 = vmul.f32 %v2000, 0.2
      %v2019 = vmul.f32 %v2001, 0.2
      %v2020 = vmul.f32 %v2002, 0.2
      %v2021 = vmul.f32 %v2003, 0.2
      %v2022 = vmul.f32 %v2004, 0.2
      %v2023 = vsel %vm2005, %v1996, %v2014
      %v2024 = vsel %vm2006, %v1997, %v2015
      %v2025 = vsel %vm2007, %v1998, %v2016
      %v2026 = vsel %vm2008, %v1999, %v2017
      %v2027 = vsel %vm2009, %v2000, %v2018
      %v2028 = vsel %vm2010, %v2001, %v2019
      %v2029 = vsel %vm2011, %v2002, %v2020
      %v2030 = vsel %vm2012, %v2003, %v2021
      %v2031 = vsel %vm2013, %v2004, %v2022
      %vm2032 = vcmask 64512
      %2033 = vst.msk [vmem:[#allocation2] sm:$0xff] %vm2032, 0.0
      %2034 = vst.msk [vmem:[#allocation2 + $0x8] sm:$0xff] %vm2032, 0.0
      %2035 = vst.msk [vmem:[#allocation2 + $0x10] sm:$0xff] %vm2032, 0.0
      %2036 = vst.msk [vmem:[#allocation2 + $0x18] sm:$0xff] %vm2032, 0.0
      %2037 = vst.msk [vmem:[#allocation2 + $0x20] sm:$0xff] %vm2032, 0.0
      %2038 = vst.msk [vmem:[#allocation2 + $0x28] sm:$0xff] %vm2032, 0.0
      %2039 = vst.msk [vmem:[#allocation2 + $0x30] sm:$0xff] %vm2032, 0.0
      %2040 = vst.msk [vmem:[#allocation2 + $0x38] sm:$0xff] %vm2032, 0.0
      %2041 = vst.msk [vmem:[#allocation2 + $0x40] sm:$0xff] %vm2032, 0.0
      %2042 = vst.msk [vmem:[#allocation2 + $0x48] sm:$0xff] %vm2032, 0.0
      %2043 = vst.msk [vmem:[#allocation2 + $0x50] sm:$0xff] %vm2032, 0.0
      %2044 = vst.msk [vmem:[#allocation2 + $0x58] sm:$0xff] %vm2032, 0.0
      %vm2045 = vcmask 60416
      %2046 = vst.msk [vmem:[#allocation2 + $0x60] sm:$0xf] %vm2045, 0.0
      %2047 = vst.msk [vmem:[#allocation2 + $0xb] sm:$0xff] %vm2032, %v2023
      %vm2048 = vcmask 64513
      %2049 = vst.msk [vmem:[#allocation2 + $0x14] sm:$0xfe] %vm2048, %v2024
      %vm2050 = vcmask 57344
      %2051 = vst.msk [vmem:[#allocation2 + $0x1c] sm:$0x1] %vm2050, %v2025
      %vm2052 = vcmask 64514
      %2053 = vst.msk [vmem:[#allocation2 + $0x1d] sm:$0xfc] %vm2052, %v2025
      %vm2054 = vcmask 58368
      %2055 = vst.msk [vmem:[#allocation2 + $0x25] sm:$0x3] %vm2054, %v2026
      %vm2056 = vcmask 64515
      %2057 = vst.msk [vmem:[#allocation2 + $0x26] sm:$0xf8] %vm2056, %v2026
      %vm2058 = vcmask 59392
      %2059 = vst.msk [vmem:[#allocation2 + $0x2e] sm:$0x7] %vm2058, %v2027
      %vm2060 = vcmask 64516
      %2061 = vst.msk [vmem:[#allocation2 + $0x2f] sm:$0xf0] %vm2060, %v2027
      %2062 = vst.msk [vmem:[#allocation2 + $0x37] sm:$0xf] %vm2045, %v2028
      %vm2063 = vcmask 64517
      %2064 = vst.msk [vmem:[#allocation2 + $0x38] sm:$0xe0] %vm2063, %v2028
      %vm2065 = vcmask 61440
      %2066 = vst.msk [vmem:[#allocation2 + $0x40] sm:$0x1f] %vm2065, %v2029
      %vm2067 = vcmask 64518
      %2068 = vst.msk [vmem:[#allocation2 + $0x41] sm:$0xc0] %vm2067, %v2029
      %vm2069 = vcmask 62464
      %2070 = vst.msk [vmem:[#allocation2 + $0x49] sm:$0x3f] %vm2069, %v2030
      %vm2071 = vcmask 64519
      %2072 = vst.msk [vmem:[#allocation2 + $0x4a] sm:$0x80] %vm2071, %v2030
      %vm2073 = vcmask 63488
      %2074 = vst.msk [vmem:[#allocation2 + $0x52] sm:$0x7f] %vm2073, %v2031
      %v2075 = vld [vmem:[#allocation2] sm:$0xff]
      %v2076 = vld [vmem:[#allocation2 + $0x8] sm:$0xff]
      %v2077 = vld [vmem:[#allocation2 + $0x10] sm:$0xff]
      %v2078 = vld [vmem:[#allocation2 + $0x18] sm:$0xff]
      %v2079 = vld [vmem:[#allocation2 + $0x20] sm:$0xff]
      %v2080 = vld [vmem:[#allocation2 + $0x28] sm:$0xff]
      %v2081 = vld [vmem:[#allocation2 + $0x30] sm:$0xff]
      %v2082 = vld [vmem:[#allocation2 + $0x38] sm:$0xff]
      %v2083 = vld [vmem:[#allocation2 + $0x40] sm:$0xff]
      %v2084 = vld [vmem:[#allocation2 + $0x48] sm:$0x3f]
      %v2085 = vpack.c.bf16 %v2076, %v2075
      %v2086 = vpack.c.bf16 %v2078, %v2077
      %v2087 = vpack.c.bf16 %v2080, %v2079
      %v2088 = vpack.c.bf16 %v2082, %v2081
      %v2089 = vpack.c.bf16 %v2084, %v2083
      %v2090 = vld [vmem:[%s3] sm:$0xf]
      %v2091 = vld [vmem:[#allocation2 + $0x1] sm:$0xff]
      %v2092 = vld [vmem:[#allocation2 + $0x9] sm:$0xff]
      %v2093 = vld [vmem:[#allocation2 + $0x11] sm:$0xff]
      %v2094 = vld [vmem:[#allocation2 + $0x19] sm:$0xff]
      %v2095 = vld [vmem:[#allocation2 + $0x21] sm:$0xff]
      %v2096 = vld [vmem:[#allocation2 + $0x29] sm:$0xff]
      %v2097 = vld [vmem:[#allocation2 + $0x31] sm:$0xff]
      %v2098 = vld [vmem:[#allocation2 + $0x39] sm:$0xff]
      %v2099 = vld [vmem:[#allocation2 + $0x41] sm:$0xff]
      %v2100 = vld [vmem:[#allocation2 + $0x49] sm:$0x3f]
      %v2101 = vpack.c.bf16 %v2092, %v2091
      %v2102 = vpack.c.bf16 %v2094, %v2093
      %v2103 = vpack.c.bf16 %v2096, %v2095
      %v2104 = vpack.c.bf16 %v2098, %v2097
      %v2105 = vpack.c.bf16 %v2100, %v2099
      %s2106 = scalar_lea.vmem %s3, 4
      %v2107 = vld [vmem:[%s2106] sm:$0xf]
      %v2109 = vsel %vm2032, %v2101, 0
      %v2112 = vsel %vm2032, %v2102, 0
      %v2115 = vsel %vm2032, %v2103, 0
      %v2118 = vsel %vm2032, %v2104, 0
      %v2121 = vsel %vm2032, %v2105, 0
      %vm2123 = vcmask 1043456
      %v2125 = vsel %vm2123, %v2107, 0
      %2127 = vmatpush.bf16.msra.mxu0 0
      %2128 = vmatpush.bf16.msra.mxu0 0
      %2129 = vmatpush.bf16.msra.mxu0 0
      %2130 = vmatpush.bf16.msra.mxu0 0
      %2131 = vmatpush.bf16.msra.mxu0 0
      %2132 = vmatpush.bf16.msra.mxu0 0
      %2133 = vmatpush.bf16.msra.mxu0 0
      %2134 = vmatpush.bf16.msra.mxu0 %v2125
      %2135 = vmatmul.bf16.gmra.mxu0 %v2109
      %v2136 = vpop.f32.mrf.mxu0
      %v2137 = vadd.f32 0.0, %v2136
      %v2138 = vpop.f32.mrf.mxu0
      %v2139 = vadd.f32 0.0, %v2138
      %2140 = vmatmul.bf16.gmra.mxu0 %v2112
      %v2141 = vpop.f32.mrf.mxu0
      %v2142 = vadd.f32 0.0, %v2141
      %v2143 = vpop.f32.mrf.mxu0
      %v2144 = vadd.f32 0.0, %v2143
      %2145 = vmatmul.bf16.gmra.mxu0 %v2115
      %v2146 = vpop.f32.mrf.mxu0
      %v2147 = vadd.f32 0.0, %v2146
      %v2148 = vpop.f32.mrf.mxu0
      %v2149 = vadd.f32 0.0, %v2148
      %2150 = vmatmul.bf16.gmra.mxu0 %v2118
      %v2151 = vpop.f32.mrf.mxu0
      %v2152 = vadd.f32 0.0, %v2151
      %v2153 = vpop.f32.mrf.mxu0
      %v2154 = vadd.f32 0.0, %v2153
      %2155 = vmatmul.bf16.gmra.mxu0 %v2121
      %v2156 = vpop.f32.mrf.mxu0
      %v2157 = vadd.f32 0.0, %v2156
      %v2158 = vpop.f32.mrf.mxu0
      %v2159 = vadd.f32 0.0, %v2158
      %2160 = vdwg.mxu0
      %v2162 = vsel %vm2032, %v2085, 0
      %v2165 = vsel %vm2032, %v2086, 0
      %v2168 = vsel %vm2032, %v2087, 0
      %v2171 = vsel %vm2032, %v2088, 0
      %v2174 = vsel %vm2032, %v2089, 0
      %v2177 = vsel %vm2123, %v2090, 0
      %2179 = vmatpush.bf16.msra.mxu0 0
      %2180 = vmatpush.bf16.msra.mxu0 0
      %2181 = vmatpush.bf16.msra.mxu0 0
      %2182 = vmatpush.bf16.msra.mxu0 0
      %2183 = vmatpush.bf16.msra.mxu0 0
      %2184 = vmatpush.bf16.msra.mxu0 0
      %2185 = vmatpush.bf16.msra.mxu0 0
      %2186 = vmatpush.bf16.msra.mxu0 %v2177
      %2187 = vmatmul.bf16.gmra.mxu0 %v2162
      %v2188 = vpop.f32.mrf.mxu0
      %v2189 = vadd.f32 %v2137, %v2188
      %v2190 = vpop.f32.mrf.mxu0
      %v2191 = vadd.f32 %v2139, %v2190
      %2192 = vmatmul.bf16.gmra.mxu0 %v2165
      %v2193 = vpop.f32.mrf.mxu0
      %v2194 = vadd.f32 %v2142, %v2193
      %v2195 = vpop.f32.mrf.mxu0
      %v2196 = vadd.f32 %v2144, %v2195
      %2197 = vmatmul.bf16.gmra.mxu0 %v2168
      %v2198 = vpop.f32.mrf.mxu0
      %v2199 = vadd.f32 %v2147, %v2198
      %v2200 = vpop.f32.mrf.mxu0
      %v2201 = vadd.f32 %v2149, %v2200
      %2202 = vmatmul.bf16.gmra.mxu0 %v2171
      %v2203 = vpop.f32.mrf.mxu0
      %v2204 = vadd.f32 %v2152, %v2203
      %v2205 = vpop.f32.mrf.mxu0
      %v2206 = vadd.f32 %v2154, %v2205
      %2207 = vmatmul.bf16.gmra.mxu0 %v2174
      %v2208 = vpop.f32.mrf.mxu0
      %v2209 = vadd.f32 %v2157, %v2208
      %v2210 = vpop.f32.mrf.mxu0
      %v2211 = vadd.f32 %v2159, %v2210
      %2212 = vdwg.mxu0
      %v2213 = vld [vmem:[#allocation2 + $0x2] sm:$0xff]
      %v2214 = vld [vmem:[#allocation2 + $0xa] sm:$0xff]
      %v2215 = vld [vmem:[#allocation2 + $0x12] sm:$0xff]
      %v2216 = vld [vmem:[#allocation2 + $0x1a] sm:$0xff]
      %v2217 = vld [vmem:[#allocation2 + $0x22] sm:$0xff]
      %v2218 = vld [vmem:[#allocation2 + $0x2a] sm:$0xff]
      %v2219 = vld [vmem:[#allocation2 + $0x32] sm:$0xff]
      %v2220 = vld [vmem:[#allocation2 + $0x3a] sm:$0xff]
      %v2221 = vld [vmem:[#allocation2 + $0x42] sm:$0xff]
      %v2222 = vld [vmem:[#allocation2 + $0x4a] sm:$0x3f]
      %v2223 = vpack.c.bf16 %v2214, %v2213
      %v2224 = vpack.c.bf16 %v2216, %v2215
      %v2225 = vpack.c.bf16 %v2218, %v2217
      %v2226 = vpack.c.bf16 %v2220, %v2219
      %v2227 = vpack.c.bf16 %v2222, %v2221
      %s2228 = scalar_lea.vmem %s3, 8
      %v2229 = vld [vmem:[%s2228] sm:$0xf]
      %v2231 = vsel %vm2032, %v2223, 0
      %v2234 = vsel %vm2032, %v2224, 0
      %v2237 = vsel %vm2032, %v2225, 0
      %v2240 = vsel %vm2032, %v2226, 0
      %v2243 = vsel %vm2032, %v2227, 0
      %v2246 = vsel %vm2123, %v2229, 0
      %2248 = vmatpush.bf16.msra.mxu0 0
      %2249 = vmatpush.bf16.msra.mxu0 0
      %2250 = vmatpush.bf16.msra.mxu0 0
      %2251 = vmatpush.bf16.msra.mxu0 0
      %2252 = vmatpush.bf16.msra.mxu0 0
      %2253 = vmatpush.bf16.msra.mxu0 0
      %2254 = vmatpush.bf16.msra.mxu0 0
      %2255 = vmatpush.bf16.msra.mxu0 %v2246
      %2256 = vmatmul.bf16.gmra.mxu0 %v2231
      %v2257 = vpop.f32.mrf.mxu0
      %v2258 = vadd.f32 0.0, %v2257
      %v2259 = vpop.f32.mrf.mxu0
      %v2260 = vadd.f32 0.0, %v2259
      %2261 = vmatmul.bf16.gmra.mxu0 %v2234
      %v2262 = vpop.f32.mrf.mxu0
      %v2263 = vadd.f32 0.0, %v2262
      %v2264 = vpop.f32.mrf.mxu0
      %v2265 = vadd.f32 0.0, %v2264
      %2266 = vmatmul.bf16.gmra.mxu0 %v2237
      %v2267 = vpop.f32.mrf.mxu0
      %v2268 = vadd.f32 0.0, %v2267
      %v2269 = vpop.f32.mrf.mxu0
      %v2270 = vadd.f32 0.0, %v2269
      %2271 = vmatmul.bf16.gmra.mxu0 %v2240
      %v2272 = vpop.f32.mrf.mxu0
      %v2273 = vadd.f32 0.0, %v2272
      %v2274 = vpop.f32.mrf.mxu0
      %v2275 = vadd.f32 0.0, %v2274
      %2276 = vmatmul.bf16.gmra.mxu0 %v2243
      %v2277 = vpop.f32.mrf.mxu0
      %v2278 = vadd.f32 0.0, %v2277
      %v2279 = vpop.f32.mrf.mxu0
      %v2280 = vadd.f32 0.0, %v2279
      %2281 = vdwg.mxu0
      %v2282 = vadd.f32 %v2189, %v2258
      %v2283 = vadd.f32 %v2191, %v2260
      %v2284 = vadd.f32 %v2194, %v2263
      %v2285 = vadd.f32 %v2196, %v2265
      %v2286 = vadd.f32 %v2199, %v2268
      %v2287 = vadd.f32 %v2201, %v2270
      %v2288 = vadd.f32 %v2204, %v2273
      %v2289 = vadd.f32 %v2206, %v2275
      %v2290 = vadd.f32 %v2209, %v2278
      %v2291 = vadd.f32 %v2211, %v2280
      %v2292 = vld [vmem:[#allocation2 + $0xa] sm:$0xff]
      %v2293 = vld [vmem:[#allocation2 + $0x12] sm:$0xff]
      %v2294 = vld [vmem:[#allocation2 + $0x1a] sm:$0xff]
      %v2295 = vld [vmem:[#allocation2 + $0x22] sm:$0xff]
      %v2296 = vld [vmem:[#allocation2 + $0x2a] sm:$0xff]
      %v2297 = vld [vmem:[#allocation2 + $0x32] sm:$0xff]
      %v2298 = vld [vmem:[#allocation2 + $0x3a] sm:$0xff]
      %v2299 = vld [vmem:[#allocation2 + $0x42] sm:$0xff]
      %v2300 = vld [vmem:[#allocation2 + $0x4a] sm:$0xff]
      %v2301 = vld [vmem:[#allocation2 + $0x52] sm:$0x3f]
      %v2302 = vpack.c.bf16 %v2293, %v2292
      %v2303 = vpack.c.bf16 %v2295, %v2294
      %v2304 = vpack.c.bf16 %v2297, %v2296
      %v2305 = vpack.c.bf16 %v2299, %v2298
      %v2306 = vpack.c.bf16 %v2301, %v2300
      %s2307 = scalar_lea.vmem %s3, 12
      %v2308 = vld [vmem:[%s2307] sm:$0xf]
      %v2310 = vsel %vm2032, %v2302, 0
      %v2313 = vsel %vm2032, %v2303, 0
      %v2316 = vsel %vm2032, %v2304, 0
      %v2319 = vsel %vm2032, %v2305, 0
      %v2322 = vsel %vm2032, %v2306, 0
      %v2325 = vsel %vm2123, %v2308, 0
      %2327 = vmatpush.bf16.msra.mxu0 0
      %2328 = vmatpush.bf16.msra.mxu0 0
      %2329 = vmatpush.bf16.msra.mxu0 0
      %2330 = vmatpush.bf16.msra.mxu0 0
      %2331 = vmatpush.bf16.msra.mxu0 0
      %2332 = vmatpush.bf16.msra.mxu0 0
      %2333 = vmatpush.bf16.msra.mxu0 0
      %2334 = vmatpush.bf16.msra.mxu0 %v2325
      %2335 = vmatmul.bf16.gmra.mxu0 %v2310
      %v2336 = vpop.f32.mrf.mxu0
      %v2337 = vadd.f32 0.0, %v2336
      %v2338 = vpop.f32.mrf.mxu0
      %v2339 = vadd.f32 0.0, %v2338
      %2340 = vmatmul.bf16.gmra.mxu0 %v2313
      %v2341 = vpop.f32.mrf.mxu0
      %v2342 = vadd.f32 0.0, %v2341
      %v2343 = vpop.f32.mrf.mxu0
      %v2344 = vadd.f32 0.0, %v2343
      %2345 = vmatmul.bf16.gmra.mxu0 %v2316
      %v2346 = vpop.f32.mrf.mxu0
      %v2347 = vadd.f32 0.0, %v2346
      %v2348 = vpop.f32.mrf.mxu0
      %v2349 = vadd.f32 0.0, %v2348
      %2350 = vmatmul.bf16.gmra.mxu0 %v2319
      %v2351 = vpop.f32.mrf.mxu0
      %v2352 = vadd.f32 0.0, %v2351
      %v2353 = vpop.f32.mrf.mxu0
      %v2354 = vadd.f32 0.0, %v2353
      %2355 = vmatmul.bf16.gmra.mxu0 %v2322
      %v2356 = vpop.f32.mrf.mxu0
      %v2357 = vadd.f32 0.0, %v2356
      %v2358 = vpop.f32.mrf.mxu0
      %v2359 = vadd.f32 0.0, %v2358
      %2360 = vdwg.mxu0
      %v2361 = vadd.f32 %v2282, %v2337
      %v2362 = vadd.f32 %v2283, %v2339
      %v2363 = vadd.f32 %v2284, %v2342
      %v2364 = vadd.f32 %v2285, %v2344
      %v2365 = vadd.f32 %v2286, %v2347
      %v2366 = vadd.f32 %v2287, %v2349
      %v2367 = vadd.f32 %v2288, %v2352
      %v2368 = vadd.f32 %v2289, %v2354
      %v2369 = vadd.f32 %v2290, %v2357
      %v2370 = vadd.f32 %v2291, %v2359
      %v2371 = vld [vmem:[#allocation2 + $0xb] sm:$0xff]
      %v2372 = vld [vmem:[#allocation2 + $0x13] sm:$0xff]
      %v2373 = vld [vmem:[#allocation2 + $0x1b] sm:$0xff]
      %v2374 = vld [vmem:[#allocation2 + $0x23] sm:$0xff]
      %v2375 = vld [vmem:[#allocation2 + $0x2b] sm:$0xff]
      %v2376 = vld [vmem:[#allocation2 + $0x33] sm:$0xff]
      %v2377 = vld [vmem:[#allocation2 + $0x3b] sm:$0xff]
      %v2378 = vld [vmem:[#allocation2 + $0x43] sm:$0xff]
      %v2379 = vld [vmem:[#allocation2 + $0x4b] sm:$0xff]
      %v2380 = vld [vmem:[#allocation2 + $0x53] sm:$0x3f]
      %v2381 = vpack.c.bf16 %v2372, %v2371
      %v2382 = vpack.c.bf16 %v2374, %v2373
      %v2383 = vpack.c.bf16 %v2376, %v2375
      %v2384 = vpack.c.bf16 %v2378, %v2377
      %v2385 = vpack.c.bf16 %v2380, %v2379
      %s2386 = scalar_lea.vmem %s3, 16
      %v2387 = vld [vmem:[%s2386] sm:$0xf]
      %v2389 = vsel %vm2032, %v2381, 0
      %v2392 = vsel %vm2032, %v2382, 0
      %v2395 = vsel %vm2032, %v2383, 0
      %v2398 = vsel %vm2032, %v2384, 0
      %v2401 = vsel %vm2032, %v2385, 0
      %v2404 = vsel %vm2123, %v2387, 0
      %2406 = vmatpush.bf16.msra.mxu0 0
      %2407 = vmatpush.bf16.msra.mxu0 0
      %2408 = vmatpush.bf16.msra.mxu0 0
      %2409 = vmatpush.bf16.msra.mxu0 0
      %2410 = vmatpush.bf16.msra.mxu0 0
      %2411 = vmatpush.bf16.msra.mxu0 0
      %2412 = vmatpush.bf16.msra.mxu0 0
      %2413 = vmatpush.bf16.msra.mxu0 %v2404
      %2414 = vmatmul.bf16.gmra.mxu0 %v2389
      %v2415 = vpop.f32.mrf.mxu0
      %v2416 = vadd.f32 0.0, %v2415
      %v2417 = vpop.f32.mrf.mxu0
      %v2418 = vadd.f32 0.0, %v2417
      %2419 = vmatmul.bf16.gmra.mxu0 %v2392
      %v2420 = vpop.f32.mrf.mxu0
      %v2421 = vadd.f32 0.0, %v2420
      %v2422 = vpop.f32.mrf.mxu0
      %v2423 = vadd.f32 0.0, %v2422
      %2424 = vmatmul.bf16.gmra.mxu0 %v2395
      %v2425 = vpop.f32.mrf.mxu0
      %v2426 = vadd.f32 0.0, %v2425
      %v2427 = vpop.f32.mrf.mxu0
      %v2428 = vadd.f32 0.0, %v2427
      %2429 = vmatmul.bf16.gmra.mxu0 %v2398
      %v2430 = vpop.f32.mrf.mxu0
      %v2431 = vadd.f32 0.0, %v2430
      %v2432 = vpop.f32.mrf.mxu0
      %v2433 = vadd.f32 0.0, %v2432
      %2434 = vmatmul.bf16.gmra.mxu0 %v2401
      %v2435 = vpop.f32.mrf.mxu0
      %v2436 = vadd.f32 0.0, %v2435
      %v2437 = vpop.f32.mrf.mxu0
      %v2438 = vadd.f32 0.0, %v2437
      %2439 = vdwg.mxu0
      %v2440 = vadd.f32 %v2361, %v2416
      %v2441 = vadd.f32 %v2362, %v2418
      %v2442 = vadd.f32 %v2363, %v2421
      %v2443 = vadd.f32 %v2364, %v2423
      %v2444 = vadd.f32 %v2365, %v2426
      %v2445 = vadd.f32 %v2366, %v2428
      %v2446 = vadd.f32 %v2367, %v2431
      %v2447 = vadd.f32 %v2368, %v2433
      %v2448 = vadd.f32 %v2369, %v2436
      %v2449 = vadd.f32 %v2370, %v2438
      %v2450 = vld [vmem:[#allocation2 + $0xc] sm:$0xff]
      %v2451 = vld [vmem:[#allocation2 + $0x14] sm:$0xff]
      %v2452 = vld [vmem:[#allocation2 + $0x1c] sm:$0xff]
      %v2453 = vld [vmem:[#allocation2 + $0x24] sm:$0xff]
      %v2454 = vld [vmem:[#allocation2 + $0x2c] sm:$0xff]
      %v2455 = vld [vmem:[#allocation2 + $0x34] sm:$0xff]
      %v2456 = vld [vmem:[#allocation2 + $0x3c] sm:$0xff]
      %v2457 = vld [vmem:[#allocation2 + $0x44] sm:$0xff]
      %v2458 = vld [vmem:[#allocation2 + $0x4c] sm:$0xff]
      %v2459 = vld [vmem:[#allocation2 + $0x54] sm:$0x3f]
      %v2460 = vpack.c.bf16 %v2451, %v2450
      %v2461 = vpack.c.bf16 %v2453, %v2452
      %v2462 = vpack.c.bf16 %v2455, %v2454
      %v2463 = vpack.c.bf16 %v2457, %v2456
      %v2464 = vpack.c.bf16 %v2459, %v2458
      %s2465 = scalar_lea.vmem %s3, 20
      %v2466 = vld [vmem:[%s2465] sm:$0xf]
      %v2468 = vsel %vm2032, %v2460, 0
      %v2471 = vsel %vm2032, %v2461, 0
      %v2474 = vsel %vm2032, %v2462, 0
      %v2477 = vsel %vm2032, %v2463, 0
      %v2480 = vsel %vm2032, %v2464, 0
      %v2483 = vsel %vm2123, %v2466, 0
      %2485 = vmatpush.bf16.msra.mxu0 0
      %2486 = vmatpush.bf16.msra.mxu0 0
      %2487 = vmatpush.bf16.msra.mxu0 0
      %2488 = vmatpush.bf16.msra.mxu0 0
      %2489 = vmatpush.bf16.msra.mxu0 0
      %2490 = vmatpush.bf16.msra.mxu0 0
      %2491 = vmatpush.bf16.msra.mxu0 0
      %2492 = vmatpush.bf16.msra.mxu0 %v2483
      %2493 = vmatmul.bf16.gmra.mxu0 %v2468
      %v2494 = vpop.f32.mrf.mxu0
      %v2495 = vadd.f32 0.0, %v2494
      %v2496 = vpop.f32.mrf.mxu0
      %v2497 = vadd.f32 0.0, %v2496
      %2498 = vmatmul.bf16.gmra.mxu0 %v2471
      %v2499 = vpop.f32.mrf.mxu0
      %v2500 = vadd.f32 0.0, %v2499
      %v2501 = vpop.f32.mrf.mxu0
      %v2502 = vadd.f32 0.0, %v2501
      %2503 = vmatmul.bf16.gmra.mxu0 %v2474
      %v2504 = vpop.f32.mrf.mxu0
      %v2505 = vadd.f32 0.0, %v2504
      %v2506 = vpop.f32.mrf.mxu0
      %v2507 = vadd.f32 0.0, %v2506
      %2508 = vmatmul.bf16.gmra.mxu0 %v2477
      %v2509 = vpop.f32.mrf.mxu0
      %v2510 = vadd.f32 0.0, %v2509
      %v2511 = vpop.f32.mrf.mxu0
      %v2512 = vadd.f32 0.0, %v2511
      %2513 = vmatmul.bf16.gmra.mxu0 %v2480
      %v2514 = vpop.f32.mrf.mxu0
      %v2515 = vadd.f32 0.0, %v2514
      %v2516 = vpop.f32.mrf.mxu0
      %v2517 = vadd.f32 0.0, %v2516
      %2518 = vdwg.mxu0
      %v2519 = vadd.f32 %v2440, %v2495
      %v2520 = vadd.f32 %v2441, %v2497
      %v2521 = vadd.f32 %v2442, %v2500
      %v2522 = vadd.f32 %v2443, %v2502
      %v2523 = vadd.f32 %v2444, %v2505
      %v2524 = vadd.f32 %v2445, %v2507
      %v2525 = vadd.f32 %v2446, %v2510
      %v2526 = vadd.f32 %v2447, %v2512
      %v2527 = vadd.f32 %v2448, %v2515
      %v2528 = vadd.f32 %v2449, %v2517
      %v2529 = vld [vmem:[#allocation2 + $0x14] sm:$0xff]
      %v2530 = vld [vmem:[#allocation2 + $0x1c] sm:$0xff]
      %v2531 = vld [vmem:[#allocation2 + $0x24] sm:$0xff]
      %v2532 = vld [vmem:[#allocation2 + $0x2c] sm:$0xff]
      %v2533 = vld [vmem:[#allocation2 + $0x34] sm:$0xff]
      %v2534 = vld [vmem:[#allocation2 + $0x3c] sm:$0xff]
      %v2535 = vld [vmem:[#allocation2 + $0x44] sm:$0xff]
      %v2536 = vld [vmem:[#allocation2 + $0x4c] sm:$0xff]
      %v2537 = vld [vmem:[#allocation2 + $0x54] sm:$0xff]
      %v2538 = vld [vmem:[#allocation2 + $0x5c] sm:$0x3f]
      %v2539 = vpack.c.bf16 %v2530, %v2529
      %v2540 = vpack.c.bf16 %v2532, %v2531
      %v2541 = vpack.c.bf16 %v2534, %v2533
      %v2542 = vpack.c.bf16 %v2536, %v2535
      %v2543 = vpack.c.bf16 %v2538, %v2537
      %s2544 = scalar_lea.vmem %s3, 24
      %v2545 = vld [vmem:[%s2544] sm:$0xf]
      %v2547 = vsel %vm2032, %v2539, 0
      %v2550 = vsel %vm2032, %v2540, 0
      %v2553 = vsel %vm2032, %v2541, 0
      %v2556 = vsel %vm2032, %v2542, 0
      %v2559 = vsel %vm2032, %v2543, 0
      %v2562 = vsel %vm2123, %v2545, 0
      %2564 = vmatpush.bf16.msra.mxu0 0
      %2565 = vmatpush.bf16.msra.mxu0 0
      %2566 = vmatpush.bf16.msra.mxu0 0
      %2567 = vmatpush.bf16.msra.mxu0 0
      %2568 = vmatpush.bf16.msra.mxu0 0
      %2569 = vmatpush.bf16.msra.mxu0 0
      %2570 = vmatpush.bf16.msra.mxu0 0
      %2571 = vmatpush.bf16.msra.mxu0 %v2562
      %2572 = vmatmul.bf16.gmra.mxu0 %v2547
      %v2573 = vpop.f32.mrf.mxu0
      %v2574 = vadd.f32 0.0, %v2573
      %v2575 = vpop.f32.mrf.mxu0
      %v2576 = vadd.f32 0.0, %v2575
      %2577 = vmatmul.bf16.gmra.mxu0 %v2550
      %v2578 = vpop.f32.mrf.mxu0
      %v2579 = vadd.f32 0.0, %v2578
      %v2580 = vpop.f32.mrf.mxu0
      %v2581 = vadd.f32 0.0, %v2580
      %2582 = vmatmul.bf16.gmra.mxu0 %v2553
      %v2583 = vpop.f32.mrf.mxu0
      %v2584 = vadd.f32 0.0, %v2583
      %v2585 = vpop.f32.mrf.mxu0
      %v2586 = vadd.f32 0.0, %v2585
      %2587 = vmatmul.bf16.gmra.mxu0 %v2556
      %v2588 = vpop.f32.mrf.mxu0
      %v2589 = vadd.f32 0.0, %v2588
      %v2590 = vpop.f32.mrf.mxu0
      %v2591 = vadd.f32 0.0, %v2590
      %2592 = vmatmul.bf16.gmra.mxu0 %v2559
      %v2593 = vpop.f32.mrf.mxu0
      %v2594 = vadd.f32 0.0, %v2593
      %v2595 = vpop.f32.mrf.mxu0
      %v2596 = vadd.f32 0.0, %v2595
      %2597 = vdwg.mxu0
      %v2598 = vadd.f32 %v2519, %v2574
      %v2599 = vadd.f32 %v2520, %v2576
      %v2600 = vadd.f32 %v2521, %v2579
      %v2601 = vadd.f32 %v2522, %v2581
      %v2602 = vadd.f32 %v2523, %v2584
      %v2603 = vadd.f32 %v2524, %v2586
      %v2604 = vadd.f32 %v2525, %v2589
      %v2605 = vadd.f32 %v2526, %v2591
      %v2606 = vadd.f32 %v2527, %v2594
      %v2607 = vadd.f32 %v2528, %v2596
      %v2608 = vld [vmem:[#allocation2 + $0x15] sm:$0xff]
      %v2609 = vld [vmem:[#allocation2 + $0x1d] sm:$0xff]
      %v2610 = vld [vmem:[#allocation2 + $0x25] sm:$0xff]
      %v2611 = vld [vmem:[#allocation2 + $0x2d] sm:$0xff]
      %v2612 = vld [vmem:[#allocation2 + $0x35] sm:$0xff]
      %v2613 = vld [vmem:[#allocation2 + $0x3d] sm:$0xff]
      %v2614 = vld [vmem:[#allocation2 + $0x45] sm:$0xff]
      %v2615 = vld [vmem:[#allocation2 + $0x4d] sm:$0xff]
      %v2616 = vld [vmem:[#allocation2 + $0x55] sm:$0xff]
      %v2617 = vld [vmem:[#allocation2 + $0x5d] sm:$0x3f]
      %v2618 = vpack.c.bf16 %v2609, %v2608
      %v2619 = vpack.c.bf16 %v2611, %v2610
      %v2620 = vpack.c.bf16 %v2613, %v2612
      %v2621 = vpack.c.bf16 %v2615, %v2614
      %v2622 = vpack.c.bf16 %v2617, %v2616
      %s2623 = scalar_lea.vmem %s3, 28
      %v2624 = vld [vmem:[%s2623] sm:$0xf]
      %v2626 = vsel %vm2032, %v2618, 0
      %v2629 = vsel %vm2032, %v2619, 0
      %v2632 = vsel %vm2032, %v2620, 0
      %v2635 = vsel %vm2032, %v2621, 0
      %v2638 = vsel %vm2032, %v2622, 0
      %v2641 = vsel %vm2123, %v2624, 0
      %2643 = vmatpush.bf16.msra.mxu0 0
      %2644 = vmatpush.bf16.msra.mxu0 0
      %2645 = vmatpush.bf16.msra.mxu0 0
      %2646 = vmatpush.bf16.msra.mxu0 0
      %2647 = vmatpush.bf16.msra.mxu0 0
      %2648 = vmatpush.bf16.msra.mxu0 0
      %2649 = vmatpush.bf16.msra.mxu0 0
      %2650 = vmatpush.bf16.msra.mxu0 %v2641
      %2651 = vmatmul.bf16.gmra.mxu0 %v2626
      %v2652 = vpop.f32.mrf.mxu0
      %v2653 = vadd.f32 0.0, %v2652
      %v2654 = vpop.f32.mrf.mxu0
      %v2655 = vadd.f32 0.0, %v2654
      %2656 = vmatmul.bf16.gmra.mxu0 %v2629
      %v2657 = vpop.f32.mrf.mxu0
      %v2658 = vadd.f32 0.0, %v2657
      %v2659 = vpop.f32.mrf.mxu0
      %v2660 = vadd.f32 0.0, %v2659
      %2661 = vmatmul.bf16.gmra.mxu0 %v2632
      %v2662 = vpop.f32.mrf.mxu0
      %v2663 = vadd.f32 0.0, %v2662
      %v2664 = vpop.f32.mrf.mxu0
      %v2665 = vadd.f32 0.0, %v2664
      %2666 = vmatmul.bf16.gmra.mxu0 %v2635
      %v2667 = vpop.f32.mrf.mxu0
      %v2668 = vadd.f32 0.0, %v2667
      %v2669 = vpop.f32.mrf.mxu0
      %v2670 = vadd.f32 0.0, %v2669
      %2671 = vmatmul.bf16.gmra.mxu0 %v2638
      %v2672 = vpop.f32.mrf.mxu0
      %v2673 = vadd.f32 0.0, %v2672
      %v2674 = vpop.f32.mrf.mxu0
      %v2675 = vadd.f32 0.0, %v2674
      %2676 = vdwg.mxu0
      %v2677 = vadd.f32 %v2598, %v2653
      %v2678 = vadd.f32 %v2599, %v2655
      %v2679 = vadd.f32 %v2600, %v2658
      %v2680 = vadd.f32 %v2601, %v2660
      %v2681 = vadd.f32 %v2602, %v2663
      %v2682 = vadd.f32 %v2603, %v2665
      %v2683 = vadd.f32 %v2604, %v2668
      %v2684 = vadd.f32 %v2605, %v2670
      %v2685 = vadd.f32 %v2606, %v2673
      %v2686 = vadd.f32 %v2607, %v2675
      %v2687 = vld [vmem:[#allocation2 + $0x16] sm:$0xff]
      %v2688 = vld [vmem:[#allocation2 + $0x1e] sm:$0xff]
      %v2689 = vld [vmem:[#allocation2 + $0x26] sm:$0xff]
      %v2690 = vld [vmem:[#allocation2 + $0x2e] sm:$0xff]
      %v2691 = vld [vmem:[#allocation2 + $0x36] sm:$0xff]
      %v2692 = vld [vmem:[#allocation2 + $0x3e] sm:$0xff]
      %v2693 = vld [vmem:[#allocation2 + $0x46] sm:$0xff]
      %v2694 = vld [vmem:[#allocation2 + $0x4e] sm:$0xff]
      %v2695 = vld [vmem:[#allocation2 + $0x56] sm:$0xff]
      %v2696 = vld [vmem:[#allocation2 + $0x5e] sm:$0x3f]
      %v2697 = vpack.c.bf16 %v2688, %v2687
      %v2698 = vpack.c.bf16 %v2690, %v2689
      %v2699 = vpack.c.bf16 %v2692, %v2691
      %v2700 = vpack.c.bf16 %v2694, %v2693
      %v2701 = vpack.c.bf16 %v2696, %v2695
      %s2702 = scalar_lea.vmem %s3, 32
      %v2703 = vld [vmem:[%s2702] sm:$0xf]
      %v2705 = vsel %vm2032, %v2697, 0
      %v2708 = vsel %vm2032, %v2698, 0
      %v2711 = vsel %vm2032, %v2699, 0
      %v2714 = vsel %vm2032, %v2700, 0
      %v2717 = vsel %vm2032, %v2701, 0
      %v2720 = vsel %vm2123, %v2703, 0
      %2722 = vmatpush.bf16.msra.mxu0 0
      %2723 = vmatpush.bf16.msra.mxu0 0
      %2724 = vmatpush.bf16.msra.mxu0 0
      %2725 = vmatpush.bf16.msra.mxu0 0
      %2726 = vmatpush.bf16.msra.mxu0 0
      %2727 = vmatpush.bf16.msra.mxu0 0
      %2728 = vmatpush.bf16.msra.mxu0 0
      %2729 = vmatpush.bf16.msra.mxu0 %v2720
      %2730 = vmatmul.bf16.gmra.mxu0 %v2705
      %v2731 = vpop.f32.mrf.mxu0
      %v2732 = vadd.f32 0.0, %v2731
      %v2733 = vpop.f32.mrf.mxu0
      %v2734 = vadd.f32 0.0, %v2733
      %2735 = vmatmul.bf16.gmra.mxu0 %v2708
      %v2736 = vpop.f32.mrf.mxu0
      %v2737 = vadd.f32 0.0, %v2736
      %v2738 = vpop.f32.mrf.mxu0
      %v2739 = vadd.f32 0.0, %v2738
      %2740 = vmatmul.bf16.gmra.mxu0 %v2711
      %v2741 = vpop.f32.mrf.mxu0
      %v2742 = vadd.f32 0.0, %v2741
      %v2743 = vpop.f32.mrf.mxu0
      %v2744 = vadd.f32 0.0, %v2743
      %2745 = vmatmul.bf16.gmra.mxu0 %v2714
      %v2746 = vpop.f32.mrf.mxu0
      %v2747 = vadd.f32 0.0, %v2746
      %v2748 = vpop.f32.mrf.mxu0
      %v2749 = vadd.f32 0.0, %v2748
      %2750 = vmatmul.bf16.gmra.mxu0 %v2717
      %v2751 = vpop.f32.mrf.mxu0
      %v2752 = vadd.f32 0.0, %v2751
      %v2753 = vpop.f32.mrf.mxu0
      %v2754 = vadd.f32 0.0, %v2753
      %2755 = vdwg.mxu0
      %v2756 = vadd.f32 %v2677, %v2732
      %v2757 = vadd.f32 %v2678, %v2734
      %v2758 = vadd.f32 %v2679, %v2737
      %v2759 = vadd.f32 %v2680, %v2739
      %v2760 = vadd.f32 %v2681, %v2742
      %v2761 = vadd.f32 %v2682, %v2744
      %v2762 = vadd.f32 %v2683, %v2747
      %v2763 = vadd.f32 %v2684, %v2749
      %v2764 = vadd.f32 %v2685, %v2752
      %v2765 = vadd.f32 %v2686, %v2754
      %v2766 = vld [vmem:[%s4] sm:$0x1]
      %v2768 = vperm.slane %v2766, 0
      %v2770 = vadd.f32 %v2756, %v2768
      %v2771 = vadd.f32 %v2757, %v2768
      %v2772 = vadd.f32 %v2758, %v2768
      %v2773 = vadd.f32 %v2759, %v2768
      %v2774 = vadd.f32 %v2760, %v2768
      %v2775 = vadd.f32 %v2761, %v2768
      %v2776 = vadd.f32 %v2762, %v2768
      %v2777 = vadd.f32 %v2763, %v2768
      %v2778 = vadd.f32 %v2764, %v2768
      %v2779 = vadd.f32 %v2765, %v2768
      %vm2780 = vcmp.ge.f32.partialorder %v2770, 0.0
      %vm2781 = vcmp.ge.f32.partialorder %v2771, 0.0
      %vm2782 = vcmp.ge.f32.partialorder %v2772, 0.0
      %vm2783 = vcmp.ge.f32.partialorder %v2773, 0.0
      %vm2784 = vcmp.ge.f32.partialorder %v2774, 0.0
      %vm2785 = vcmp.ge.f32.partialorder %v2775, 0.0
      %vm2786 = vcmp.ge.f32.partialorder %v2776, 0.0
      %vm2787 = vcmp.ge.f32.partialorder %v2777, 0.0
      %vm2788 = vcmp.ge.f32.partialorder %v2778, 0.0
      %vm2789 = vcmp.ge.f32.partialorder %v2779, 0.0
      %v2790 = vmul.f32 %v2770, 0.2
      %v2791 = vmul.f32 %v2771, 0.2
      %v2792 = vmul.f32 %v2772, 0.2
      %v2793 = vmul.f32 %v2773, 0.2
      %v2794 = vmul.f32 %v2774, 0.2
      %v2795 = vmul.f32 %v2775, 0.2
      %v2796 = vmul.f32 %v2776, 0.2
      %v2797 = vmul.f32 %v2777, 0.2
      %v2798 = vmul.f32 %v2778, 0.2
      %v2799 = vmul.f32 %v2779, 0.2
      %v2800 = vsel %vm2780, %v2770, %v2790
      %v2801 = vsel %vm2781, %v2771, %v2791
      %v2802 = vsel %vm2782, %v2772, %v2792
      %v2803 = vsel %vm2783, %v2773, %v2793
      %v2804 = vsel %vm2784, %v2774, %v2794
      %v2805 = vsel %vm2785, %v2775, %v2795
      %v2806 = vsel %vm2786, %v2776, %v2796
      %v2807 = vsel %vm2787, %v2777, %v2797
      %v2808 = vsel %vm2788, %v2778, %v2798
      %v2809 = vsel %vm2789, %v2779, %v2799
      %2810 = vst.msk [vmem:[#allocation2 + $0xb] sm:$0xff] %vm2032, %v2800
      %2811 = vst.msk [vmem:[#allocation2 + $0x13] sm:$0xfc] %vm2052, %v2801
      %2812 = vst.msk [vmem:[#allocation2 + $0x1b] sm:$0x3] %vm2054, %v2802
      %2813 = vst.msk [vmem:[#allocation2 + $0x1b] sm:$0xf0] %vm2060, %v2802
      %2814 = vst.msk [vmem:[#allocation2 + $0x23] sm:$0xf] %vm2045, %v2803
      %2815 = vst.msk [vmem:[#allocation2 + $0x23] sm:$0xc0] %vm2067, %v2803
      %2816 = vst.msk [vmem:[#allocation2 + $0x2b] sm:$0x3f] %vm2069, %v2804
      %2817 = vst.msk [vmem:[#allocation2 + $0x33] sm:$0xff] %vm2032, %v2805
      %2818 = vst.msk [vmem:[#allocation2 + $0x3b] sm:$0xfc] %vm2052, %v2806
      %2819 = vst.msk [vmem:[#allocation2 + $0x43] sm:$0x3] %vm2054, %v2807
      %2820 = vst.msk [vmem:[#allocation2 + $0x43] sm:$0xf0] %vm2060, %v2807
      %2821 = vst.msk [vmem:[#allocation2 + $0x4b] sm:$0xf] %vm2045, %v2808
      %2822 = vst.msk [vmem:[#allocation2 + $0x4b] sm:$0xc0] %vm2067, %v2808
      %2823 = vst.msk [vmem:[#allocation2 + $0x53] sm:$0x3f] %vm2069, %v2809
      %v2824 = vld [vmem:[#allocation2] sm:$0xff]
      %v2825 = vld [vmem:[#allocation2 + $0x8] sm:$0xff]
      %v2826 = vld [vmem:[#allocation2 + $0x10] sm:$0xff]
      %v2827 = vld [vmem:[#allocation2 + $0x18] sm:$0xff]
      %v2828 = vld [vmem:[#allocation2 + $0x20] sm:$0xff]
      %v2829 = vld [vmem:[#allocation2 + $0x28] sm:$0xff]
      %v2830 = vld [vmem:[#allocation2 + $0x30] sm:$0xff]
      %v2831 = vld [vmem:[#allocation2 + $0x38] sm:$0xff]
      %v2832 = vld [vmem:[#allocation2 + $0x40] sm:$0xff]
      %v2833 = vld [vmem:[#allocation2 + $0x48] sm:$0x3f]
      %v2834 = vpack.c.bf16 %v2825, %v2824
      %v2835 = vpack.c.bf16 %v2827, %v2826
      %v2836 = vpack.c.bf16 %v2829, %v2828
      %v2837 = vpack.c.bf16 %v2831, %v2830
      %v2838 = vpack.c.bf16 %v2833, %v2832
      %v2839 = vld [vmem:[%s5] sm:$0xf]
      %v2840 = vld [vmem:[#allocation2 + $0x1] sm:$0xff]
      %v2841 = vld [vmem:[#allocation2 + $0x9] sm:$0xff]
      %v2842 = vld [vmem:[#allocation2 + $0x11] sm:$0xff]
      %v2843 = vld [vmem:[#allocation2 + $0x19] sm:$0xff]
      %v2844 = vld [vmem:[#allocation2 + $0x21] sm:$0xff]
      %v2845 = vld [vmem:[#allocation2 + $0x29] sm:$0xff]
      %v2846 = vld [vmem:[#allocation2 + $0x31] sm:$0xff]
      %v2847 = vld [vmem:[#allocation2 + $0x39] sm:$0xff]
      %v2848 = vld [vmem:[#allocation2 + $0x41] sm:$0xff]
      %v2849 = vld [vmem:[#allocation2 + $0x49] sm:$0x3f]
      %v2850 = vpack.c.bf16 %v2841, %v2840
      %v2851 = vpack.c.bf16 %v2843, %v2842
      %v2852 = vpack.c.bf16 %v2845, %v2844
      %v2853 = vpack.c.bf16 %v2847, %v2846
      %v2854 = vpack.c.bf16 %v2849, %v2848
      %s2855 = scalar_lea.vmem %s5, 4
      %v2856 = vld [vmem:[%s2855] sm:$0xf]
      %v2858 = vsel %vm2032, %v2850, 0
      %v2861 = vsel %vm2032, %v2851, 0
      %v2864 = vsel %vm2032, %v2852, 0
      %v2867 = vsel %vm2032, %v2853, 0
      %v2870 = vsel %vm2032, %v2854, 0
      %v2873 = vsel %vm2123, %v2856, 0
      %2875 = vmatpush.bf16.msra.mxu0 0
      %2876 = vmatpush.bf16.msra.mxu0 0
      %2877 = vmatpush.bf16.msra.mxu0 0
      %2878 = vmatpush.bf16.msra.mxu0 0
      %2879 = vmatpush.bf16.msra.mxu0 0
      %2880 = vmatpush.bf16.msra.mxu0 0
      %2881 = vmatpush.bf16.msra.mxu0 0
      %2882 = vmatpush.bf16.msra.mxu0 %v2873
      %2883 = vmatmul.bf16.gmra.mxu0 %v2858
      %v2884 = vpop.f32.mrf.mxu0
      %v2885 = vadd.f32 0.0, %v2884
      %v2886 = vpop.f32.mrf.mxu0
      %v2887 = vadd.f32 0.0, %v2886
      %2888 = vmatmul.bf16.gmra.mxu0 %v2861
      %v2889 = vpop.f32.mrf.mxu0
      %v2890 = vadd.f32 0.0, %v2889
      %v2891 = vpop.f32.mrf.mxu0
      %v2892 = vadd.f32 0.0, %v2891
      %2893 = vmatmul.bf16.gmra.mxu0 %v2864
      %v2894 = vpop.f32.mrf.mxu0
      %v2895 = vadd.f32 0.0, %v2894
      %v2896 = vpop.f32.mrf.mxu0
      %v2897 = vadd.f32 0.0, %v2896
      %2898 = vmatmul.bf16.gmra.mxu0 %v2867
      %v2899 = vpop.f32.mrf.mxu0
      %v2900 = vadd.f32 0.0, %v2899
      %v2901 = vpop.f32.mrf.mxu0
      %v2902 = vadd.f32 0.0, %v2901
      %2903 = vmatmul.bf16.gmra.mxu0 %v2870
      %v2904 = vpop.f32.mrf.mxu0
      %v2905 = vadd.f32 0.0, %v2904
      %v2906 = vpop.f32.mrf.mxu0
      %v2907 = vadd.f32 0.0, %v2906
      %2908 = vdwg.mxu0
      %v2910 = vsel %vm2032, %v2834, 0
      %v2913 = vsel %vm2032, %v2835, 0
      %v2916 = vsel %vm2032, %v2836, 0
      %v2919 = vsel %vm2032, %v2837, 0
      %v2922 = vsel %vm2032, %v2838, 0
      %v2925 = vsel %vm2123, %v2839, 0
      %2927 = vmatpush.bf16.msra.mxu0 0
      %2928 = vmatpush.bf16.msra.mxu0 0
      %2929 = vmatpush.bf16.msra.mxu0 0
      %2930 = vmatpush.bf16.msra.mxu0 0
      %2931 = vmatpush.bf16.msra.mxu0 0
      %2932 = vmatpush.bf16.msra.mxu0 0
      %2933 = vmatpush.bf16.msra.mxu0 0
      %2934 = vmatpush.bf16.msra.mxu0 %v2925
      %2935 = vmatmul.bf16.gmra.mxu0 %v2910
      %v2936 = vpop.f32.mrf.mxu0
      %v2937 = vadd.f32 %v2885, %v2936
      %v2938 = vpop.f32.mrf.mxu0
      %v2939 = vadd.f32 %v2887, %v2938
      %2940 = vmatmul.bf16.gmra.mxu0 %v2913
      %v2941 = vpop.f32.mrf.mxu0
      %v2942 = vadd.f32 %v2890, %v2941
      %v2943 = vpop.f32.mrf.mxu0
      %v2944 = vadd.f32 %v2892, %v2943
      %2945 = vmatmul.bf16.gmra.mxu0 %v2916
      %v2946 = vpop.f32.mrf.mxu0
      %v2947 = vadd.f32 %v2895, %v2946
      %v2948 = vpop.f32.mrf.mxu0
      %v2949 = vadd.f32 %v2897, %v2948
      %2950 = vmatmul.bf16.gmra.mxu0 %v2919
      %v2951 = vpop.f32.mrf.mxu0
      %v2952 = vadd.f32 %v2900, %v2951
      %v2953 = vpop.f32.mrf.mxu0
      %v2954 = vadd.f32 %v2902, %v2953
      %2955 = vmatmul.bf16.gmra.mxu0 %v2922
      %v2956 = vpop.f32.mrf.mxu0
      %v2957 = vadd.f32 %v2905, %v2956
      %v2958 = vpop.f32.mrf.mxu0
      %v2959 = vadd.f32 %v2907, %v2958
      %2960 = vdwg.mxu0
      %v2961 = vld [vmem:[#allocation2 + $0x2] sm:$0xff]
      %v2962 = vld [vmem:[#allocation2 + $0xa] sm:$0xff]
      %v2963 = vld [vmem:[#allocation2 + $0x12] sm:$0xff]
      %v2964 = vld [vmem:[#allocation2 + $0x1a] sm:$0xff]
      %v2965 = vld [vmem:[#allocation2 + $0x22] sm:$0xff]
      %v2966 = vld [vmem:[#allocation2 + $0x2a] sm:$0xff]
      %v2967 = vld [vmem:[#allocation2 + $0x32] sm:$0xff]
      %v2968 = vld [vmem:[#allocation2 + $0x3a] sm:$0xff]
      %v2969 = vld [vmem:[#allocation2 + $0x42] sm:$0xff]
      %v2970 = vld [vmem:[#allocation2 + $0x4a] sm:$0x3f]
      %v2971 = vpack.c.bf16 %v2962, %v2961
      %v2972 = vpack.c.bf16 %v2964, %v2963
      %v2973 = vpack.c.bf16 %v2966, %v2965
      %v2974 = vpack.c.bf16 %v2968, %v2967
      %v2975 = vpack.c.bf16 %v2970, %v2969
      %s2976 = scalar_lea.vmem %s5, 8
      %v2977 = vld [vmem:[%s2976] sm:$0xf]
      %v2979 = vsel %vm2032, %v2971, 0
      %v2982 = vsel %vm2032, %v2972, 0
      %v2985 = vsel %vm2032, %v2973, 0
      %v2988 = vsel %vm2032, %v2974, 0
      %v2991 = vsel %vm2032, %v2975, 0
      %v2994 = vsel %vm2123, %v2977, 0
      %2996 = vmatpush.bf16.msra.mxu0 0
      %2997 = vmatpush.bf16.msra.mxu0 0
      %2998 = vmatpush.bf16.msra.mxu0 0
      %2999 = vmatpush.bf16.msra.mxu0 0
      %3000 = vmatpush.bf16.msra.mxu0 0
      %3001 = vmatpush.bf16.msra.mxu0 0
      %3002 = vmatpush.bf16.msra.mxu0 0
      %3003 = vmatpush.bf16.msra.mxu0 %v2994
      %3004 = vmatmul.bf16.gmra.mxu0 %v2979
      %v3005 = vpop.f32.mrf.mxu0
      %v3006 = vadd.f32 0.0, %v3005
      %v3007 = vpop.f32.mrf.mxu0
      %v3008 = vadd.f32 0.0, %v3007
      %3009 = vmatmul.bf16.gmra.mxu0 %v2982
      %v3010 = vpop.f32.mrf.mxu0
      %v3011 = vadd.f32 0.0, %v3010
      %v3012 = vpop.f32.mrf.mxu0
      %v3013 = vadd.f32 0.0, %v3012
      %3014 = vmatmul.bf16.gmra.mxu0 %v2985
      %v3015 = vpop.f32.mrf.mxu0
      %v3016 = vadd.f32 0.0, %v3015
      %v3017 = vpop.f32.mrf.mxu0
      %v3018 = vadd.f32 0.0, %v3017
      %3019 = vmatmul.bf16.gmra.mxu0 %v2988
      %v3020 = vpop.f32.mrf.mxu0
      %v3021 = vadd.f32 0.0, %v3020
      %v3022 = vpop.f32.mrf.mxu0
      %v3023 = vadd.f32 0.0, %v3022
      %3024 = vmatmul.bf16.gmra.mxu0 %v2991
      %v3025 = vpop.f32.mrf.mxu0
      %v3026 = vadd.f32 0.0, %v3025
      %v3027 = vpop.f32.mrf.mxu0
      %v3028 = vadd.f32 0.0, %v3027
      %3029 = vdwg.mxu0
      %v3030 = vadd.f32 %v2937, %v3006
      %v3031 = vadd.f32 %v2939, %v3008
      %v3032 = vadd.f32 %v2942, %v3011
      %v3033 = vadd.f32 %v2944, %v3013
      %v3034 = vadd.f32 %v2947, %v3016
      %v3035 = vadd.f32 %v2949, %v3018
      %v3036 = vadd.f32 %v2952, %v3021
      %v3037 = vadd.f32 %v2954, %v3023
      %v3038 = vadd.f32 %v2957, %v3026
      %v3039 = vadd.f32 %v2959, %v3028
      %v3040 = vld [vmem:[#allocation2 + $0xa] sm:$0xff]
      %v3041 = vld [vmem:[#allocation2 + $0x12] sm:$0xff]
      %v3042 = vld [vmem:[#allocation2 + $0x1a] sm:$0xff]
      %v3043 = vld [vmem:[#allocation2 + $0x22] sm:$0xff]
      %v3044 = vld [vmem:[#allocation2 + $0x2a] sm:$0xff]
      %v3045 = vld [vmem:[#allocation2 + $0x32] sm:$0xff]
      %v3046 = vld [vmem:[#allocation2 + $0x3a] sm:$0xff]
      %v3047 = vld [vmem:[#allocation2 + $0x42] sm:$0xff]
      %v3048 = vld [vmem:[#allocation2 + $0x4a] sm:$0xff]
      %v3049 = vld [vmem:[#allocation2 + $0x52] sm:$0x3f]
      %v3050 = vpack.c.bf16 %v3041, %v3040
      %v3051 = vpack.c.bf16 %v3043, %v3042
      %v3052 = vpack.c.bf16 %v3045, %v3044
      %v3053 = vpack.c.bf16 %v3047, %v3046
      %v3054 = vpack.c.bf16 %v3049, %v3048
      %s3055 = scalar_lea.vmem %s5, 12
      %v3056 = vld [vmem:[%s3055] sm:$0xf]
      %v3058 = vsel %vm2032, %v3050, 0
      %v3061 = vsel %vm2032, %v3051, 0
      %v3064 = vsel %vm2032, %v3052, 0
      %v3067 = vsel %vm2032, %v3053, 0
      %v3070 = vsel %vm2032, %v3054, 0
      %v3073 = vsel %vm2123, %v3056, 0
      %3075 = vmatpush.bf16.msra.mxu0 0
      %3076 = vmatpush.bf16.msra.mxu0 0
      %3077 = vmatpush.bf16.msra.mxu0 0
      %3078 = vmatpush.bf16.msra.mxu0 0
      %3079 = vmatpush.bf16.msra.mxu0 0
      %3080 = vmatpush.bf16.msra.mxu0 0
      %3081 = vmatpush.bf16.msra.mxu0 0
      %3082 = vmatpush.bf16.msra.mxu0 %v3073
      %3083 = vmatmul.bf16.gmra.mxu0 %v3058
      %v3084 = vpop.f32.mrf.mxu0
      %v3085 = vadd.f32 0.0, %v3084
      %v3086 = vpop.f32.mrf.mxu0
      %v3087 = vadd.f32 0.0, %v3086
      %3088 = vmatmul.bf16.gmra.mxu0 %v3061
      %v3089 = vpop.f32.mrf.mxu0
      %v3090 = vadd.f32 0.0, %v3089
      %v3091 = vpop.f32.mrf.mxu0
      %v3092 = vadd.f32 0.0, %v3091
      %3093 = vmatmul.bf16.gmra.mxu0 %v3064
      %v3094 = vpop.f32.mrf.mxu0
      %v3095 = vadd.f32 0.0, %v3094
      %v3096 = vpop.f32.mrf.mxu0
      %v3097 = vadd.f32 0.0, %v3096
      %3098 = vmatmul.bf16.gmra.mxu0 %v3067
      %v3099 = vpop.f32.mrf.mxu0
      %v3100 = vadd.f32 0.0, %v3099
      %v3101 = vpop.f32.mrf.mxu0
      %v3102 = vadd.f32 0.0, %v3101
      %3103 = vmatmul.bf16.gmra.mxu0 %v3070
      %v3104 = vpop.f32.mrf.mxu0
      %v3105 = vadd.f32 0.0, %v3104
      %v3106 = vpop.f32.mrf.mxu0
      %v3107 = vadd.f32 0.0, %v3106
      %3108 = vdwg.mxu0
      %v3109 = vadd.f32 %v3030, %v3085
      %v3110 = vadd.f32 %v3031, %v3087
      %v3111 = vadd.f32 %v3032, %v3090
      %v3112 = vadd.f32 %v3033, %v3092
      %v3113 = vadd.f32 %v3034, %v3095
      %v3114 = vadd.f32 %v3035, %v3097
      %v3115 = vadd.f32 %v3036, %v3100
      %v3116 = vadd.f32 %v3037, %v3102
      %v3117 = vadd.f32 %v3038, %v3105
      %v3118 = vadd.f32 %v3039, %v3107
      %v3119 = vld [vmem:[#allocation2 + $0xb] sm:$0xff]
      %v3120 = vld [vmem:[#allocation2 + $0x13] sm:$0xff]
      %v3121 = vld [vmem:[#allocation2 + $0x1b] sm:$0xff]
      %v3122 = vld [vmem:[#allocation2 + $0x23] sm:$0xff]
      %v3123 = vld [vmem:[#allocation2 + $0x2b] sm:$0xff]
      %v3124 = vld [vmem:[#allocation2 + $0x33] sm:$0xff]
      %v3125 = vld [vmem:[#allocation2 + $0x3b] sm:$0xff]
      %v3126 = vld [vmem:[#allocation2 + $0x43] sm:$0xff]
      %v3127 = vld [vmem:[#allocation2 + $0x4b] sm:$0xff]
      %v3128 = vld [vmem:[#allocation2 + $0x53] sm:$0x3f]
      %v3129 = vpack.c.bf16 %v3120, %v3119
      %v3130 = vpack.c.bf16 %v3122, %v3121
      %v3131 = vpack.c.bf16 %v3124, %v3123
      %v3132 = vpack.c.bf16 %v3126, %v3125
      %v3133 = vpack.c.bf16 %v3128, %v3127
      %s3134 = scalar_lea.vmem %s5, 16
      %v3135 = vld [vmem:[%s3134] sm:$0xf]
      %v3137 = vsel %vm2032, %v3129, 0
      %v3140 = vsel %vm2032, %v3130, 0
      %v3143 = vsel %vm2032, %v3131, 0
      %v3146 = vsel %vm2032, %v3132, 0
      %v3149 = vsel %vm2032, %v3133, 0
      %v3152 = vsel %vm2123, %v3135, 0
      %3154 = vmatpush.bf16.msra.mxu0 0
      %3155 = vmatpush.bf16.msra.mxu0 0
      %3156 = vmatpush.bf16.msra.mxu0 0
      %3157 = vmatpush.bf16.msra.mxu0 0
      %3158 = vmatpush.bf16.msra.mxu0 0
      %3159 = vmatpush.bf16.msra.mxu0 0
      %3160 = vmatpush.bf16.msra.mxu0 0
      %3161 = vmatpush.bf16.msra.mxu0 %v3152
      %3162 = vmatmul.bf16.gmra.mxu0 %v3137
      %v3163 = vpop.f32.mrf.mxu0
      %v3164 = vadd.f32 0.0, %v3163
      %v3165 = vpop.f32.mrf.mxu0
      %v3166 = vadd.f32 0.0, %v3165
      %3167 = vmatmul.bf16.gmra.mxu0 %v3140
      %v3168 = vpop.f32.mrf.mxu0
      %v3169 = vadd.f32 0.0, %v3168
      %v3170 = vpop.f32.mrf.mxu0
      %v3171 = vadd.f32 0.0, %v3170
      %3172 = vmatmul.bf16.gmra.mxu0 %v3143
      %v3173 = vpop.f32.mrf.mxu0
      %v3174 = vadd.f32 0.0, %v3173
      %v3175 = vpop.f32.mrf.mxu0
      %v3176 = vadd.f32 0.0, %v3175
      %3177 = vmatmul.bf16.gmra.mxu0 %v3146
      %v3178 = vpop.f32.mrf.mxu0
      %v3179 = vadd.f32 0.0, %v3178
      %v3180 = vpop.f32.mrf.mxu0
      %v3181 = vadd.f32 0.0, %v3180
      %3182 = vmatmul.bf16.gmra.mxu0 %v3149
      %v3183 = vpop.f32.mrf.mxu0
      %v3184 = vadd.f32 0.0, %v3183
      %v3185 = vpop.f32.mrf.mxu0
      %v3186 = vadd.f32 0.0, %v3185
      %3187 = vdwg.mxu0
      %v3188 = vadd.f32 %v3109, %v3164
      %v3189 = vadd.f32 %v3110, %v3166
      %v3190 = vadd.f32 %v3111, %v3169
      %v3191 = vadd.f32 %v3112, %v3171
      %v3192 = vadd.f32 %v3113, %v3174
      %v3193 = vadd.f32 %v3114, %v3176
      %v3194 = vadd.f32 %v3115, %v3179
      %v3195 = vadd.f32 %v3116, %v3181
      %v3196 = vadd.f32 %v3117, %v3184
      %v3197 = vadd.f32 %v3118, %v3186
      %v3198 = vld [vmem:[#allocation2 + $0xc] sm:$0xff]
      %v3199 = vld [vmem:[#allocation2 + $0x14] sm:$0xff]
      %v3200 = vld [vmem:[#allocation2 + $0x1c] sm:$0xff]
      %v3201 = vld [vmem:[#allocation2 + $0x24] sm:$0xff]
      %v3202 = vld [vmem:[#allocation2 + $0x2c] sm:$0xff]
      %v3203 = vld [vmem:[#allocation2 + $0x34] sm:$0xff]
      %v3204 = vld [vmem:[#allocation2 + $0x3c] sm:$0xff]
      %v3205 = vld [vmem:[#allocation2 + $0x44] sm:$0xff]
      %v3206 = vld [vmem:[#allocation2 + $0x4c] sm:$0xff]
      %v3207 = vld [vmem:[#allocation2 + $0x54] sm:$0x3f]
      %v3208 = vpack.c.bf16 %v3199, %v3198
      %v3209 = vpack.c.bf16 %v3201, %v3200
      %v3210 = vpack.c.bf16 %v3203, %v3202
      %v3211 = vpack.c.bf16 %v3205, %v3204
      %v3212 = vpack.c.bf16 %v3207, %v3206
      %s3213 = scalar_lea.vmem %s5, 20
      %v3214 = vld [vmem:[%s3213] sm:$0xf]
      %v3216 = vsel %vm2032, %v3208, 0
      %v3219 = vsel %vm2032, %v3209, 0
      %v3222 = vsel %vm2032, %v3210, 0
      %v3225 = vsel %vm2032, %v3211, 0
      %v3228 = vsel %vm2032, %v3212, 0
      %v3231 = vsel %vm2123, %v3214, 0
      %3233 = vmatpush.bf16.msra.mxu0 0
      %3234 = vmatpush.bf16.msra.mxu0 0
      %3235 = vmatpush.bf16.msra.mxu0 0
      %3236 = vmatpush.bf16.msra.mxu0 0
      %3237 = vmatpush.bf16.msra.mxu0 0
      %3238 = vmatpush.bf16.msra.mxu0 0
      %3239 = vmatpush.bf16.msra.mxu0 0
      %3240 = vmatpush.bf16.msra.mxu0 %v3231
      %3241 = vmatmul.bf16.gmra.mxu0 %v3216
      %v3242 = vpop.f32.mrf.mxu0
      %v3243 = vadd.f32 0.0, %v3242
      %v3244 = vpop.f32.mrf.mxu0
      %v3245 = vadd.f32 0.0, %v3244
      %3246 = vmatmul.bf16.gmra.mxu0 %v3219
      %v3247 = vpop.f32.mrf.mxu0
      %v3248 = vadd.f32 0.0, %v3247
      %v3249 = vpop.f32.mrf.mxu0
      %v3250 = vadd.f32 0.0, %v3249
      %3251 = vmatmul.bf16.gmra.mxu0 %v3222
      %v3252 = vpop.f32.mrf.mxu0
      %v3253 = vadd.f32 0.0, %v3252
      %v3254 = vpop.f32.mrf.mxu0
      %v3255 = vadd.f32 0.0, %v3254
      %3256 = vmatmul.bf16.gmra.mxu0 %v3225
      %v3257 = vpop.f32.mrf.mxu0
      %v3258 = vadd.f32 0.0, %v3257
      %v3259 = vpop.f32.mrf.mxu0
      %v3260 = vadd.f32 0.0, %v3259
      %3261 = vmatmul.bf16.gmra.mxu0 %v3228
      %v3262 = vpop.f32.mrf.mxu0
      %v3263 = vadd.f32 0.0, %v3262
      %v3264 = vpop.f32.mrf.mxu0
      %v3265 = vadd.f32 0.0, %v3264
      %3266 = vdwg.mxu0
      %v3267 = vadd.f32 %v3188, %v3243
      %v3268 = vadd.f32 %v3189, %v3245
      %v3269 = vadd.f32 %v3190, %v3248
      %v3270 = vadd.f32 %v3191, %v3250
      %v3271 = vadd.f32 %v3192, %v3253
      %v3272 = vadd.f32 %v3193, %v3255
      %v3273 = vadd.f32 %v3194, %v3258
      %v3274 = vadd.f32 %v3195, %v3260
      %v3275 = vadd.f32 %v3196, %v3263
      %v3276 = vadd.f32 %v3197, %v3265
      %v3277 = vld [vmem:[#allocation2 + $0x14] sm:$0xff]
      %v3278 = vld [vmem:[#allocation2 + $0x1c] sm:$0xff]
      %v3279 = vld [vmem:[#allocation2 + $0x24] sm:$0xff]
      %v3280 = vld [vmem:[#allocation2 + $0x2c] sm:$0xff]
      %v3281 = vld [vmem:[#allocation2 + $0x34] sm:$0xff]
      %v3282 = vld [vmem:[#allocation2 + $0x3c] sm:$0xff]
      %v3283 = vld [vmem:[#allocation2 + $0x44] sm:$0xff]
      %v3284 = vld [vmem:[#allocation2 + $0x4c] sm:$0xff]
      %v3285 = vld [vmem:[#allocation2 + $0x54] sm:$0xff]
      %v3286 = vld [vmem:[#allocation2 + $0x5c] sm:$0x3f]
      %v3287 = vpack.c.bf16 %v3278, %v3277
      %v3288 = vpack.c.bf16 %v3280, %v3279
      %v3289 = vpack.c.bf16 %v3282, %v3281
      %v3290 = vpack.c.bf16 %v3284, %v3283
      %v3291 = vpack.c.bf16 %v3286, %v3285
      %s3292 = scalar_lea.vmem %s5, 24
      %v3293 = vld [vmem:[%s3292] sm:$0xf]
      %v3295 = vsel %vm2032, %v3287, 0
      %v3298 = vsel %vm2032, %v3288, 0
      %v3301 = vsel %vm2032, %v3289, 0
      %v3304 = vsel %vm2032, %v3290, 0
      %v3307 = vsel %vm2032, %v3291, 0
      %v3310 = vsel %vm2123, %v3293, 0
      %3312 = vmatpush.bf16.msra.mxu0 0
      %3313 = vmatpush.bf16.msra.mxu0 0
      %3314 = vmatpush.bf16.msra.mxu0 0
      %3315 = vmatpush.bf16.msra.mxu0 0
      %3316 = vmatpush.bf16.msra.mxu0 0
      %3317 = vmatpush.bf16.msra.mxu0 0
      %3318 = vmatpush.bf16.msra.mxu0 0
      %3319 = vmatpush.bf16.msra.mxu0 %v3310
      %3320 = vmatmul.bf16.gmra.mxu0 %v3295
      %v3321 = vpop.f32.mrf.mxu0
      %v3322 = vadd.f32 0.0, %v3321
      %v3323 = vpop.f32.mrf.mxu0
      %v3324 = vadd.f32 0.0, %v3323
      %3325 = vmatmul.bf16.gmra.mxu0 %v3298
      %v3326 = vpop.f32.mrf.mxu0
      %v3327 = vadd.f32 0.0, %v3326
      %v3328 = vpop.f32.mrf.mxu0
      %v3329 = vadd.f32 0.0, %v3328
      %3330 = vmatmul.bf16.gmra.mxu0 %v3301
      %v3331 = vpop.f32.mrf.mxu0
      %v3332 = vadd.f32 0.0, %v3331
      %v3333 = vpop.f32.mrf.mxu0
      %v3334 = vadd.f32 0.0, %v3333
      %3335 = vmatmul.bf16.gmra.mxu0 %v3304
      %v3336 = vpop.f32.mrf.mxu0
      %v3337 = vadd.f32 0.0, %v3336
      %v3338 = vpop.f32.mrf.mxu0
      %v3339 = vadd.f32 0.0, %v3338
      %3340 = vmatmul.bf16.gmra.mxu0 %v3307
      %v3341 = vpop.f32.mrf.mxu0
      %v3342 = vadd.f32 0.0, %v3341
      %v3343 = vpop.f32.mrf.mxu0
      %v3344 = vadd.f32 0.0, %v3343
      %3345 = vdwg.mxu0
      %v3346 = vadd.f32 %v3267, %v3322
      %v3347 = vadd.f32 %v3268, %v3324
      %v3348 = vadd.f32 %v3269, %v3327
      %v3349 = vadd.f32 %v3270, %v3329
      %v3350 = vadd.f32 %v3271, %v3332
      %v3351 = vadd.f32 %v3272, %v3334
      %v3352 = vadd.f32 %v3273, %v3337
      %v3353 = vadd.f32 %v3274, %v3339
      %v3354 = vadd.f32 %v3275, %v3342
      %v3355 = vadd.f32 %v3276, %v3344
      %v3356 = vld [vmem:[#allocation2 + $0x15] sm:$0xff]
      %v3357 = vld [vmem:[#allocation2 + $0x1d] sm:$0xff]
      %v3358 = vld [vmem:[#allocation2 + $0x25] sm:$0xff]
      %v3359 = vld [vmem:[#allocation2 + $0x2d] sm:$0xff]
      %v3360 = vld [vmem:[#allocation2 + $0x35] sm:$0xff]
      %v3361 = vld [vmem:[#allocation2 + $0x3d] sm:$0xff]
      %v3362 = vld [vmem:[#allocation2 + $0x45] sm:$0xff]
      %v3363 = vld [vmem:[#allocation2 + $0x4d] sm:$0xff]
      %v3364 = vld [vmem:[#allocation2 + $0x55] sm:$0xff]
      %v3365 = vld [vmem:[#allocation2 + $0x5d] sm:$0x3f]
      %v3366 = vpack.c.bf16 %v3357, %v3356
      %v3367 = vpack.c.bf16 %v3359, %v3358
      %v3368 = vpack.c.bf16 %v3361, %v3360
      %v3369 = vpack.c.bf16 %v3363, %v3362
      %v3370 = vpack.c.bf16 %v3365, %v3364
      %s3371 = scalar_lea.vmem %s5, 28
      %v3372 = vld [vmem:[%s3371] sm:$0xf]
      %v3374 = vsel %vm2032, %v3366, 0
      %v3377 = vsel %vm2032, %v3367, 0
      %v3380 = vsel %vm2032, %v3368, 0
      %v3383 = vsel %vm2032, %v3369, 0
      %v3386 = vsel %vm2032, %v3370, 0
      %v3389 = vsel %vm2123, %v3372, 0
      %3391 = vmatpush.bf16.msra.mxu0 0
      %3392 = vmatpush.bf16.msra.mxu0 0
      %3393 = vmatpush.bf16.msra.mxu0 0
      %3394 = vmatpush.bf16.msra.mxu0 0
      %3395 = vmatpush.bf16.msra.mxu0 0
      %3396 = vmatpush.bf16.msra.mxu0 0
      %3397 = vmatpush.bf16.msra.mxu0 0
      %3398 = vmatpush.bf16.msra.mxu0 %v3389
      %3399 = vmatmul.bf16.gmra.mxu0 %v3374
      %v3400 = vpop.f32.mrf.mxu0
      %v3401 = vadd.f32 0.0, %v3400
      %v3402 = vpop.f32.mrf.mxu0
      %v3403 = vadd.f32 0.0, %v3402
      %3404 = vmatmul.bf16.gmra.mxu0 %v3377
      %v3405 = vpop.f32.mrf.mxu0
      %v3406 = vadd.f32 0.0, %v3405
      %v3407 = vpop.f32.mrf.mxu0
      %v3408 = vadd.f32 0.0, %v3407
      %3409 = vmatmul.bf16.gmra.mxu0 %v3380
      %v3410 = vpop.f32.mrf.mxu0
      %v3411 = vadd.f32 0.0, %v3410
      %v3412 = vpop.f32.mrf.mxu0
      %v3413 = vadd.f32 0.0, %v3412
      %3414 = vmatmul.bf16.gmra.mxu0 %v3383
      %v3415 = vpop.f32.mrf.mxu0
      %v3416 = vadd.f32 0.0, %v3415
      %v3417 = vpop.f32.mrf.mxu0
      %v3418 = vadd.f32 0.0, %v3417
      %3419 = vmatmul.bf16.gmra.mxu0 %v3386
      %v3420 = vpop.f32.mrf.mxu0
      %v3421 = vadd.f32 0.0, %v3420
      %v3422 = vpop.f32.mrf.mxu0
      %v3423 = vadd.f32 0.0, %v3422
      %3424 = vdwg.mxu0
      %v3425 = vadd.f32 %v3346, %v3401
      %v3426 = vadd.f32 %v3347, %v3403
      %v3427 = vadd.f32 %v3348, %v3406
      %v3428 = vadd.f32 %v3349, %v3408
      %v3429 = vadd.f32 %v3350, %v3411
      %v3430 = vadd.f32 %v3351, %v3413
      %v3431 = vadd.f32 %v3352, %v3416
      %v3432 = vadd.f32 %v3353, %v3418
      %v3433 = vadd.f32 %v3354, %v3421
      %v3434 = vadd.f32 %v3355, %v3423
      %v3435 = vld [vmem:[#allocation2 + $0x16] sm:$0xff]
      %v3436 = vld [vmem:[#allocation2 + $0x1e] sm:$0xff]
      %v3437 = vld [vmem:[#allocation2 + $0x26] sm:$0xff]
      %v3438 = vld [vmem:[#allocation2 + $0x2e] sm:$0xff]
      %v3439 = vld [vmem:[#allocation2 + $0x36] sm:$0xff]
      %v3440 = vld [vmem:[#allocation2 + $0x3e] sm:$0xff]
      %v3441 = vld [vmem:[#allocation2 + $0x46] sm:$0xff]
      %v3442 = vld [vmem:[#allocation2 + $0x4e] sm:$0xff]
      %v3443 = vld [vmem:[#allocation2 + $0x56] sm:$0xff]
      %v3444 = vld [vmem:[#allocation2 + $0x5e] sm:$0x3f]
      %v3445 = vpack.c.bf16 %v3436, %v3435
      %v3446 = vpack.c.bf16 %v3438, %v3437
      %v3447 = vpack.c.bf16 %v3440, %v3439
      %v3448 = vpack.c.bf16 %v3442, %v3441
      %v3449 = vpack.c.bf16 %v3444, %v3443
      %s3450 = scalar_lea.vmem %s5, 32
      %v3451 = vld [vmem:[%s3450] sm:$0xf]
      %v3453 = vsel %vm2032, %v3445, 0
      %v3456 = vsel %vm2032, %v3446, 0
      %v3459 = vsel %vm2032, %v3447, 0
      %v3462 = vsel %vm2032, %v3448, 0
      %v3465 = vsel %vm2032, %v3449, 0
      %v3468 = vsel %vm2123, %v3451, 0
      %3470 = vmatpush.bf16.msra.mxu0 0
      %3471 = vmatpush.bf16.msra.mxu0 0
      %3472 = vmatpush.bf16.msra.mxu0 0
      %3473 = vmatpush.bf16.msra.mxu0 0
      %3474 = vmatpush.bf16.msra.mxu0 0
      %3475 = vmatpush.bf16.msra.mxu0 0
      %3476 = vmatpush.bf16.msra.mxu0 0
      %3477 = vmatpush.bf16.msra.mxu0 %v3468
      %3478 = vmatmul.bf16.gmra.mxu0 %v3453
      %v3479 = vpop.f32.mrf.mxu0
      %v3480 = vadd.f32 0.0, %v3479
      %v3481 = vpop.f32.mrf.mxu0
      %v3482 = vadd.f32 0.0, %v3481
      %3483 = vmatmul.bf16.gmra.mxu0 %v3456
      %v3484 = vpop.f32.mrf.mxu0
      %v3485 = vadd.f32 0.0, %v3484
      %v3486 = vpop.f32.mrf.mxu0
      %v3487 = vadd.f32 0.0, %v3486
      %3488 = vmatmul.bf16.gmra.mxu0 %v3459
      %v3489 = vpop.f32.mrf.mxu0
      %v3490 = vadd.f32 0.0, %v3489
      %v3491 = vpop.f32.mrf.mxu0
      %v3492 = vadd.f32 0.0, %v3491
      %3493 = vmatmul.bf16.gmra.mxu0 %v3462
      %v3494 = vpop.f32.mrf.mxu0
      %v3495 = vadd.f32 0.0, %v3494
      %v3496 = vpop.f32.mrf.mxu0
      %v3497 = vadd.f32 0.0, %v3496
      %3498 = vmatmul.bf16.gmra.mxu0 %v3465
      %v3499 = vpop.f32.mrf.mxu0
      %v3500 = vadd.f32 0.0, %v3499
      %v3501 = vpop.f32.mrf.mxu0
      %v3502 = vadd.f32 0.0, %v3501
      %3503 = vdwg.mxu0
      %v3504 = vadd.f32 %v3425, %v3480
      %v3505 = vadd.f32 %v3426, %v3482
      %v3506 = vadd.f32 %v3427, %v3485
      %v3507 = vadd.f32 %v3428, %v3487
      %v3508 = vadd.f32 %v3429, %v3490
      %v3509 = vadd.f32 %v3430, %v3492
      %v3510 = vadd.f32 %v3431, %v3495
      %v3511 = vadd.f32 %v3432, %v3497
      %v3512 = vadd.f32 %v3433, %v3500
      %v3513 = vadd.f32 %v3434, %v3502
      %v3514 = vld [vmem:[%s6] sm:$0x1]
      %v3516 = vperm.slane %v3514, 0
      %v3518 = vadd.f32 %v3504, %v3516
      %v3519 = vadd.f32 %v3505, %v3516
      %v3520 = vadd.f32 %v3506, %v3516
      %v3521 = vadd.f32 %v3507, %v3516
      %v3522 = vadd.f32 %v3508, %v3516
      %v3523 = vadd.f32 %v3509, %v3516
      %v3524 = vadd.f32 %v3510, %v3516
      %v3525 = vadd.f32 %v3511, %v3516
      %v3526 = vadd.f32 %v3512, %v3516
      %v3527 = vadd.f32 %v3513, %v3516
      %v3528 = vadd.f32 %v3518, %v2023
      %3529 = vst.msk [vmem:[%s283] sm:$0xff] %vm2032, %v3528
      %v3532 = vrot.slane %v2024, 7
      %v3533 = vrot.slane %v2025, 7
      %v3534 = vsel %vm376, %v3532, %v3533
      %v3537 = vadd.f32 %v3519, %v3532
      %v3538 = vadd.f32 %v3520, %v3534
      %s3539 = scalar_lea.vmem %s283, 8
      %3540 = vst.msk [vmem:[%s3539 - $0x2] sm:$0xfc] %vm2052, %v3537
      %3541 = vst.msk [vmem:[%s3539 + $0x6] sm:$0x3] %vm2054, %v3538
      %v3543 = vrot.slane %v2025, 6
      %v3544 = vrot.slane %v2026, 6
      %v3545 = vsel %vm377, %v3543, %v3544
      %v3548 = vadd.f32 %v3520, %v3543
      %v3549 = vadd.f32 %v3521, %v3545
      %s3550 = scalar_lea.vmem %s283, 16
      %3551 = vst.msk [vmem:[%s3550 - $0x4] sm:$0xf0] %vm2060, %v3548
      %3552 = vst.msk [vmem:[%s3550 + $0x4] sm:$0xf] %vm2045, %v3549
      %vm3554 = vcmask 1042432
      %v3555 = vrot.slane %v2026, 5
      %v3556 = vrot.slane %v2027, 5
      %v3557 = vsel %vm3554, %v3555, %v3556
      %v3560 = vadd.f32 %v3521, %v3555
      %v3561 = vadd.f32 %v3522, %v3557
      %s3562 = scalar_lea.vmem %s283, 24
      %3563 = vst.msk [vmem:[%s3562 - $0x6] sm:$0xc0] %vm2067, %v3560
      %3564 = vst.msk [vmem:[%s3562 + $0x2] sm:$0x3f] %vm2069, %v3561
      %v3566 = vrot.slane %v2027, 4
      %v3567 = vrot.slane %v2028, 4
      %v3568 = vsel %vm2123, %v3566, %v3567
      %v3570 = vadd.f32 %v3523, %v3568
      %s3571 = scalar_lea.vmem %s283, 32
      %3572 = vst.msk [vmem:[%s3571] sm:$0xff] %vm2032, %v3570
      %vm3574 = vcmask 1044480
      %v3575 = vrot.slane %v2028, 3
      %v3576 = vrot.slane %v2029, 3
      %v3577 = vsel %vm3574, %v3575, %v3576
      %v3580 = vadd.f32 %v3524, %v3577
      %v3581 = vadd.f32 %v3525, %v3576
      %s3582 = scalar_lea.vmem %s283, 40
      %3583 = vst.msk [vmem:[%s3582 - $0x2] sm:$0xfc] %vm2052, %v3580
      %3584 = vst.msk [vmem:[%s3582 + $0x6] sm:$0x3] %vm2054, %v3581
      %vm3586 = vcmask 1045504
      %v3587 = vrot.slane %v2029, 2
      %v3588 = vrot.slane %v2030, 2
      %v3589 = vsel %vm3586, %v3587, %v3588
      %v3592 = vadd.f32 %v3525, %v3589
      %v3593 = vadd.f32 %v3526, %v3588
      %s3594 = scalar_lea.vmem %s283, 48
      %3595 = vst.msk [vmem:[%s3594 - $0x4] sm:$0xf0] %vm2060, %v3592
      %3596 = vst.msk [vmem:[%s3594 + $0x4] sm:$0xf] %vm2045, %v3593
      %vm3598 = vcmask 1046528
      %v3599 = vrot.slane %v2030, 1
      %v3600 = vrot.slane %v2031, 1
      %v3601 = vsel %vm3598, %v3599, %v3600
      %v3604 = vadd.f32 %v3526, %v3601
      %v3605 = vadd.f32 %v3527, %v3600
      %s3606 = scalar_lea.vmem %s283, 56
      %3607 = vst.msk [vmem:[%s3606 - $0x6] sm:$0xc0] %vm2067, %v3604
      %3608 = vst.msk [vmem:[%s3606 + $0x2] sm:$0x3f] %vm2069, %v3605
      %p3609 = scmp.lt.s32.totalorder %s18, 1
      %s3610 = scalar_select %p3609, %s18, 1
      %s3611 = smul.addr %s3610, 8
      %s3612 = smul.addr %s3611, 8
      %s3613 = scalar_lea.vmem %s7, %s3612
      // Predicated region
      $region49: #{_lambda_.3} parent=47 // pred_check
        %p3614 = pneg %p188
      $region50: #{_lambda_.3} parent=47 // pred_check_branch
        %3616 = sbr.rel (%p3614) target = $region52
      $region51: #{_lambda_.3} parent=47 // pred_region
        _
      $region52: #{_lambda_.3} parent=47 // pred_fallthru
        _
    $region48: #{_lambda_.3} parent=5 // pred_fallthru
      _
    %p3617 = scmp.le.s32.totalorder 2, %s13
    // Predicated region
    $region53: #{_lambda_.3} parent=5 // pred_check
      %p3618 = pneg %p3617
    $region54: #{_lambda_.3} parent=5 // pred_check_branch
      %3620 = sbr.rel (%p3618) target = $region56
    $region55: #{_lambda_.3} parent=5 // pred_region
      %s3621 = ssub.s32 %s13, 2
      // Predicated region
      $region57: #{_lambda_.3} parent=55 // pred_check
        %p3622 = pneg %p194
      $region58: #{_lambda_.3} parent=55 // pred_check_branch
        %3624 = sbr.rel (%p3622) target = $region60
      $region59: #{_lambda_.3} parent=55 // pred_region
        %p3625 = scmp.lt.s32.totalorder %s19, 1
        %s3626 = scalar_select %p3625, %s19, 1
        %s3627 = smul.addr %s3626, 8
        %s3628 = smul.addr %s3627, 8
        %s3629 = scalar_lea.vmem %s7, %s3628
      $region60: #{_lambda_.3} parent=55 // pred_fallthru
        _
    $region56: #{_lambda_.3} parent=5 // pred_fallthru
      _
  $region6: #{_lambda_.3} parent=0 // loop_footer
    %s17 = sadd.s32 1, %s13
  $region7: #{_lambda_.3} parent=0 // loop_footer_branch
    %12 = sbr.rel target = $region3
  $region8: #{_lambda_.3} parent=0 // loop_exit
    _

</llo_original>
